<compile_context>
chip_gen: v7x
topology: tpu7x:2x2x1
jax: 0.10.0
libtpu: 0.0.40
codegen_flags: <defaults>
</compile_context>

<pallas_src>
import functools

import jax
import jax.numpy as jnp
from jax.experimental import pallas as pl
from jax.experimental.pallas import tpu as pltpu


def _round_up(x, m):
    return ((x + m - 1) // m) * m


def _line_ce_tail(edge, lbl, w1_ref, b1_ref, w2_ref, b2_ref, out_ref,
                  tile_idx, e_actual):
    """Shared tail: LineNetwork -> softmax -> CE partial sum into out_ref."""
    # LineNetwork: Linear(D,D) -> ReLU -> Linear(D,C); bf16 MXU, f32 accumulation.
    h = jnp.dot(edge.astype(jnp.bfloat16), w1_ref[...],
                preferred_element_type=jnp.float32)
    h = jnp.maximum(h + b1_ref[...], 0.0)
    logits = jnp.dot(h.astype(jnp.bfloat16), w2_ref[...],
                     preferred_element_type=jnp.float32) + b2_ref[...]

    # Softmax(dim=-1) from the module's forward.
    m = jnp.max(logits, axis=-1, keepdims=True)
    e = jnp.exp(logits - m)
    probs = e * pl.reciprocal(jnp.sum(e, axis=-1, keepdims=True), approx=True)

    # CrossEntropyLoss on the already-softmaxed probs (the module's semantics):
    # log_softmax(probs) + NLL.  probs lie in [0,1] so no max-shift needed.
    log_sm = probs - jnp.log(jnp.sum(jnp.exp(probs), axis=-1, keepdims=True))

    t_e, n_cls = log_sm.shape
    cls_ids = jax.lax.broadcasted_iota(jnp.int32, (t_e, n_cls), 1)
    tgt_logp = jnp.sum(jnp.where(cls_ids == lbl, log_sm, 0.0),
                       axis=-1, keepdims=True)                       # [tE, 1]

    # mask padded rows (E rounded up to a multiple of the tile)
    row_ids = jax.lax.broadcasted_iota(jnp.int32, (t_e, 1), 0) + tile_idx * t_e
    nll = jnp.where(row_ids < e_actual, -tgt_logp, 0.0)

    out_ref[...] += jnp.sum(nll)


def _deepwalk_fused_kernel(ids_ref, emb_ref, w1_ref, b1_ref, w2_ref, b2_ref,
                           out_ref, *, e_actual, tiles_per_core):
    c = pl.program_id(0)          # core / partition axis ("parallel")
    i = pl.program_id(1)          # tile axis within partition ("arbitrary" reduction)

    @pl.when(i == 0)
    def _():
        out_ref[...] = jnp.zeros_like(out_ref)

    t_e = ids_ref.shape[0]
    n_pad = emb_ref.shape[0]

    src_id = ids_ref[:, 0:1]      # [tE, 1] int32
    dst_id = ids_ref[:, 1:2]
    lbl = ids_ref[:, 2:3]

    # In-kernel row gather via one-hot MXU matmul against the VMEM-resident table.
    node_iota = jax.lax.broadcasted_iota(jnp.int32, (t_e, n_pad), 1)
    oh_src = jnp.where(node_iota == src_id, 1.0, 0.0).astype(jnp.bfloat16)
    oh_dst = jnp.where(node_iota == dst_id, 1.0, 0.0).astype(jnp.bfloat16)
    src_emb = jnp.dot(oh_src, emb_ref[...], preferred_element_type=jnp.float32)
    dst_emb = jnp.dot(oh_dst, emb_ref[...], preferred_element_type=jnp.float32)

    edge = src_emb * dst_emb      # f32 VPU product (v5e-friendly)

    _line_ce_tail(edge, lbl, w1_ref, b1_ref, w2_ref, b2_ref, out_ref,
                  c * tiles_per_core + i, e_actual)


def _deepwalk_stream_kernel(src_ref, dst_ref, lbl_ref, w1_ref, b1_ref, w2_ref,
                            b2_ref, out_ref, *, e_actual, tiles_per_core):
    c = pl.program_id(0)
    i = pl.program_id(1)

    @pl.when(i == 0)
    def _():
        out_ref[...] = jnp.zeros_like(out_ref)

    # bf16-streamed gathered embeddings; product kept in f32.
    edge = src_ref[...].astype(jnp.float32) * dst_ref[...].astype(jnp.float32)

    _line_ce_tail(edge, lbl_ref[...], w1_ref, b1_ref, w2_ref, b2_ref, out_ref,
                  c * tiles_per_core + i, e_actual)


def deepwalk_forward(edges, labels, word_embeddings, w1, b1, w2, b2, *,
                     tile_e=1024, num_cores=2, max_fused_nodes=1024):
    """Mirror of Deep_Walk.forward: returns the scalar cross-entropy loss."""
    E = edges.shape[0]
    N, D = word_embeddings.shape
    C = w2.shape[1]

    # Pad the feature dim to a lane-dense multiple of 128 (zero padding is exact:
    # padded embedding columns / W1 rows&cols / W2 rows are all zero).
    d_pad = _round_up(D, 128)
    emb = word_embeddings.astype(jnp.float32)
    if d_pad != D:
        emb = jnp.pad(emb, ((0, 0), (0, d_pad - D)))
        w1 = jnp.pad(w1, ((0, d_pad - D), (0, d_pad - D)))
        b1 = jnp.pad(b1, ((0, 0), (0, d_pad - D)))
        w2 = jnp.pad(w2, ((0, d_pad - D), (0, 0)))
    w1_bf = w1.astype(jnp.bfloat16)       # pre-cast once in glue, not per grid step
    w2_bf = w2.astype(jnp.bfloat16)
    b1 = b1.astype(jnp.float32)
    b2 = b2.astype(jnp.float32)

    # Edge-axis tiling, split across two cores (v7x megacore; harmless elsewhere).
    t_e = min(tile_e, _round_up(E, 8))
    e_pad = _round_up(E, num_cores * t_e)
    tiles_per_core = (e_pad // t_e) // num_cores

    # Pad the tiny id/label arrays BEFORE any gather (never pad [E, D] arrays).
    pad = e_pad - E
    edges_i = edges.astype(jnp.int32)
    labels_i = labels.astype(jnp.int32)
    if pad:
        edges_i = jnp.pad(edges_i, ((0, pad), (0, 0)))
        labels_i = jnp.pad(labels_i, ((0, pad),))

    resident = lambda shape: pl.BlockSpec(shape, lambda c, i: (0, 0))
    streamed = lambda shape: pl.BlockSpec(
        shape, lambda c, i: (c * tiles_per_core + i, 0))

    common_w_specs = [resident((d_pad, d_pad)),   # W1 (bf16)
                      resident((1, d_pad)),       # b1 (f32)
                      resident((d_pad, C)),       # W2 (bf16)
                      resident((1, C))]           # b2 (f32)
    out_spec = pl.BlockSpec((1, 8, 128), lambda c, i: (c, 0, 0))
    out_shape = jax.ShapeDtypeStruct((num_cores, 8, 128), jnp.float32)
    cparams = pltpu.CompilerParams(
        dimension_semantics=("parallel", "arbitrary"),
        vmem_limit_bytes=48 * 1024 * 1024)        # fits v7x's 64 MiB physical VMEM

    n_pad = _round_up(N, 128)
    if n_pad <= max_fused_nodes:
        # FUSED PATH: embedding table VMEM-resident, only ids + labels stream.
        emb_bf = jnp.pad(emb, ((0, n_pad - N), (0, 0))).astype(jnp.bfloat16)
        ids = jnp.concatenate([edges_i, labels_i[:, None]], axis=1)   # [e_pad, 3]
        kernel = functools.partial(_deepwalk_fused_kernel, e_actual=E,
                                   tiles_per_core=tiles_per_core)
        loss_sum = pl.pallas_call(
            kernel,
            out_shape=out_shape,
            grid_spec=pltpu.PrefetchScalarGridSpec(
                num_scalar_prefetch=0,
                grid=(num_cores, tiles_per_core),
                in_specs=[streamed((t_e, 3)),            # ids+labels (streamed)
                          resident((n_pad, d_pad))] +    # embedding table (resident)
                         common_w_specs,
                out_specs=out_spec),
            compiler_params=cparams,
        )(ids, emb_bf, w1_bf, b1, w2_bf, b2)
    else:
        # STREAMING FALLBACK (large vocab): XLA-glue gather, bf16 streams.
        src_emb = jnp.take(emb, edges_i[:, 0], axis=0).astype(jnp.bfloat16)
        dst_emb = jnp.take(emb, edges_i[:, 1], axis=0).astype(jnp.bfloat16)
        labels2d = labels_i.reshape(e_pad, 1)
        kernel = functools.partial(_deepwalk_stream_kernel, e_actual=E,
                                   tiles_per_core=tiles_per_core)
        loss_sum = pl.pallas_call(
            kernel,
            out_shape=out_shape,
            grid_spec=pltpu.PrefetchScalarGridSpec(
                num_scalar_prefetch=0,
                grid=(num_cores, tiles_per_core),
                in_specs=[streamed((t_e, d_pad)),        # src embeddings (bf16)
                          streamed((t_e, d_pad)),        # dst embeddings (bf16)
                          streamed((t_e, 1))] +          # labels
                         common_w_specs,
                out_specs=out_spec),
            compiler_params=cparams,
        )(src_emb, dst_emb, labels2d, w1_bf, b1, w2_bf, b2)

    # per-core partial sums combined in glue; CrossEntropyLoss reduction='mean'
    return jnp.sum(loss_sum[:, 0, 0]) / E


def _reference_loss(edges, labels, word_embeddings, w1, b1, w2, b2):
    src = word_embeddings[edges[:, 0]]
    dst = word_embeddings[edges[:, 1]]
    x = src * dst
    h = jnp.maximum(x @ w1 + b1, 0.0)
    logits = h @ w2 + b2
    probs = jax.nn.softmax(logits, axis=-1)
    logp = jax.nn.log_softmax(probs, axis=-1)
    nll = -jnp.take_along_axis(logp, labels[:, None], axis=1)[:, 0]
    return jnp.mean(nll)


if __name__ == "__main__":
    # small, deterministic synthetic setup (embed_size=30 = module default)
    N = 64           # number of graph nodes
    D = 30           # embed_size (padded to 128 lanes inside the wrapper)
    C = 2            # output_features
    E = 1000         # number of edges (not a multiple of the tile -> exercises masking)

    key = jax.random.PRNGKey(0)
    k_emb, k_w1, k_b1, k_w2, k_b2, k_e, k_l = jax.random.split(key, 7)

    # "word_embeddings" from DeepWalk/Word2Vec — synthetic deterministic init
    word_embeddings = jax.random.normal(k_emb, (N, D), dtype=jnp.float32) * 0.1

    # LineNetwork parameters (stored already transposed: y = x @ W + b)
    w1 = jax.random.normal(k_w1, (D, D), dtype=jnp.float32) * 0.1
    b1 = jax.random.normal(k_b1, (1, D), dtype=jnp.float32) * 0.01
    w2 = jax.random.normal(k_w2, (D, C), dtype=jnp.float32) * 0.1
    b2 = jax.random.normal(k_b2, (1, C), dtype=jnp.float32) * 0.01

    # forward inputs: edge list [E, 2] of node ids, binary labels [E]
    edges = jax.random.randint(k_e, (E, 2), 0, N, dtype=jnp.int32)
    labels = jax.random.randint(k_l, (E,), 0, C, dtype=jnp.int32)

    ref = _reference_loss(edges, labels, word_embeddings, w1, b1, w2, b2)

    # fused path (resident embedding table, in-kernel gather)
    loss_fused = jax.jit(deepwalk_forward)(
        edges, labels, word_embeddings, w1, b1, w2, b2)
    jax.block_until_ready(loss_fused)
    assert loss_fused.shape == () and jnp.isfinite(loss_fused)
    assert jnp.allclose(loss_fused, ref, rtol=5e-2, atol=5e-3), (loss_fused, ref)

    # large-vocab streaming fallback (forced), checked against the same reference
    loss_stream = jax.jit(functools.partial(deepwalk_forward, max_fused_nodes=0))(
        edges, labels, word_embeddings, w1, b1, w2, b2)
    jax.block_until_ready(loss_stream)
    assert loss_stream.shape == () and jnp.isfinite(loss_stream)
    assert jnp.allclose(loss_stream, ref, rtol=5e-2, atol=5e-3), (loss_stream, ref)

    print("KERNEL_OK")
</pallas_src>

<mosaic_0001>
module attributes {stable_mosaic.version = 11 : i64} {
  func.func @_deepwalk_fused_kernel(%arg0: i32, %arg1: i32, %arg2: memref<1000x3xi32, #tpu.memory_space<vmem>>, %arg3: memref<128x128xbf16, #tpu.memory_space<vmem>>, %arg4: memref<128x128xbf16, #tpu.memory_space<vmem>>, %arg5: memref<1x128xf32, #tpu.memory_space<vmem>>, %arg6: memref<128x2xbf16, #tpu.memory_space<vmem>>, %arg7: memref<1x2xf32, #tpu.memory_space<vmem>>, %arg8: memref<1x8x128xf32, #tpu.memory_space<vmem>>) attributes {dimension_semantics = [#tpu.dimension_semantics<parallel>, #tpu.dimension_semantics<arbitrary>], iteration_bounds = array<i64: 2, 1>, scalar_prefetch = 0 : i64, scratch_operands = 0 : i64, tpu.core_type = #tpu.core_type<tc>, window_params = [{transform_indices = @transform_0, window_bounds = array<i64: 1000, 3>}, {pipeline_mode = #tpu.pipeline_mode<synchronous>, transform_indices = @transform_1, window_bounds = array<i64: 128, 128>}, {pipeline_mode = #tpu.pipeline_mode<synchronous>, transform_indices = @transform_2, window_bounds = array<i64: 128, 128>}, {pipeline_mode = #tpu.pipeline_mode<synchronous>, transform_indices = @transform_3, window_bounds = array<i64: 1, 128>}, {pipeline_mode = #tpu.pipeline_mode<synchronous>, transform_indices = @transform_4, window_bounds = array<i64: 128, 2>}, {pipeline_mode = #tpu.pipeline_mode<synchronous>, transform_indices = @transform_5, window_bounds = array<i64: 1, 2>}, {transform_indices = @transform_6, window_bounds = array<i64: 1, 8, 128>}]} {
    %c0_i32 = arith.constant 0 : i32
    %0 = arith.cmpi eq, %arg1, %c0_i32 : i32
    %1 = arith.extui %0 : i1 to i32
    %c0_i32_0 = arith.constant 0 : i32
    %2 = arith.cmpi ne, %1, %c0_i32_0 : i32
    scf.if %2 {
      %cst_39 = arith.constant 0.000000e+00 : f32
      %81 = vector.broadcast %cst_39 : f32 to vector<1x8x128xf32>
      %c0_40 = arith.constant 0 : index
      %c0_41 = arith.constant 0 : index
      %c0_42 = arith.constant 0 : index
      %82 = vector.load %arg8[%c0_40, %c0_41, %c0_42] : memref<1x8x128xf32, #tpu.memory_space<vmem>>, vector<1x8x128xf32>
      tpu.vector_store %arg8[%c0_40, %c0_41, %c0_42], %81 {strides = array<i32>} : memref<1x8x128xf32, #tpu.memory_space<vmem>>, vector<1x8x128xf32>,
    } else {
    }
    %c0 = arith.constant 0 : index
    %c0_1 = arith.constant 0 : index
    %3 = vector.load %arg2[%c0, %c0_1] : memref<1000x3xi32, #tpu.memory_space<vmem>>, vector<1000x1xi32>
    %c0_2 = arith.constant 0 : index
    %c1 = arith.constant 1 : index
    %4 = vector.load %arg2[%c0_2, %c1] : memref<1000x3xi32, #tpu.memory_space<vmem>>, vector<1000x1xi32>
    %c0_3 = arith.constant 0 : index
    %c2 = arith.constant 2 : index
    %5 = vector.load %arg2[%c0_3, %c2] : memref<1000x3xi32, #tpu.memory_space<vmem>>, vector<1000x1xi32>
    %6 = tpu.iota {dimensions = array<i32: 1>} : vector<1000x128xi32>
    %7 = vector.broadcast %3 : vector<1000x1xi32> to vector<1000x128xi32>
    %8 = arith.cmpi eq, %6, %7 : vector<1000x128xi32>
    %cst = arith.constant 1.000000e+00 : f32
    %cst_4 = arith.constant 0.000000e+00 : f32
    %9 = vector.broadcast %cst : f32 to vector<1000x128xf32>
    %10 = vector.broadcast %cst_4 : f32 to vector<1000x128xf32>
    %11 = arith.select %8, %9, %10 : vector<1000x128xi1>, vector<1000x128xf32>
    %12 = arith.truncf %11 : vector<1000x128xf32> to vector<1000x128xbf16>
    %13 = vector.broadcast %4 : vector<1000x1xi32> to vector<1000x128xi32>
    %14 = arith.cmpi eq, %6, %13 : vector<1000x128xi32>
    %cst_5 = arith.constant 1.000000e+00 : f32
    %cst_6 = arith.constant 0.000000e+00 : f32
    %15 = vector.broadcast %cst_5 : f32 to vector<1000x128xf32>
    %16 = vector.broadcast %cst_6 : f32 to vector<1000x128xf32>
    %17 = arith.select %14, %15, %16 : vector<1000x128xi1>, vector<1000x128xf32>
    %18 = arith.truncf %17 : vector<1000x128xf32> to vector<1000x128xbf16>
    %c0_7 = arith.constant 0 : index
    %c0_8 = arith.constant 0 : index
    %19 = vector.load %arg3[%c0_7, %c0_8] : memref<128x128xbf16, #tpu.memory_space<vmem>>, vector<128x128xbf16>
    %cst_9 = arith.constant dense<0.000000e+00> : vector<1000x128xf32>
    %20 = tpu.matmul %12, %19, %cst_9 {dimension_numbers = #tpu.dot_dimension_numbers<[1], [0], [0], [1], [0, 0, 1, 1], [], []>} : vector<1000x128xbf16>, vector<128x128xbf16>, vector<1000x128xf32> -> vector<1000x128xf32>
    %c0_10 = arith.constant 0 : index
    %c0_11 = arith.constant 0 : index
    %21 = vector.load %arg3[%c0_10, %c0_11] : memref<128x128xbf16, #tpu.memory_space<vmem>>, vector<128x128xbf16>
    %cst_12 = arith.constant dense<0.000000e+00> : vector<1000x128xf32>
    %22 = tpu.matmul %18, %21, %cst_12 {dimension_numbers = #tpu.dot_dimension_numbers<[1], [0], [0], [1], [0, 0, 1, 1], [], []>} : vector<1000x128xbf16>, vector<128x128xbf16>, vector<1000x128xf32> -> vector<1000x128xf32>
    %23 = arith.mulf %20, %22 : vector<1000x128xf32>
    %c1_i32 = arith.constant 1 : i32
    %24 = arith.muli %arg0, %c1_i32 : i32
    %25 = arith.addi %24, %arg1 : i32
    %26 = arith.truncf %23 : vector<1000x128xf32> to vector<1000x128xbf16>
    %c0_13 = arith.constant 0 : index
    %c0_14 = arith.constant 0 : index
    %27 = vector.load %arg4[%c0_13, %c0_14] : memref<128x128xbf16, #tpu.memory_space<vmem>>, vector<128x128xbf16>
    %cst_15 = arith.constant dense<0.000000e+00> : vector<1000x128xf32>
    %28 = tpu.matmul %26, %27, %cst_15 {dimension_numbers = #tpu.dot_dimension_numbers<[1], [0], [0], [1], [0, 0, 1, 1], [], []>} : vector<1000x128xbf16>, vector<128x128xbf16>, vector<1000x128xf32> -> vector<1000x128xf32>
    %c0_16 = arith.constant 0 : index
    %c0_17 = arith.constant 0 : index
    %29 = vector.load %arg5[%c0_16, %c0_17] : memref<1x128xf32, #tpu.memory_space<vmem>>, vector<1x128xf32>
    %30 = vector.broadcast %29 : vector<1x128xf32> to vector<1000x128xf32>
    %31 = arith.addf %28, %30 : vector<1000x128xf32>
    %cst_18 = arith.constant 0.000000e+00 : f32
    %32 = vector.broadcast %cst_18 : f32 to vector<1000x128xf32>
    %33 = arith.maximumf %31, %32 : vector<1000x128xf32>
    %34 = arith.truncf %33 : vector<1000x128xf32> to vector<1000x128xbf16>
    %c0_19 = arith.constant 0 : index
    %c0_20 = arith.constant 0 : index
    %35 = vector.load %arg6[%c0_19, %c0_20] : memref<128x2xbf16, #tpu.memory_space<vmem>>, vector<128x2xbf16>
    %cst_21 = arith.constant dense<0.000000e+00> : vector<1000x2xf32>
    %36 = tpu.matmul %34, %35, %cst_21 {dimension_numbers = #tpu.dot_dimension_numbers<[1], [0], [0], [1], [0, 0, 1, 1], [], []>} : vector<1000x128xbf16>, vector<128x2xbf16>, vector<1000x2xf32> -> vector<1000x2xf32>
    %c0_22 = arith.constant 0 : index
    %c0_23 = arith.constant 0 : index
    %37 = vector.load %arg7[%c0_22, %c0_23] : memref<1x2xf32, #tpu.memory_space<vmem>>, vector<1x2xf32>
    %38 = vector.broadcast %37 : vector<1x2xf32> to vector<1000x2xf32>
    %39 = arith.addf %36, %38 : vector<1000x2xf32>
    %cst_24 = arith.constant dense<0xFF800000> : vector<1000xf32>
    %40 = vector.multi_reduction <maximumf>, %39, %cst_24 [1] : vector<1000x2xf32> to vector<1000xf32>
    %41 = vector.shape_cast %40 : vector<1000xf32> to vector<1000x1xf32>
    %42 = vector.broadcast %41 : vector<1000x1xf32> to vector<1000x2xf32>
    %43 = arith.subf %39, %42 : vector<1000x2xf32>
    %44 = math.exp %43 : vector<1000x2xf32>
    %cst_25 = arith.constant dense<0.000000e+00> : vector<1000xf32>
    %45 = vector.multi_reduction <add>, %44, %cst_25 [1] : vector<1000x2xf32> to vector<1000xf32>
    %46 = vector.shape_cast %45 : vector<1000xf32> to vector<1000x1xf32>
    %47 = tpu.reciprocal %46 {approx = true} : vector<1000x1xf32> -> vector<1000x1xf32>
    %48 = vector.broadcast %47 : vector<1000x1xf32> to vector<1000x2xf32>
    %49 = arith.mulf %44, %48 : vector<1000x2xf32>
    %50 = math.exp %49 : vector<1000x2xf32>
    %cst_26 = arith.constant dense<0.000000e+00> : vector<1000xf32>
    %51 = vector.multi_reduction <add>, %50, %cst_26 [1] : vector<1000x2xf32> to vector<1000xf32>
    %52 = vector.shape_cast %51 : vector<1000xf32> to vector<1000x1xf32>
    %53 = math.log %52 : vector<1000x1xf32>
    %54 = vector.broadcast %53 : vector<1000x1xf32> to vector<1000x2xf32>
    %55 = arith.subf %49, %54 : vector<1000x2xf32>
    %56 = tpu.iota {dimensions = array<i32: 1>} : vector<1000x2xi32>
    %57 = vector.broadcast %5 : vector<1000x1xi32> to vector<1000x2xi32>
    %58 = arith.cmpi eq, %56, %57 : vector<1000x2xi32>
    %cst_27 = arith.constant 0.000000e+00 : f32
    %59 = vector.broadcast %cst_27 : f32 to vector<1000x2xf32>
    %60 = arith.select %58, %55, %59 : vector<1000x2xi1>, vector<1000x2xf32>
    %cst_28 = arith.constant dense<0.000000e+00> : vector<1000xf32>
    %61 = vector.multi_reduction <add>, %60, %cst_28 [1] : vector<1000x2xf32> to vector<1000xf32>
    %62 = vector.shape_cast %61 : vector<1000xf32> to vector<1000x1xf32>
    %63 = tpu.iota {dimensions = array<i32: 0>} : vector<1000x1xi32>
    %c1000_i32 = arith.constant 1000 : i32
    %64 = arith.muli %25, %c1000_i32 : i32
    %65 = vector.broadcast %64 : i32 to vector<1000x1xi32>
    %66 = arith.addi %63, %65 : vector<1000x1xi32>
    %c1000_i32_29 = arith.constant 1000 : i32
    %67 = vector.broadcast %c1000_i32_29 : i32 to vector<1000x1xi32>
    %68 = arith.cmpi slt, %66, %67 : vector<1000x1xi32>
    %cst_30 = arith.constant 0.000000e+00 : f32
    %69 = vector.broadcast %cst_30 : f32 to vector<1000x1xf32>
    %70 = arith.subf %69, %62 : vector<1000x1xf32>
    %cst_31 = arith.constant 0.000000e+00 : f32
    %71 = vector.broadcast %cst_31 : f32 to vector<1000x1xf32>
    %72 = arith.select %68, %70, %71 : vector<1000x1xi1>, vector<1000x1xf32>
    %c0_32 = arith.constant 0 : index
    %c0_33 = arith.constant 0 : index
    %c0_34 = arith.constant 0 : index
    %73 = vector.load %arg8[%c0_32, %c0_33, %c0_34] : memref<1x8x128xf32, #tpu.memory_space<vmem>>, vector<1x8x128xf32>
    %74 = vector.shape_cast %72 : vector<1000x1xf32> to vector<1x1000x1xf32>
    %cst_35 = arith.constant dense<0.000000e+00> : vector<1xf32>
    %75 = vector.multi_reduction <add>, %74, %cst_35 [1, 2] : vector<1x1000x1xf32> to vector<1xf32>
    %76 = vector.shape_cast %75 : vector<1xf32> to vector<1x1x1xf32>
    %77 = vector.extract %76[0, 0, 0] : f32 from vector<1x1x1xf32>
    %78 = vector.broadcast %77 : f32 to vector<1x8x128xf32>
    %79 = arith.addf %73, %78 : vector<1x8x128xf32>
    %c0_36 = arith.constant 0 : index
    %c0_37 = arith.constant 0 : index
    %c0_38 = arith.constant 0 : index
    %80 = vector.load %arg8[%c0_36, %c0_37, %c0_38] : memref<1x8x128xf32, #tpu.memory_space<vmem>>, vector<1x8x128xf32>
    tpu.vector_store %arg8[%c0_36, %c0_37, %c0_38], %79 {strides = array<i32>} : memref<1x8x128xf32, #tpu.memory_space<vmem>>, vector<1x8x128xf32>,
    return
  }
  func.func @transform_0(%arg0: i32, %arg1: i32) -> (i32, i32) {
    %c1_i32 = arith.constant 1 : i32
    %0 = arith.muli %arg0, %c1_i32 : i32
    %1 = arith.addi %0, %arg1 : i32
    %c0_i32 = arith.constant 0 : i32
    %c0_i32_0 = arith.constant 0 : i32
    return %1, %c0_i32 : i32, i32
  }
  func.func @transform_1(%arg0: i32, %arg1: i32) -> (i32, i32) {
    %c0_i32 = arith.constant 0 : i32
    %c0_i32_0 = arith.constant 0 : i32
    %c0_i32_1 = arith.constant 0 : i32
    return %c0_i32, %c0_i32_0 : i32, i32
  }
  func.func @transform_2(%arg0: i32, %arg1: i32) -> (i32, i32) {
    %c0_i32 = arith.constant 0 : i32
    %c0_i32_0 = arith.constant 0 : i32
    %c0_i32_1 = arith.constant 0 : i32
    return %c0_i32, %c0_i32_0 : i32, i32
  }
  func.func @transform_3(%arg0: i32, %arg1: i32) -> (i32, i32) {
    %c0_i32 = arith.constant 0 : i32
    %c0_i32_0 = arith.constant 0 : i32
    %c0_i32_1 = arith.constant 0 : i32
    return %c0_i32, %c0_i32_0 : i32, i32
  }
  func.func @transform_4(%arg0: i32, %arg1: i32) -> (i32, i32) {
    %c0_i32 = arith.constant 0 : i32
    %c0_i32_0 = arith.constant 0 : i32
    %c0_i32_1 = arith.constant 0 : i32
    return %c0_i32, %c0_i32_0 : i32, i32
  }
  func.func @transform_5(%arg0: i32, %arg1: i32) -> (i32, i32) {
    %c0_i32 = arith.constant 0 : i32
    %c0_i32_0 = arith.constant 0 : i32
    %c0_i32_1 = arith.constant 0 : i32
    return %c0_i32, %c0_i32_0 : i32, i32
  }
  func.func @transform_6(%arg0: i32, %arg1: i32) -> (i32, i32, i32) {
    %c0_i32 = arith.constant 0 : i32
    %c0_i32_0 = arith.constant 0 : i32
    %c0_i32_1 = arith.constant 0 : i32
    return %arg0, %c0_i32, %c0_i32_0 : i32, i32, i32
  }
}

</mosaic_0001>

<llo_original>
// kernel: deepwalk_forward.1
$region0: #{deepwalk_forward.1}
  #allocation0 [shape = 'u32[]', space=smem, size = 0x4, offset = 0x4, fixed_abs, tag = 'smem constant byte address 0x4 - core index']
  #allocation1 [shape = 'u32[144,128]{1,0:T(1,128)}', space=vmem, size = 0x12000, scoped, tag = 'internal scratch']
  %s0 = inlined_call_operand.vmem [shape: s32[2000,3], index: 0, kind: input, shape index: {}]
  %s1 = inlined_call_operand.vmem [shape: bf16[128,128], index: 1, kind: input, shape index: {}]
  %s2 = inlined_call_operand.vmem [shape: bf16[128,128], index: 2, kind: input, shape index: {}]
  %s3 = inlined_call_operand.vmem [shape: f32[1,128], index: 3, kind: input, shape index: {}]
  %s4 = inlined_call_operand.vmem [shape: bf16[128,2], index: 4, kind: input, shape index: {}]
  %s5 = inlined_call_operand.vmem [shape: f32[1,2], index: 5, kind: input, shape index: {}]
  %s6 = inlined_call_operand.vmem [shape: f32[2,8,128], index: 6, kind: output, shape index: {}]
  %s7 = sld [smem:[#allocation0]]
  $region61: #{deepwalk_forward.1} parent=0
    _
  %s9 = ssub.s32 1, %s7
  %s10 = scalar_select 0, %s9, %s7
  loop: start=0, step=1, limit=4
  $region2: #{deepwalk_forward.1} parent=0 // loop_pre_header
    _
  $region3: #{deepwalk_forward.1} parent=0 // loop_header
    %s12 = sphi 0, %s16
    %p13 = scmp.ge.s32.totalorder %s12, 4
    %s19 = sphi 0, %s31
    %s20 = sphi 0, %s27
    %s21 = sphi 0, %s19
    %s22 = sphi 0, %s20
    %s23 = sphi 0, %s21
    %s24 = sphi 0, %s22
    %s36 = sphi 0, %s38
    %s39 = sphi 0, %s36
    %s40 = sphi 0, %s39
    %s56 = sphi 0, %s40
    %s60 = sphi 0, %s60
    %s62 = sphi 0, %s60
    %s63 = sphi 0, %s62
    %s77 = sphi 0, %s63
    %s81 = sphi 0, %s81
    %s83 = sphi 0, %s81
    %s84 = sphi 0, %s83
    %s98 = sphi 0, %s84
    %s102 = sphi 0, %s102
    %s104 = sphi 0, %s102
    %s105 = sphi 0, %s104
    %s119 = sphi 0, %s105
    %s123 = sphi 0, %s123
    %s125 = sphi 0, %s123
    %s126 = sphi 0, %s125
    %s140 = sphi 0, %s126
    %s144 = sphi 0, %s144
    %s146 = sphi 0, %s144
    %s147 = sphi 0, %s146
    %s161 = sphi 0, %s147
    %s167 = sphi 0, %s169
    %s170 = sphi 0, %s167
    %s171 = sphi 0, %s170
    %s187 = sphi 0, %s171
  $region4: #{deepwalk_forward.1} parent=0 // loop_header_branch
    %15 = sbr.rel (%p13) target = $region8
  $region5: #{deepwalk_forward.1} parent=0 // loop_body
    %s17 = ssub.s32 %s12, 1
    %s18 = ssub.s32 %s12, 2
    %s25 = sadd.s32 1, %s20
    %p26 = scmp.ge.s32.totalorder %s25, 1
    %s27 = scalar_select %p26, 0, %s25
    %s28 = sadd.s32 1, %s19
    %s29 = scalar_select %p26, %s28, %s19
    %p30 = scmp.ge.s32.totalorder %s29, 2
    %s31 = scalar_select %p30, 0, %s29
    %s32 = sadd.s32 %s19, %s20
    %s33 = sadd.s32 %s31, %s27
    %s34 = ssub.s32 %s32, %s33
    %p35 = scmp.eq.s32.totalorder %s34, 0
    %s37 = sadd.s32 %s36, 1
    %s38 = scalar_select %p35, %s36, %s37
    %p41 = pneg %p35
    %p42 = scmp.eq.s32.totalorder %s12, 1
    %p43 = por %p41, %p42
    %p44 = scmp.ne.s32.totalorder %s36, %s39
    %p45 = scmp.eq.s32.totalorder %s12, 0
    %p46 = por %p44, %p45
    %p47 = scmp.ne.s32.totalorder %s36, %s39
    %p48 = scmp.eq.s32.totalorder %s17, 1
    %p49 = por %p47, %p48
    %p50 = scmp.ne.s32.totalorder %s39, %s40
    %p51 = scmp.eq.s32.totalorder %s17, 0
    %p52 = por %p50, %p51
    %p53 = scmp.ne.s32.totalorder %s39, %s40
    %p54 = scmp.eq.s32.totalorder %s18, 1
    %p55 = por %p53, %p54
    %p57 = scmp.ne.s32.totalorder %s40, %s56
    %p58 = scmp.eq.s32.totalorder %s18, 0
    %p59 = por %p57, %p58
    %s61 = sadd.s32 %s60, 1
    %p64 = scmp.eq.s32.totalorder %s12, 1
    %p65 = scmp.ne.s32.totalorder %s60, %s62
    %p66 = scmp.eq.s32.totalorder %s12, 0
    %p67 = por %p65, %p66
    %p68 = scmp.ne.s32.totalorder %s60, %s62
    %p69 = scmp.eq.s32.totalorder %s17, 1
    %p70 = por %p68, %p69
    %p71 = scmp.ne.s32.totalorder %s62, %s63
    %p72 = scmp.eq.s32.totalorder %s17, 0
    %p73 = por %p71, %p72
    %p74 = scmp.ne.s32.totalorder %s62, %s63
    %p75 = scmp.eq.s32.totalorder %s18, 1
    %p76 = por %p74, %p75
    %p78 = scmp.ne.s32.totalorder %s63, %s77
    %p79 = scmp.eq.s32.totalorder %s18, 0
    %p80 = por %p78, %p79
    %s82 = sadd.s32 %s81, 1
    %p85 = scmp.eq.s32.totalorder %s12, 1
    %p86 = scmp.ne.s32.totalorder %s81, %s83
    %p87 = scmp.eq.s32.totalorder %s12, 0
    %p88 = por %p86, %p87
    %p89 = scmp.ne.s32.totalorder %s81, %s83
    %p90 = scmp.eq.s32.totalorder %s17, 1
    %p91 = por %p89, %p90
    %p92 = scmp.ne.s32.totalorder %s83, %s84
    %p93 = scmp.eq.s32.totalorder %s17, 0
    %p94 = por %p92, %p93
    %p95 = scmp.ne.s32.totalorder %s83, %s84
    %p96 = scmp.eq.s32.totalorder %s18, 1
    %p97 = por %p95, %p96
    %p99 = scmp.ne.s32.totalorder %s84, %s98
    %p100 = scmp.eq.s32.totalorder %s18, 0
    %p101 = por %p99, %p100
    %s103 = sadd.s32 %s102, 1
    %p106 = scmp.eq.s32.totalorder %s12, 1
    %p107 = scmp.ne.s32.totalorder %s102, %s104
    %p108 = scmp.eq.s32.totalorder %s12, 0
    %p109 = por %p107, %p108
    %p110 = scmp.ne.s32.totalorder %s102, %s104
    %p111 = scmp.eq.s32.totalorder %s17, 1
    %p112 = por %p110, %p111
    %p113 = scmp.ne.s32.totalorder %s104, %s105
    %p114 = scmp.eq.s32.totalorder %s17, 0
    %p115 = por %p113, %p114
    %p116 = scmp.ne.s32.totalorder %s104, %s105
    %p117 = scmp.eq.s32.totalorder %s18, 1
    %p118 = por %p116, %p117
    %p120 = scmp.ne.s32.totalorder %s105, %s119
    %p121 = scmp.eq.s32.totalorder %s18, 0
    %p122 = por %p120, %p121
    %s124 = sadd.s32 %s123, 1
    %p127 = scmp.eq.s32.totalorder %s12, 1
    %p128 = scmp.ne.s32.totalorder %s123, %s125
    %p129 = scmp.eq.s32.totalorder %s12, 0
    %p130 = por %p128, %p129
    %p131 = scmp.ne.s32.totalorder %s123, %s125
    %p132 = scmp.eq.s32.totalorder %s17, 1
    %p133 = por %p131, %p132
    %p134 = scmp.ne.s32.totalorder %s125, %s126
    %p135 = scmp.eq.s32.totalorder %s17, 0
    %p136 = por %p134, %p135
    %p137 = scmp.ne.s32.totalorder %s125, %s126
    %p138 = scmp.eq.s32.totalorder %s18, 1
    %p139 = por %p137, %p138
    %p141 = scmp.ne.s32.totalorder %s126, %s140
    %p142 = scmp.eq.s32.totalorder %s18, 0
    %p143 = por %p141, %p142
    %s145 = sadd.s32 %s144, 1
    %p148 = scmp.eq.s32.totalorder %s12, 1
    %p149 = scmp.ne.s32.totalorder %s144, %s146
    %p150 = scmp.eq.s32.totalorder %s12, 0
    %p151 = por %p149, %p150
    %p152 = scmp.ne.s32.totalorder %s144, %s146
    %p153 = scmp.eq.s32.totalorder %s17, 1
    %p154 = por %p152, %p153
    %p155 = scmp.ne.s32.totalorder %s146, %s147
    %p156 = scmp.eq.s32.totalorder %s17, 0
    %p157 = por %p155, %p156
    %p158 = scmp.ne.s32.totalorder %s146, %s147
    %p159 = scmp.eq.s32.totalorder %s18, 1
    %p160 = por %p158, %p159
    %p162 = scmp.ne.s32.totalorder %s147, %s161
    %p163 = scmp.eq.s32.totalorder %s18, 0
    %p164 = por %p162, %p163
    %s165 = ssub.s32 %s19, %s31
    %p166 = scmp.eq.s32.totalorder %s165, 0
    %s168 = sadd.s32 %s167, 1
    %s169 = scalar_select %p166, %s167, %s168
    %p172 = pneg %p166
    %p173 = scmp.eq.s32.totalorder %s12, 1
    %p174 = por %p172, %p173
    %p175 = scmp.ne.s32.totalorder %s167, %s170
    %p176 = scmp.eq.s32.totalorder %s12, 0
    %p177 = por %p175, %p176
    %p178 = scmp.ne.s32.totalorder %s167, %s170
    %p179 = scmp.eq.s32.totalorder %s17, 1
    %p180 = por %p178, %p179
    %p181 = scmp.ne.s32.totalorder %s170, %s171
    %p182 = scmp.eq.s32.totalorder %s17, 0
    %p183 = por %p181, %p182
    %p184 = scmp.ne.s32.totalorder %s170, %s171
    %p185 = scmp.eq.s32.totalorder %s18, 1
    %p186 = por %p184, %p185
    %p188 = scmp.ne.s32.totalorder %s171, %s187
    %p189 = scmp.eq.s32.totalorder %s18, 0
    %p190 = por %p188, %p189
    %p191 = scmp.le.s32.totalorder 1, %s12
    %p192 = scmp.lt.s32.totalorder %s12, 3
    %p193 = pnand %p191, %p192
    %p194 = pneg %p193
    // Predicated region
    $region9: #{deepwalk_forward.1} parent=5 // pred_check
      _
    $region10: #{deepwalk_forward.1} parent=5 // pred_check_branch
      %196 = sbr.rel (%p193) target = $region12
    $region11: #{deepwalk_forward.1} parent=5 // pred_region
      %s197 = ssub.s32 %s12, 1
      // Predicated region
      $region13: #{deepwalk_forward.1} parent=11 // pred_check
        %p198 = pneg %p73
      $region14: #{deepwalk_forward.1} parent=11 // pred_check_branch
        %200 = sbr.rel (%p198) target = $region16
      $region15: #{deepwalk_forward.1} parent=11 // pred_region
        _
      $region16: #{deepwalk_forward.1} parent=11 // pred_fallthru
        _
      // Predicated region
      $region17: #{deepwalk_forward.1} parent=11 // pred_check
        %p201 = pneg %p94
      $region18: #{deepwalk_forward.1} parent=11 // pred_check_branch
        %203 = sbr.rel (%p201) target = $region20
      $region19: #{deepwalk_forward.1} parent=11 // pred_region
        _
      $region20: #{deepwalk_forward.1} parent=11 // pred_fallthru
        _
      // Predicated region
      $region21: #{deepwalk_forward.1} parent=11 // pred_check
        %p204 = pneg %p115
      $region22: #{deepwalk_forward.1} parent=11 // pred_check_branch
        %206 = sbr.rel (%p204) target = $region24
      $region23: #{deepwalk_forward.1} parent=11 // pred_region
        _
      $region24: #{deepwalk_forward.1} parent=11 // pred_fallthru
        _
      // Predicated region
      $region25: #{deepwalk_forward.1} parent=11 // pred_check
        %p207 = pneg %p136
      $region26: #{deepwalk_forward.1} parent=11 // pred_check_branch
        %209 = sbr.rel (%p207) target = $region28
      $region27: #{deepwalk_forward.1} parent=11 // pred_region
        _
      $region28: #{deepwalk_forward.1} parent=11 // pred_fallthru
        _
      // Predicated region
      $region29: #{deepwalk_forward.1} parent=11 // pred_check
        %p210 = pneg %p157
      $region30: #{deepwalk_forward.1} parent=11 // pred_check_branch
        %212 = sbr.rel (%p210) target = $region32
      $region31: #{deepwalk_forward.1} parent=11 // pred_region
        _
      $region32: #{deepwalk_forward.1} parent=11 // pred_fallthru
        _
    $region12: #{deepwalk_forward.1} parent=5 // pred_fallthru
      _
    %p213 = scmp.lt.s32.totalorder %s12, 2
    // Predicated region
    $region33: #{deepwalk_forward.1} parent=5 // pred_check
      %p214 = pneg %p213
    $region34: #{deepwalk_forward.1} parent=5 // pred_check_branch
      %216 = sbr.rel (%p214) target = $region36
    $region35: #{deepwalk_forward.1} parent=5 // pred_region
      // Predicated region
      $region37: #{deepwalk_forward.1} parent=35 // pred_check
        %p217 = pneg %p46
      $region38: #{deepwalk_forward.1} parent=35 // pred_check_branch
        %219 = sbr.rel (%p217) target = $region40
      $region39: #{deepwalk_forward.1} parent=35 // pred_region
        %s220 = sadd.s32 %s19, %s20
        %s221 = smul.u32 125, %s220
        %p222 = scmp.lt.s32.totalorder %s221, 249
        %s223 = scalar_select %p222, %s221, 249
        %s224 = smul.addr %s223, 8
        %s225 = scalar_lea.vmem %s0, %s224
        %s226 = sadd.s32 %s19, %s20
        %s227 = smul.u32 125, %s226
      $region40: #{deepwalk_forward.1} parent=35 // pred_fallthru
        _
    $region36: #{deepwalk_forward.1} parent=5 // pred_fallthru
      _
    %p228 = scmp.le.s32.totalorder 1, %s12
    %p229 = scmp.lt.s32.totalorder %s12, 3
    %p230 = pnand %p228, %p229
    %p231 = pneg %p230
    // Predicated region
    $region41: #{deepwalk_forward.1} parent=5 // pred_check
      _
    $region42: #{deepwalk_forward.1} parent=5 // pred_check_branch
      %233 = sbr.rel (%p230) target = $region44
    $region43: #{deepwalk_forward.1} parent=5 // pred_region
      %s234 = ssub.s32 %s12, 1
      %s235 = sadd.s32 %s21, %s22
      %s236 = smul.u32 125, %s235
      %p237 = scmp.lt.s32.totalorder %s236, 249
      %s238 = scalar_select %p237, %s236, 249
      %s239 = smul.addr %s238, 8
      %s240 = scalar_lea.vmem %s0, %s239
      %p241 = pneg %p52
      %p242 = pneg %p49
      %p243 = pneg %p73
      %p244 = pneg %p70
      %p245 = pneg %p94
      %p246 = pneg %p91
      %p247 = pneg %p115
      %p248 = pneg %p112
      %p249 = pneg %p136
      %p250 = pneg %p133
      %p251 = pneg %p157
      %p252 = pneg %p154
      %p253 = pneg %p183
      %p254 = pneg %p180
      %p255 = scmp.lt.s32.totalorder %s21, 1
      %s256 = scalar_select %p255, %s21, 1
      %s257 = smul.addr %s256, 8
      %s258 = scalar_lea.vmem %s6, %s257
      %s259 = sadd.s32 %s21, %s22
      %s260 = smul.u32 125, %s259
      %p261 = scmp.lt.s32.totalorder %s260, 249
      %s262 = scalar_select %p261, %s260, 249
      %s263 = smul.addr %s262, 8
      %s264 = scalar_lea.vmem %s0, %s263
      %s265 = sadd.s32 %s21, %s22
      %s266 = smul.u32 125, %s265
      %p267 = scmp.lt.s32.totalorder %s21, 1
      %s268 = scalar_select %p267, %s21, 1
      %s269 = smul.addr %s268, 8
      %s270 = scalar_lea.vmem %s6, %s269
      %p272 = scmp.eq.s32.totalorder %s22, 0
      // Predicated region
      $region45: #{deepwalk_forward.1} parent=43 // pred_check
        %p273 = pneg %p272
      $region46: #{deepwalk_forward.1} parent=43 // pred_check_branch
        %275 = sbr.rel (%p273) target = $region48
      $region47: #{deepwalk_forward.1} parent=43 // pred_region
        %276 = vst [vmem:[%s270] sm:$0xff] 0.0
      $region48: #{deepwalk_forward.1} parent=43 // pred_fallthru
        _
      %v277 = vld [vmem:[%s264] sm:$0xff]
      %v278 = vld [vmem:[%s264 + $0x8] sm:$0xff]
      %v279 = vld [vmem:[%s264 + $0x10] sm:$0xff]
      %v280 = vld [vmem:[%s264 + $0x18] sm:$0xff]
      %v281 = vld [vmem:[%s264 + $0x20] sm:$0xff]
      %v282 = vld [vmem:[%s264 + $0x28] sm:$0xff]
      %v283 = vld [vmem:[%s264 + $0x30] sm:$0xff]
      %v284 = vld [vmem:[%s264 + $0x38] sm:$0xff]
      %v285 = vld [vmem:[%s264 + $0x40] sm:$0xff]
      %v286 = vld [vmem:[%s264 + $0x48] sm:$0xff]
      %v287 = vld [vmem:[%s264 + $0x50] sm:$0xff]
      %v288 = vld [vmem:[%s264 + $0x58] sm:$0xff]
      %v289 = vld [vmem:[%s264 + $0x60] sm:$0xff]
      %v290 = vld [vmem:[%s264 + $0x68] sm:$0xff]
      %v291 = vld [vmem:[%s264 + $0x70] sm:$0xff]
      %v292 = vld [vmem:[%s264 + $0x78] sm:$0xff]
      %v293 = vld [vmem:[%s264 + $0x80] sm:$0xff]
      %v294 = vld [vmem:[%s264 + $0x88] sm:$0xff]
      %v295 = vld [vmem:[%s264 + $0x90] sm:$0xff]
      %v296 = vld [vmem:[%s264 + $0x98] sm:$0xff]
      %v297 = vld [vmem:[%s264 + $0xa0] sm:$0xff]
      %v298 = vld [vmem:[%s264 + $0xa8] sm:$0xff]
      %v299 = vld [vmem:[%s264 + $0xb0] sm:$0xff]
      %v300 = vld [vmem:[%s264 + $0xb8] sm:$0xff]
      %v301 = vld [vmem:[%s264 + $0xc0] sm:$0xff]
      %v302 = vld [vmem:[%s264 + $0xc8] sm:$0xff]
      %v303 = vld [vmem:[%s264 + $0xd0] sm:$0xff]
      %v304 = vld [vmem:[%s264 + $0xd8] sm:$0xff]
      %v305 = vld [vmem:[%s264 + $0xe0] sm:$0xff]
      %v306 = vld [vmem:[%s264 + $0xe8] sm:$0xff]
      %v307 = vld [vmem:[%s264 + $0xf0] sm:$0xff]
      %v308 = vld [vmem:[%s264 + $0xf8] sm:$0xff]
      %v309 = vld [vmem:[%s264 + $0x100] sm:$0xff]
      %v310 = vld [vmem:[%s264 + $0x108] sm:$0xff]
      %v311 = vld [vmem:[%s264 + $0x110] sm:$0xff]
      %v312 = vld [vmem:[%s264 + $0x118] sm:$0xff]
      %v313 = vld [vmem:[%s264 + $0x120] sm:$0xff]
      %v314 = vld [vmem:[%s264 + $0x128] sm:$0xff]
      %v315 = vld [vmem:[%s264 + $0x130] sm:$0xff]
      %v316 = vld [vmem:[%s264 + $0x138] sm:$0xff]
      %v317 = vld [vmem:[%s264 + $0x140] sm:$0xff]
      %v318 = vld [vmem:[%s264 + $0x148] sm:$0xff]
      %v319 = vld [vmem:[%s264 + $0x150] sm:$0xff]
      %v320 = vld [vmem:[%s264 + $0x158] sm:$0xff]
      %v321 = vld [vmem:[%s264 + $0x160] sm:$0xff]
      %v322 = vld [vmem:[%s264 + $0x168] sm:$0xff]
      %v323 = vld [vmem:[%s264 + $0x170] sm:$0xff]
      %v324 = vld [vmem:[%s264 + $0x178] sm:$0xff]
      %v325 = vld [vmem:[%s264 + $0x180] sm:$0xff]
      %v326 = vld [vmem:[%s264 + $0x188] sm:$0xff]
      %v327 = vld [vmem:[%s264 + $0x190] sm:$0xff]
      %v328 = vld [vmem:[%s264 + $0x198] sm:$0xff]
      %v329 = vld [vmem:[%s264 + $0x1a0] sm:$0xff]
      %v330 = vld [vmem:[%s264 + $0x1a8] sm:$0xff]
      %v331 = vld [vmem:[%s264 + $0x1b0] sm:$0xff]
      %v332 = vld [vmem:[%s264 + $0x1b8] sm:$0xff]
      %v333 = vld [vmem:[%s264 + $0x1c0] sm:$0xff]
      %v334 = vld [vmem:[%s264 + $0x1c8] sm:$0xff]
      %v335 = vld [vmem:[%s264 + $0x1d0] sm:$0xff]
      %v336 = vld [vmem:[%s264 + $0x1d8] sm:$0xff]
      %v337 = vld [vmem:[%s264 + $0x1e0] sm:$0xff]
      %v338 = vld [vmem:[%s264 + $0x1e8] sm:$0xff]
      %v339 = vld [vmem:[%s264 + $0x1f0] sm:$0xff]
      %v340 = vld [vmem:[%s264 + $0x1f8] sm:$0xff]
      %v341 = vld [vmem:[%s264 + $0x200] sm:$0xff]
      %v342 = vld [vmem:[%s264 + $0x208] sm:$0xff]
      %v343 = vld [vmem:[%s264 + $0x210] sm:$0xff]
      %v344 = vld [vmem:[%s264 + $0x218] sm:$0xff]
      %v345 = vld [vmem:[%s264 + $0x220] sm:$0xff]
      %v346 = vld [vmem:[%s264 + $0x228] sm:$0xff]
      %v347 = vld [vmem:[%s264 + $0x230] sm:$0xff]
      %v348 = vld [vmem:[%s264 + $0x238] sm:$0xff]
      %v349 = vld [vmem:[%s264 + $0x240] sm:$0xff]
      %v350 = vld [vmem:[%s264 + $0x248] sm:$0xff]
      %v351 = vld [vmem:[%s264 + $0x250] sm:$0xff]
      %v352 = vld [vmem:[%s264 + $0x258] sm:$0xff]
      %v353 = vld [vmem:[%s264 + $0x260] sm:$0xff]
      %v354 = vld [vmem:[%s264 + $0x268] sm:$0xff]
      %v355 = vld [vmem:[%s264 + $0x270] sm:$0xff]
      %v356 = vld [vmem:[%s264 + $0x278] sm:$0xff]
      %v357 = vld [vmem:[%s264 + $0x280] sm:$0xff]
      %v358 = vld [vmem:[%s264 + $0x288] sm:$0xff]
      %v359 = vld [vmem:[%s264 + $0x290] sm:$0xff]
      %v360 = vld [vmem:[%s264 + $0x298] sm:$0xff]
      %v361 = vld [vmem:[%s264 + $0x2a0] sm:$0xff]
      %v362 = vld [vmem:[%s264 + $0x2a8] sm:$0xff]
      %v363 = vld [vmem:[%s264 + $0x2b0] sm:$0xff]
      %v364 = vld [vmem:[%s264 + $0x2b8] sm:$0xff]
      %v365 = vld [vmem:[%s264 + $0x2c0] sm:$0xff]
      %v366 = vld [vmem:[%s264 + $0x2c8] sm:$0xff]
      %v367 = vld [vmem:[%s264 + $0x2d0] sm:$0xff]
      %v368 = vld [vmem:[%s264 + $0x2d8] sm:$0xff]
      %v369 = vld [vmem:[%s264 + $0x2e0] sm:$0xff]
      %v370 = vld [vmem:[%s264 + $0x2e8] sm:$0xff]
      %v371 = vld [vmem:[%s264 + $0x2f0] sm:$0xff]
      %v372 = vld [vmem:[%s264 + $0x2f8] sm:$0xff]
      %v373 = vld [vmem:[%s264 + $0x300] sm:$0xff]
      %v374 = vld [vmem:[%s264 + $0x308] sm:$0xff]
      %v375 = vld [vmem:[%s264 + $0x310] sm:$0xff]
      %v376 = vld [vmem:[%s264 + $0x318] sm:$0xff]
      %v377 = vld [vmem:[%s264 + $0x320] sm:$0xff]
      %v378 = vld [vmem:[%s264 + $0x328] sm:$0xff]
      %v379 = vld [vmem:[%s264 + $0x330] sm:$0xff]
      %v380 = vld [vmem:[%s264 + $0x338] sm:$0xff]
      %v381 = vld [vmem:[%s264 + $0x340] sm:$0xff]
      %v382 = vld [vmem:[%s264 + $0x348] sm:$0xff]
      %v383 = vld [vmem:[%s264 + $0x350] sm:$0xff]
      %v384 = vld [vmem:[%s264 + $0x358] sm:$0xff]
      %v385 = vld [vmem:[%s264 + $0x360] sm:$0xff]
      %v386 = vld [vmem:[%s264 + $0x368] sm:$0xff]
      %v387 = vld [vmem:[%s264 + $0x370] sm:$0xff]
      %v388 = vld [vmem:[%s264 + $0x378] sm:$0xff]
      %v389 = vld [vmem:[%s264 + $0x380] sm:$0xff]
      %v390 = vld [vmem:[%s264 + $0x388] sm:$0xff]
      %v391 = vld [vmem:[%s264 + $0x390] sm:$0xff]
      %v392 = vld [vmem:[%s264 + $0x398] sm:$0xff]
      %v393 = vld [vmem:[%s264 + $0x3a0] sm:$0xff]
      %v394 = vld [vmem:[%s264 + $0x3a8] sm:$0xff]
      %v395 = vld [vmem:[%s264 + $0x3b0] sm:$0xff]
      %v396 = vld [vmem:[%s264 + $0x3b8] sm:$0xff]
      %v397 = vld [vmem:[%s264 + $0x3c0] sm:$0xff]
      %v398 = vld [vmem:[%s264 + $0x3c8] sm:$0xff]
      %v399 = vld [vmem:[%s264 + $0x3d0] sm:$0xff]
      %v400 = vld [vmem:[%s264 + $0x3d8] sm:$0xff]
      %v401 = vld [vmem:[%s264 + $0x3e0] sm:$0xff]
      %v402 = vlaneseq
      %v403 = vand.u32 %v402, 127
      %404 = vset.pattern.permute.xlu0 0
      %405 = vperm.xlu0 %404, %v277
      %v406 = vpop.permute.xlu0 %405
      %407 = vset.pattern.permute.xlu0 0
      %408 = vperm.xlu0 %407, %v278
      %v409 = vpop.permute.xlu0 %408
      %410 = vset.pattern.permute.xlu0 0
      %411 = vperm.xlu0 %410, %v279
      %v412 = vpop.permute.xlu0 %411
      %413 = vset.pattern.permute.xlu0 0
      %414 = vperm.xlu0 %413, %v280
      %v415 = vpop.permute.xlu0 %414
      %416 = vset.pattern.permute.xlu0 0
      %417 = vperm.xlu0 %416, %v281
      %v418 = vpop.permute.xlu0 %417
      %419 = vset.pattern.permute.xlu0 0
      %420 = vperm.xlu0 %419, %v282
      %v421 = vpop.permute.xlu0 %420
      %422 = vset.pattern.permute.xlu0 0
      %423 = vperm.xlu0 %422, %v283
      %v424 = vpop.permute.xlu0 %423
      %425 = vset.pattern.permute.xlu0 0
      %426 = vperm.xlu0 %425, %v284
      %v427 = vpop.permute.xlu0 %426
      %428 = vset.pattern.permute.xlu0 0
      %429 = vperm.xlu0 %428, %v285
      %v430 = vpop.permute.xlu0 %429
      %431 = vset.pattern.permute.xlu0 0
      %432 = vperm.xlu0 %431, %v286
      %v433 = vpop.permute.xlu0 %432
      %434 = vset.pattern.permute.xlu0 0
      %435 = vperm.xlu0 %434, %v287
      %v436 = vpop.permute.xlu0 %435
      %437 = vset.pattern.permute.xlu0 0
      %438 = vperm.xlu0 %437, %v288
      %v439 = vpop.permute.xlu0 %438
      %440 = vset.pattern.permute.xlu0 0
      %441 = vperm.xlu0 %440, %v289
      %v442 = vpop.permute.xlu0 %441
      %443 = vset.pattern.permute.xlu0 0
      %444 = vperm.xlu0 %443, %v290
      %v445 = vpop.permute.xlu0 %444
      %446 = vset.pattern.permute.xlu0 0
      %447 = vperm.xlu0 %446, %v291
      %v448 = vpop.permute.xlu0 %447
      %449 = vset.pattern.permute.xlu0 0
      %450 = vperm.xlu0 %449, %v292
      %v451 = vpop.permute.xlu0 %450
      %452 = vset.pattern.permute.xlu0 0
      %453 = vperm.xlu0 %452, %v293
      %v454 = vpop.permute.xlu0 %453
      %455 = vset.pattern.permute.xlu0 0
      %456 = vperm.xlu0 %455, %v294
      %v457 = vpop.permute.xlu0 %456
      %458 = vset.pattern.permute.xlu0 0
      %459 = vperm.xlu0 %458, %v295
      %v460 = vpop.permute.xlu0 %459
      %461 = vset.pattern.permute.xlu0 0
      %462 = vperm.xlu0 %461, %v296
      %v463 = vpop.permute.xlu0 %462
      %464 = vset.pattern.permute.xlu0 0
      %465 = vperm.xlu0 %464, %v297
      %v466 = vpop.permute.xlu0 %465
      %467 = vset.pattern.permute.xlu0 0
      %468 = vperm.xlu0 %467, %v298
      %v469 = vpop.permute.xlu0 %468
      %470 = vset.pattern.permute.xlu0 0
      %471 = vperm.xlu0 %470, %v299
      %v472 = vpop.permute.xlu0 %471
      %473 = vset.pattern.permute.xlu0 0
      %474 = vperm.xlu0 %473, %v300
      %v475 = vpop.permute.xlu0 %474
      %476 = vset.pattern.permute.xlu0 0
      %477 = vperm.xlu0 %476, %v301
      %v478 = vpop.permute.xlu0 %477
      %479 = vset.pattern.permute.xlu0 0
      %480 = vperm.xlu0 %479, %v302
      %v481 = vpop.permute.xlu0 %480
      %482 = vset.pattern.permute.xlu0 0
      %483 = vperm.xlu0 %482, %v303
      %v484 = vpop.permute.xlu0 %483
      %485 = vset.pattern.permute.xlu0 0
      %486 = vperm.xlu0 %485, %v304
      %v487 = vpop.permute.xlu0 %486
      %488 = vset.pattern.permute.xlu0 0
      %489 = vperm.xlu0 %488, %v305
      %v490 = vpop.permute.xlu0 %489
      %491 = vset.pattern.permute.xlu0 0
      %492 = vperm.xlu0 %491, %v306
      %v493 = vpop.permute.xlu0 %492
      %494 = vset.pattern.permute.xlu0 0
      %495 = vperm.xlu0 %494, %v307
      %v496 = vpop.permute.xlu0 %495
      %497 = vset.pattern.permute.xlu0 0
      %498 = vperm.xlu0 %497, %v308
      %v499 = vpop.permute.xlu0 %498
      %500 = vset.pattern.permute.xlu0 0
      %501 = vperm.xlu0 %500, %v309
      %v502 = vpop.permute.xlu0 %501
      %503 = vset.pattern.permute.xlu0 0
      %504 = vperm.xlu0 %503, %v310
      %v505 = vpop.permute.xlu0 %504
      %506 = vset.pattern.permute.xlu0 0
      %507 = vperm.xlu0 %506, %v311
      %v508 = vpop.permute.xlu0 %507
      %509 = vset.pattern.permute.xlu0 0
      %510 = vperm.xlu0 %509, %v312
      %v511 = vpop.permute.xlu0 %510
      %512 = vset.pattern.permute.xlu0 0
      %513 = vperm.xlu0 %512, %v313
      %v514 = vpop.permute.xlu0 %513
      %515 = vset.pattern.permute.xlu0 0
      %516 = vperm.xlu0 %515, %v314
      %v517 = vpop.permute.xlu0 %516
      %518 = vset.pattern.permute.xlu0 0
      %519 = vperm.xlu0 %518, %v315
      %v520 = vpop.permute.xlu0 %519
      %521 = vset.pattern.permute.xlu0 0
      %522 = vperm.xlu0 %521, %v316
      %v523 = vpop.permute.xlu0 %522
      %524 = vset.pattern.permute.xlu0 0
      %525 = vperm.xlu0 %524, %v317
      %v526 = vpop.permute.xlu0 %525
      %527 = vset.pattern.permute.xlu0 0
      %528 = vperm.xlu0 %527, %v318
      %v529 = vpop.permute.xlu0 %528
      %530 = vset.pattern.permute.xlu0 0
      %531 = vperm.xlu0 %530, %v319
      %v532 = vpop.permute.xlu0 %531
      %533 = vset.pattern.permute.xlu0 0
      %534 = vperm.xlu0 %533, %v320
      %v535 = vpop.permute.xlu0 %534
      %536 = vset.pattern.permute.xlu0 0
      %537 = vperm.xlu0 %536, %v321
      %v538 = vpop.permute.xlu0 %537
      %539 = vset.pattern.permute.xlu0 0
      %540 = vperm.xlu0 %539, %v322
      %v541 = vpop.permute.xlu0 %540
      %542 = vset.pattern.permute.xlu0 0
      %543 = vperm.xlu0 %542, %v323
      %v544 = vpop.permute.xlu0 %543
      %545 = vset.pattern.permute.xlu0 0
      %546 = vperm.xlu0 %545, %v324
      %v547 = vpop.permute.xlu0 %546
      %548 = vset.pattern.permute.xlu0 0
      %549 = vperm.xlu0 %548, %v325
      %v550 = vpop.permute.xlu0 %549
      %551 = vset.pattern.permute.xlu0 0
      %552 = vperm.xlu0 %551, %v326
      %v553 = vpop.permute.xlu0 %552
      %554 = vset.pattern.permute.xlu0 0
      %555 = vperm.xlu0 %554, %v327
      %v556 = vpop.permute.xlu0 %555
      %557 = vset.pattern.permute.xlu0 0
      %558 = vperm.xlu0 %557, %v328
      %v559 = vpop.permute.xlu0 %558
      %560 = vset.pattern.permute.xlu0 0
      %561 = vperm.xlu0 %560, %v329
      %v562 = vpop.permute.xlu0 %561
      %563 = vset.pattern.permute.xlu0 0
      %564 = vperm.xlu0 %563, %v330
      %v565 = vpop.permute.xlu0 %564
      %566 = vset.pattern.permute.xlu0 0
      %567 = vperm.xlu0 %566, %v331
      %v568 = vpop.permute.xlu0 %567
      %569 = vset.pattern.permute.xlu0 0
      %570 = vperm.xlu0 %569, %v332
      %v571 = vpop.permute.xlu0 %570
      %572 = vset.pattern.permute.xlu0 0
      %573 = vperm.xlu0 %572, %v333
      %v574 = vpop.permute.xlu0 %573
      %575 = vset.pattern.permute.xlu0 0
      %576 = vperm.xlu0 %575, %v334
      %v577 = vpop.permute.xlu0 %576
      %578 = vset.pattern.permute.xlu0 0
      %579 = vperm.xlu0 %578, %v335
      %v580 = vpop.permute.xlu0 %579
      %581 = vset.pattern.permute.xlu0 0
      %582 = vperm.xlu0 %581, %v336
      %v583 = vpop.permute.xlu0 %582
      %584 = vset.pattern.permute.xlu0 0
      %585 = vperm.xlu0 %584, %v337
      %v586 = vpop.permute.xlu0 %585
      %587 = vset.pattern.permute.xlu0 0
      %588 = vperm.xlu0 %587, %v338
      %v589 = vpop.permute.xlu0 %588
      %590 = vset.pattern.permute.xlu0 0
      %591 = vperm.xlu0 %590, %v339
      %v592 = vpop.permute.xlu0 %591
      %593 = vset.pattern.permute.xlu0 0
      %594 = vperm.xlu0 %593, %v340
      %v595 = vpop.permute.xlu0 %594
      %596 = vset.pattern.permute.xlu0 0
      %597 = vperm.xlu0 %596, %v341
      %v598 = vpop.permute.xlu0 %597
      %599 = vset.pattern.permute.xlu0 0
      %600 = vperm.xlu0 %599, %v342
      %v601 = vpop.permute.xlu0 %600
      %602 = vset.pattern.permute.xlu0 0
      %603 = vperm.xlu0 %602, %v343
      %v604 = vpop.permute.xlu0 %603
      %605 = vset.pattern.permute.xlu0 0
      %606 = vperm.xlu0 %605, %v344
      %v607 = vpop.permute.xlu0 %606
      %608 = vset.pattern.permute.xlu0 0
      %609 = vperm.xlu0 %608, %v345
      %v610 = vpop.permute.xlu0 %609
      %611 = vset.pattern.permute.xlu0 0
      %612 = vperm.xlu0 %611, %v346
      %v613 = vpop.permute.xlu0 %612
      %614 = vset.pattern.permute.xlu0 0
      %615 = vperm.xlu0 %614, %v347
      %v616 = vpop.permute.xlu0 %615
      %617 = vset.pattern.permute.xlu0 0
      %618 = vperm.xlu0 %617, %v348
      %v619 = vpop.permute.xlu0 %618
      %620 = vset.pattern.permute.xlu0 0
      %621 = vperm.xlu0 %620, %v349
      %v622 = vpop.permute.xlu0 %621
      %623 = vset.pattern.permute.xlu0 0
      %624 = vperm.xlu0 %623, %v350
      %v625 = vpop.permute.xlu0 %624
      %626 = vset.pattern.permute.xlu0 0
      %627 = vperm.xlu0 %626, %v351
      %v628 = vpop.permute.xlu0 %627
      %629 = vset.pattern.permute.xlu0 0
      %630 = vperm.xlu0 %629, %v352
      %v631 = vpop.permute.xlu0 %630
      %632 = vset.pattern.permute.xlu0 0
      %633 = vperm.xlu0 %632, %v353
      %v634 = vpop.permute.xlu0 %633
      %635 = vset.pattern.permute.xlu0 0
      %636 = vperm.xlu0 %635, %v354
      %v637 = vpop.permute.xlu0 %636
      %638 = vset.pattern.permute.xlu0 0
      %639 = vperm.xlu0 %638, %v355
      %v640 = vpop.permute.xlu0 %639
      %641 = vset.pattern.permute.xlu0 0
      %642 = vperm.xlu0 %641, %v356
      %v643 = vpop.permute.xlu0 %642
      %644 = vset.pattern.permute.xlu0 0
      %645 = vperm.xlu0 %644, %v357
      %v646 = vpop.permute.xlu0 %645
      %647 = vset.pattern.permute.xlu0 0
      %648 = vperm.xlu0 %647, %v358
      %v649 = vpop.permute.xlu0 %648
      %650 = vset.pattern.permute.xlu0 0
      %651 = vperm.xlu0 %650, %v359
      %v652 = vpop.permute.xlu0 %651
      %653 = vset.pattern.permute.xlu0 0
      %654 = vperm.xlu0 %653, %v360
      %v655 = vpop.permute.xlu0 %654
      %656 = vset.pattern.permute.xlu0 0
      %657 = vperm.xlu0 %656, %v361
      %v658 = vpop.permute.xlu0 %657
      %659 = vset.pattern.permute.xlu0 0
      %660 = vperm.xlu0 %659, %v362
      %v661 = vpop.permute.xlu0 %660
      %662 = vset.pattern.permute.xlu0 0
      %663 = vperm.xlu0 %662, %v363
      %v664 = vpop.permute.xlu0 %663
      %665 = vset.pattern.permute.xlu0 0
      %666 = vperm.xlu0 %665, %v364
      %v667 = vpop.permute.xlu0 %666
      %668 = vset.pattern.permute.xlu0 0
      %669 = vperm.xlu0 %668, %v365
      %v670 = vpop.permute.xlu0 %669
      %671 = vset.pattern.permute.xlu0 0
      %672 = vperm.xlu0 %671, %v366
      %v673 = vpop.permute.xlu0 %672
      %674 = vset.pattern.permute.xlu0 0
      %675 = vperm.xlu0 %674, %v367
      %v676 = vpop.permute.xlu0 %675
      %677 = vset.pattern.permute.xlu0 0
      %678 = vperm.xlu0 %677, %v368
      %v679 = vpop.permute.xlu0 %678
      %680 = vset.pattern.permute.xlu0 0
      %681 = vperm.xlu0 %680, %v369
      %v682 = vpop.permute.xlu0 %681
      %683 = vset.pattern.permute.xlu0 0
      %684 = vperm.xlu0 %683, %v370
      %v685 = vpop.permute.xlu0 %684
      %686 = vset.pattern.permute.xlu0 0
      %687 = vperm.xlu0 %686, %v371
      %v688 = vpop.permute.xlu0 %687
      %689 = vset.pattern.permute.xlu0 0
      %690 = vperm.xlu0 %689, %v372
      %v691 = vpop.permute.xlu0 %690
      %692 = vset.pattern.permute.xlu0 0
      %693 = vperm.xlu0 %692, %v373
      %v694 = vpop.permute.xlu0 %693
      %695 = vset.pattern.permute.xlu0 0
      %696 = vperm.xlu0 %695, %v374
      %v697 = vpop.permute.xlu0 %696
      %698 = vset.pattern.permute.xlu0 0
      %699 = vperm.xlu0 %698, %v375
      %v700 = vpop.permute.xlu0 %699
      %701 = vset.pattern.permute.xlu0 0
      %702 = vperm.xlu0 %701, %v376
      %v703 = vpop.permute.xlu0 %702
      %704 = vset.pattern.permute.xlu0 0
      %705 = vperm.xlu0 %704, %v377
      %v706 = vpop.permute.xlu0 %705
      %707 = vset.pattern.permute.xlu0 0
      %708 = vperm.xlu0 %707, %v378
      %v709 = vpop.permute.xlu0 %708
      %710 = vset.pattern.permute.xlu0 0
      %711 = vperm.xlu0 %710, %v379
      %v712 = vpop.permute.xlu0 %711
      %713 = vset.pattern.permute.xlu0 0
      %714 = vperm.xlu0 %713, %v380
      %v715 = vpop.permute.xlu0 %714
      %716 = vset.pattern.permute.xlu0 0
      %717 = vperm.xlu0 %716, %v381
      %v718 = vpop.permute.xlu0 %717
      %719 = vset.pattern.permute.xlu0 0
      %720 = vperm.xlu0 %719, %v382
      %v721 = vpop.permute.xlu0 %720
      %722 = vset.pattern.permute.xlu0 0
      %723 = vperm.xlu0 %722, %v383
      %v724 = vpop.permute.xlu0 %723
      %725 = vset.pattern.permute.xlu0 0
      %726 = vperm.xlu0 %725, %v384
      %v727 = vpop.permute.xlu0 %726
      %728 = vset.pattern.permute.xlu0 0
      %729 = vperm.xlu0 %728, %v385
      %v730 = vpop.permute.xlu0 %729
      %731 = vset.pattern.permute.xlu0 0
      %732 = vperm.xlu0 %731, %v386
      %v733 = vpop.permute.xlu0 %732
      %734 = vset.pattern.permute.xlu0 0
      %735 = vperm.xlu0 %734, %v387
      %v736 = vpop.permute.xlu0 %735
      %737 = vset.pattern.permute.xlu0 0
      %738 = vperm.xlu0 %737, %v388
      %v739 = vpop.permute.xlu0 %738
      %740 = vset.pattern.permute.xlu0 0
      %741 = vperm.xlu0 %740, %v389
      %v742 = vpop.permute.xlu0 %741
      %743 = vset.pattern.permute.xlu0 0
      %744 = vperm.xlu0 %743, %v390
      %v745 = vpop.permute.xlu0 %744
      %746 = vset.pattern.permute.xlu0 0
      %747 = vperm.xlu0 %746, %v391
      %v748 = vpop.permute.xlu0 %747
      %749 = vset.pattern.permute.xlu0 0
      %750 = vperm.xlu0 %749, %v392
      %v751 = vpop.permute.xlu0 %750
      %752 = vset.pattern.permute.xlu0 0
      %753 = vperm.xlu0 %752, %v393
      %v754 = vpop.permute.xlu0 %753
      %755 = vset.pattern.permute.xlu0 0
      %756 = vperm.xlu0 %755, %v394
      %v757 = vpop.permute.xlu0 %756
      %758 = vset.pattern.permute.xlu0 0
      %759 = vperm.xlu0 %758, %v395
      %v760 = vpop.permute.xlu0 %759
      %761 = vset.pattern.permute.xlu0 0
      %762 = vperm.xlu0 %761, %v396
      %v763 = vpop.permute.xlu0 %762
      %764 = vset.pattern.permute.xlu0 0
      %765 = vperm.xlu0 %764, %v397
      %v766 = vpop.permute.xlu0 %765
      %767 = vset.pattern.permute.xlu0 0
      %768 = vperm.xlu0 %767, %v398
      %v769 = vpop.permute.xlu0 %768
      %770 = vset.pattern.permute.xlu0 0
      %771 = vperm.xlu0 %770, %v399
      %v772 = vpop.permute.xlu0 %771
      %773 = vset.pattern.permute.xlu0 0
      %774 = vperm.xlu0 %773, %v400
      %v775 = vpop.permute.xlu0 %774
      %776 = vset.pattern.permute.xlu0 0
      %777 = vperm.xlu0 %776, %v401
      %v778 = vpop.permute.xlu0 %777
      %vm779 = vcmp.eq.s32.totalorder %v403, %v406
      %vm780 = vcmp.eq.s32.totalorder %v403, %v409
      %vm781 = vcmp.eq.s32.totalorder %v403, %v412
      %vm782 = vcmp.eq.s32.totalorder %v403, %v415
      %vm783 = vcmp.eq.s32.totalorder %v403, %v418
      %vm784 = vcmp.eq.s32.totalorder %v403, %v421
      %vm785 = vcmp.eq.s32.totalorder %v403, %v424
      %vm786 = vcmp.eq.s32.totalorder %v403, %v427
      %vm787 = vcmp.eq.s32.totalorder %v403, %v430
      %vm788 = vcmp.eq.s32.totalorder %v403, %v433
      %vm789 = vcmp.eq.s32.totalorder %v403, %v436
      %vm790 = vcmp.eq.s32.totalorder %v403, %v439
      %vm791 = vcmp.eq.s32.totalorder %v403, %v442
      %vm792 = vcmp.eq.s32.totalorder %v403, %v445
      %vm793 = vcmp.eq.s32.totalorder %v403, %v448
      %vm794 = vcmp.eq.s32.totalorder %v403, %v451
      %vm795 = vcmp.eq.s32.totalorder %v403, %v454
      %vm796 = vcmp.eq.s32.totalorder %v403, %v457
      %vm797 = vcmp.eq.s32.totalorder %v403, %v460
      %vm798 = vcmp.eq.s32.totalorder %v403, %v463
      %vm799 = vcmp.eq.s32.totalorder %v403, %v466
      %vm800 = vcmp.eq.s32.totalorder %v403, %v469
      %vm801 = vcmp.eq.s32.totalorder %v403, %v472
      %vm802 = vcmp.eq.s32.totalorder %v403, %v475
      %vm803 = vcmp.eq.s32.totalorder %v403, %v478
      %vm804 = vcmp.eq.s32.totalorder %v403, %v481
      %vm805 = vcmp.eq.s32.totalorder %v403, %v484
      %vm806 = vcmp.eq.s32.totalorder %v403, %v487
      %vm807 = vcmp.eq.s32.totalorder %v403, %v490
      %vm808 = vcmp.eq.s32.totalorder %v403, %v493
      %vm809 = vcmp.eq.s32.totalorder %v403, %v496
      %vm810 = vcmp.eq.s32.totalorder %v403, %v499
      %vm811 = vcmp.eq.s32.totalorder %v403, %v502
      %vm812 = vcmp.eq.s32.totalorder %v403, %v505
      %vm813 = vcmp.eq.s32.totalorder %v403, %v508
      %vm814 = vcmp.eq.s32.totalorder %v403, %v511
      %vm815 = vcmp.eq.s32.totalorder %v403, %v514
      %vm816 = vcmp.eq.s32.totalorder %v403, %v517
      %vm817 = vcmp.eq.s32.totalorder %v403, %v520
      %vm818 = vcmp.eq.s32.totalorder %v403, %v523
      %vm819 = vcmp.eq.s32.totalorder %v403, %v526
      %vm820 = vcmp.eq.s32.totalorder %v403, %v529
      %vm821 = vcmp.eq.s32.totalorder %v403, %v532
      %vm822 = vcmp.eq.s32.totalorder %v403, %v535
      %vm823 = vcmp.eq.s32.totalorder %v403, %v538
      %vm824 = vcmp.eq.s32.totalorder %v403, %v541
      %vm825 = vcmp.eq.s32.totalorder %v403, %v544
      %vm826 = vcmp.eq.s32.totalorder %v403, %v547
      %vm827 = vcmp.eq.s32.totalorder %v403, %v550
      %vm828 = vcmp.eq.s32.totalorder %v403, %v553
      %vm829 = vcmp.eq.s32.totalorder %v403, %v556
      %vm830 = vcmp.eq.s32.totalorder %v403, %v559
      %vm831 = vcmp.eq.s32.totalorder %v403, %v562
      %vm832 = vcmp.eq.s32.totalorder %v403, %v565
      %vm833 = vcmp.eq.s32.totalorder %v403, %v568
      %vm834 = vcmp.eq.s32.totalorder %v403, %v571
      %vm835 = vcmp.eq.s32.totalorder %v403, %v574
      %vm836 = vcmp.eq.s32.totalorder %v403, %v577
      %vm837 = vcmp.eq.s32.totalorder %v403, %v580
      %vm838 = vcmp.eq.s32.totalorder %v403, %v583
      %vm839 = vcmp.eq.s32.totalorder %v403, %v586
      %vm840 = vcmp.eq.s32.totalorder %v403, %v589
      %vm841 = vcmp.eq.s32.totalorder %v403, %v592
      %vm842 = vcmp.eq.s32.totalorder %v403, %v595
      %vm843 = vcmp.eq.s32.totalorder %v403, %v598
      %vm844 = vcmp.eq.s32.totalorder %v403, %v601
      %vm845 = vcmp.eq.s32.totalorder %v403, %v604
      %vm846 = vcmp.eq.s32.totalorder %v403, %v607
      %vm847 = vcmp.eq.s32.totalorder %v403, %v610
      %vm848 = vcmp.eq.s32.totalorder %v403, %v613
      %vm849 = vcmp.eq.s32.totalorder %v403, %v616
      %vm850 = vcmp.eq.s32.totalorder %v403, %v619
      %vm851 = vcmp.eq.s32.totalorder %v403, %v622
      %vm852 = vcmp.eq.s32.totalorder %v403, %v625
      %vm853 = vcmp.eq.s32.totalorder %v403, %v628
      %vm854 = vcmp.eq.s32.totalorder %v403, %v631
      %vm855 = vcmp.eq.s32.totalorder %v403, %v634
      %vm856 = vcmp.eq.s32.totalorder %v403, %v637
      %vm857 = vcmp.eq.s32.totalorder %v403, %v640
      %vm858 = vcmp.eq.s32.totalorder %v403, %v643
      %vm859 = vcmp.eq.s32.totalorder %v403, %v646
      %vm860 = vcmp.eq.s32.totalorder %v403, %v649
      %vm861 = vcmp.eq.s32.totalorder %v403, %v652
      %vm862 = vcmp.eq.s32.totalorder %v403, %v655
      %vm863 = vcmp.eq.s32.totalorder %v403, %v658
      %vm864 = vcmp.eq.s32.totalorder %v403, %v661
      %vm865 = vcmp.eq.s32.totalorder %v403, %v664
      %vm866 = vcmp.eq.s32.totalorder %v403, %v667
      %vm867 = vcmp.eq.s32.totalorder %v403, %v670
      %vm868 = vcmp.eq.s32.totalorder %v403, %v673
      %vm869 = vcmp.eq.s32.totalorder %v403, %v676
      %vm870 = vcmp.eq.s32.totalorder %v403, %v679
      %vm871 = vcmp.eq.s32.totalorder %v403, %v682
      %vm872 = vcmp.eq.s32.totalorder %v403, %v685
      %vm873 = vcmp.eq.s32.totalorder %v403, %v688
      %vm874 = vcmp.eq.s32.totalorder %v403, %v691
      %vm875 = vcmp.eq.s32.totalorder %v403, %v694
      %vm876 = vcmp.eq.s32.totalorder %v403, %v697
      %vm877 = vcmp.eq.s32.totalorder %v403, %v700
      %vm878 = vcmp.eq.s32.totalorder %v403, %v703
      %vm879 = vcmp.eq.s32.totalorder %v403, %v706
      %vm880 = vcmp.eq.s32.totalorder %v403, %v709
      %vm881 = vcmp.eq.s32.totalorder %v403, %v712
      %vm882 = vcmp.eq.s32.totalorder %v403, %v715
      %vm883 = vcmp.eq.s32.totalorder %v403, %v718
      %vm884 = vcmp.eq.s32.totalorder %v403, %v721
      %vm885 = vcmp.eq.s32.totalorder %v403, %v724
      %vm886 = vcmp.eq.s32.totalorder %v403, %v727
      %vm887 = vcmp.eq.s32.totalorder %v403, %v730
      %vm888 = vcmp.eq.s32.totalorder %v403, %v733
      %vm889 = vcmp.eq.s32.totalorder %v403, %v736
      %vm890 = vcmp.eq.s32.totalorder %v403, %v739
      %vm891 = vcmp.eq.s32.totalorder %v403, %v742
      %vm892 = vcmp.eq.s32.totalorder %v403, %v745
      %vm893 = vcmp.eq.s32.totalorder %v403, %v748
      %vm894 = vcmp.eq.s32.totalorder %v403, %v751
      %vm895 = vcmp.eq.s32.totalorder %v403, %v754
      %vm896 = vcmp.eq.s32.totalorder %v403, %v757
      %vm897 = vcmp.eq.s32.totalorder %v403, %v760
      %vm898 = vcmp.eq.s32.totalorder %v403, %v763
      %vm899 = vcmp.eq.s32.totalorder %v403, %v766
      %vm900 = vcmp.eq.s32.totalorder %v403, %v769
      %vm901 = vcmp.eq.s32.totalorder %v403, %v772
      %vm902 = vcmp.eq.s32.totalorder %v403, %v775
      %vm903 = vcmp.eq.s32.totalorder %v403, %v778
      %v904 = vsel %vm779, 1.0, 0.0
      %v905 = vsel %vm780, 1.0, 0.0
      %v906 = vsel %vm781, 1.0, 0.0
      %v907 = vsel %vm782, 1.0, 0.0
      %v908 = vsel %vm783, 1.0, 0.0
      %v909 = vsel %vm784, 1.0, 0.0
      %v910 = vsel %vm785, 1.0, 0.0
      %v911 = vsel %vm786, 1.0, 0.0
      %v912 = vsel %vm787, 1.0, 0.0
      %v913 = vsel %vm788, 1.0, 0.0
      %v914 = vsel %vm789, 1.0, 0.0
      %v915 = vsel %vm790, 1.0, 0.0
      %v916 = vsel %vm791, 1.0, 0.0
      %v917 = vsel %vm792, 1.0, 0.0
      %v918 = vsel %vm793, 1.0, 0.0
      %v919 = vsel %vm794, 1.0, 0.0
      %v920 = vsel %vm795, 1.0, 0.0
      %v921 = vsel %vm796, 1.0, 0.0
      %v922 = vsel %vm797, 1.0, 0.0
      %v923 = vsel %vm798, 1.0, 0.0
      %v924 = vsel %vm799, 1.0, 0.0
      %v925 = vsel %vm800, 1.0, 0.0
      %v926 = vsel %vm801, 1.0, 0.0
      %v927 = vsel %vm802, 1.0, 0.0
      %v928 = vsel %vm803, 1.0, 0.0
      %v929 = vsel %vm804, 1.0, 0.0
      %v930 = vsel %vm805, 1.0, 0.0
      %v931 = vsel %vm806, 1.0, 0.0
      %v932 = vsel %vm807, 1.0, 0.0
      %v933 = vsel %vm808, 1.0, 0.0
      %v934 = vsel %vm809, 1.0, 0.0
      %v935 = vsel %vm810, 1.0, 0.0
      %v936 = vsel %vm811, 1.0, 0.0
      %v937 = vsel %vm812, 1.0, 0.0
      %v938 = vsel %vm813, 1.0, 0.0
      %v939 = vsel %vm814, 1.0, 0.0
      %v940 = vsel %vm815, 1.0, 0.0
      %v941 = vsel %vm816, 1.0, 0.0
      %v942 = vsel %vm817, 1.0, 0.0
      %v943 = vsel %vm818, 1.0, 0.0
      %v944 = vsel %vm819, 1.0, 0.0
      %v945 = vsel %vm820, 1.0, 0.0
      %v946 = vsel %vm821, 1.0, 0.0
      %v947 = vsel %vm822, 1.0, 0.0
      %v948 = vsel %vm823, 1.0, 0.0
      %v949 = vsel %vm824, 1.0, 0.0
      %v950 = vsel %vm825, 1.0, 0.0
      %v951 = vsel %vm826, 1.0, 0.0
      %v952 = vsel %vm827, 1.0, 0.0
      %v953 = vsel %vm828, 1.0, 0.0
      %v954 = vsel %vm829, 1.0, 0.0
      %v955 = vsel %vm830, 1.0, 0.0
      %v956 = vsel %vm831, 1.0, 0.0
      %v957 = vsel %vm832, 1.0, 0.0
      %v958 = vsel %vm833, 1.0, 0.0
      %v959 = vsel %vm834, 1.0, 0.0
      %v960 = vsel %vm835, 1.0, 0.0
      %v961 = vsel %vm836, 1.0, 0.0
      %v962 = vsel %vm837, 1.0, 0.0
      %v963 = vsel %vm838, 1.0, 0.0
      %v964 = vsel %vm839, 1.0, 0.0
      %v965 = vsel %vm840, 1.0, 0.0
      %v966 = vsel %vm841, 1.0, 0.0
      %v967 = vsel %vm842, 1.0, 0.0
      %v968 = vsel %vm843, 1.0, 0.0
      %v969 = vsel %vm844, 1.0, 0.0
      %v970 = vsel %vm845, 1.0, 0.0
      %v971 = vsel %vm846, 1.0, 0.0
      %v972 = vsel %vm847, 1.0, 0.0
      %v973 = vsel %vm848, 1.0, 0.0
      %v974 = vsel %vm849, 1.0, 0.0
      %v975 = vsel %vm850, 1.0, 0.0
      %v976 = vsel %vm851, 1.0, 0.0
      %v977 = vsel %vm852, 1.0, 0.0
      %v978 = vsel %vm853, 1.0, 0.0
      %v979 = vsel %vm854, 1.0, 0.0
      %v980 = vsel %vm855, 1.0, 0.0
      %v981 = vsel %vm856, 1.0, 0.0
      %v982 = vsel %vm857, 1.0, 0.0
      %v983 = vsel %vm858, 1.0, 0.0
      %v984 = vsel %vm859, 1.0, 0.0
      %v985 = vsel %vm860, 1.0, 0.0
      %v986 = vsel %vm861, 1.0, 0.0
      %v987 = vsel %vm862, 1.0, 0.0
      %v988 = vsel %vm863, 1.0, 0.0
      %v989 = vsel %vm864, 1.0, 0.0
      %v990 = vsel %vm865, 1.0, 0.0
      %v991 = vsel %vm866, 1.0, 0.0
      %v992 = vsel %vm867, 1.0, 0.0
      %v993 = vsel %vm868, 1.0, 0.0
      %v994 = vsel %vm869, 1.0, 0.0
      %v995 = vsel %vm870, 1.0, 0.0
      %v996 = vsel %vm871, 1.0, 0.0
      %v997 = vsel %vm872, 1.0, 0.0
      %v998 = vsel %vm873, 1.0, 0.0
      %v999 = vsel %vm874, 1.0, 0.0
      %v1000 = vsel %vm875, 1.0, 0.0
      %v1001 = vsel %vm876, 1.0, 0.0
      %v1002 = vsel %vm877, 1.0, 0.0
      %v1003 = vsel %vm878, 1.0, 0.0
      %v1004 = vsel %vm879, 1.0, 0.0
      %v1005 = vsel %vm880, 1.0, 0.0
      %v1006 = vsel %vm881, 1.0, 0.0
      %v1007 = vsel %vm882, 1.0, 0.0
      %v1008 = vsel %vm883, 1.0, 0.0
      %v1009 = vsel %vm884, 1.0, 0.0
      %v1010 = vsel %vm885, 1.0, 0.0
      %v1011 = vsel %vm886, 1.0, 0.0
      %v1012 = vsel %vm887, 1.0, 0.0
      %v1013 = vsel %vm888, 1.0, 0.0
      %v1014 = vsel %vm889, 1.0, 0.0
      %v1015 = vsel %vm890, 1.0, 0.0
      %v1016 = vsel %vm891, 1.0, 0.0
      %v1017 = vsel %vm892, 1.0, 0.0
      %v1018 = vsel %vm893, 1.0, 0.0
      %v1019 = vsel %vm894, 1.0, 0.0
      %v1020 = vsel %vm895, 1.0, 0.0
      %v1021 = vsel %vm896, 1.0, 0.0
      %v1022 = vsel %vm897, 1.0, 0.0
      %v1023 = vsel %vm898, 1.0, 0.0
      %v1024 = vsel %vm899, 1.0, 0.0
      %v1025 = vsel %vm900, 1.0, 0.0
      %v1026 = vsel %vm901, 1.0, 0.0
      %v1027 = vsel %vm902, 1.0, 0.0
      %v1028 = vsel %vm903, 1.0, 0.0
      %v1029 = vpack.c.bf16 %v905, %v904
      %v1030 = vpack.c.bf16 %v907, %v906
      %v1031 = vpack.c.bf16 %v909, %v908
      %v1032 = vpack.c.bf16 %v911, %v910
      %v1033 = vpack.c.bf16 %v913, %v912
      %v1034 = vpack.c.bf16 %v915, %v914
      %v1035 = vpack.c.bf16 %v917, %v916
      %v1036 = vpack.c.bf16 %v919, %v918
      %v1037 = vpack.c.bf16 %v921, %v920
      %v1038 = vpack.c.bf16 %v923, %v922
      %v1039 = vpack.c.bf16 %v925, %v924
      %v1040 = vpack.c.bf16 %v927, %v926
      %v1041 = vpack.c.bf16 %v929, %v928
      %v1042 = vpack.c.bf16 %v931, %v930
      %v1043 = vpack.c.bf16 %v933, %v932
      %v1044 = vpack.c.bf16 %v935, %v934
      %v1045 = vpack.c.bf16 %v937, %v936
      %v1046 = vpack.c.bf16 %v939, %v938
      %v1047 = vpack.c.bf16 %v941, %v940
      %v1048 = vpack.c.bf16 %v943, %v942
      %v1049 = vpack.c.bf16 %v945, %v944
      %v1050 = vpack.c.bf16 %v947, %v946
      %v1051 = vpack.c.bf16 %v949, %v948
      %v1052 = vpack.c.bf16 %v951, %v950
      %v1053 = vpack.c.bf16 %v953, %v952
      %v1054 = vpack.c.bf16 %v955, %v954
      %v1055 = vpack.c.bf16 %v957, %v956
      %v1056 = vpack.c.bf16 %v959, %v958
      %v1057 = vpack.c.bf16 %v961, %v960
      %v1058 = vpack.c.bf16 %v963, %v962
      %v1059 = vpack.c.bf16 %v965, %v964
      %v1060 = vpack.c.bf16 %v967, %v966
      %v1061 = vpack.c.bf16 %v969, %v968
      %v1062 = vpack.c.bf16 %v971, %v970
      %v1063 = vpack.c.bf16 %v973, %v972
      %v1064 = vpack.c.bf16 %v975, %v974
      %v1065 = vpack.c.bf16 %v977, %v976
      %v1066 = vpack.c.bf16 %v979, %v978
      %v1067 = vpack.c.bf16 %v981, %v980
      %v1068 = vpack.c.bf16 %v983, %v982
      %v1069 = vpack.c.bf16 %v985, %v984
      %v1070 = vpack.c.bf16 %v987, %v986
      %v1071 = vpack.c.bf16 %v989, %v988
      %v1072 = vpack.c.bf16 %v991, %v990
      %v1073 = vpack.c.bf16 %v993, %v992
      %v1074 = vpack.c.bf16 %v995, %v994
      %v1075 = vpack.c.bf16 %v997, %v996
      %v1076 = vpack.c.bf16 %v999, %v998
      %v1077 = vpack.c.bf16 %v1001, %v1000
      %v1078 = vpack.c.bf16 %v1003, %v1002
      %v1079 = vpack.c.bf16 %v1005, %v1004
      %v1080 = vpack.c.bf16 %v1007, %v1006
      %v1081 = vpack.c.bf16 %v1009, %v1008
      %v1082 = vpack.c.bf16 %v1011, %v1010
      %v1083 = vpack.c.bf16 %v1013, %v1012
      %v1084 = vpack.c.bf16 %v1015, %v1014
      %v1085 = vpack.c.bf16 %v1017, %v1016
      %v1086 = vpack.c.bf16 %v1019, %v1018
      %v1087 = vpack.c.bf16 %v1021, %v1020
      %v1088 = vpack.c.bf16 %v1023, %v1022
      %v1089 = vpack.c.bf16 %v1025, %v1024
      %v1090 = vpack.c.bf16 %v1027, %v1026
      %v1091 = vpack.c.bf16 %v1028, %v1028
      %1092 = vset.pattern.permute.xlu0 1
      %1093 = vperm.xlu0 %1092, %v277
      %v1094 = vpop.permute.xlu0 %1093
      %1095 = vset.pattern.permute.xlu0 1
      %1096 = vperm.xlu0 %1095, %v278
      %v1097 = vpop.permute.xlu0 %1096
      %1098 = vset.pattern.permute.xlu0 1
      %1099 = vperm.xlu0 %1098, %v279
      %v1100 = vpop.permute.xlu0 %1099
      %1101 = vset.pattern.permute.xlu0 1
      %1102 = vperm.xlu0 %1101, %v280
      %v1103 = vpop.permute.xlu0 %1102
      %1104 = vset.pattern.permute.xlu0 1
      %1105 = vperm.xlu0 %1104, %v281
      %v1106 = vpop.permute.xlu0 %1105
      %1107 = vset.pattern.permute.xlu0 1
      %1108 = vperm.xlu0 %1107, %v282
      %v1109 = vpop.permute.xlu0 %1108
      %1110 = vset.pattern.permute.xlu0 1
      %1111 = vperm.xlu0 %1110, %v283
      %v1112 = vpop.permute.xlu0 %1111
      %1113 = vset.pattern.permute.xlu0 1
      %1114 = vperm.xlu0 %1113, %v284
      %v1115 = vpop.permute.xlu0 %1114
      %1116 = vset.pattern.permute.xlu0 1
      %1117 = vperm.xlu0 %1116, %v285
      %v1118 = vpop.permute.xlu0 %1117
      %1119 = vset.pattern.permute.xlu0 1
      %1120 = vperm.xlu0 %1119, %v286
      %v1121 = vpop.permute.xlu0 %1120
      %1122 = vset.pattern.permute.xlu0 1
      %1123 = vperm.xlu0 %1122, %v287
      %v1124 = vpop.permute.xlu0 %1123
      %1125 = vset.pattern.permute.xlu0 1
      %1126 = vperm.xlu0 %1125, %v288
      %v1127 = vpop.permute.xlu0 %1126
      %1128 = vset.pattern.permute.xlu0 1
      %1129 = vperm.xlu0 %1128, %v289
      %v1130 = vpop.permute.xlu0 %1129
      %1131 = vset.pattern.permute.xlu0 1
      %1132 = vperm.xlu0 %1131, %v290
      %v1133 = vpop.permute.xlu0 %1132
      %1134 = vset.pattern.permute.xlu0 1
      %1135 = vperm.xlu0 %1134, %v291
      %v1136 = vpop.permute.xlu0 %1135
      %1137 = vset.pattern.permute.xlu0 1
      %1138 = vperm.xlu0 %1137, %v292
      %v1139 = vpop.permute.xlu0 %1138
      %1140 = vset.pattern.permute.xlu0 1
      %1141 = vperm.xlu0 %1140, %v293
      %v1142 = vpop.permute.xlu0 %1141
      %1143 = vset.pattern.permute.xlu0 1
      %1144 = vperm.xlu0 %1143, %v294
      %v1145 = vpop.permute.xlu0 %1144
      %1146 = vset.pattern.permute.xlu0 1
      %1147 = vperm.xlu0 %1146, %v295
      %v1148 = vpop.permute.xlu0 %1147
      %1149 = vset.pattern.permute.xlu0 1
      %1150 = vperm.xlu0 %1149, %v296
      %v1151 = vpop.permute.xlu0 %1150
      %1152 = vset.pattern.permute.xlu0 1
      %1153 = vperm.xlu0 %1152, %v297
      %v1154 = vpop.permute.xlu0 %1153
      %1155 = vset.pattern.permute.xlu0 1
      %1156 = vperm.xlu0 %1155, %v298
      %v1157 = vpop.permute.xlu0 %1156
      %1158 = vset.pattern.permute.xlu0 1
      %1159 = vperm.xlu0 %1158, %v299
      %v1160 = vpop.permute.xlu0 %1159
      %1161 = vset.pattern.permute.xlu0 1
      %1162 = vperm.xlu0 %1161, %v300
      %v1163 = vpop.permute.xlu0 %1162
      %1164 = vset.pattern.permute.xlu0 1
      %1165 = vperm.xlu0 %1164, %v301
      %v1166 = vpop.permute.xlu0 %1165
      %1167 = vset.pattern.permute.xlu0 1
      %1168 = vperm.xlu0 %1167, %v302
      %v1169 = vpop.permute.xlu0 %1168
      %1170 = vset.pattern.permute.xlu0 1
      %1171 = vperm.xlu0 %1170, %v303
      %v1172 = vpop.permute.xlu0 %1171
      %1173 = vset.pattern.permute.xlu0 1
      %1174 = vperm.xlu0 %1173, %v304
      %v1175 = vpop.permute.xlu0 %1174
      %1176 = vset.pattern.permute.xlu0 1
      %1177 = vperm.xlu0 %1176, %v305
      %v1178 = vpop.permute.xlu0 %1177
      %1179 = vset.pattern.permute.xlu0 1
      %1180 = vperm.xlu0 %1179, %v306
      %v1181 = vpop.permute.xlu0 %1180
      %1182 = vset.pattern.permute.xlu0 1
      %1183 = vperm.xlu0 %1182, %v307
      %v1184 = vpop.permute.xlu0 %1183
      %1185 = vset.pattern.permute.xlu0 1
      %1186 = vperm.xlu0 %1185, %v308
      %v1187 = vpop.permute.xlu0 %1186
      %1188 = vset.pattern.permute.xlu0 1
      %1189 = vperm.xlu0 %1188, %v309
      %v1190 = vpop.permute.xlu0 %1189
      %1191 = vset.pattern.permute.xlu0 1
      %1192 = vperm.xlu0 %1191, %v310
      %v1193 = vpop.permute.xlu0 %1192
      %1194 = vset.pattern.permute.xlu0 1
      %1195 = vperm.xlu0 %1194, %v311
      %v1196 = vpop.permute.xlu0 %1195
      %1197 = vset.pattern.permute.xlu0 1
      %1198 = vperm.xlu0 %1197, %v312
      %v1199 = vpop.permute.xlu0 %1198
      %1200 = vset.pattern.permute.xlu0 1
      %1201 = vperm.xlu0 %1200, %v313
      %v1202 = vpop.permute.xlu0 %1201
      %1203 = vset.pattern.permute.xlu0 1
      %1204 = vperm.xlu0 %1203, %v314
      %v1205 = vpop.permute.xlu0 %1204
      %1206 = vset.pattern.permute.xlu0 1
      %1207 = vperm.xlu0 %1206, %v315
      %v1208 = vpop.permute.xlu0 %1207
      %1209 = vset.pattern.permute.xlu0 1
      %1210 = vperm.xlu0 %1209, %v316
      %v1211 = vpop.permute.xlu0 %1210
      %1212 = vset.pattern.permute.xlu0 1
      %1213 = vperm.xlu0 %1212, %v317
      %v1214 = vpop.permute.xlu0 %1213
      %1215 = vset.pattern.permute.xlu0 1
      %1216 = vperm.xlu0 %1215, %v318
      %v1217 = vpop.permute.xlu0 %1216
      %1218 = vset.pattern.permute.xlu0 1
      %1219 = vperm.xlu0 %1218, %v319
      %v1220 = vpop.permute.xlu0 %1219
      %1221 = vset.pattern.permute.xlu0 1
      %1222 = vperm.xlu0 %1221, %v320
      %v1223 = vpop.permute.xlu0 %1222
      %1224 = vset.pattern.permute.xlu0 1
      %1225 = vperm.xlu0 %1224, %v321
      %v1226 = vpop.permute.xlu0 %1225
      %1227 = vset.pattern.permute.xlu0 1
      %1228 = vperm.xlu0 %1227, %v322
      %v1229 = vpop.permute.xlu0 %1228
      %1230 = vset.pattern.permute.xlu0 1
      %1231 = vperm.xlu0 %1230, %v323
      %v1232 = vpop.permute.xlu0 %1231
      %1233 = vset.pattern.permute.xlu0 1
      %1234 = vperm.xlu0 %1233, %v324
      %v1235 = vpop.permute.xlu0 %1234
      %1236 = vset.pattern.permute.xlu0 1
      %1237 = vperm.xlu0 %1236, %v325
      %v1238 = vpop.permute.xlu0 %1237
      %1239 = vset.pattern.permute.xlu0 1
      %1240 = vperm.xlu0 %1239, %v326
      %v1241 = vpop.permute.xlu0 %1240
      %1242 = vset.pattern.permute.xlu0 1
      %1243 = vperm.xlu0 %1242, %v327
      %v1244 = vpop.permute.xlu0 %1243
      %1245 = vset.pattern.permute.xlu0 1
      %1246 = vperm.xlu0 %1245, %v328
      %v1247 = vpop.permute.xlu0 %1246
      %1248 = vset.pattern.permute.xlu0 1
      %1249 = vperm.xlu0 %1248, %v329
      %v1250 = vpop.permute.xlu0 %1249
      %1251 = vset.pattern.permute.xlu0 1
      %1252 = vperm.xlu0 %1251, %v330
      %v1253 = vpop.permute.xlu0 %1252
      %1254 = vset.pattern.permute.xlu0 1
      %1255 = vperm.xlu0 %1254, %v331
      %v1256 = vpop.permute.xlu0 %1255
      %1257 = vset.pattern.permute.xlu0 1
      %1258 = vperm.xlu0 %1257, %v332
      %v1259 = vpop.permute.xlu0 %1258
      %1260 = vset.pattern.permute.xlu0 1
      %1261 = vperm.xlu0 %1260, %v333
      %v1262 = vpop.permute.xlu0 %1261
      %1263 = vset.pattern.permute.xlu0 1
      %1264 = vperm.xlu0 %1263, %v334
      %v1265 = vpop.permute.xlu0 %1264
      %1266 = vset.pattern.permute.xlu0 1
      %1267 = vperm.xlu0 %1266, %v335
      %v1268 = vpop.permute.xlu0 %1267
      %1269 = vset.pattern.permute.xlu0 1
      %1270 = vperm.xlu0 %1269, %v336
      %v1271 = vpop.permute.xlu0 %1270
      %1272 = vset.pattern.permute.xlu0 1
      %1273 = vperm.xlu0 %1272, %v337
      %v1274 = vpop.permute.xlu0 %1273
      %1275 = vset.pattern.permute.xlu0 1
      %1276 = vperm.xlu0 %1275, %v338
      %v1277 = vpop.permute.xlu0 %1276
      %1278 = vset.pattern.permute.xlu0 1
      %1279 = vperm.xlu0 %1278, %v339
      %v1280 = vpop.permute.xlu0 %1279
      %1281 = vset.pattern.permute.xlu0 1
      %1282 = vperm.xlu0 %1281, %v340
      %v1283 = vpop.permute.xlu0 %1282
      %1284 = vset.pattern.permute.xlu0 1
      %1285 = vperm.xlu0 %1284, %v341
      %v1286 = vpop.permute.xlu0 %1285
      %1287 = vset.pattern.permute.xlu0 1
      %1288 = vperm.xlu0 %1287, %v342
      %v1289 = vpop.permute.xlu0 %1288
      %1290 = vset.pattern.permute.xlu0 1
      %1291 = vperm.xlu0 %1290, %v343
      %v1292 = vpop.permute.xlu0 %1291
      %1293 = vset.pattern.permute.xlu0 1
      %1294 = vperm.xlu0 %1293, %v344
      %v1295 = vpop.permute.xlu0 %1294
      %1296 = vset.pattern.permute.xlu0 1
      %1297 = vperm.xlu0 %1296, %v345
      %v1298 = vpop.permute.xlu0 %1297
      %1299 = vset.pattern.permute.xlu0 1
      %1300 = vperm.xlu0 %1299, %v346
      %v1301 = vpop.permute.xlu0 %1300
      %1302 = vset.pattern.permute.xlu0 1
      %1303 = vperm.xlu0 %1302, %v347
      %v1304 = vpop.permute.xlu0 %1303
      %1305 = vset.pattern.permute.xlu0 1
      %1306 = vperm.xlu0 %1305, %v348
      %v1307 = vpop.permute.xlu0 %1306
      %1308 = vset.pattern.permute.xlu0 1
      %1309 = vperm.xlu0 %1308, %v349
      %v1310 = vpop.permute.xlu0 %1309
      %1311 = vset.pattern.permute.xlu0 1
      %1312 = vperm.xlu0 %1311, %v350
      %v1313 = vpop.permute.xlu0 %1312
      %1314 = vset.pattern.permute.xlu0 1
      %1315 = vperm.xlu0 %1314, %v351
      %v1316 = vpop.permute.xlu0 %1315
      %1317 = vset.pattern.permute.xlu0 1
      %1318 = vperm.xlu0 %1317, %v352
      %v1319 = vpop.permute.xlu0 %1318
      %1320 = vset.pattern.permute.xlu0 1
      %1321 = vperm.xlu0 %1320, %v353
      %v1322 = vpop.permute.xlu0 %1321
      %1323 = vset.pattern.permute.xlu0 1
      %1324 = vperm.xlu0 %1323, %v354
      %v1325 = vpop.permute.xlu0 %1324
      %1326 = vset.pattern.permute.xlu0 1
      %1327 = vperm.xlu0 %1326, %v355
      %v1328 = vpop.permute.xlu0 %1327
      %1329 = vset.pattern.permute.xlu0 1
      %1330 = vperm.xlu0 %1329, %v356
      %v1331 = vpop.permute.xlu0 %1330
      %1332 = vset.pattern.permute.xlu0 1
      %1333 = vperm.xlu0 %1332, %v357
      %v1334 = vpop.permute.xlu0 %1333
      %1335 = vset.pattern.permute.xlu0 1
      %1336 = vperm.xlu0 %1335, %v358
      %v1337 = vpop.permute.xlu0 %1336
      %1338 = vset.pattern.permute.xlu0 1
      %1339 = vperm.xlu0 %1338, %v359
      %v1340 = vpop.permute.xlu0 %1339
      %1341 = vset.pattern.permute.xlu0 1
      %1342 = vperm.xlu0 %1341, %v360
      %v1343 = vpop.permute.xlu0 %1342
      %1344 = vset.pattern.permute.xlu0 1
      %1345 = vperm.xlu0 %1344, %v361
      %v1346 = vpop.permute.xlu0 %1345
      %1347 = vset.pattern.permute.xlu0 1
      %1348 = vperm.xlu0 %1347, %v362
      %v1349 = vpop.permute.xlu0 %1348
      %1350 = vset.pattern.permute.xlu0 1
      %1351 = vperm.xlu0 %1350, %v363
      %v1352 = vpop.permute.xlu0 %1351
      %1353 = vset.pattern.permute.xlu0 1
      %1354 = vperm.xlu0 %1353, %v364
      %v1355 = vpop.permute.xlu0 %1354
      %1356 = vset.pattern.permute.xlu0 1
      %1357 = vperm.xlu0 %1356, %v365
      %v1358 = vpop.permute.xlu0 %1357
      %1359 = vset.pattern.permute.xlu0 1
      %1360 = vperm.xlu0 %1359, %v366
      %v1361 = vpop.permute.xlu0 %1360
      %1362 = vset.pattern.permute.xlu0 1
      %1363 = vperm.xlu0 %1362, %v367
      %v1364 = vpop.permute.xlu0 %1363
      %1365 = vset.pattern.permute.xlu0 1
      %1366 = vperm.xlu0 %1365, %v368
      %v1367 = vpop.permute.xlu0 %1366
      %1368 = vset.pattern.permute.xlu0 1
      %1369 = vperm.xlu0 %1368, %v369
      %v1370 = vpop.permute.xlu0 %1369
      %1371 = vset.pattern.permute.xlu0 1
      %1372 = vperm.xlu0 %1371, %v370
      %v1373 = vpop.permute.xlu0 %1372
      %1374 = vset.pattern.permute.xlu0 1
      %1375 = vperm.xlu0 %1374, %v371
      %v1376 = vpop.permute.xlu0 %1375
      %1377 = vset.pattern.permute.xlu0 1
      %1378 = vperm.xlu0 %1377, %v372
      %v1379 = vpop.permute.xlu0 %1378
      %1380 = vset.pattern.permute.xlu0 1
      %1381 = vperm.xlu0 %1380, %v373
      %v1382 = vpop.permute.xlu0 %1381
      %1383 = vset.pattern.permute.xlu0 1
      %1384 = vperm.xlu0 %1383, %v374
      %v1385 = vpop.permute.xlu0 %1384
      %1386 = vset.pattern.permute.xlu0 1
      %1387 = vperm.xlu0 %1386, %v375
      %v1388 = vpop.permute.xlu0 %1387
      %1389 = vset.pattern.permute.xlu0 1
      %1390 = vperm.xlu0 %1389, %v376
      %v1391 = vpop.permute.xlu0 %1390
      %1392 = vset.pattern.permute.xlu0 1
      %1393 = vperm.xlu0 %1392, %v377
      %v1394 = vpop.permute.xlu0 %1393
      %1395 = vset.pattern.permute.xlu0 1
      %1396 = vperm.xlu0 %1395, %v378
      %v1397 = vpop.permute.xlu0 %1396
      %1398 = vset.pattern.permute.xlu0 1
      %1399 = vperm.xlu0 %1398, %v379
      %v1400 = vpop.permute.xlu0 %1399
      %1401 = vset.pattern.permute.xlu0 1
      %1402 = vperm.xlu0 %1401, %v380
      %v1403 = vpop.permute.xlu0 %1402
      %1404 = vset.pattern.permute.xlu0 1
      %1405 = vperm.xlu0 %1404, %v381
      %v1406 = vpop.permute.xlu0 %1405
      %1407 = vset.pattern.permute.xlu0 1
      %1408 = vperm.xlu0 %1407, %v382
      %v1409 = vpop.permute.xlu0 %1408
      %1410 = vset.pattern.permute.xlu0 1
      %1411 = vperm.xlu0 %1410, %v383
      %v1412 = vpop.permute.xlu0 %1411
      %1413 = vset.pattern.permute.xlu0 1
      %1414 = vperm.xlu0 %1413, %v384
      %v1415 = vpop.permute.xlu0 %1414
      %1416 = vset.pattern.permute.xlu0 1
      %1417 = vperm.xlu0 %1416, %v385
      %v1418 = vpop.permute.xlu0 %1417
      %1419 = vset.pattern.permute.xlu0 1
      %1420 = vperm.xlu0 %1419, %v386
      %v1421 = vpop.permute.xlu0 %1420
      %1422 = vset.pattern.permute.xlu0 1
      %1423 = vperm.xlu0 %1422, %v387
      %v1424 = vpop.permute.xlu0 %1423
      %1425 = vset.pattern.permute.xlu0 1
      %1426 = vperm.xlu0 %1425, %v388
      %v1427 = vpop.permute.xlu0 %1426
      %1428 = vset.pattern.permute.xlu0 1
      %1429 = vperm.xlu0 %1428, %v389
      %v1430 = vpop.permute.xlu0 %1429
      %1431 = vset.pattern.permute.xlu0 1
      %1432 = vperm.xlu0 %1431, %v390
      %v1433 = vpop.permute.xlu0 %1432
      %1434 = vset.pattern.permute.xlu0 1
      %1435 = vperm.xlu0 %1434, %v391
      %v1436 = vpop.permute.xlu0 %1435
      %1437 = vset.pattern.permute.xlu0 1
      %1438 = vperm.xlu0 %1437, %v392
      %v1439 = vpop.permute.xlu0 %1438
      %1440 = vset.pattern.permute.xlu0 1
      %1441 = vperm.xlu0 %1440, %v393
      %v1442 = vpop.permute.xlu0 %1441
      %1443 = vset.pattern.permute.xlu0 1
      %1444 = vperm.xlu0 %1443, %v394
      %v1445 = vpop.permute.xlu0 %1444
      %1446 = vset.pattern.permute.xlu0 1
      %1447 = vperm.xlu0 %1446, %v395
      %v1448 = vpop.permute.xlu0 %1447
      %1449 = vset.pattern.permute.xlu0 1
      %1450 = vperm.xlu0 %1449, %v396
      %v1451 = vpop.permute.xlu0 %1450
      %1452 = vset.pattern.permute.xlu0 1
      %1453 = vperm.xlu0 %1452, %v397
      %v1454 = vpop.permute.xlu0 %1453
      %1455 = vset.pattern.permute.xlu0 1
      %1456 = vperm.xlu0 %1455, %v398
      %v1457 = vpop.permute.xlu0 %1456
      %1458 = vset.pattern.permute.xlu0 1
      %1459 = vperm.xlu0 %1458, %v399
      %v1460 = vpop.permute.xlu0 %1459
      %1461 = vset.pattern.permute.xlu0 1
      %1462 = vperm.xlu0 %1461, %v400
      %v1463 = vpop.permute.xlu0 %1462
      %1464 = vset.pattern.permute.xlu0 1
      %1465 = vperm.xlu0 %1464, %v401
      %v1466 = vpop.permute.xlu0 %1465
      %vm1467 = vcmp.eq.s32.totalorder %v403, %v1094
      %vm1468 = vcmp.eq.s32.totalorder %v403, %v1097
      %vm1469 = vcmp.eq.s32.totalorder %v403, %v1100
      %vm1470 = vcmp.eq.s32.totalorder %v403, %v1103
      %vm1471 = vcmp.eq.s32.totalorder %v403, %v1106
      %vm1472 = vcmp.eq.s32.totalorder %v403, %v1109
      %vm1473 = vcmp.eq.s32.totalorder %v403, %v1112
      %vm1474 = vcmp.eq.s32.totalorder %v403, %v1115
      %vm1475 = vcmp.eq.s32.totalorder %v403, %v1118
      %vm1476 = vcmp.eq.s32.totalorder %v403, %v1121
      %vm1477 = vcmp.eq.s32.totalorder %v403, %v1124
      %vm1478 = vcmp.eq.s32.totalorder %v403, %v1127
      %vm1479 = vcmp.eq.s32.totalorder %v403, %v1130
      %vm1480 = vcmp.eq.s32.totalorder %v403, %v1133
      %vm1481 = vcmp.eq.s32.totalorder %v403, %v1136
      %vm1482 = vcmp.eq.s32.totalorder %v403, %v1139
      %vm1483 = vcmp.eq.s32.totalorder %v403, %v1142
      %vm1484 = vcmp.eq.s32.totalorder %v403, %v1145
      %vm1485 = vcmp.eq.s32.totalorder %v403, %v1148
      %vm1486 = vcmp.eq.s32.totalorder %v403, %v1151
      %vm1487 = vcmp.eq.s32.totalorder %v403, %v1154
      %vm1488 = vcmp.eq.s32.totalorder %v403, %v1157
      %vm1489 = vcmp.eq.s32.totalorder %v403, %v1160
      %vm1490 = vcmp.eq.s32.totalorder %v403, %v1163
      %vm1491 = vcmp.eq.s32.totalorder %v403, %v1166
      %vm1492 = vcmp.eq.s32.totalorder %v403, %v1169
      %vm1493 = vcmp.eq.s32.totalorder %v403, %v1172
      %vm1494 = vcmp.eq.s32.totalorder %v403, %v1175
      %vm1495 = vcmp.eq.s32.totalorder %v403, %v1178
      %vm1496 = vcmp.eq.s32.totalorder %v403, %v1181
      %vm1497 = vcmp.eq.s32.totalorder %v403, %v1184
      %vm1498 = vcmp.eq.s32.totalorder %v403, %v1187
      %vm1499 = vcmp.eq.s32.totalorder %v403, %v1190
      %vm1500 = vcmp.eq.s32.totalorder %v403, %v1193
      %vm1501 = vcmp.eq.s32.totalorder %v403, %v1196
      %vm1502 = vcmp.eq.s32.totalorder %v403, %v1199
      %vm1503 = vcmp.eq.s32.totalorder %v403, %v1202
      %vm1504 = vcmp.eq.s32.totalorder %v403, %v1205
      %vm1505 = vcmp.eq.s32.totalorder %v403, %v1208
      %vm1506 = vcmp.eq.s32.totalorder %v403, %v1211
      %vm1507 = vcmp.eq.s32.totalorder %v403, %v1214
      %vm1508 = vcmp.eq.s32.totalorder %v403, %v1217
      %vm1509 = vcmp.eq.s32.totalorder %v403, %v1220
      %vm1510 = vcmp.eq.s32.totalorder %v403, %v1223
      %vm1511 = vcmp.eq.s32.totalorder %v403, %v1226
      %vm1512 = vcmp.eq.s32.totalorder %v403, %v1229
      %vm1513 = vcmp.eq.s32.totalorder %v403, %v1232
      %vm1514 = vcmp.eq.s32.totalorder %v403, %v1235
      %vm1515 = vcmp.eq.s32.totalorder %v403, %v1238
      %vm1516 = vcmp.eq.s32.totalorder %v403, %v1241
      %vm1517 = vcmp.eq.s32.totalorder %v403, %v1244
      %vm1518 = vcmp.eq.s32.totalorder %v403, %v1247
      %vm1519 = vcmp.eq.s32.totalorder %v403, %v1250
      %vm1520 = vcmp.eq.s32.totalorder %v403, %v1253
      %vm1521 = vcmp.eq.s32.totalorder %v403, %v1256
      %vm1522 = vcmp.eq.s32.totalorder %v403, %v1259
      %vm1523 = vcmp.eq.s32.totalorder %v403, %v1262
      %vm1524 = vcmp.eq.s32.totalorder %v403, %v1265
      %vm1525 = vcmp.eq.s32.totalorder %v403, %v1268
      %vm1526 = vcmp.eq.s32.totalorder %v403, %v1271
      %vm1527 = vcmp.eq.s32.totalorder %v403, %v1274
      %vm1528 = vcmp.eq.s32.totalorder %v403, %v1277
      %vm1529 = vcmp.eq.s32.totalorder %v403, %v1280
      %vm1530 = vcmp.eq.s32.totalorder %v403, %v1283
      %vm1531 = vcmp.eq.s32.totalorder %v403, %v1286
      %vm1532 = vcmp.eq.s32.totalorder %v403, %v1289
      %vm1533 = vcmp.eq.s32.totalorder %v403, %v1292
      %vm1534 = vcmp.eq.s32.totalorder %v403, %v1295
      %vm1535 = vcmp.eq.s32.totalorder %v403, %v1298
      %vm1536 = vcmp.eq.s32.totalorder %v403, %v1301
      %vm1537 = vcmp.eq.s32.totalorder %v403, %v1304
      %vm1538 = vcmp.eq.s32.totalorder %v403, %v1307
      %vm1539 = vcmp.eq.s32.totalorder %v403, %v1310
      %vm1540 = vcmp.eq.s32.totalorder %v403, %v1313
      %vm1541 = vcmp.eq.s32.totalorder %v403, %v1316
      %vm1542 = vcmp.eq.s32.totalorder %v403, %v1319
      %vm1543 = vcmp.eq.s32.totalorder %v403, %v1322
      %vm1544 = vcmp.eq.s32.totalorder %v403, %v1325
      %vm1545 = vcmp.eq.s32.totalorder %v403, %v1328
      %vm1546 = vcmp.eq.s32.totalorder %v403, %v1331
      %vm1547 = vcmp.eq.s32.totalorder %v403, %v1334
      %vm1548 = vcmp.eq.s32.totalorder %v403, %v1337
      %vm1549 = vcmp.eq.s32.totalorder %v403, %v1340
      %vm1550 = vcmp.eq.s32.totalorder %v403, %v1343
      %vm1551 = vcmp.eq.s32.totalorder %v403, %v1346
      %vm1552 = vcmp.eq.s32.totalorder %v403, %v1349
      %vm1553 = vcmp.eq.s32.totalorder %v403, %v1352
      %vm1554 = vcmp.eq.s32.totalorder %v403, %v1355
      %vm1555 = vcmp.eq.s32.totalorder %v403, %v1358
      %vm1556 = vcmp.eq.s32.totalorder %v403, %v1361
      %vm1557 = vcmp.eq.s32.totalorder %v403, %v1364
      %vm1558 = vcmp.eq.s32.totalorder %v403, %v1367
      %vm1559 = vcmp.eq.s32.totalorder %v403, %v1370
      %vm1560 = vcmp.eq.s32.totalorder %v403, %v1373
      %vm1561 = vcmp.eq.s32.totalorder %v403, %v1376
      %vm1562 = vcmp.eq.s32.totalorder %v403, %v1379
      %vm1563 = vcmp.eq.s32.totalorder %v403, %v1382
      %vm1564 = vcmp.eq.s32.totalorder %v403, %v1385
      %vm1565 = vcmp.eq.s32.totalorder %v403, %v1388
      %vm1566 = vcmp.eq.s32.totalorder %v403, %v1391
      %vm1567 = vcmp.eq.s32.totalorder %v403, %v1394
      %vm1568 = vcmp.eq.s32.totalorder %v403, %v1397
      %vm1569 = vcmp.eq.s32.totalorder %v403, %v1400
      %vm1570 = vcmp.eq.s32.totalorder %v403, %v1403
      %vm1571 = vcmp.eq.s32.totalorder %v403, %v1406
      %vm1572 = vcmp.eq.s32.totalorder %v403, %v1409
      %vm1573 = vcmp.eq.s32.totalorder %v403, %v1412
      %vm1574 = vcmp.eq.s32.totalorder %v403, %v1415
      %vm1575 = vcmp.eq.s32.totalorder %v403, %v1418
      %vm1576 = vcmp.eq.s32.totalorder %v403, %v1421
      %vm1577 = vcmp.eq.s32.totalorder %v403, %v1424
      %vm1578 = vcmp.eq.s32.totalorder %v403, %v1427
      %vm1579 = vcmp.eq.s32.totalorder %v403, %v1430
      %vm1580 = vcmp.eq.s32.totalorder %v403, %v1433
      %vm1581 = vcmp.eq.s32.totalorder %v403, %v1436
      %vm1582 = vcmp.eq.s32.totalorder %v403, %v1439
      %vm1583 = vcmp.eq.s32.totalorder %v403, %v1442
      %vm1584 = vcmp.eq.s32.totalorder %v403, %v1445
      %vm1585 = vcmp.eq.s32.totalorder %v403, %v1448
      %vm1586 = vcmp.eq.s32.totalorder %v403, %v1451
      %vm1587 = vcmp.eq.s32.totalorder %v403, %v1454
      %vm1588 = vcmp.eq.s32.totalorder %v403, %v1457
      %vm1589 = vcmp.eq.s32.totalorder %v403, %v1460
      %vm1590 = vcmp.eq.s32.totalorder %v403, %v1463
      %vm1591 = vcmp.eq.s32.totalorder %v403, %v1466
      %v1592 = vsel %vm1467, 1.0, 0.0
      %v1593 = vsel %vm1468, 1.0, 0.0
      %v1594 = vsel %vm1469, 1.0, 0.0
      %v1595 = vsel %vm1470, 1.0, 0.0
      %v1596 = vsel %vm1471, 1.0, 0.0
      %v1597 = vsel %vm1472, 1.0, 0.0
      %v1598 = vsel %vm1473, 1.0, 0.0
      %v1599 = vsel %vm1474, 1.0, 0.0
      %v1600 = vsel %vm1475, 1.0, 0.0
      %v1601 = vsel %vm1476, 1.0, 0.0
      %v1602 = vsel %vm1477, 1.0, 0.0
      %v1603 = vsel %vm1478, 1.0, 0.0
      %v1604 = vsel %vm1479, 1.0, 0.0
      %v1605 = vsel %vm1480, 1.0, 0.0
      %v1606 = vsel %vm1481, 1.0, 0.0
      %v1607 = vsel %vm1482, 1.0, 0.0
      %v1608 = vsel %vm1483, 1.0, 0.0
      %v1609 = vsel %vm1484, 1.0, 0.0
      %v1610 = vsel %vm1485, 1.0, 0.0
      %v1611 = vsel %vm1486, 1.0, 0.0
      %v1612 = vsel %vm1487, 1.0, 0.0
      %v1613 = vsel %vm1488, 1.0, 0.0
      %v1614 = vsel %vm1489, 1.0, 0.0
      %v1615 = vsel %vm1490, 1.0, 0.0
      %v1616 = vsel %vm1491, 1.0, 0.0
      %v1617 = vsel %vm1492, 1.0, 0.0
      %v1618 = vsel %vm1493, 1.0, 0.0
      %v1619 = vsel %vm1494, 1.0, 0.0
      %v1620 = vsel %vm1495, 1.0, 0.0
      %v1621 = vsel %vm1496, 1.0, 0.0
      %v1622 = vsel %vm1497, 1.0, 0.0
      %v1623 = vsel %vm1498, 1.0, 0.0
      %v1624 = vsel %vm1499, 1.0, 0.0
      %v1625 = vsel %vm1500, 1.0, 0.0
      %v1626 = vsel %vm1501, 1.0, 0.0
      %v1627 = vsel %vm1502, 1.0, 0.0
      %v1628 = vsel %vm1503, 1.0, 0.0
      %v1629 = vsel %vm1504, 1.0, 0.0
      %v1630 = vsel %vm1505, 1.0, 0.0
      %v1631 = vsel %vm1506, 1.0, 0.0
      %v1632 = vsel %vm1507, 1.0, 0.0
      %v1633 = vsel %vm1508, 1.0, 0.0
      %v1634 = vsel %vm1509, 1.0, 0.0
      %v1635 = vsel %vm1510, 1.0, 0.0
      %v1636 = vsel %vm1511, 1.0, 0.0
      %v1637 = vsel %vm1512, 1.0, 0.0
      %v1638 = vsel %vm1513, 1.0, 0.0
      %v1639 = vsel %vm1514, 1.0, 0.0
      %v1640 = vsel %vm1515, 1.0, 0.0
      %v1641 = vsel %vm1516, 1.0, 0.0
      %v1642 = vsel %vm1517, 1.0, 0.0
      %v1643 = vsel %vm1518, 1.0, 0.0
      %v1644 = vsel %vm1519, 1.0, 0.0
      %v1645 = vsel %vm1520, 1.0, 0.0
      %v1646 = vsel %vm1521, 1.0, 0.0
      %v1647 = vsel %vm1522, 1.0, 0.0
      %v1648 = vsel %vm1523, 1.0, 0.0
      %v1649 = vsel %vm1524, 1.0, 0.0
      %v1650 = vsel %vm1525, 1.0, 0.0
      %v1651 = vsel %vm1526, 1.0, 0.0
      %v1652 = vsel %vm1527, 1.0, 0.0
      %v1653 = vsel %vm1528, 1.0, 0.0
      %v1654 = vsel %vm1529, 1.0, 0.0
      %v1655 = vsel %vm1530, 1.0, 0.0
      %v1656 = vsel %vm1531, 1.0, 0.0
      %v1657 = vsel %vm1532, 1.0, 0.0
      %v1658 = vsel %vm1533, 1.0, 0.0
      %v1659 = vsel %vm1534, 1.0, 0.0
      %v1660 = vsel %vm1535, 1.0, 0.0
      %v1661 = vsel %vm1536, 1.0, 0.0
      %v1662 = vsel %vm1537, 1.0, 0.0
      %v1663 = vsel %vm1538, 1.0, 0.0
      %v1664 = vsel %vm1539, 1.0, 0.0
      %v1665 = vsel %vm1540, 1.0, 0.0
      %v1666 = vsel %vm1541, 1.0, 0.0
      %v1667 = vsel %vm1542, 1.0, 0.0
      %v1668 = vsel %vm1543, 1.0, 0.0
      %v1669 = vsel %vm1544, 1.0, 0.0
      %v1670 = vsel %vm1545, 1.0, 0.0
      %v1671 = vsel %vm1546, 1.0, 0.0
      %v1672 = vsel %vm1547, 1.0, 0.0
      %v1673 = vsel %vm1548, 1.0, 0.0
      %v1674 = vsel %vm1549, 1.0, 0.0
      %v1675 = vsel %vm1550, 1.0, 0.0
      %v1676 = vsel %vm1551, 1.0, 0.0
      %v1677 = vsel %vm1552, 1.0, 0.0
      %v1678 = vsel %vm1553, 1.0, 0.0
      %v1679 = vsel %vm1554, 1.0, 0.0
      %v1680 = vsel %vm1555, 1.0, 0.0
      %v1681 = vsel %vm1556, 1.0, 0.0
      %v1682 = vsel %vm1557, 1.0, 0.0
      %v1683 = vsel %vm1558, 1.0, 0.0
      %v1684 = vsel %vm1559, 1.0, 0.0
      %v1685 = vsel %vm1560, 1.0, 0.0
      %v1686 = vsel %vm1561, 1.0, 0.0
      %v1687 = vsel %vm1562, 1.0, 0.0
      %v1688 = vsel %vm1563, 1.0, 0.0
      %v1689 = vsel %vm1564, 1.0, 0.0
      %v1690 = vsel %vm1565, 1.0, 0.0
      %v1691 = vsel %vm1566, 1.0, 0.0
      %v1692 = vsel %vm1567, 1.0, 0.0
      %v1693 = vsel %vm1568, 1.0, 0.0
      %v1694 = vsel %vm1569, 1.0, 0.0
      %v1695 = vsel %vm1570, 1.0, 0.0
      %v1696 = vsel %vm1571, 1.0, 0.0
      %v1697 = vsel %vm1572, 1.0, 0.0
      %v1698 = vsel %vm1573, 1.0, 0.0
      %v1699 = vsel %vm1574, 1.0, 0.0
      %v1700 = vsel %vm1575, 1.0, 0.0
      %v1701 = vsel %vm1576, 1.0, 0.0
      %v1702 = vsel %vm1577, 1.0, 0.0
      %v1703 = vsel %vm1578, 1.0, 0.0
      %v1704 = vsel %vm1579, 1.0, 0.0
      %v1705 = vsel %vm1580, 1.0, 0.0
      %v1706 = vsel %vm1581, 1.0, 0.0
      %v1707 = vsel %vm1582, 1.0, 0.0
      %v1708 = vsel %vm1583, 1.0, 0.0
      %v1709 = vsel %vm1584, 1.0, 0.0
      %v1710 = vsel %vm1585, 1.0, 0.0
      %v1711 = vsel %vm1586, 1.0, 0.0
      %v1712 = vsel %vm1587, 1.0, 0.0
      %v1713 = vsel %vm1588, 1.0, 0.0
      %v1714 = vsel %vm1589, 1.0, 0.0
      %v1715 = vsel %vm1590, 1.0, 0.0
      %v1716 = vsel %vm1591, 1.0, 0.0
      %v1717 = vpack.c.bf16 %v1593, %v1592
      %v1718 = vpack.c.bf16 %v1595, %v1594
      %v1719 = vpack.c.bf16 %v1597, %v1596
      %v1720 = vpack.c.bf16 %v1599, %v1598
      %v1721 = vpack.c.bf16 %v1601, %v1600
      %v1722 = vpack.c.bf16 %v1603, %v1602
      %v1723 = vpack.c.bf16 %v1605, %v1604
      %v1724 = vpack.c.bf16 %v1607, %v1606
      %v1725 = vpack.c.bf16 %v1609, %v1608
      %v1726 = vpack.c.bf16 %v1611, %v1610
      %v1727 = vpack.c.bf16 %v1613, %v1612
      %v1728 = vpack.c.bf16 %v1615, %v1614
      %v1729 = vpack.c.bf16 %v1617, %v1616
      %v1730 = vpack.c.bf16 %v1619, %v1618
      %v1731 = vpack.c.bf16 %v1621, %v1620
      %v1732 = vpack.c.bf16 %v1623, %v1622
      %v1733 = vpack.c.bf16 %v1625, %v1624
      %v1734 = vpack.c.bf16 %v1627, %v1626
      %v1735 = vpack.c.bf16 %v1629, %v1628
      %v1736 = vpack.c.bf16 %v1631, %v1630
      %v1737 = vpack.c.bf16 %v1633, %v1632
      %v1738 = vpack.c.bf16 %v1635, %v1634
      %v1739 = vpack.c.bf16 %v1637, %v1636
      %v1740 = vpack.c.bf16 %v1639, %v1638
      %v1741 = vpack.c.bf16 %v1641, %v1640
      %v1742 = vpack.c.bf16 %v1643, %v1642
      %v1743 = vpack.c.bf16 %v1645, %v1644
      %v1744 = vpack.c.bf16 %v1647, %v1646
      %v1745 = vpack.c.bf16 %v1649, %v1648
      %v1746 = vpack.c.bf16 %v1651, %v1650
      %v1747 = vpack.c.bf16 %v1653, %v1652
      %v1748 = vpack.c.bf16 %v1655, %v1654
      %v1749 = vpack.c.bf16 %v1657, %v1656
      %v1750 = vpack.c.bf16 %v1659, %v1658
      %v1751 = vpack.c.bf16 %v1661, %v1660
      %v1752 = vpack.c.bf16 %v1663, %v1662
      %v1753 = vpack.c.bf16 %v1665, %v1664
      %v1754 = vpack.c.bf16 %v1667, %v1666
      %v1755 = vpack.c.bf16 %v1669, %v1668
      %v1756 = vpack.c.bf16 %v1671, %v1670
      %v1757 = vpack.c.bf16 %v1673, %v1672
      %v1758 = vpack.c.bf16 %v1675, %v1674
      %v1759 = vpack.c.bf16 %v1677, %v1676
      %v1760 = vpack.c.bf16 %v1679, %v1678
      %v1761 = vpack.c.bf16 %v1681, %v1680
      %v1762 = vpack.c.bf16 %v1683, %v1682
      %v1763 = vpack.c.bf16 %v1685, %v1684
      %v1764 = vpack.c.bf16 %v1687, %v1686
      %v1765 = vpack.c.bf16 %v1689, %v1688
      %v1766 = vpack.c.bf16 %v1691, %v1690
      %v1767 = vpack.c.bf16 %v1693, %v1692
      %v1768 = vpack.c.bf16 %v1695, %v1694
      %v1769 = vpack.c.bf16 %v1697, %v1696
      %v1770 = vpack.c.bf16 %v1699, %v1698
      %v1771 = vpack.c.bf16 %v1701, %v1700
      %v1772 = vpack.c.bf16 %v1703, %v1702
      %v1773 = vpack.c.bf16 %v1705, %v1704
      %v1774 = vpack.c.bf16 %v1707, %v1706
      %v1775 = vpack.c.bf16 %v1709, %v1708
      %v1776 = vpack.c.bf16 %v1711, %v1710
      %v1777 = vpack.c.bf16 %v1713, %v1712
      %v1778 = vpack.c.bf16 %v1715, %v1714
      %v1779 = vpack.c.bf16 %v1716, %v1716
      %v1780 = vld [vmem:[%s1] sm:$0xf]
      %v1781 = vld [vmem:[%s1 + $0x4] sm:$0xf]
      %v1782 = vld [vmem:[%s1 + $0x8] sm:$0xf]
      %v1783 = vld [vmem:[%s1 + $0xc] sm:$0xf]
      %v1784 = vld [vmem:[%s1 + $0x10] sm:$0xf]
      %v1785 = vld [vmem:[%s1 + $0x14] sm:$0xf]
      %v1786 = vld [vmem:[%s1 + $0x18] sm:$0xf]
      %v1787 = vld [vmem:[%s1 + $0x1c] sm:$0xf]
      %v1788 = vld [vmem:[%s1 + $0x20] sm:$0xf]
      %v1789 = vld [vmem:[%s1 + $0x24] sm:$0xf]
      %v1790 = vld [vmem:[%s1 + $0x28] sm:$0xf]
      %v1791 = vld [vmem:[%s1 + $0x2c] sm:$0xf]
      %v1792 = vld [vmem:[%s1 + $0x30] sm:$0xf]
      %v1793 = vld [vmem:[%s1 + $0x34] sm:$0xf]
      %v1794 = vld [vmem:[%s1 + $0x38] sm:$0xf]
      %v1795 = vld [vmem:[%s1 + $0x3c] sm:$0xf]
      %v1812 = vunpack.c.l.b16 %v1780
      %v1813 = vunpack.c.l.b16 %v1781
      %v1814 = vunpack.c.l.b16 %v1782
      %v1815 = vunpack.c.l.b16 %v1783
      %v1816 = vunpack.c.l.b16 %v1784
      %v1817 = vunpack.c.l.b16 %v1785
      %v1818 = vunpack.c.l.b16 %v1786
      %v1819 = vunpack.c.l.b16 %v1787
      %v1820 = vunpack.c.l.b16 %v1788
      %v1821 = vunpack.c.l.b16 %v1789
      %v1822 = vunpack.c.l.b16 %v1790
      %v1823 = vunpack.c.l.b16 %v1791
      %v1824 = vunpack.c.l.b16 %v1792
      %v1825 = vunpack.c.l.b16 %v1793
      %v1826 = vunpack.c.l.b16 %v1794
      %v1827 = vunpack.c.l.b16 %v1795
      %v1828 = vpack.c.b16 %v1813, %v1812
      %v1829 = vpack.c.b16 %v1815, %v1814
      %v1830 = vpack.c.b16 %v1817, %v1816
      %v1831 = vpack.c.b16 %v1819, %v1818
      %v1832 = vpack.c.b16 %v1821, %v1820
      %v1833 = vpack.c.b16 %v1823, %v1822
      %v1834 = vpack.c.b16 %v1825, %v1824
      %v1835 = vpack.c.b16 %v1827, %v1826
      %1844 = vmatprep.subr.bf16.mxu0 0
      %1845 = vmatpush1.bf16.msra.mxu0 %v1828
      %1846 = vmatprep.subr.bf16.mxu0 0
      %1847 = vmatpush1.bf16.msra.mxu0 %v1829
      %1848 = vmatprep.subr.bf16.mxu0 0
      %1849 = vmatpush1.bf16.msra.mxu0 %v1830
      %1850 = vmatprep.subr.bf16.mxu0 0
      %1851 = vmatpush1.bf16.msra.mxu0 %v1831
      %1852 = vmatprep.subr.bf16.mxu0 0
      %1853 = vmatpush1.bf16.msra.mxu0 %v1832
      %1854 = vmatprep.subr.bf16.mxu0 0
      %1855 = vmatpush1.bf16.msra.mxu0 %v1833
      %1856 = vmatprep.subr.bf16.mxu0 0
      %1857 = vmatpush1.bf16.msra.mxu0 %v1834
      %1858 = vmatprep.subr.bf16.mxu0 0
      %1859 = vmatpush1.bf16.msra.mxu0 %v1835
      %1860 = vmatprep.subr.bf16.mxu0 0
      %1861 = vmatpush1.bf16.msra.mxu0 0
      %1862 = vmatprep.subr.bf16.mxu0 0
      %1863 = vmatpush1.bf16.msra.mxu0 0
      %1864 = vmatprep.subr.bf16.mxu0 0
      %1865 = vmatpush1.bf16.msra.mxu0 0
      %1866 = vmatprep.subr.bf16.mxu0 0
      %1867 = vmatpush1.bf16.msra.mxu0 0
      %1868 = vmatprep.subr.bf16.mxu0 0
      %1869 = vmatpush1.bf16.msra.mxu0 0
      %1870 = vmatprep.subr.bf16.mxu0 0
      %1871 = vmatpush1.bf16.msra.mxu0 0
      %1872 = vmatprep.subr.bf16.mxu0 0
      %1873 = vmatpush1.bf16.msra.mxu0 0
      %1874 = vmatprep.subr.bf16.mxu0 0
      %1875 = vmatpush1.bf16.msra.mxu0 0
      %1876 = vmatprep.mubr.bf16.mxu0 0
      %1877 = vmatmul.mubr.bf16.gmra.mrb[0].mxu0 %v1029
      %v1878 = vpop.f32.mrb[0].mxu0
      %v1879 = vadd.f32 0.0, %v1878
      %v1880 = vpop.f32.mrb[0].mxu0
      %v1881 = vpop.f32.mrb[0].mxu0
      %v1882 = vadd.f32 0.0, %v1881
      %v1883 = vpop.f32.mrb[0].mxu0
      %1884 = vmatprep.mubr.bf16.mxu0 0
      %1885 = vmatmul.mubr.bf16.gmra.mrb[0].mxu0 %v1030
      %v1886 = vpop.f32.mrb[0].mxu0
      %v1887 = vadd.f32 0.0, %v1886
      %v1888 = vpop.f32.mrb[0].mxu0
      %v1889 = vpop.f32.mrb[0].mxu0
      %v1890 = vadd.f32 0.0, %v1889
      %v1891 = vpop.f32.mrb[0].mxu0
      %1892 = vmatprep.mubr.bf16.mxu0 0
      %1893 = vmatmul.mubr.bf16.gmra.mrb[0].mxu0 %v1031
      %v1894 = vpop.f32.mrb[0].mxu0
      %v1895 = vadd.f32 0.0, %v1894
      %v1896 = vpop.f32.mrb[0].mxu0
      %v1897 = vpop.f32.mrb[0].mxu0
      %v1898 = vadd.f32 0.0, %v1897
      %v1899 = vpop.f32.mrb[0].mxu0
      %1900 = vmatprep.mubr.bf16.mxu0 0
      %1901 = vmatmul.mubr.bf16.gmra.mrb[0].mxu0 %v1032
      %v1902 = vpop.f32.mrb[0].mxu0
      %v1903 = vadd.f32 0.0, %v1902
      %v1904 = vpop.f32.mrb[0].mxu0
      %v1905 = vpop.f32.mrb[0].mxu0
      %v1906 = vadd.f32 0.0, %v1905
      %v1907 = vpop.f32.mrb[0].mxu0
      %1908 = vmatprep.mubr.bf16.mxu0 0
      %1909 = vmatmul.mubr.bf16.gmra.mrb[0].mxu0 %v1033
      %v1910 = vpop.f32.mrb[0].mxu0
      %v1911 = vadd.f32 0.0, %v1910
      %v1912 = vpop.f32.mrb[0].mxu0
      %v1913 = vpop.f32.mrb[0].mxu0
      %v1914 = vadd.f32 0.0, %v1913
      %v1915 = vpop.f32.mrb[0].mxu0
      %1916 = vmatprep.mubr.bf16.mxu0 0
      %1917 = vmatmul.mubr.bf16.gmra.mrb[0].mxu0 %v1034
      %v1918 = vpop.f32.mrb[0].mxu0
      %v1919 = vadd.f32 0.0, %v1918
      %v1920 = vpop.f32.mrb[0].mxu0
      %v1921 = vpop.f32.mrb[0].mxu0
      %v1922 = vadd.f32 0.0, %v1921
      %v1923 = vpop.f32.mrb[0].mxu0
      %1924 = vmatprep.mubr.bf16.mxu0 0
      %1925 = vmatmul.mubr.bf16.gmra.mrb[0].mxu0 %v1035
      %v1926 = vpop.f32.mrb[0].mxu0
      %v1927 = vadd.f32 0.0, %v1926
      %v1928 = vpop.f32.mrb[0].mxu0
      %v1929 = vpop.f32.mrb[0].mxu0
      %v1930 = vadd.f32 0.0, %v1929
      %v1931 = vpop.f32.mrb[0].mxu0
      %1932 = vmatprep.mubr.bf16.mxu0 0
      %1933 = vmatmul.mubr.bf16.gmra.mrb[0].mxu0 %v1036
      %v1934 = vpop.f32.mrb[0].mxu0
      %v1935 = vadd.f32 0.0, %v1934
      %v1936 = vpop.f32.mrb[0].mxu0
      %v1937 = vpop.f32.mrb[0].mxu0
      %v1938 = vadd.f32 0.0, %v1937
      %v1939 = vpop.f32.mrb[0].mxu0
      %1940 = vmatprep.mubr.bf16.mxu0 0
      %1941 = vmatmul.mubr.bf16.gmra.mrb[0].mxu0 %v1037
      %v1942 = vpop.f32.mrb[0].mxu0
      %v1943 = vadd.f32 0.0, %v1942
      %v1944 = vpop.f32.mrb[0].mxu0
      %v1945 = vpop.f32.mrb[0].mxu0
      %v1946 = vadd.f32 0.0, %v1945
      %v1947 = vpop.f32.mrb[0].mxu0
      %1948 = vmatprep.mubr.bf16.mxu0 0
      %1949 = vmatmul.mubr.bf16.gmra.mrb[0].mxu0 %v1038
      %v1950 = vpop.f32.mrb[0].mxu0
      %v1951 = vadd.f32 0.0, %v1950
      %v1952 = vpop.f32.mrb[0].mxu0
      %v1953 = vpop.f32.mrb[0].mxu0
      %v1954 = vadd.f32 0.0, %v1953
      %v1955 = vpop.f32.mrb[0].mxu0
      %1956 = vmatprep.mubr.bf16.mxu0 0
      %1957 = vmatmul.mubr.bf16.gmra.mrb[0].mxu0 %v1039
      %v1958 = vpop.f32.mrb[0].mxu0
      %v1959 = vadd.f32 0.0, %v1958
      %v1960 = vpop.f32.mrb[0].mxu0
      %v1961 = vpop.f32.mrb[0].mxu0
      %v1962 = vadd.f32 0.0, %v1961
      %v1963 = vpop.f32.mrb[0].mxu0
      %1964 = vmatprep.mubr.bf16.mxu0 0
      %1965 = vmatmul.mubr.bf16.gmra.mrb[0].mxu0 %v1040
      %v1966 = vpop.f32.mrb[0].mxu0
      %v1967 = vadd.f32 0.0, %v1966
      %v1968 = vpop.f32.mrb[0].mxu0
      %v1969 = vpop.f32.mrb[0].mxu0
      %v1970 = vadd.f32 0.0, %v1969
      %v1971 = vpop.f32.mrb[0].mxu0
      %1972 = vmatprep.mubr.bf16.mxu0 0
      %1973 = vmatmul.mubr.bf16.gmra.mrb[0].mxu0 %v1041
      %v1974 = vpop.f32.mrb[0].mxu0
      %v1975 = vadd.f32 0.0, %v1974
      %v1976 = vpop.f32.mrb[0].mxu0
      %v1977 = vpop.f32.mrb[0].mxu0
      %v1978 = vadd.f32 0.0, %v1977
      %v1979 = vpop.f32.mrb[0].mxu0
      %1980 = vmatprep.mubr.bf16.mxu0 0
      %1981 = vmatmul.mubr.bf16.gmra.mrb[0].mxu0 %v1042
      %v1982 = vpop.f32.mrb[0].mxu0
      %v1983 = vadd.f32 0.0, %v1982
      %v1984 = vpop.f32.mrb[0].mxu0
      %v1985 = vpop.f32.mrb[0].mxu0
      %v1986 = vadd.f32 0.0, %v1985
      %v1987 = vpop.f32.mrb[0].mxu0
      %1988 = vmatprep.mubr.bf16.mxu0 0
      %1989 = vmatmul.mubr.bf16.gmra.mrb[0].mxu0 %v1043
      %v1990 = vpop.f32.mrb[0].mxu0
      %v1991 = vadd.f32 0.0, %v1990
      %v1992 = vpop.f32.mrb[0].mxu0
      %v1993 = vpop.f32.mrb[0].mxu0
      %v1994 = vadd.f32 0.0, %v1993
      %v1995 = vpop.f32.mrb[0].mxu0
      %1996 = vmatprep.mubr.bf16.mxu0 0
      %1997 = vmatmul.mubr.bf16.gmra.mrb[0].mxu0 %v1044
      %v1998 = vpop.f32.mrb[0].mxu0
      %v1999 = vadd.f32 0.0, %v1998
      %v2000 = vpop.f32.mrb[0].mxu0
      %v2001 = vpop.f32.mrb[0].mxu0
      %v2002 = vadd.f32 0.0, %v2001
      %v2003 = vpop.f32.mrb[0].mxu0
      %2004 = vmatprep.mubr.bf16.mxu0 0
      %2005 = vmatmul.mubr.bf16.gmra.mrb[0].mxu0 %v1045
      %v2006 = vpop.f32.mrb[0].mxu0
      %v2007 = vadd.f32 0.0, %v2006
      %v2008 = vpop.f32.mrb[0].mxu0
      %v2009 = vpop.f32.mrb[0].mxu0
      %v2010 = vadd.f32 0.0, %v2009
      %v2011 = vpop.f32.mrb[0].mxu0
      %2012 = vmatprep.mubr.bf16.mxu0 0
      %2013 = vmatmul.mubr.bf16.gmra.mrb[0].mxu0 %v1046
      %v2014 = vpop.f32.mrb[0].mxu0
      %v2015 = vadd.f32 0.0, %v2014
      %v2016 = vpop.f32.mrb[0].mxu0
      %v2017 = vpop.f32.mrb[0].mxu0
      %v2018 = vadd.f32 0.0, %v2017
      %v2019 = vpop.f32.mrb[0].mxu0
      %2020 = vmatprep.mubr.bf16.mxu0 0
      %2021 = vmatmul.mubr.bf16.gmra.mrb[0].mxu0 %v1047
      %v2022 = vpop.f32.mrb[0].mxu0
      %v2023 = vadd.f32 0.0, %v2022
      %v2024 = vpop.f32.mrb[0].mxu0
      %v2025 = vpop.f32.mrb[0].mxu0
      %v2026 = vadd.f32 0.0, %v2025
      %v2027 = vpop.f32.mrb[0].mxu0
      %2028 = vmatprep.mubr.bf16.mxu0 0
      %2029 = vmatmul.mubr.bf16.gmra.mrb[0].mxu0 %v1048
      %v2030 = vpop.f32.mrb[0].mxu0
      %v2031 = vadd.f32 0.0, %v2030
      %v2032 = vpop.f32.mrb[0].mxu0
      %v2033 = vpop.f32.mrb[0].mxu0
      %v2034 = vadd.f32 0.0, %v2033
      %v2035 = vpop.f32.mrb[0].mxu0
      %2036 = vmatprep.mubr.bf16.mxu0 0
      %2037 = vmatmul.mubr.bf16.gmra.mrb[0].mxu0 %v1049
      %v2038 = vpop.f32.mrb[0].mxu0
      %v2039 = vadd.f32 0.0, %v2038
      %v2040 = vpop.f32.mrb[0].mxu0
      %v2041 = vpop.f32.mrb[0].mxu0
      %v2042 = vadd.f32 0.0, %v2041
      %v2043 = vpop.f32.mrb[0].mxu0
      %2044 = vmatprep.mubr.bf16.mxu0 0
      %2045 = vmatmul.mubr.bf16.gmra.mrb[0].mxu0 %v1050
      %v2046 = vpop.f32.mrb[0].mxu0
      %v2047 = vadd.f32 0.0, %v2046
      %v2048 = vpop.f32.mrb[0].mxu0
      %v2049 = vpop.f32.mrb[0].mxu0
      %v2050 = vadd.f32 0.0, %v2049
      %v2051 = vpop.f32.mrb[0].mxu0
      %2052 = vmatprep.mubr.bf16.mxu0 0
      %2053 = vmatmul.mubr.bf16.gmra.mrb[0].mxu0 %v1051
      %v2054 = vpop.f32.mrb[0].mxu0
      %v2055 = vadd.f32 0.0, %v2054
      %v2056 = vpop.f32.mrb[0].mxu0
      %v2057 = vpop.f32.mrb[0].mxu0
      %v2058 = vadd.f32 0.0, %v2057
      %v2059 = vpop.f32.mrb[0].mxu0
      %2060 = vmatprep.mubr.bf16.mxu0 0
      %2061 = vmatmul.mubr.bf16.gmra.mrb[0].mxu0 %v1052
      %v2062 = vpop.f32.mrb[0].mxu0
      %v2063 = vadd.f32 0.0, %v2062
      %v2064 = vpop.f32.mrb[0].mxu0
      %v2065 = vpop.f32.mrb[0].mxu0
      %v2066 = vadd.f32 0.0, %v2065
      %v2067 = vpop.f32.mrb[0].mxu0
      %2068 = vmatprep.mubr.bf16.mxu0 0
      %2069 = vmatmul.mubr.bf16.gmra.mrb[0].mxu0 %v1053
      %v2070 = vpop.f32.mrb[0].mxu0
      %v2071 = vadd.f32 0.0, %v2070
      %v2072 = vpop.f32.mrb[0].mxu0
      %v2073 = vpop.f32.mrb[0].mxu0
      %v2074 = vadd.f32 0.0, %v2073
      %v2075 = vpop.f32.mrb[0].mxu0
      %2076 = vmatprep.mubr.bf16.mxu0 0
      %2077 = vmatmul.mubr.bf16.gmra.mrb[0].mxu0 %v1054
      %v2078 = vpop.f32.mrb[0].mxu0
      %v2079 = vadd.f32 0.0, %v2078
      %v2080 = vpop.f32.mrb[0].mxu0
      %v2081 = vpop.f32.mrb[0].mxu0
      %v2082 = vadd.f32 0.0, %v2081
      %v2083 = vpop.f32.mrb[0].mxu0
      %2084 = vmatprep.mubr.bf16.mxu0 0
      %2085 = vmatmul.mubr.bf16.gmra.mrb[0].mxu0 %v1055
      %v2086 = vpop.f32.mrb[0].mxu0
      %v2087 = vadd.f32 0.0, %v2086
      %v2088 = vpop.f32.mrb[0].mxu0
      %v2089 = vpop.f32.mrb[0].mxu0
      %v2090 = vadd.f32 0.0, %v2089
      %v2091 = vpop.f32.mrb[0].mxu0
      %2092 = vmatprep.mubr.bf16.mxu0 0
      %2093 = vmatmul.mubr.bf16.gmra.mrb[0].mxu0 %v1056
      %v2094 = vpop.f32.mrb[0].mxu0
      %v2095 = vadd.f32 0.0, %v2094
      %v2096 = vpop.f32.mrb[0].mxu0
      %v2097 = vpop.f32.mrb[0].mxu0
      %v2098 = vadd.f32 0.0, %v2097
      %v2099 = vpop.f32.mrb[0].mxu0
      %2100 = vmatprep.mubr.bf16.mxu0 0
      %2101 = vmatmul.mubr.bf16.gmra.mrb[0].mxu0 %v1057
      %v2102 = vpop.f32.mrb[0].mxu0
      %v2103 = vadd.f32 0.0, %v2102
      %v2104 = vpop.f32.mrb[0].mxu0
      %v2105 = vpop.f32.mrb[0].mxu0
      %v2106 = vadd.f32 0.0, %v2105
      %v2107 = vpop.f32.mrb[0].mxu0
      %2108 = vmatprep.mubr.bf16.mxu0 0
      %2109 = vmatmul.mubr.bf16.gmra.mrb[0].mxu0 %v1058
      %v2110 = vpop.f32.mrb[0].mxu0
      %v2111 = vadd.f32 0.0, %v2110
      %v2112 = vpop.f32.mrb[0].mxu0
      %v2113 = vpop.f32.mrb[0].mxu0
      %v2114 = vadd.f32 0.0, %v2113
      %v2115 = vpop.f32.mrb[0].mxu0
      %2116 = vmatprep.mubr.bf16.mxu0 0
      %2117 = vmatmul.mubr.bf16.gmra.mrb[0].mxu0 %v1059
      %v2118 = vpop.f32.mrb[0].mxu0
      %v2119 = vadd.f32 0.0, %v2118
      %v2120 = vpop.f32.mrb[0].mxu0
      %v2121 = vpop.f32.mrb[0].mxu0
      %v2122 = vadd.f32 0.0, %v2121
      %v2123 = vpop.f32.mrb[0].mxu0
      %2124 = vmatprep.mubr.bf16.mxu0 0
      %2125 = vmatmul.mubr.bf16.gmra.mrb[0].mxu0 %v1060
      %v2126 = vpop.f32.mrb[0].mxu0
      %v2127 = vadd.f32 0.0, %v2126
      %v2128 = vpop.f32.mrb[0].mxu0
      %v2129 = vpop.f32.mrb[0].mxu0
      %v2130 = vadd.f32 0.0, %v2129
      %v2131 = vpop.f32.mrb[0].mxu0
      %2132 = vmatprep.mubr.bf16.mxu0 0
      %2133 = vmatmul.mubr.bf16.gmra.mrb[0].mxu0 %v1061
      %v2134 = vpop.f32.mrb[0].mxu0
      %v2135 = vadd.f32 0.0, %v2134
      %v2136 = vpop.f32.mrb[0].mxu0
      %v2137 = vpop.f32.mrb[0].mxu0
      %v2138 = vadd.f32 0.0, %v2137
      %v2139 = vpop.f32.mrb[0].mxu0
      %2140 = vmatprep.mubr.bf16.mxu0 0
      %2141 = vmatmul.mubr.bf16.gmra.mrb[0].mxu0 %v1062
      %v2142 = vpop.f32.mrb[0].mxu0
      %v2143 = vadd.f32 0.0, %v2142
      %v2144 = vpop.f32.mrb[0].mxu0
      %v2145 = vpop.f32.mrb[0].mxu0
      %v2146 = vadd.f32 0.0, %v2145
      %v2147 = vpop.f32.mrb[0].mxu0
      %2148 = vmatprep.mubr.bf16.mxu0 0
      %2149 = vmatmul.mubr.bf16.gmra.mrb[0].mxu0 %v1063
      %v2150 = vpop.f32.mrb[0].mxu0
      %v2151 = vadd.f32 0.0, %v2150
      %v2152 = vpop.f32.mrb[0].mxu0
      %v2153 = vpop.f32.mrb[0].mxu0
      %v2154 = vadd.f32 0.0, %v2153
      %v2155 = vpop.f32.mrb[0].mxu0
      %2156 = vmatprep.mubr.bf16.mxu0 0
      %2157 = vmatmul.mubr.bf16.gmra.mrb[0].mxu0 %v1064
      %v2158 = vpop.f32.mrb[0].mxu0
      %v2159 = vadd.f32 0.0, %v2158
      %v2160 = vpop.f32.mrb[0].mxu0
      %v2161 = vpop.f32.mrb[0].mxu0
      %v2162 = vadd.f32 0.0, %v2161
      %v2163 = vpop.f32.mrb[0].mxu0
      %2164 = vmatprep.mubr.bf16.mxu0 0
      %2165 = vmatmul.mubr.bf16.gmra.mrb[0].mxu0 %v1065
      %v2166 = vpop.f32.mrb[0].mxu0
      %v2167 = vadd.f32 0.0, %v2166
      %v2168 = vpop.f32.mrb[0].mxu0
      %v2169 = vpop.f32.mrb[0].mxu0
      %v2170 = vadd.f32 0.0, %v2169
      %v2171 = vpop.f32.mrb[0].mxu0
      %2172 = vmatprep.mubr.bf16.mxu0 0
      %2173 = vmatmul.mubr.bf16.gmra.mrb[0].mxu0 %v1066
      %v2174 = vpop.f32.mrb[0].mxu0
      %v2175 = vadd.f32 0.0, %v2174
      %v2176 = vpop.f32.mrb[0].mxu0
      %v2177 = vpop.f32.mrb[0].mxu0
      %v2178 = vadd.f32 0.0, %v2177
      %v2179 = vpop.f32.mrb[0].mxu0
      %2180 = vmatprep.mubr.bf16.mxu0 0
      %2181 = vmatmul.mubr.bf16.gmra.mrb[0].mxu0 %v1067
      %v2182 = vpop.f32.mrb[0].mxu0
      %v2183 = vadd.f32 0.0, %v2182
      %v2184 = vpop.f32.mrb[0].mxu0
      %v2185 = vpop.f32.mrb[0].mxu0
      %v2186 = vadd.f32 0.0, %v2185
      %v2187 = vpop.f32.mrb[0].mxu0
      %2188 = vmatprep.mubr.bf16.mxu0 0
      %2189 = vmatmul.mubr.bf16.gmra.mrb[0].mxu0 %v1068
      %v2190 = vpop.f32.mrb[0].mxu0
      %v2191 = vadd.f32 0.0, %v2190
      %v2192 = vpop.f32.mrb[0].mxu0
      %v2193 = vpop.f32.mrb[0].mxu0
      %v2194 = vadd.f32 0.0, %v2193
      %v2195 = vpop.f32.mrb[0].mxu0
      %2196 = vmatprep.mubr.bf16.mxu0 0
      %2197 = vmatmul.mubr.bf16.gmra.mrb[0].mxu0 %v1069
      %v2198 = vpop.f32.mrb[0].mxu0
      %v2199 = vadd.f32 0.0, %v2198
      %v2200 = vpop.f32.mrb[0].mxu0
      %v2201 = vpop.f32.mrb[0].mxu0
      %v2202 = vadd.f32 0.0, %v2201
      %v2203 = vpop.f32.mrb[0].mxu0
      %2204 = vmatprep.mubr.bf16.mxu0 0
      %2205 = vmatmul.mubr.bf16.gmra.mrb[0].mxu0 %v1070
      %v2206 = vpop.f32.mrb[0].mxu0
      %v2207 = vadd.f32 0.0, %v2206
      %v2208 = vpop.f32.mrb[0].mxu0
      %v2209 = vpop.f32.mrb[0].mxu0
      %v2210 = vadd.f32 0.0, %v2209
      %v2211 = vpop.f32.mrb[0].mxu0
      %2212 = vmatprep.mubr.bf16.mxu0 0
      %2213 = vmatmul.mubr.bf16.gmra.mrb[0].mxu0 %v1071
      %v2214 = vpop.f32.mrb[0].mxu0
      %v2215 = vadd.f32 0.0, %v2214
      %v2216 = vpop.f32.mrb[0].mxu0
      %v2217 = vpop.f32.mrb[0].mxu0
      %v2218 = vadd.f32 0.0, %v2217
      %v2219 = vpop.f32.mrb[0].mxu0
      %2220 = vmatprep.mubr.bf16.mxu0 0
      %2221 = vmatmul.mubr.bf16.gmra.mrb[0].mxu0 %v1072
      %v2222 = vpop.f32.mrb[0].mxu0
      %v2223 = vadd.f32 0.0, %v2222
      %v2224 = vpop.f32.mrb[0].mxu0
      %v2225 = vpop.f32.mrb[0].mxu0
      %v2226 = vadd.f32 0.0, %v2225
      %v2227 = vpop.f32.mrb[0].mxu0
      %2228 = vmatprep.mubr.bf16.mxu0 0
      %2229 = vmatmul.mubr.bf16.gmra.mrb[0].mxu0 %v1073
      %v2230 = vpop.f32.mrb[0].mxu0
      %v2231 = vadd.f32 0.0, %v2230
      %v2232 = vpop.f32.mrb[0].mxu0
      %v2233 = vpop.f32.mrb[0].mxu0
      %v2234 = vadd.f32 0.0, %v2233
      %v2235 = vpop.f32.mrb[0].mxu0
      %2236 = vmatprep.mubr.bf16.mxu0 0
      %2237 = vmatmul.mubr.bf16.gmra.mrb[0].mxu0 %v1074
      %v2238 = vpop.f32.mrb[0].mxu0
      %v2239 = vadd.f32 0.0, %v2238
      %v2240 = vpop.f32.mrb[0].mxu0
      %v2241 = vpop.f32.mrb[0].mxu0
      %v2242 = vadd.f32 0.0, %v2241
      %v2243 = vpop.f32.mrb[0].mxu0
      %2244 = vmatprep.mubr.bf16.mxu0 0
      %2245 = vmatmul.mubr.bf16.gmra.mrb[0].mxu0 %v1075
      %v2246 = vpop.f32.mrb[0].mxu0
      %v2247 = vadd.f32 0.0, %v2246
      %v2248 = vpop.f32.mrb[0].mxu0
      %v2249 = vpop.f32.mrb[0].mxu0
      %v2250 = vadd.f32 0.0, %v2249
      %v2251 = vpop.f32.mrb[0].mxu0
      %2252 = vmatprep.mubr.bf16.mxu0 0
      %2253 = vmatmul.mubr.bf16.gmra.mrb[0].mxu0 %v1076
      %v2254 = vpop.f32.mrb[0].mxu0
      %v2255 = vadd.f32 0.0, %v2254
      %v2256 = vpop.f32.mrb[0].mxu0
      %v2257 = vpop.f32.mrb[0].mxu0
      %v2258 = vadd.f32 0.0, %v2257
      %v2259 = vpop.f32.mrb[0].mxu0
      %2260 = vmatprep.mubr.bf16.mxu0 0
      %2261 = vmatmul.mubr.bf16.gmra.mrb[0].mxu0 %v1077
      %v2262 = vpop.f32.mrb[0].mxu0
      %v2263 = vadd.f32 0.0, %v2262
      %v2264 = vpop.f32.mrb[0].mxu0
      %v2265 = vpop.f32.mrb[0].mxu0
      %v2266 = vadd.f32 0.0, %v2265
      %v2267 = vpop.f32.mrb[0].mxu0
      %2268 = vmatprep.mubr.bf16.mxu0 0
      %2269 = vmatmul.mubr.bf16.gmra.mrb[0].mxu0 %v1078
      %v2270 = vpop.f32.mrb[0].mxu0
      %v2271 = vadd.f32 0.0, %v2270
      %v2272 = vpop.f32.mrb[0].mxu0
      %v2273 = vpop.f32.mrb[0].mxu0
      %v2274 = vadd.f32 0.0, %v2273
      %v2275 = vpop.f32.mrb[0].mxu0
      %2276 = vmatprep.mubr.bf16.mxu0 0
      %2277 = vmatmul.mubr.bf16.gmra.mrb[0].mxu0 %v1079
      %v2278 = vpop.f32.mrb[0].mxu0
      %v2279 = vadd.f32 0.0, %v2278
      %v2280 = vpop.f32.mrb[0].mxu0
      %v2281 = vpop.f32.mrb[0].mxu0
      %v2282 = vadd.f32 0.0, %v2281
      %v2283 = vpop.f32.mrb[0].mxu0
      %2284 = vmatprep.mubr.bf16.mxu0 0
      %2285 = vmatmul.mubr.bf16.gmra.mrb[0].mxu0 %v1080
      %v2286 = vpop.f32.mrb[0].mxu0
      %v2287 = vadd.f32 0.0, %v2286
      %v2288 = vpop.f32.mrb[0].mxu0
      %v2289 = vpop.f32.mrb[0].mxu0
      %v2290 = vadd.f32 0.0, %v2289
      %v2291 = vpop.f32.mrb[0].mxu0
      %2292 = vmatprep.mubr.bf16.mxu0 0
      %2293 = vmatmul.mubr.bf16.gmra.mrb[0].mxu0 %v1081
      %v2294 = vpop.f32.mrb[0].mxu0
      %v2295 = vadd.f32 0.0, %v2294
      %v2296 = vpop.f32.mrb[0].mxu0
      %v2297 = vpop.f32.mrb[0].mxu0
      %v2298 = vadd.f32 0.0, %v2297
      %v2299 = vpop.f32.mrb[0].mxu0
      %2300 = vmatprep.mubr.bf16.mxu0 0
      %2301 = vmatmul.mubr.bf16.gmra.mrb[0].mxu0 %v1082
      %v2302 = vpop.f32.mrb[0].mxu0
      %v2303 = vadd.f32 0.0, %v2302
      %v2304 = vpop.f32.mrb[0].mxu0
      %v2305 = vpop.f32.mrb[0].mxu0
      %v2306 = vadd.f32 0.0, %v2305
      %v2307 = vpop.f32.mrb[0].mxu0
      %2308 = vmatprep.mubr.bf16.mxu0 0
      %2309 = vmatmul.mubr.bf16.gmra.mrb[0].mxu0 %v1083
      %v2310 = vpop.f32.mrb[0].mxu0
      %v2311 = vadd.f32 0.0, %v2310
      %v2312 = vpop.f32.mrb[0].mxu0
      %v2313 = vpop.f32.mrb[0].mxu0
      %v2314 = vadd.f32 0.0, %v2313
      %v2315 = vpop.f32.mrb[0].mxu0
      %2316 = vmatprep.mubr.bf16.mxu0 0
      %2317 = vmatmul.mubr.bf16.gmra.mrb[0].mxu0 %v1084
      %v2318 = vpop.f32.mrb[0].mxu0
      %v2319 = vadd.f32 0.0, %v2318
      %v2320 = vpop.f32.mrb[0].mxu0
      %v2321 = vpop.f32.mrb[0].mxu0
      %v2322 = vadd.f32 0.0, %v2321
      %v2323 = vpop.f32.mrb[0].mxu0
      %2324 = vmatprep.mubr.bf16.mxu0 0
      %2325 = vmatmul.mubr.bf16.gmra.mrb[0].mxu0 %v1085
      %v2326 = vpop.f32.mrb[0].mxu0
      %v2327 = vadd.f32 0.0, %v2326
      %v2328 = vpop.f32.mrb[0].mxu0
      %v2329 = vpop.f32.mrb[0].mxu0
      %v2330 = vadd.f32 0.0, %v2329
      %v2331 = vpop.f32.mrb[0].mxu0
      %2332 = vmatprep.mubr.bf16.mxu0 0
      %2333 = vmatmul.mubr.bf16.gmra.mrb[0].mxu0 %v1086
      %v2334 = vpop.f32.mrb[0].mxu0
      %v2335 = vadd.f32 0.0, %v2334
      %v2336 = vpop.f32.mrb[0].mxu0
      %v2337 = vpop.f32.mrb[0].mxu0
      %v2338 = vadd.f32 0.0, %v2337
      %v2339 = vpop.f32.mrb[0].mxu0
      %2340 = vmatprep.mubr.bf16.mxu0 0
      %2341 = vmatmul.mubr.bf16.gmra.mrb[0].mxu0 %v1087
      %v2342 = vpop.f32.mrb[0].mxu0
      %v2343 = vadd.f32 0.0, %v2342
      %v2344 = vpop.f32.mrb[0].mxu0
      %v2345 = vpop.f32.mrb[0].mxu0
      %v2346 = vadd.f32 0.0, %v2345
      %v2347 = vpop.f32.mrb[0].mxu0
      %2348 = vmatprep.mubr.bf16.mxu0 0
      %2349 = vmatmul.mubr.bf16.gmra.mrb[0].mxu0 %v1088
      %v2350 = vpop.f32.mrb[0].mxu0
      %v2351 = vadd.f32 0.0, %v2350
      %v2352 = vpop.f32.mrb[0].mxu0
      %v2353 = vpop.f32.mrb[0].mxu0
      %v2354 = vadd.f32 0.0, %v2353
      %v2355 = vpop.f32.mrb[0].mxu0
      %2356 = vmatprep.mubr.bf16.mxu0 0
      %2357 = vmatmul.mubr.bf16.gmra.mrb[0].mxu0 %v1089
      %v2358 = vpop.f32.mrb[0].mxu0
      %v2359 = vadd.f32 0.0, %v2358
      %v2360 = vpop.f32.mrb[0].mxu0
      %v2361 = vpop.f32.mrb[0].mxu0
      %v2362 = vadd.f32 0.0, %v2361
      %v2363 = vpop.f32.mrb[0].mxu0
      %2364 = vmatprep.mubr.bf16.mxu0 0
      %2365 = vmatmul.mubr.bf16.gmra.mrb[0].mxu0 %v1090
      %v2366 = vpop.f32.mrb[0].mxu0
      %v2367 = vadd.f32 0.0, %v2366
      %v2368 = vpop.f32.mrb[0].mxu0
      %v2369 = vpop.f32.mrb[0].mxu0
      %v2370 = vadd.f32 0.0, %v2369
      %v2371 = vpop.f32.mrb[0].mxu0
      %2372 = vmatprep.mubr.bf16.mxu0 0
      %2373 = vmatmul.mubr.bf16.gmra.mrb[0].mxu0 %v1091
      %v2374 = vpop.f32.mrb[0].mxu0
      %v2375 = vadd.f32 0.0, %v2374
      %v2376 = vpop.f32.mrb[0].mxu0
      %v2377 = vpop.f32.mrb[0].mxu0
      %v2378 = vpop.f32.mrb[0].mxu0
      %2379 = vdwg.mxu0
      %2380 = vmatprep.subr.bf16.mxu0 0
      %2381 = vmatpush1.bf16.msra.mxu0 %v1828
      %2382 = vmatprep.subr.bf16.mxu0 0
      %2383 = vmatpush1.bf16.msra.mxu0 %v1829
      %2384 = vmatprep.subr.bf16.mxu0 0
      %2385 = vmatpush1.bf16.msra.mxu0 %v1830
      %2386 = vmatprep.subr.bf16.mxu0 0
      %2387 = vmatpush1.bf16.msra.mxu0 %v1831
      %2388 = vmatprep.subr.bf16.mxu0 0
      %2389 = vmatpush1.bf16.msra.mxu0 %v1832
      %2390 = vmatprep.subr.bf16.mxu0 0
      %2391 = vmatpush1.bf16.msra.mxu0 %v1833
      %2392 = vmatprep.subr.bf16.mxu0 0
      %2393 = vmatpush1.bf16.msra.mxu0 %v1834
      %2394 = vmatprep.subr.bf16.mxu0 0
      %2395 = vmatpush1.bf16.msra.mxu0 %v1835
      %2396 = vmatprep.subr.bf16.mxu0 0
      %2397 = vmatpush1.bf16.msra.mxu0 0
      %2398 = vmatprep.subr.bf16.mxu0 0
      %2399 = vmatpush1.bf16.msra.mxu0 0
      %2400 = vmatprep.subr.bf16.mxu0 0
      %2401 = vmatpush1.bf16.msra.mxu0 0
      %2402 = vmatprep.subr.bf16.mxu0 0
      %2403 = vmatpush1.bf16.msra.mxu0 0
      %2404 = vmatprep.subr.bf16.mxu0 0
      %2405 = vmatpush1.bf16.msra.mxu0 0
      %2406 = vmatprep.subr.bf16.mxu0 0
      %2407 = vmatpush1.bf16.msra.mxu0 0
      %2408 = vmatprep.subr.bf16.mxu0 0
      %2409 = vmatpush1.bf16.msra.mxu0 0
      %2410 = vmatprep.subr.bf16.mxu0 0
      %2411 = vmatpush1.bf16.msra.mxu0 0
      %2412 = vmatprep.mubr.bf16.mxu0 0
      %2413 = vmatmul.mubr.bf16.gmra.mrb[0].mxu0 %v1717
      %v2414 = vpop.f32.mrb[0].mxu0
      %v2415 = vadd.f32 0.0, %v2414
      %v2416 = vpop.f32.mrb[0].mxu0
      %v2417 = vpop.f32.mrb[0].mxu0
      %v2418 = vadd.f32 0.0, %v2417
      %v2419 = vpop.f32.mrb[0].mxu0
      %2420 = vmatprep.mubr.bf16.mxu0 0
      %2421 = vmatmul.mubr.bf16.gmra.mrb[0].mxu0 %v1718
      %v2422 = vpop.f32.mrb[0].mxu0
      %v2423 = vadd.f32 0.0, %v2422
      %v2424 = vpop.f32.mrb[0].mxu0
      %v2425 = vpop.f32.mrb[0].mxu0
      %v2426 = vadd.f32 0.0, %v2425
      %v2427 = vpop.f32.mrb[0].mxu0
      %2428 = vmatprep.mubr.bf16.mxu0 0
      %2429 = vmatmul.mubr.bf16.gmra.mrb[0].mxu0 %v1719
      %v2430 = vpop.f32.mrb[0].mxu0
      %v2431 = vadd.f32 0.0, %v2430
      %v2432 = vpop.f32.mrb[0].mxu0
      %v2433 = vpop.f32.mrb[0].mxu0
      %v2434 = vadd.f32 0.0, %v2433
      %v2435 = vpop.f32.mrb[0].mxu0
      %2436 = vmatprep.mubr.bf16.mxu0 0
      %2437 = vmatmul.mubr.bf16.gmra.mrb[0].mxu0 %v1720
      %v2438 = vpop.f32.mrb[0].mxu0
      %v2439 = vadd.f32 0.0, %v2438
      %v2440 = vpop.f32.mrb[0].mxu0
      %v2441 = vpop.f32.mrb[0].mxu0
      %v2442 = vadd.f32 0.0, %v2441
      %v2443 = vpop.f32.mrb[0].mxu0
      %2444 = vmatprep.mubr.bf16.mxu0 0
      %2445 = vmatmul.mubr.bf16.gmra.mrb[0].mxu0 %v1721
      %v2446 = vpop.f32.mrb[0].mxu0
      %v2447 = vadd.f32 0.0, %v2446
      %v2448 = vpop.f32.mrb[0].mxu0
      %v2449 = vpop.f32.mrb[0].mxu0
      %v2450 = vadd.f32 0.0, %v2449
      %v2451 = vpop.f32.mrb[0].mxu0
      %2452 = vmatprep.mubr.bf16.mxu0 0
      %2453 = vmatmul.mubr.bf16.gmra.mrb[0].mxu0 %v1722
      %v2454 = vpop.f32.mrb[0].mxu0
      %v2455 = vadd.f32 0.0, %v2454
      %v2456 = vpop.f32.mrb[0].mxu0
      %v2457 = vpop.f32.mrb[0].mxu0
      %v2458 = vadd.f32 0.0, %v2457
      %v2459 = vpop.f32.mrb[0].mxu0
      %2460 = vmatprep.mubr.bf16.mxu0 0
      %2461 = vmatmul.mubr.bf16.gmra.mrb[0].mxu0 %v1723
      %v2462 = vpop.f32.mrb[0].mxu0
      %v2463 = vadd.f32 0.0, %v2462
      %v2464 = vpop.f32.mrb[0].mxu0
      %v2465 = vpop.f32.mrb[0].mxu0
      %v2466 = vadd.f32 0.0, %v2465
      %v2467 = vpop.f32.mrb[0].mxu0
      %2468 = vmatprep.mubr.bf16.mxu0 0
      %2469 = vmatmul.mubr.bf16.gmra.mrb[0].mxu0 %v1724
      %v2470 = vpop.f32.mrb[0].mxu0
      %v2471 = vadd.f32 0.0, %v2470
      %v2472 = vpop.f32.mrb[0].mxu0
      %v2473 = vpop.f32.mrb[0].mxu0
      %v2474 = vadd.f32 0.0, %v2473
      %v2475 = vpop.f32.mrb[0].mxu0
      %2476 = vmatprep.mubr.bf16.mxu0 0
      %2477 = vmatmul.mubr.bf16.gmra.mrb[0].mxu0 %v1725
      %v2478 = vpop.f32.mrb[0].mxu0
      %v2479 = vadd.f32 0.0, %v2478
      %v2480 = vpop.f32.mrb[0].mxu0
      %v2481 = vpop.f32.mrb[0].mxu0
      %v2482 = vadd.f32 0.0, %v2481
      %v2483 = vpop.f32.mrb[0].mxu0
      %2484 = vmatprep.mubr.bf16.mxu0 0
      %2485 = vmatmul.mubr.bf16.gmra.mrb[0].mxu0 %v1726
      %v2486 = vpop.f32.mrb[0].mxu0
      %v2487 = vadd.f32 0.0, %v2486
      %v2488 = vpop.f32.mrb[0].mxu0
      %v2489 = vpop.f32.mrb[0].mxu0
      %v2490 = vadd.f32 0.0, %v2489
      %v2491 = vpop.f32.mrb[0].mxu0
      %2492 = vmatprep.mubr.bf16.mxu0 0
      %2493 = vmatmul.mubr.bf16.gmra.mrb[0].mxu0 %v1727
      %v2494 = vpop.f32.mrb[0].mxu0
      %v2495 = vadd.f32 0.0, %v2494
      %v2496 = vpop.f32.mrb[0].mxu0
      %v2497 = vpop.f32.mrb[0].mxu0
      %v2498 = vadd.f32 0.0, %v2497
      %v2499 = vpop.f32.mrb[0].mxu0
      %2500 = vmatprep.mubr.bf16.mxu0 0
      %2501 = vmatmul.mubr.bf16.gmra.mrb[0].mxu0 %v1728
      %v2502 = vpop.f32.mrb[0].mxu0
      %v2503 = vadd.f32 0.0, %v2502
      %v2504 = vpop.f32.mrb[0].mxu0
      %v2505 = vpop.f32.mrb[0].mxu0
      %v2506 = vadd.f32 0.0, %v2505
      %v2507 = vpop.f32.mrb[0].mxu0
      %2508 = vmatprep.mubr.bf16.mxu0 0
      %2509 = vmatmul.mubr.bf16.gmra.mrb[0].mxu0 %v1729
      %v2510 = vpop.f32.mrb[0].mxu0
      %v2511 = vadd.f32 0.0, %v2510
      %v2512 = vpop.f32.mrb[0].mxu0
      %v2513 = vpop.f32.mrb[0].mxu0
      %v2514 = vadd.f32 0.0, %v2513
      %v2515 = vpop.f32.mrb[0].mxu0
      %2516 = vmatprep.mubr.bf16.mxu0 0
      %2517 = vmatmul.mubr.bf16.gmra.mrb[0].mxu0 %v1730
      %v2518 = vpop.f32.mrb[0].mxu0
      %v2519 = vadd.f32 0.0, %v2518
      %v2520 = vpop.f32.mrb[0].mxu0
      %v2521 = vpop.f32.mrb[0].mxu0
      %v2522 = vadd.f32 0.0, %v2521
      %v2523 = vpop.f32.mrb[0].mxu0
      %2524 = vmatprep.mubr.bf16.mxu0 0
      %2525 = vmatmul.mubr.bf16.gmra.mrb[0].mxu0 %v1731
      %v2526 = vpop.f32.mrb[0].mxu0
      %v2527 = vadd.f32 0.0, %v2526
      %v2528 = vpop.f32.mrb[0].mxu0
      %v2529 = vpop.f32.mrb[0].mxu0
      %v2530 = vadd.f32 0.0, %v2529
      %v2531 = vpop.f32.mrb[0].mxu0
      %2532 = vmatprep.mubr.bf16.mxu0 0
      %2533 = vmatmul.mubr.bf16.gmra.mrb[0].mxu0 %v1732
      %v2534 = vpop.f32.mrb[0].mxu0
      %v2535 = vadd.f32 0.0, %v2534
      %v2536 = vpop.f32.mrb[0].mxu0
      %v2537 = vpop.f32.mrb[0].mxu0
      %v2538 = vadd.f32 0.0, %v2537
      %v2539 = vpop.f32.mrb[0].mxu0
      %2540 = vmatprep.mubr.bf16.mxu0 0
      %2541 = vmatmul.mubr.bf16.gmra.mrb[0].mxu0 %v1733
      %v2542 = vpop.f32.mrb[0].mxu0
      %v2543 = vadd.f32 0.0, %v2542
      %v2544 = vpop.f32.mrb[0].mxu0
      %v2545 = vpop.f32.mrb[0].mxu0
      %v2546 = vadd.f32 0.0, %v2545
      %v2547 = vpop.f32.mrb[0].mxu0
      %2548 = vmatprep.mubr.bf16.mxu0 0
      %2549 = vmatmul.mubr.bf16.gmra.mrb[0].mxu0 %v1734
      %v2550 = vpop.f32.mrb[0].mxu0
      %v2551 = vadd.f32 0.0, %v2550
      %v2552 = vpop.f32.mrb[0].mxu0
      %v2553 = vpop.f32.mrb[0].mxu0
      %v2554 = vadd.f32 0.0, %v2553
      %v2555 = vpop.f32.mrb[0].mxu0
      %2556 = vmatprep.mubr.bf16.mxu0 0
      %2557 = vmatmul.mubr.bf16.gmra.mrb[0].mxu0 %v1735
      %v2558 = vpop.f32.mrb[0].mxu0
      %v2559 = vadd.f32 0.0, %v2558
      %v2560 = vpop.f32.mrb[0].mxu0
      %v2561 = vpop.f32.mrb[0].mxu0
      %v2562 = vadd.f32 0.0, %v2561
      %v2563 = vpop.f32.mrb[0].mxu0
      %2564 = vmatprep.mubr.bf16.mxu0 0
      %2565 = vmatmul.mubr.bf16.gmra.mrb[0].mxu0 %v1736
      %v2566 = vpop.f32.mrb[0].mxu0
      %v2567 = vadd.f32 0.0, %v2566
      %v2568 = vpop.f32.mrb[0].mxu0
      %v2569 = vpop.f32.mrb[0].mxu0
      %v2570 = vadd.f32 0.0, %v2569
      %v2571 = vpop.f32.mrb[0].mxu0
      %2572 = vmatprep.mubr.bf16.mxu0 0
      %2573 = vmatmul.mubr.bf16.gmra.mrb[0].mxu0 %v1737
      %v2574 = vpop.f32.mrb[0].mxu0
      %v2575 = vadd.f32 0.0, %v2574
      %v2576 = vpop.f32.mrb[0].mxu0
      %v2577 = vpop.f32.mrb[0].mxu0
      %v2578 = vadd.f32 0.0, %v2577
      %v2579 = vpop.f32.mrb[0].mxu0
      %2580 = vmatprep.mubr.bf16.mxu0 0
      %2581 = vmatmul.mubr.bf16.gmra.mrb[0].mxu0 %v1738
      %v2582 = vpop.f32.mrb[0].mxu0
      %v2583 = vadd.f32 0.0, %v2582
      %v2584 = vpop.f32.mrb[0].mxu0
      %v2585 = vpop.f32.mrb[0].mxu0
      %v2586 = vadd.f32 0.0, %v2585
      %v2587 = vpop.f32.mrb[0].mxu0
      %2588 = vmatprep.mubr.bf16.mxu0 0
      %2589 = vmatmul.mubr.bf16.gmra.mrb[0].mxu0 %v1739
      %v2590 = vpop.f32.mrb[0].mxu0
      %v2591 = vadd.f32 0.0, %v2590
      %v2592 = vpop.f32.mrb[0].mxu0
      %v2593 = vpop.f32.mrb[0].mxu0
      %v2594 = vadd.f32 0.0, %v2593
      %v2595 = vpop.f32.mrb[0].mxu0
      %2596 = vmatprep.mubr.bf16.mxu0 0
      %2597 = vmatmul.mubr.bf16.gmra.mrb[0].mxu0 %v1740
      %v2598 = vpop.f32.mrb[0].mxu0
      %v2599 = vadd.f32 0.0, %v2598
      %v2600 = vpop.f32.mrb[0].mxu0
      %v2601 = vpop.f32.mrb[0].mxu0
      %v2602 = vadd.f32 0.0, %v2601
      %v2603 = vpop.f32.mrb[0].mxu0
      %2604 = vmatprep.mubr.bf16.mxu0 0
      %2605 = vmatmul.mubr.bf16.gmra.mrb[0].mxu0 %v1741
      %v2606 = vpop.f32.mrb[0].mxu0
      %v2607 = vadd.f32 0.0, %v2606
      %v2608 = vpop.f32.mrb[0].mxu0
      %v2609 = vpop.f32.mrb[0].mxu0
      %v2610 = vadd.f32 0.0, %v2609
      %v2611 = vpop.f32.mrb[0].mxu0
      %2612 = vmatprep.mubr.bf16.mxu0 0
      %2613 = vmatmul.mubr.bf16.gmra.mrb[0].mxu0 %v1742
      %v2614 = vpop.f32.mrb[0].mxu0
      %v2615 = vadd.f32 0.0, %v2614
      %v2616 = vpop.f32.mrb[0].mxu0
      %v2617 = vpop.f32.mrb[0].mxu0
      %v2618 = vadd.f32 0.0, %v2617
      %v2619 = vpop.f32.mrb[0].mxu0
      %2620 = vmatprep.mubr.bf16.mxu0 0
      %2621 = vmatmul.mubr.bf16.gmra.mrb[0].mxu0 %v1743
      %v2622 = vpop.f32.mrb[0].mxu0
      %v2623 = vadd.f32 0.0, %v2622
      %v2624 = vpop.f32.mrb[0].mxu0
      %v2625 = vpop.f32.mrb[0].mxu0
      %v2626 = vadd.f32 0.0, %v2625
      %v2627 = vpop.f32.mrb[0].mxu0
      %2628 = vmatprep.mubr.bf16.mxu0 0
      %2629 = vmatmul.mubr.bf16.gmra.mrb[0].mxu0 %v1744
      %v2630 = vpop.f32.mrb[0].mxu0
      %v2631 = vadd.f32 0.0, %v2630
      %v2632 = vpop.f32.mrb[0].mxu0
      %v2633 = vpop.f32.mrb[0].mxu0
      %v2634 = vadd.f32 0.0, %v2633
      %v2635 = vpop.f32.mrb[0].mxu0
      %2636 = vmatprep.mubr.bf16.mxu0 0
      %2637 = vmatmul.mubr.bf16.gmra.mrb[0].mxu0 %v1745
      %v2638 = vpop.f32.mrb[0].mxu0
      %v2639 = vadd.f32 0.0, %v2638
      %v2640 = vpop.f32.mrb[0].mxu0
      %v2641 = vpop.f32.mrb[0].mxu0
      %v2642 = vadd.f32 0.0, %v2641
      %v2643 = vpop.f32.mrb[0].mxu0
      %2644 = vmatprep.mubr.bf16.mxu0 0
      %2645 = vmatmul.mubr.bf16.gmra.mrb[0].mxu0 %v1746
      %v2646 = vpop.f32.mrb[0].mxu0
      %v2647 = vadd.f32 0.0, %v2646
      %v2648 = vpop.f32.mrb[0].mxu0
      %v2649 = vpop.f32.mrb[0].mxu0
      %v2650 = vadd.f32 0.0, %v2649
      %v2651 = vpop.f32.mrb[0].mxu0
      %2652 = vmatprep.mubr.bf16.mxu0 0
      %2653 = vmatmul.mubr.bf16.gmra.mrb[0].mxu0 %v1747
      %v2654 = vpop.f32.mrb[0].mxu0
      %v2655 = vadd.f32 0.0, %v2654
      %v2656 = vpop.f32.mrb[0].mxu0
      %v2657 = vpop.f32.mrb[0].mxu0
      %v2658 = vadd.f32 0.0, %v2657
      %v2659 = vpop.f32.mrb[0].mxu0
      %2660 = vmatprep.mubr.bf16.mxu0 0
      %2661 = vmatmul.mubr.bf16.gmra.mrb[0].mxu0 %v1748
      %v2662 = vpop.f32.mrb[0].mxu0
      %v2663 = vadd.f32 0.0, %v2662
      %v2664 = vpop.f32.mrb[0].mxu0
      %v2665 = vpop.f32.mrb[0].mxu0
      %v2666 = vadd.f32 0.0, %v2665
      %v2667 = vpop.f32.mrb[0].mxu0
      %2668 = vmatprep.mubr.bf16.mxu0 0
      %2669 = vmatmul.mubr.bf16.gmra.mrb[0].mxu0 %v1749
      %v2670 = vpop.f32.mrb[0].mxu0
      %v2671 = vadd.f32 0.0, %v2670
      %v2672 = vpop.f32.mrb[0].mxu0
      %v2673 = vpop.f32.mrb[0].mxu0
      %v2674 = vadd.f32 0.0, %v2673
      %v2675 = vpop.f32.mrb[0].mxu0
      %2676 = vmatprep.mubr.bf16.mxu0 0
      %2677 = vmatmul.mubr.bf16.gmra.mrb[0].mxu0 %v1750
      %v2678 = vpop.f32.mrb[0].mxu0
      %v2679 = vadd.f32 0.0, %v2678
      %v2680 = vpop.f32.mrb[0].mxu0
      %v2681 = vpop.f32.mrb[0].mxu0
      %v2682 = vadd.f32 0.0, %v2681
      %v2683 = vpop.f32.mrb[0].mxu0
      %2684 = vmatprep.mubr.bf16.mxu0 0
      %2685 = vmatmul.mubr.bf16.gmra.mrb[0].mxu0 %v1751
      %v2686 = vpop.f32.mrb[0].mxu0
      %v2687 = vadd.f32 0.0, %v2686
      %v2688 = vpop.f32.mrb[0].mxu0
      %v2689 = vpop.f32.mrb[0].mxu0
      %v2690 = vadd.f32 0.0, %v2689
      %v2691 = vpop.f32.mrb[0].mxu0
      %2692 = vmatprep.mubr.bf16.mxu0 0
      %2693 = vmatmul.mubr.bf16.gmra.mrb[0].mxu0 %v1752
      %v2694 = vpop.f32.mrb[0].mxu0
      %v2695 = vadd.f32 0.0, %v2694
      %v2696 = vpop.f32.mrb[0].mxu0
      %v2697 = vpop.f32.mrb[0].mxu0
      %v2698 = vadd.f32 0.0, %v2697
      %v2699 = vpop.f32.mrb[0].mxu0
      %2700 = vmatprep.mubr.bf16.mxu0 0
      %2701 = vmatmul.mubr.bf16.gmra.mrb[0].mxu0 %v1753
      %v2702 = vpop.f32.mrb[0].mxu0
      %v2703 = vadd.f32 0.0, %v2702
      %v2704 = vpop.f32.mrb[0].mxu0
      %v2705 = vpop.f32.mrb[0].mxu0
      %v2706 = vadd.f32 0.0, %v2705
      %v2707 = vpop.f32.mrb[0].mxu0
      %2708 = vmatprep.mubr.bf16.mxu0 0
      %2709 = vmatmul.mubr.bf16.gmra.mrb[0].mxu0 %v1754
      %v2710 = vpop.f32.mrb[0].mxu0
      %v2711 = vadd.f32 0.0, %v2710
      %v2712 = vpop.f32.mrb[0].mxu0
      %v2713 = vpop.f32.mrb[0].mxu0
      %v2714 = vadd.f32 0.0, %v2713
      %v2715 = vpop.f32.mrb[0].mxu0
      %2716 = vmatprep.mubr.bf16.mxu0 0
      %2717 = vmatmul.mubr.bf16.gmra.mrb[0].mxu0 %v1755
      %v2718 = vpop.f32.mrb[0].mxu0
      %v2719 = vadd.f32 0.0, %v2718
      %v2720 = vpop.f32.mrb[0].mxu0
      %v2721 = vpop.f32.mrb[0].mxu0
      %v2722 = vadd.f32 0.0, %v2721
      %v2723 = vpop.f32.mrb[0].mxu0
      %2724 = vmatprep.mubr.bf16.mxu0 0
      %2725 = vmatmul.mubr.bf16.gmra.mrb[0].mxu0 %v1756
      %v2726 = vpop.f32.mrb[0].mxu0
      %v2727 = vadd.f32 0.0, %v2726
      %v2728 = vpop.f32.mrb[0].mxu0
      %v2729 = vpop.f32.mrb[0].mxu0
      %v2730 = vadd.f32 0.0, %v2729
      %v2731 = vpop.f32.mrb[0].mxu0
      %2732 = vmatprep.mubr.bf16.mxu0 0
      %2733 = vmatmul.mubr.bf16.gmra.mrb[0].mxu0 %v1757
      %v2734 = vpop.f32.mrb[0].mxu0
      %v2735 = vadd.f32 0.0, %v2734
      %v2736 = vpop.f32.mrb[0].mxu0
      %v2737 = vpop.f32.mrb[0].mxu0
      %v2738 = vadd.f32 0.0, %v2737
      %v2739 = vpop.f32.mrb[0].mxu0
      %2740 = vmatprep.mubr.bf16.mxu0 0
      %2741 = vmatmul.mubr.bf16.gmra.mrb[0].mxu0 %v1758
      %v2742 = vpop.f32.mrb[0].mxu0
      %v2743 = vadd.f32 0.0, %v2742
      %v2744 = vpop.f32.mrb[0].mxu0
      %v2745 = vpop.f32.mrb[0].mxu0
      %v2746 = vadd.f32 0.0, %v2745
      %v2747 = vpop.f32.mrb[0].mxu0
      %2748 = vmatprep.mubr.bf16.mxu0 0
      %2749 = vmatmul.mubr.bf16.gmra.mrb[0].mxu0 %v1759
      %v2750 = vpop.f32.mrb[0].mxu0
      %v2751 = vadd.f32 0.0, %v2750
      %v2752 = vpop.f32.mrb[0].mxu0
      %v2753 = vpop.f32.mrb[0].mxu0
      %v2754 = vadd.f32 0.0, %v2753
      %v2755 = vpop.f32.mrb[0].mxu0
      %2756 = vmatprep.mubr.bf16.mxu0 0
      %2757 = vmatmul.mubr.bf16.gmra.mrb[0].mxu0 %v1760
      %v2758 = vpop.f32.mrb[0].mxu0
      %v2759 = vadd.f32 0.0, %v2758
      %v2760 = vpop.f32.mrb[0].mxu0
      %v2761 = vpop.f32.mrb[0].mxu0
      %v2762 = vadd.f32 0.0, %v2761
      %v2763 = vpop.f32.mrb[0].mxu0
      %2764 = vmatprep.mubr.bf16.mxu0 0
      %2765 = vmatmul.mubr.bf16.gmra.mrb[0].mxu0 %v1761
      %v2766 = vpop.f32.mrb[0].mxu0
      %v2767 = vadd.f32 0.0, %v2766
      %v2768 = vpop.f32.mrb[0].mxu0
      %v2769 = vpop.f32.mrb[0].mxu0
      %v2770 = vadd.f32 0.0, %v2769
      %v2771 = vpop.f32.mrb[0].mxu0
      %2772 = vmatprep.mubr.bf16.mxu0 0
      %2773 = vmatmul.mubr.bf16.gmra.mrb[0].mxu0 %v1762
      %v2774 = vpop.f32.mrb[0].mxu0
      %v2775 = vadd.f32 0.0, %v2774
      %v2776 = vpop.f32.mrb[0].mxu0
      %v2777 = vpop.f32.mrb[0].mxu0
      %v2778 = vadd.f32 0.0, %v2777
      %v2779 = vpop.f32.mrb[0].mxu0
      %2780 = vmatprep.mubr.bf16.mxu0 0
      %2781 = vmatmul.mubr.bf16.gmra.mrb[0].mxu0 %v1763
      %v2782 = vpop.f32.mrb[0].mxu0
      %v2783 = vadd.f32 0.0, %v2782
      %v2784 = vpop.f32.mrb[0].mxu0
      %v2785 = vpop.f32.mrb[0].mxu0
      %v2786 = vadd.f32 0.0, %v2785
      %v2787 = vpop.f32.mrb[0].mxu0
      %2788 = vmatprep.mubr.bf16.mxu0 0
      %2789 = vmatmul.mubr.bf16.gmra.mrb[0].mxu0 %v1764
      %v2790 = vpop.f32.mrb[0].mxu0
      %v2791 = vadd.f32 0.0, %v2790
      %v2792 = vpop.f32.mrb[0].mxu0
      %v2793 = vpop.f32.mrb[0].mxu0
      %v2794 = vadd.f32 0.0, %v2793
      %v2795 = vpop.f32.mrb[0].mxu0
      %2796 = vmatprep.mubr.bf16.mxu0 0
      %2797 = vmatmul.mubr.bf16.gmra.mrb[0].mxu0 %v1765
      %v2798 = vpop.f32.mrb[0].mxu0
      %v2799 = vadd.f32 0.0, %v2798
      %v2800 = vpop.f32.mrb[0].mxu0
      %v2801 = vpop.f32.mrb[0].mxu0
      %v2802 = vadd.f32 0.0, %v2801
      %v2803 = vpop.f32.mrb[0].mxu0
      %2804 = vmatprep.mubr.bf16.mxu0 0
      %2805 = vmatmul.mubr.bf16.gmra.mrb[0].mxu0 %v1766
      %v2806 = vpop.f32.mrb[0].mxu0
      %v2807 = vadd.f32 0.0, %v2806
      %v2808 = vpop.f32.mrb[0].mxu0
      %v2809 = vpop.f32.mrb[0].mxu0
      %v2810 = vadd.f32 0.0, %v2809
      %v2811 = vpop.f32.mrb[0].mxu0
      %2812 = vmatprep.mubr.bf16.mxu0 0
      %2813 = vmatmul.mubr.bf16.gmra.mrb[0].mxu0 %v1767
      %v2814 = vpop.f32.mrb[0].mxu0
      %v2815 = vadd.f32 0.0, %v2814
      %v2816 = vpop.f32.mrb[0].mxu0
      %v2817 = vpop.f32.mrb[0].mxu0
      %v2818 = vadd.f32 0.0, %v2817
      %v2819 = vpop.f32.mrb[0].mxu0
      %2820 = vmatprep.mubr.bf16.mxu0 0
      %2821 = vmatmul.mubr.bf16.gmra.mrb[0].mxu0 %v1768
      %v2822 = vpop.f32.mrb[0].mxu0
      %v2823 = vadd.f32 0.0, %v2822
      %v2824 = vpop.f32.mrb[0].mxu0
      %v2825 = vpop.f32.mrb[0].mxu0
      %v2826 = vadd.f32 0.0, %v2825
      %v2827 = vpop.f32.mrb[0].mxu0
      %2828 = vmatprep.mubr.bf16.mxu0 0
      %2829 = vmatmul.mubr.bf16.gmra.mrb[0].mxu0 %v1769
      %v2830 = vpop.f32.mrb[0].mxu0
      %v2831 = vadd.f32 0.0, %v2830
      %v2832 = vpop.f32.mrb[0].mxu0
      %v2833 = vpop.f32.mrb[0].mxu0
      %v2834 = vadd.f32 0.0, %v2833
      %v2835 = vpop.f32.mrb[0].mxu0
      %2836 = vmatprep.mubr.bf16.mxu0 0
      %2837 = vmatmul.mubr.bf16.gmra.mrb[0].mxu0 %v1770
      %v2838 = vpop.f32.mrb[0].mxu0
      %v2839 = vadd.f32 0.0, %v2838
      %v2840 = vpop.f32.mrb[0].mxu0
      %v2841 = vpop.f32.mrb[0].mxu0
      %v2842 = vadd.f32 0.0, %v2841
      %v2843 = vpop.f32.mrb[0].mxu0
      %2844 = vmatprep.mubr.bf16.mxu0 0
      %2845 = vmatmul.mubr.bf16.gmra.mrb[0].mxu0 %v1771
      %v2846 = vpop.f32.mrb[0].mxu0
      %v2847 = vadd.f32 0.0, %v2846
      %v2848 = vpop.f32.mrb[0].mxu0
      %v2849 = vpop.f32.mrb[0].mxu0
      %v2850 = vadd.f32 0.0, %v2849
      %v2851 = vpop.f32.mrb[0].mxu0
      %2852 = vmatprep.mubr.bf16.mxu0 0
      %2853 = vmatmul.mubr.bf16.gmra.mrb[0].mxu0 %v1772
      %v2854 = vpop.f32.mrb[0].mxu0
      %v2855 = vadd.f32 0.0, %v2854
      %v2856 = vpop.f32.mrb[0].mxu0
      %v2857 = vpop.f32.mrb[0].mxu0
      %v2858 = vadd.f32 0.0, %v2857
      %v2859 = vpop.f32.mrb[0].mxu0
      %2860 = vmatprep.mubr.bf16.mxu0 0
      %2861 = vmatmul.mubr.bf16.gmra.mrb[0].mxu0 %v1773
      %v2862 = vpop.f32.mrb[0].mxu0
      %v2863 = vadd.f32 0.0, %v2862
      %v2864 = vpop.f32.mrb[0].mxu0
      %v2865 = vpop.f32.mrb[0].mxu0
      %v2866 = vadd.f32 0.0, %v2865
      %v2867 = vpop.f32.mrb[0].mxu0
      %2868 = vmatprep.mubr.bf16.mxu0 0
      %2869 = vmatmul.mubr.bf16.gmra.mrb[0].mxu0 %v1774
      %v2870 = vpop.f32.mrb[0].mxu0
      %v2871 = vadd.f32 0.0, %v2870
      %v2872 = vpop.f32.mrb[0].mxu0
      %v2873 = vpop.f32.mrb[0].mxu0
      %v2874 = vadd.f32 0.0, %v2873
      %v2875 = vpop.f32.mrb[0].mxu0
      %2876 = vmatprep.mubr.bf16.mxu0 0
      %2877 = vmatmul.mubr.bf16.gmra.mrb[0].mxu0 %v1775
      %v2878 = vpop.f32.mrb[0].mxu0
      %v2879 = vadd.f32 0.0, %v2878
      %v2880 = vpop.f32.mrb[0].mxu0
      %v2881 = vpop.f32.mrb[0].mxu0
      %v2882 = vadd.f32 0.0, %v2881
      %v2883 = vpop.f32.mrb[0].mxu0
      %2884 = vmatprep.mubr.bf16.mxu0 0
      %2885 = vmatmul.mubr.bf16.gmra.mrb[0].mxu0 %v1776
      %v2886 = vpop.f32.mrb[0].mxu0
      %v2887 = vadd.f32 0.0, %v2886
      %v2888 = vpop.f32.mrb[0].mxu0
      %v2889 = vpop.f32.mrb[0].mxu0
      %v2890 = vadd.f32 0.0, %v2889
      %v2891 = vpop.f32.mrb[0].mxu0
      %2892 = vmatprep.mubr.bf16.mxu0 0
      %2893 = vmatmul.mubr.bf16.gmra.mrb[0].mxu0 %v1777
      %v2894 = vpop.f32.mrb[0].mxu0
      %v2895 = vadd.f32 0.0, %v2894
      %v2896 = vpop.f32.mrb[0].mxu0
      %v2897 = vpop.f32.mrb[0].mxu0
      %v2898 = vadd.f32 0.0, %v2897
      %v2899 = vpop.f32.mrb[0].mxu0
      %2900 = vmatprep.mubr.bf16.mxu0 0
      %2901 = vmatmul.mubr.bf16.gmra.mrb[0].mxu0 %v1778
      %v2902 = vpop.f32.mrb[0].mxu0
      %v2903 = vadd.f32 0.0, %v2902
      %v2904 = vpop.f32.mrb[0].mxu0
      %v2905 = vpop.f32.mrb[0].mxu0
      %v2906 = vadd.f32 0.0, %v2905
      %v2907 = vpop.f32.mrb[0].mxu0
      %2908 = vmatprep.mubr.bf16.mxu0 0
      %2909 = vmatmul.mubr.bf16.gmra.mrb[0].mxu0 %v1779
      %v2910 = vpop.f32.mrb[0].mxu0
      %v2911 = vadd.f32 0.0, %v2910
      %v2912 = vpop.f32.mrb[0].mxu0
      %v2913 = vpop.f32.mrb[0].mxu0
      %v2914 = vpop.f32.mrb[0].mxu0
      %2915 = vdwg.mxu0
      %v2916 = vmul.f32 %v1879, %v2415
      %v2917 = vmul.f32 %v1882, %v2418
      %v2918 = vmul.f32 %v1887, %v2423
      %v2919 = vmul.f32 %v1890, %v2426
      %v2920 = vmul.f32 %v1895, %v2431
      %v2921 = vmul.f32 %v1898, %v2434
      %v2922 = vmul.f32 %v1903, %v2439
      %v2923 = vmul.f32 %v1906, %v2442
      %v2924 = vmul.f32 %v1911, %v2447
      %v2925 = vmul.f32 %v1914, %v2450
      %v2926 = vmul.f32 %v1919, %v2455
      %v2927 = vmul.f32 %v1922, %v2458
      %v2928 = vmul.f32 %v1927, %v2463
      %v2929 = vmul.f32 %v1930, %v2466
      %v2930 = vmul.f32 %v1935, %v2471
      %v2931 = vmul.f32 %v1938, %v2474
      %v2932 = vmul.f32 %v1943, %v2479
      %v2933 = vmul.f32 %v1946, %v2482
      %v2934 = vmul.f32 %v1951, %v2487
      %v2935 = vmul.f32 %v1954, %v2490
      %v2936 = vmul.f32 %v1959, %v2495
      %v2937 = vmul.f32 %v1962, %v2498
      %v2938 = vmul.f32 %v1967, %v2503
      %v2939 = vmul.f32 %v1970, %v2506
      %v2940 = vmul.f32 %v1975, %v2511
      %v2941 = vmul.f32 %v1978, %v2514
      %v2942 = vmul.f32 %v1983, %v2519
      %v2943 = vmul.f32 %v1986, %v2522
      %v2944 = vmul.f32 %v1991, %v2527
      %v2945 = vmul.f32 %v1994, %v2530
      %v2946 = vmul.f32 %v1999, %v2535
      %v2947 = vmul.f32 %v2002, %v2538
      %v2948 = vmul.f32 %v2007, %v2543
      %v2949 = vmul.f32 %v2010, %v2546
      %v2950 = vmul.f32 %v2015, %v2551
      %v2951 = vmul.f32 %v2018, %v2554
      %v2952 = vmul.f32 %v2023, %v2559
      %v2953 = vmul.f32 %v2026, %v2562
      %v2954 = vmul.f32 %v2031, %v2567
      %v2955 = vmul.f32 %v2034, %v2570
      %v2956 = vmul.f32 %v2039, %v2575
      %v2957 = vmul.f32 %v2042, %v2578
      %v2958 = vmul.f32 %v2047, %v2583
      %v2959 = vmul.f32 %v2050, %v2586
      %v2960 = vmul.f32 %v2055, %v2591
      %v2961 = vmul.f32 %v2058, %v2594
      %v2962 = vmul.f32 %v2063, %v2599
      %v2963 = vmul.f32 %v2066, %v2602
      %v2964 = vmul.f32 %v2071, %v2607
      %v2965 = vmul.f32 %v2074, %v2610
      %v2966 = vmul.f32 %v2079, %v2615
      %v2967 = vmul.f32 %v2082, %v2618
      %v2968 = vmul.f32 %v2087, %v2623
      %v2969 = vmul.f32 %v2090, %v2626
      %v2970 = vmul.f32 %v2095, %v2631
      %v2971 = vmul.f32 %v2098, %v2634
      %v2972 = vmul.f32 %v2103, %v2639
      %v2973 = vmul.f32 %v2106, %v2642
      %v2974 = vmul.f32 %v2111, %v2647
      %v2975 = vmul.f32 %v2114, %v2650
      %v2976 = vmul.f32 %v2119, %v2655
      %v2977 = vmul.f32 %v2122, %v2658
      %v2978 = vmul.f32 %v2127, %v2663
      %v2979 = vmul.f32 %v2130, %v2666
      %v2980 = vmul.f32 %v2135, %v2671
      %v2981 = vmul.f32 %v2138, %v2674
      %v2982 = vmul.f32 %v2143, %v2679
      %v2983 = vmul.f32 %v2146, %v2682
      %v2984 = vmul.f32 %v2151, %v2687
      %v2985 = vmul.f32 %v2154, %v2690
      %v2986 = vmul.f32 %v2159, %v2695
      %v2987 = vmul.f32 %v2162, %v2698
      %v2988 = vmul.f32 %v2167, %v2703
      %v2989 = vmul.f32 %v2170, %v2706
      %v2990 = vmul.f32 %v2175, %v2711
      %v2991 = vmul.f32 %v2178, %v2714
      %v2992 = vmul.f32 %v2183, %v2719
      %v2993 = vmul.f32 %v2186, %v2722
      %v2994 = vmul.f32 %v2191, %v2727
      %v2995 = vmul.f32 %v2194, %v2730
      %v2996 = vmul.f32 %v2199, %v2735
      %v2997 = vmul.f32 %v2202, %v2738
      %v2998 = vmul.f32 %v2207, %v2743
      %v2999 = vmul.f32 %v2210, %v2746
      %v3000 = vmul.f32 %v2215, %v2751
      %v3001 = vmul.f32 %v2218, %v2754
      %v3002 = vmul.f32 %v2223, %v2759
      %v3003 = vmul.f32 %v2226, %v2762
      %v3004 = vmul.f32 %v2231, %v2767
      %v3005 = vmul.f32 %v2234, %v2770
      %v3006 = vmul.f32 %v2239, %v2775
      %v3007 = vmul.f32 %v2242, %v2778
      %v3008 = vmul.f32 %v2247, %v2783
      %v3009 = vmul.f32 %v2250, %v2786
      %v3010 = vmul.f32 %v2255, %v2791
      %v3011 = vmul.f32 %v2258, %v2794
      %v3012 = vmul.f32 %v2263, %v2799
      %v3013 = vmul.f32 %v2266, %v2802
      %v3014 = vmul.f32 %v2271, %v2807
      %v3015 = vmul.f32 %v2274, %v2810
      %v3016 = vmul.f32 %v2279, %v2815
      %v3017 = vmul.f32 %v2282, %v2818
      %v3018 = vmul.f32 %v2287, %v2823
      %v3019 = vmul.f32 %v2290, %v2826
      %v3020 = vmul.f32 %v2295, %v2831
      %v3021 = vmul.f32 %v2298, %v2834
      %v3022 = vmul.f32 %v2303, %v2839
      %v3023 = vmul.f32 %v2306, %v2842
      %v3024 = vmul.f32 %v2311, %v2847
      %v3025 = vmul.f32 %v2314, %v2850
      %v3026 = vmul.f32 %v2319, %v2855
      %v3027 = vmul.f32 %v2322, %v2858
      %v3028 = vmul.f32 %v2327, %v2863
      %v3029 = vmul.f32 %v2330, %v2866
      %v3030 = vmul.f32 %v2335, %v2871
      %v3031 = vmul.f32 %v2338, %v2874
      %v3032 = vmul.f32 %v2343, %v2879
      %v3033 = vmul.f32 %v2346, %v2882
      %v3034 = vmul.f32 %v2351, %v2887
      %v3035 = vmul.f32 %v2354, %v2890
      %v3036 = vmul.f32 %v2359, %v2895
      %v3037 = vmul.f32 %v2362, %v2898
      %v3038 = vmul.f32 %v2367, %v2903
      %v3039 = vmul.f32 %v2370, %v2906
      %v3040 = vmul.f32 %v2375, %v2911
      %s3041 = sadd.s32 %s21, %s22
      %v3042 = vpack.c.bf16 %v2917, %v2916
      %v3043 = vpack.c.bf16 %v2919, %v2918
      %v3044 = vpack.c.bf16 %v2921, %v2920
      %v3045 = vpack.c.bf16 %v2923, %v2922
      %v3046 = vpack.c.bf16 %v2925, %v2924
      %v3047 = vpack.c.bf16 %v2927, %v2926
      %v3048 = vpack.c.bf16 %v2929, %v2928
      %v3049 = vpack.c.bf16 %v2931, %v2930
      %v3050 = vpack.c.bf16 %v2933, %v2932
      %v3051 = vpack.c.bf16 %v2935, %v2934
      %v3052 = vpack.c.bf16 %v2937, %v2936
      %v3053 = vpack.c.bf16 %v2939, %v2938
      %v3054 = vpack.c.bf16 %v2941, %v2940
      %v3055 = vpack.c.bf16 %v2943, %v2942
      %v3056 = vpack.c.bf16 %v2945, %v2944
      %v3057 = vpack.c.bf16 %v2947, %v2946
      %v3058 = vpack.c.bf16 %v2949, %v2948
      %v3059 = vpack.c.bf16 %v2951, %v2950
      %v3060 = vpack.c.bf16 %v2953, %v2952
      %v3061 = vpack.c.bf16 %v2955, %v2954
      %v3062 = vpack.c.bf16 %v2957, %v2956
      %v3063 = vpack.c.bf16 %v2959, %v2958
      %v3064 = vpack.c.bf16 %v2961, %v2960
      %v3065 = vpack.c.bf16 %v2963, %v2962
      %v3066 = vpack.c.bf16 %v2965, %v2964
      %v3067 = vpack.c.bf16 %v2967, %v2966
      %v3068 = vpack.c.bf16 %v2969, %v2968
      %v3069 = vpack.c.bf16 %v2971, %v2970
      %v3070 = vpack.c.bf16 %v2973, %v2972
      %v3071 = vpack.c.bf16 %v2975, %v2974
      %v3072 = vpack.c.bf16 %v2977, %v2976
      %v3073 = vpack.c.bf16 %v2979, %v2978
      %v3074 = vpack.c.bf16 %v2981, %v2980
      %v3075 = vpack.c.bf16 %v2983, %v2982
      %v3076 = vpack.c.bf16 %v2985, %v2984
      %v3077 = vpack.c.bf16 %v2987, %v2986
      %v3078 = vpack.c.bf16 %v2989, %v2988
      %v3079 = vpack.c.bf16 %v2991, %v2990
      %v3080 = vpack.c.bf16 %v2993, %v2992
      %v3081 = vpack.c.bf16 %v2995, %v2994
      %v3082 = vpack.c.bf16 %v2997, %v2996
      %v3083 = vpack.c.bf16 %v2999, %v2998
      %v3084 = vpack.c.bf16 %v3001, %v3000
      %v3085 = vpack.c.bf16 %v3003, %v3002
      %v3086 = vpack.c.bf16 %v3005, %v3004
      %v3087 = vpack.c.bf16 %v3007, %v3006
      %v3088 = vpack.c.bf16 %v3009, %v3008
      %v3089 = vpack.c.bf16 %v3011, %v3010
      %v3090 = vpack.c.bf16 %v3013, %v3012
      %v3091 = vpack.c.bf16 %v3015, %v3014
      %v3092 = vpack.c.bf16 %v3017, %v3016
      %v3093 = vpack.c.bf16 %v3019, %v3018
      %v3094 = vpack.c.bf16 %v3021, %v3020
      %v3095 = vpack.c.bf16 %v3023, %v3022
      %v3096 = vpack.c.bf16 %v3025, %v3024
      %v3097 = vpack.c.bf16 %v3027, %v3026
      %v3098 = vpack.c.bf16 %v3029, %v3028
      %v3099 = vpack.c.bf16 %v3031, %v3030
      %v3100 = vpack.c.bf16 %v3033, %v3032
      %v3101 = vpack.c.bf16 %v3035, %v3034
      %v3102 = vpack.c.bf16 %v3037, %v3036
      %v3103 = vpack.c.bf16 %v3039, %v3038
      %v3104 = vpack.c.bf16 %v3040, %v3040
      %v3105 = vld [vmem:[%s2] sm:$0xf]
      %v3106 = vld [vmem:[%s2 + $0x4] sm:$0xf]
      %v3107 = vld [vmem:[%s2 + $0x8] sm:$0xf]
      %v3108 = vld [vmem:[%s2 + $0xc] sm:$0xf]
      %v3109 = vld [vmem:[%s2 + $0x10] sm:$0xf]
      %v3110 = vld [vmem:[%s2 + $0x14] sm:$0xf]
      %v3111 = vld [vmem:[%s2 + $0x18] sm:$0xf]
      %v3112 = vld [vmem:[%s2 + $0x1c] sm:$0xf]
      %v3113 = vld [vmem:[%s2 + $0x20] sm:$0xf]
      %v3114 = vld [vmem:[%s2 + $0x24] sm:$0xf]
      %v3115 = vld [vmem:[%s2 + $0x28] sm:$0xf]
      %v3116 = vld [vmem:[%s2 + $0x2c] sm:$0xf]
      %v3117 = vld [vmem:[%s2 + $0x30] sm:$0xf]
      %v3118 = vld [vmem:[%s2 + $0x34] sm:$0xf]
      %v3119 = vld [vmem:[%s2 + $0x38] sm:$0xf]
      %v3120 = vld [vmem:[%s2 + $0x3c] sm:$0xf]
      %v3121 = vld [vmem:[%s3] sm:$0x1]
      %v3123 = vlaneseq
      %v3124 = vshrl.u32 %v3123, 7
      %v3125 = vsub.s32 0, %v3124
      %v3126 = vrot.slane %v3121, %v3125
      %v3144 = vunpack.c.l.b16 %v3105
      %v3145 = vunpack.c.l.b16 %v3106
      %v3146 = vunpack.c.l.b16 %v3107
      %v3147 = vunpack.c.l.b16 %v3108
      %v3148 = vunpack.c.l.b16 %v3109
      %v3149 = vunpack.c.l.b16 %v3110
      %v3150 = vunpack.c.l.b16 %v3111
      %v3151 = vunpack.c.l.b16 %v3112
      %v3152 = vunpack.c.l.b16 %v3113
      %v3153 = vunpack.c.l.b16 %v3114
      %v3154 = vunpack.c.l.b16 %v3115
      %v3155 = vunpack.c.l.b16 %v3116
      %v3156 = vunpack.c.l.b16 %v3117
      %v3157 = vunpack.c.l.b16 %v3118
      %v3158 = vunpack.c.l.b16 %v3119
      %v3159 = vunpack.c.l.b16 %v3120
      %v3160 = vpack.c.b16 %v3145, %v3144
      %v3161 = vpack.c.b16 %v3147, %v3146
      %v3162 = vpack.c.b16 %v3149, %v3148
      %v3163 = vpack.c.b16 %v3151, %v3150
      %v3164 = vpack.c.b16 %v3153, %v3152
      %v3165 = vpack.c.b16 %v3155, %v3154
      %v3166 = vpack.c.b16 %v3157, %v3156
      %v3167 = vpack.c.b16 %v3159, %v3158
      %3176 = vmatprep.subr.bf16.mxu0 0
      %3177 = vmatpush1.bf16.msra.mxu0 %v3160
      %3178 = vmatprep.subr.bf16.mxu0 0
      %3179 = vmatpush1.bf16.msra.mxu0 %v3161
      %3180 = vmatprep.subr.bf16.mxu0 0
      %3181 = vmatpush1.bf16.msra.mxu0 %v3162
      %3182 = vmatprep.subr.bf16.mxu0 0
      %3183 = vmatpush1.bf16.msra.mxu0 %v3163
      %3184 = vmatprep.subr.bf16.mxu0 0
      %3185 = vmatpush1.bf16.msra.mxu0 %v3164
      %3186 = vmatprep.subr.bf16.mxu0 0
      %3187 = vmatpush1.bf16.msra.mxu0 %v3165
      %3188 = vmatprep.subr.bf16.mxu0 0
      %3189 = vmatpush1.bf16.msra.mxu0 %v3166
      %3190 = vmatprep.subr.bf16.mxu0 0
      %3191 = vmatpush1.bf16.msra.mxu0 %v3167
      %3192 = vmatprep.subr.bf16.mxu0 0
      %3193 = vmatpush1.bf16.msra.mxu0 0
      %3194 = vmatprep.subr.bf16.mxu0 0
      %3195 = vmatpush1.bf16.msra.mxu0 0
      %3196 = vmatprep.subr.bf16.mxu0 0
      %3197 = vmatpush1.bf16.msra.mxu0 0
      %3198 = vmatprep.subr.bf16.mxu0 0
      %3199 = vmatpush1.bf16.msra.mxu0 0
      %3200 = vmatprep.subr.bf16.mxu0 0
      %3201 = vmatpush1.bf16.msra.mxu0 0
      %3202 = vmatprep.subr.bf16.mxu0 0
      %3203 = vmatpush1.bf16.msra.mxu0 0
      %3204 = vmatprep.subr.bf16.mxu0 0
      %3205 = vmatpush1.bf16.msra.mxu0 0
      %3206 = vmatprep.subr.bf16.mxu0 0
      %3207 = vmatpush1.bf16.msra.mxu0 0
      %3208 = vmatprep.mubr.bf16.mxu0 0
      %3209 = vmatmul.mubr.bf16.gmra.mrb[0].mxu0 %v3042
      %v3210 = vpop.f32.mrb[0].mxu0
      %v3211 = vadd.f32 %v3126, %v3210
      %v3212 = vpop.f32.mrb[0].mxu0
      %v3213 = vpop.f32.mrb[0].mxu0
      %v3214 = vadd.f32 %v3126, %v3213
      %v3215 = vpop.f32.mrb[0].mxu0
      %3216 = vmatprep.mubr.bf16.mxu0 0
      %3217 = vmatmul.mubr.bf16.gmra.mrb[0].mxu0 %v3043
      %v3218 = vpop.f32.mrb[0].mxu0
      %v3219 = vadd.f32 %v3126, %v3218
      %v3220 = vpop.f32.mrb[0].mxu0
      %v3221 = vpop.f32.mrb[0].mxu0
      %v3222 = vadd.f32 %v3126, %v3221
      %v3223 = vpop.f32.mrb[0].mxu0
      %3224 = vmatprep.mubr.bf16.mxu0 0
      %3225 = vmatmul.mubr.bf16.gmra.mrb[0].mxu0 %v3044
      %v3226 = vpop.f32.mrb[0].mxu0
      %v3227 = vadd.f32 %v3126, %v3226
      %v3228 = vpop.f32.mrb[0].mxu0
      %v3229 = vpop.f32.mrb[0].mxu0
      %v3230 = vadd.f32 %v3126, %v3229
      %v3231 = vpop.f32.mrb[0].mxu0
      %3232 = vmatprep.mubr.bf16.mxu0 0
      %3233 = vmatmul.mubr.bf16.gmra.mrb[0].mxu0 %v3045
      %v3234 = vpop.f32.mrb[0].mxu0
      %v3235 = vadd.f32 %v3126, %v3234
      %v3236 = vpop.f32.mrb[0].mxu0
      %v3237 = vpop.f32.mrb[0].mxu0
      %v3238 = vadd.f32 %v3126, %v3237
      %v3239 = vpop.f32.mrb[0].mxu0
      %3240 = vmatprep.mubr.bf16.mxu0 0
      %3241 = vmatmul.mubr.bf16.gmra.mrb[0].mxu0 %v3046
      %v3242 = vpop.f32.mrb[0].mxu0
      %v3243 = vadd.f32 %v3126, %v3242
      %v3244 = vpop.f32.mrb[0].mxu0
      %v3245 = vpop.f32.mrb[0].mxu0
      %v3246 = vadd.f32 %v3126, %v3245
      %v3247 = vpop.f32.mrb[0].mxu0
      %3248 = vmatprep.mubr.bf16.mxu0 0
      %3249 = vmatmul.mubr.bf16.gmra.mrb[0].mxu0 %v3047
      %v3250 = vpop.f32.mrb[0].mxu0
      %v3251 = vadd.f32 %v3126, %v3250
      %v3252 = vpop.f32.mrb[0].mxu0
      %v3253 = vpop.f32.mrb[0].mxu0
      %v3254 = vadd.f32 %v3126, %v3253
      %v3255 = vpop.f32.mrb[0].mxu0
      %3256 = vmatprep.mubr.bf16.mxu0 0
      %3257 = vmatmul.mubr.bf16.gmra.mrb[0].mxu0 %v3048
      %v3258 = vpop.f32.mrb[0].mxu0
      %v3259 = vadd.f32 %v3126, %v3258
      %v3260 = vpop.f32.mrb[0].mxu0
      %v3261 = vpop.f32.mrb[0].mxu0
      %v3262 = vadd.f32 %v3126, %v3261
      %v3263 = vpop.f32.mrb[0].mxu0
      %3264 = vmatprep.mubr.bf16.mxu0 0
      %3265 = vmatmul.mubr.bf16.gmra.mrb[0].mxu0 %v3049
      %v3266 = vpop.f32.mrb[0].mxu0
      %v3267 = vadd.f32 %v3126, %v3266
      %v3268 = vpop.f32.mrb[0].mxu0
      %v3269 = vpop.f32.mrb[0].mxu0
      %v3270 = vadd.f32 %v3126, %v3269
      %v3271 = vpop.f32.mrb[0].mxu0
      %3272 = vmatprep.mubr.bf16.mxu0 0
      %3273 = vmatmul.mubr.bf16.gmra.mrb[0].mxu0 %v3050
      %v3274 = vpop.f32.mrb[0].mxu0
      %v3275 = vadd.f32 %v3126, %v3274
      %v3276 = vpop.f32.mrb[0].mxu0
      %v3277 = vpop.f32.mrb[0].mxu0
      %v3278 = vadd.f32 %v3126, %v3277
      %v3279 = vpop.f32.mrb[0].mxu0
      %3280 = vmatprep.mubr.bf16.mxu0 0
      %3281 = vmatmul.mubr.bf16.gmra.mrb[0].mxu0 %v3051
      %v3282 = vpop.f32.mrb[0].mxu0
      %v3283 = vadd.f32 %v3126, %v3282
      %v3284 = vpop.f32.mrb[0].mxu0
      %v3285 = vpop.f32.mrb[0].mxu0
      %v3286 = vadd.f32 %v3126, %v3285
      %v3287 = vpop.f32.mrb[0].mxu0
      %3288 = vmatprep.mubr.bf16.mxu0 0
      %3289 = vmatmul.mubr.bf16.gmra.mrb[0].mxu0 %v3052
      %v3290 = vpop.f32.mrb[0].mxu0
      %v3291 = vadd.f32 %v3126, %v3290
      %v3292 = vpop.f32.mrb[0].mxu0
      %v3293 = vpop.f32.mrb[0].mxu0
      %v3294 = vadd.f32 %v3126, %v3293
      %v3295 = vpop.f32.mrb[0].mxu0
      %3296 = vmatprep.mubr.bf16.mxu0 0
      %3297 = vmatmul.mubr.bf16.gmra.mrb[0].mxu0 %v3053
      %v3298 = vpop.f32.mrb[0].mxu0
      %v3299 = vadd.f32 %v3126, %v3298
      %v3300 = vpop.f32.mrb[0].mxu0
      %v3301 = vpop.f32.mrb[0].mxu0
      %v3302 = vadd.f32 %v3126, %v3301
      %v3303 = vpop.f32.mrb[0].mxu0
      %3304 = vmatprep.mubr.bf16.mxu0 0
      %3305 = vmatmul.mubr.bf16.gmra.mrb[0].mxu0 %v3054
      %v3306 = vpop.f32.mrb[0].mxu0
      %v3307 = vadd.f32 %v3126, %v3306
      %v3308 = vpop.f32.mrb[0].mxu0
      %v3309 = vpop.f32.mrb[0].mxu0
      %v3310 = vadd.f32 %v3126, %v3309
      %v3311 = vpop.f32.mrb[0].mxu0
      %3312 = vmatprep.mubr.bf16.mxu0 0
      %3313 = vmatmul.mubr.bf16.gmra.mrb[0].mxu0 %v3055
      %v3314 = vpop.f32.mrb[0].mxu0
      %v3315 = vadd.f32 %v3126, %v3314
      %v3316 = vpop.f32.mrb[0].mxu0
      %v3317 = vpop.f32.mrb[0].mxu0
      %v3318 = vadd.f32 %v3126, %v3317
      %v3319 = vpop.f32.mrb[0].mxu0
      %3320 = vmatprep.mubr.bf16.mxu0 0
      %3321 = vmatmul.mubr.bf16.gmra.mrb[0].mxu0 %v3056
      %v3322 = vpop.f32.mrb[0].mxu0
      %v3323 = vadd.f32 %v3126, %v3322
      %v3324 = vpop.f32.mrb[0].mxu0
      %v3325 = vpop.f32.mrb[0].mxu0
      %v3326 = vadd.f32 %v3126, %v3325
      %v3327 = vpop.f32.mrb[0].mxu0
      %3328 = vmatprep.mubr.bf16.mxu0 0
      %3329 = vmatmul.mubr.bf16.gmra.mrb[0].mxu0 %v3057
      %v3330 = vpop.f32.mrb[0].mxu0
      %v3331 = vadd.f32 %v3126, %v3330
      %v3332 = vpop.f32.mrb[0].mxu0
      %v3333 = vpop.f32.mrb[0].mxu0
      %v3334 = vadd.f32 %v3126, %v3333
      %v3335 = vpop.f32.mrb[0].mxu0
      %3336 = vmatprep.mubr.bf16.mxu0 0
      %3337 = vmatmul.mubr.bf16.gmra.mrb[0].mxu0 %v3058
      %v3338 = vpop.f32.mrb[0].mxu0
      %v3339 = vadd.f32 %v3126, %v3338
      %v3340 = vpop.f32.mrb[0].mxu0
      %v3341 = vpop.f32.mrb[0].mxu0
      %v3342 = vadd.f32 %v3126, %v3341
      %v3343 = vpop.f32.mrb[0].mxu0
      %3344 = vmatprep.mubr.bf16.mxu0 0
      %3345 = vmatmul.mubr.bf16.gmra.mrb[0].mxu0 %v3059
      %v3346 = vpop.f32.mrb[0].mxu0
      %v3347 = vadd.f32 %v3126, %v3346
      %v3348 = vpop.f32.mrb[0].mxu0
      %v3349 = vpop.f32.mrb[0].mxu0
      %v3350 = vadd.f32 %v3126, %v3349
      %v3351 = vpop.f32.mrb[0].mxu0
      %3352 = vmatprep.mubr.bf16.mxu0 0
      %3353 = vmatmul.mubr.bf16.gmra.mrb[0].mxu0 %v3060
      %v3354 = vpop.f32.mrb[0].mxu0
      %v3355 = vadd.f32 %v3126, %v3354
      %v3356 = vpop.f32.mrb[0].mxu0
      %v3357 = vpop.f32.mrb[0].mxu0
      %v3358 = vadd.f32 %v3126, %v3357
      %v3359 = vpop.f32.mrb[0].mxu0
      %3360 = vmatprep.mubr.bf16.mxu0 0
      %3361 = vmatmul.mubr.bf16.gmra.mrb[0].mxu0 %v3061
      %v3362 = vpop.f32.mrb[0].mxu0
      %v3363 = vadd.f32 %v3126, %v3362
      %v3364 = vpop.f32.mrb[0].mxu0
      %v3365 = vpop.f32.mrb[0].mxu0
      %v3366 = vadd.f32 %v3126, %v3365
      %v3367 = vpop.f32.mrb[0].mxu0
      %3368 = vmatprep.mubr.bf16.mxu0 0
      %3369 = vmatmul.mubr.bf16.gmra.mrb[0].mxu0 %v3062
      %v3370 = vpop.f32.mrb[0].mxu0
      %v3371 = vadd.f32 %v3126, %v3370
      %v3372 = vpop.f32.mrb[0].mxu0
      %v3373 = vpop.f32.mrb[0].mxu0
      %v3374 = vadd.f32 %v3126, %v3373
      %v3375 = vpop.f32.mrb[0].mxu0
      %3376 = vmatprep.mubr.bf16.mxu0 0
      %3377 = vmatmul.mubr.bf16.gmra.mrb[0].mxu0 %v3063
      %v3378 = vpop.f32.mrb[0].mxu0
      %v3379 = vadd.f32 %v3126, %v3378
      %v3380 = vpop.f32.mrb[0].mxu0
      %v3381 = vpop.f32.mrb[0].mxu0
      %v3382 = vadd.f32 %v3126, %v3381
      %v3383 = vpop.f32.mrb[0].mxu0
      %3384 = vmatprep.mubr.bf16.mxu0 0
      %3385 = vmatmul.mubr.bf16.gmra.mrb[0].mxu0 %v3064
      %v3386 = vpop.f32.mrb[0].mxu0
      %v3387 = vadd.f32 %v3126, %v3386
      %v3388 = vpop.f32.mrb[0].mxu0
      %v3389 = vpop.f32.mrb[0].mxu0
      %v3390 = vadd.f32 %v3126, %v3389
      %v3391 = vpop.f32.mrb[0].mxu0
      %3392 = vmatprep.mubr.bf16.mxu0 0
      %3393 = vmatmul.mubr.bf16.gmra.mrb[0].mxu0 %v3065
      %v3394 = vpop.f32.mrb[0].mxu0
      %v3395 = vadd.f32 %v3126, %v3394
      %v3396 = vpop.f32.mrb[0].mxu0
      %v3397 = vpop.f32.mrb[0].mxu0
      %v3398 = vadd.f32 %v3126, %v3397
      %v3399 = vpop.f32.mrb[0].mxu0
      %3400 = vmatprep.mubr.bf16.mxu0 0
      %3401 = vmatmul.mubr.bf16.gmra.mrb[0].mxu0 %v3066
      %v3402 = vpop.f32.mrb[0].mxu0
      %v3403 = vadd.f32 %v3126, %v3402
      %v3404 = vpop.f32.mrb[0].mxu0
      %v3405 = vpop.f32.mrb[0].mxu0
      %v3406 = vadd.f32 %v3126, %v3405
      %v3407 = vpop.f32.mrb[0].mxu0
      %3408 = vmatprep.mubr.bf16.mxu0 0
      %3409 = vmatmul.mubr.bf16.gmra.mrb[0].mxu0 %v3067
      %v3410 = vpop.f32.mrb[0].mxu0
      %v3411 = vadd.f32 %v3126, %v3410
      %v3412 = vpop.f32.mrb[0].mxu0
      %v3413 = vpop.f32.mrb[0].mxu0
      %v3414 = vadd.f32 %v3126, %v3413
      %v3415 = vpop.f32.mrb[0].mxu0
      %3416 = vmatprep.mubr.bf16.mxu0 0
      %3417 = vmatmul.mubr.bf16.gmra.mrb[0].mxu0 %v3068
      %v3418 = vpop.f32.mrb[0].mxu0
      %v3419 = vadd.f32 %v3126, %v3418
      %v3420 = vpop.f32.mrb[0].mxu0
      %v3421 = vpop.f32.mrb[0].mxu0
      %v3422 = vadd.f32 %v3126, %v3421
      %v3423 = vpop.f32.mrb[0].mxu0
      %3424 = vmatprep.mubr.bf16.mxu0 0
      %3425 = vmatmul.mubr.bf16.gmra.mrb[0].mxu0 %v3069
      %v3426 = vpop.f32.mrb[0].mxu0
      %v3427 = vadd.f32 %v3126, %v3426
      %v3428 = vpop.f32.mrb[0].mxu0
      %v3429 = vpop.f32.mrb[0].mxu0
      %v3430 = vadd.f32 %v3126, %v3429
      %v3431 = vpop.f32.mrb[0].mxu0
      %3432 = vmatprep.mubr.bf16.mxu0 0
      %3433 = vmatmul.mubr.bf16.gmra.mrb[0].mxu0 %v3070
      %v3434 = vpop.f32.mrb[0].mxu0
      %v3435 = vadd.f32 %v3126, %v3434
      %v3436 = vpop.f32.mrb[0].mxu0
      %v3437 = vpop.f32.mrb[0].mxu0
      %v3438 = vadd.f32 %v3126, %v3437
      %v3439 = vpop.f32.mrb[0].mxu0
      %3440 = vmatprep.mubr.bf16.mxu0 0
      %3441 = vmatmul.mubr.bf16.gmra.mrb[0].mxu0 %v3071
      %v3442 = vpop.f32.mrb[0].mxu0
      %v3443 = vadd.f32 %v3126, %v3442
      %v3444 = vpop.f32.mrb[0].mxu0
      %v3445 = vpop.f32.mrb[0].mxu0
      %v3446 = vadd.f32 %v3126, %v3445
      %v3447 = vpop.f32.mrb[0].mxu0
      %3448 = vmatprep.mubr.bf16.mxu0 0
      %3449 = vmatmul.mubr.bf16.gmra.mrb[0].mxu0 %v3072
      %v3450 = vpop.f32.mrb[0].mxu0
      %v3451 = vadd.f32 %v3126, %v3450
      %v3452 = vpop.f32.mrb[0].mxu0
      %v3453 = vpop.f32.mrb[0].mxu0
      %v3454 = vadd.f32 %v3126, %v3453
      %v3455 = vpop.f32.mrb[0].mxu0
      %3456 = vmatprep.mubr.bf16.mxu0 0
      %3457 = vmatmul.mubr.bf16.gmra.mrb[0].mxu0 %v3073
      %v3458 = vpop.f32.mrb[0].mxu0
      %v3459 = vadd.f32 %v3126, %v3458
      %v3460 = vpop.f32.mrb[0].mxu0
      %v3461 = vpop.f32.mrb[0].mxu0
      %v3462 = vadd.f32 %v3126, %v3461
      %v3463 = vpop.f32.mrb[0].mxu0
      %3464 = vmatprep.mubr.bf16.mxu0 0
      %3465 = vmatmul.mubr.bf16.gmra.mrb[0].mxu0 %v3074
      %v3466 = vpop.f32.mrb[0].mxu0
      %v3467 = vadd.f32 %v3126, %v3466
      %v3468 = vpop.f32.mrb[0].mxu0
      %v3469 = vpop.f32.mrb[0].mxu0
      %v3470 = vadd.f32 %v3126, %v3469
      %v3471 = vpop.f32.mrb[0].mxu0
      %3472 = vmatprep.mubr.bf16.mxu0 0
      %3473 = vmatmul.mubr.bf16.gmra.mrb[0].mxu0 %v3075
      %v3474 = vpop.f32.mrb[0].mxu0
      %v3475 = vadd.f32 %v3126, %v3474
      %v3476 = vpop.f32.mrb[0].mxu0
      %v3477 = vpop.f32.mrb[0].mxu0
      %v3478 = vadd.f32 %v3126, %v3477
      %v3479 = vpop.f32.mrb[0].mxu0
      %3480 = vmatprep.mubr.bf16.mxu0 0
      %3481 = vmatmul.mubr.bf16.gmra.mrb[0].mxu0 %v3076
      %v3482 = vpop.f32.mrb[0].mxu0
      %v3483 = vadd.f32 %v3126, %v3482
      %v3484 = vpop.f32.mrb[0].mxu0
      %v3485 = vpop.f32.mrb[0].mxu0
      %v3486 = vadd.f32 %v3126, %v3485
      %v3487 = vpop.f32.mrb[0].mxu0
      %3488 = vmatprep.mubr.bf16.mxu0 0
      %3489 = vmatmul.mubr.bf16.gmra.mrb[0].mxu0 %v3077
      %v3490 = vpop.f32.mrb[0].mxu0
      %v3491 = vadd.f32 %v3126, %v3490
      %v3492 = vpop.f32.mrb[0].mxu0
      %v3493 = vpop.f32.mrb[0].mxu0
      %v3494 = vadd.f32 %v3126, %v3493
      %v3495 = vpop.f32.mrb[0].mxu0
      %3496 = vmatprep.mubr.bf16.mxu0 0
      %3497 = vmatmul.mubr.bf16.gmra.mrb[0].mxu0 %v3078
      %v3498 = vpop.f32.mrb[0].mxu0
      %v3499 = vadd.f32 %v3126, %v3498
      %v3500 = vpop.f32.mrb[0].mxu0
      %v3501 = vpop.f32.mrb[0].mxu0
      %v3502 = vadd.f32 %v3126, %v3501
      %v3503 = vpop.f32.mrb[0].mxu0
      %3504 = vmatprep.mubr.bf16.mxu0 0
      %3505 = vmatmul.mubr.bf16.gmra.mrb[0].mxu0 %v3079
      %v3506 = vpop.f32.mrb[0].mxu0
      %v3507 = vadd.f32 %v3126, %v3506
      %v3508 = vpop.f32.mrb[0].mxu0
      %v3509 = vpop.f32.mrb[0].mxu0
      %v3510 = vadd.f32 %v3126, %v3509
      %v3511 = vpop.f32.mrb[0].mxu0
      %3512 = vmatprep.mubr.bf16.mxu0 0
      %3513 = vmatmul.mubr.bf16.gmra.mrb[0].mxu0 %v3080
      %v3514 = vpop.f32.mrb[0].mxu0
      %v3515 = vadd.f32 %v3126, %v3514
      %v3516 = vpop.f32.mrb[0].mxu0
      %v3517 = vpop.f32.mrb[0].mxu0
      %v3518 = vadd.f32 %v3126, %v3517
      %v3519 = vpop.f32.mrb[0].mxu0
      %3520 = vmatprep.mubr.bf16.mxu0 0
      %3521 = vmatmul.mubr.bf16.gmra.mrb[0].mxu0 %v3081
      %v3522 = vpop.f32.mrb[0].mxu0
      %v3523 = vadd.f32 %v3126, %v3522
      %v3524 = vpop.f32.mrb[0].mxu0
      %v3525 = vpop.f32.mrb[0].mxu0
      %v3526 = vadd.f32 %v3126, %v3525
      %v3527 = vpop.f32.mrb[0].mxu0
      %3528 = vmatprep.mubr.bf16.mxu0 0
      %3529 = vmatmul.mubr.bf16.gmra.mrb[0].mxu0 %v3082
      %v3530 = vpop.f32.mrb[0].mxu0
      %v3531 = vadd.f32 %v3126, %v3530
      %v3532 = vpop.f32.mrb[0].mxu0
      %v3533 = vpop.f32.mrb[0].mxu0
      %v3534 = vadd.f32 %v3126, %v3533
      %v3535 = vpop.f32.mrb[0].mxu0
      %3536 = vmatprep.mubr.bf16.mxu0 0
      %3537 = vmatmul.mubr.bf16.gmra.mrb[0].mxu0 %v3083
      %v3538 = vpop.f32.mrb[0].mxu0
      %v3539 = vadd.f32 %v3126, %v3538
      %v3540 = vpop.f32.mrb[0].mxu0
      %v3541 = vpop.f32.mrb[0].mxu0
      %v3542 = vadd.f32 %v3126, %v3541
      %v3543 = vpop.f32.mrb[0].mxu0
      %3544 = vmatprep.mubr.bf16.mxu0 0
      %3545 = vmatmul.mubr.bf16.gmra.mrb[0].mxu0 %v3084
      %v3546 = vpop.f32.mrb[0].mxu0
      %v3547 = vadd.f32 %v3126, %v3546
      %v3548 = vpop.f32.mrb[0].mxu0
      %v3549 = vpop.f32.mrb[0].mxu0
      %v3550 = vadd.f32 %v3126, %v3549
      %v3551 = vpop.f32.mrb[0].mxu0
      %3552 = vmatprep.mubr.bf16.mxu0 0
      %3553 = vmatmul.mubr.bf16.gmra.mrb[0].mxu0 %v3085
      %v3554 = vpop.f32.mrb[0].mxu0
      %v3555 = vadd.f32 %v3126, %v3554
      %v3556 = vpop.f32.mrb[0].mxu0
      %v3557 = vpop.f32.mrb[0].mxu0
      %v3558 = vadd.f32 %v3126, %v3557
      %v3559 = vpop.f32.mrb[0].mxu0
      %3560 = vmatprep.mubr.bf16.mxu0 0
      %3561 = vmatmul.mubr.bf16.gmra.mrb[0].mxu0 %v3086
      %v3562 = vpop.f32.mrb[0].mxu0
      %v3563 = vadd.f32 %v3126, %v3562
      %v3564 = vpop.f32.mrb[0].mxu0
      %v3565 = vpop.f32.mrb[0].mxu0
      %v3566 = vadd.f32 %v3126, %v3565
      %v3567 = vpop.f32.mrb[0].mxu0
      %3568 = vmatprep.mubr.bf16.mxu0 0
      %3569 = vmatmul.mubr.bf16.gmra.mrb[0].mxu0 %v3087
      %v3570 = vpop.f32.mrb[0].mxu0
      %v3571 = vadd.f32 %v3126, %v3570
      %v3572 = vpop.f32.mrb[0].mxu0
      %v3573 = vpop.f32.mrb[0].mxu0
      %v3574 = vadd.f32 %v3126, %v3573
      %v3575 = vpop.f32.mrb[0].mxu0
      %3576 = vmatprep.mubr.bf16.mxu0 0
      %3577 = vmatmul.mubr.bf16.gmra.mrb[0].mxu0 %v3088
      %v3578 = vpop.f32.mrb[0].mxu0
      %v3579 = vadd.f32 %v3126, %v3578
      %v3580 = vpop.f32.mrb[0].mxu0
      %v3581 = vpop.f32.mrb[0].mxu0
      %v3582 = vadd.f32 %v3126, %v3581
      %v3583 = vpop.f32.mrb[0].mxu0
      %3584 = vmatprep.mubr.bf16.mxu0 0
      %3585 = vmatmul.mubr.bf16.gmra.mrb[0].mxu0 %v3089
      %v3586 = vpop.f32.mrb[0].mxu0
      %v3587 = vadd.f32 %v3126, %v3586
      %v3588 = vpop.f32.mrb[0].mxu0
      %v3589 = vpop.f32.mrb[0].mxu0
      %v3590 = vadd.f32 %v3126, %v3589
      %v3591 = vpop.f32.mrb[0].mxu0
      %3592 = vmatprep.mubr.bf16.mxu0 0
      %3593 = vmatmul.mubr.bf16.gmra.mrb[0].mxu0 %v3090
      %v3594 = vpop.f32.mrb[0].mxu0
      %v3595 = vadd.f32 %v3126, %v3594
      %v3596 = vpop.f32.mrb[0].mxu0
      %v3597 = vpop.f32.mrb[0].mxu0
      %v3598 = vadd.f32 %v3126, %v3597
      %v3599 = vpop.f32.mrb[0].mxu0
      %3600 = vmatprep.mubr.bf16.mxu0 0
      %3601 = vmatmul.mubr.bf16.gmra.mrb[0].mxu0 %v3091
      %v3602 = vpop.f32.mrb[0].mxu0
      %v3603 = vadd.f32 %v3126, %v3602
      %v3604 = vpop.f32.mrb[0].mxu0
      %v3605 = vpop.f32.mrb[0].mxu0
      %v3606 = vadd.f32 %v3126, %v3605
      %v3607 = vpop.f32.mrb[0].mxu0
      %3608 = vmatprep.mubr.bf16.mxu0 0
      %3609 = vmatmul.mubr.bf16.gmra.mrb[0].mxu0 %v3092
      %v3610 = vpop.f32.mrb[0].mxu0
      %v3611 = vadd.f32 %v3126, %v3610
      %v3612 = vpop.f32.mrb[0].mxu0
      %v3613 = vpop.f32.mrb[0].mxu0
      %v3614 = vadd.f32 %v3126, %v3613
      %v3615 = vpop.f32.mrb[0].mxu0
      %3616 = vmatprep.mubr.bf16.mxu0 0
      %3617 = vmatmul.mubr.bf16.gmra.mrb[0].mxu0 %v3093
      %v3618 = vpop.f32.mrb[0].mxu0
      %v3619 = vadd.f32 %v3126, %v3618
      %v3620 = vpop.f32.mrb[0].mxu0
      %v3621 = vpop.f32.mrb[0].mxu0
      %v3622 = vadd.f32 %v3126, %v3621
      %v3623 = vpop.f32.mrb[0].mxu0
      %3624 = vmatprep.mubr.bf16.mxu0 0
      %3625 = vmatmul.mubr.bf16.gmra.mrb[0].mxu0 %v3094
      %v3626 = vpop.f32.mrb[0].mxu0
      %v3627 = vadd.f32 %v3126, %v3626
      %v3628 = vpop.f32.mrb[0].mxu0
      %v3629 = vpop.f32.mrb[0].mxu0
      %v3630 = vadd.f32 %v3126, %v3629
      %v3631 = vpop.f32.mrb[0].mxu0
      %3632 = vmatprep.mubr.bf16.mxu0 0
      %3633 = vmatmul.mubr.bf16.gmra.mrb[0].mxu0 %v3095
      %v3634 = vpop.f32.mrb[0].mxu0
      %v3635 = vadd.f32 %v3126, %v3634
      %v3636 = vpop.f32.mrb[0].mxu0
      %v3637 = vpop.f32.mrb[0].mxu0
      %v3638 = vadd.f32 %v3126, %v3637
      %v3639 = vpop.f32.mrb[0].mxu0
      %3640 = vmatprep.mubr.bf16.mxu0 0
      %3641 = vmatmul.mubr.bf16.gmra.mrb[0].mxu0 %v3096
      %v3642 = vpop.f32.mrb[0].mxu0
      %v3643 = vadd.f32 %v3126, %v3642
      %v3644 = vpop.f32.mrb[0].mxu0
      %v3645 = vpop.f32.mrb[0].mxu0
      %v3646 = vadd.f32 %v3126, %v3645
      %v3647 = vpop.f32.mrb[0].mxu0
      %3648 = vmatprep.mubr.bf16.mxu0 0
      %3649 = vmatmul.mubr.bf16.gmra.mrb[0].mxu0 %v3097
      %v3650 = vpop.f32.mrb[0].mxu0
      %v3651 = vadd.f32 %v3126, %v3650
      %v3652 = vpop.f32.mrb[0].mxu0
      %v3653 = vpop.f32.mrb[0].mxu0
      %v3654 = vadd.f32 %v3126, %v3653
      %v3655 = vpop.f32.mrb[0].mxu0
      %3656 = vmatprep.mubr.bf16.mxu0 0
      %3657 = vmatmul.mubr.bf16.gmra.mrb[0].mxu0 %v3098
      %v3658 = vpop.f32.mrb[0].mxu0
      %v3659 = vadd.f32 %v3126, %v3658
      %v3660 = vpop.f32.mrb[0].mxu0
      %v3661 = vpop.f32.mrb[0].mxu0
      %v3662 = vadd.f32 %v3126, %v3661
      %v3663 = vpop.f32.mrb[0].mxu0
      %3664 = vmatprep.mubr.bf16.mxu0 0
      %3665 = vmatmul.mubr.bf16.gmra.mrb[0].mxu0 %v3099
      %v3666 = vpop.f32.mrb[0].mxu0
      %v3667 = vadd.f32 %v3126, %v3666
      %v3668 = vpop.f32.mrb[0].mxu0
      %v3669 = vpop.f32.mrb[0].mxu0
      %v3670 = vadd.f32 %v3126, %v3669
      %v3671 = vpop.f32.mrb[0].mxu0
      %3672 = vmatprep.mubr.bf16.mxu0 0
      %3673 = vmatmul.mubr.bf16.gmra.mrb[0].mxu0 %v3100
      %v3674 = vpop.f32.mrb[0].mxu0
      %v3675 = vadd.f32 %v3126, %v3674
      %v3676 = vpop.f32.mrb[0].mxu0
      %v3677 = vpop.f32.mrb[0].mxu0
      %v3678 = vadd.f32 %v3126, %v3677
      %v3679 = vpop.f32.mrb[0].mxu0
      %3680 = vmatprep.mubr.bf16.mxu0 0
      %3681 = vmatmul.mubr.bf16.gmra.mrb[0].mxu0 %v3101
      %v3682 = vpop.f32.mrb[0].mxu0
      %v3683 = vadd.f32 %v3126, %v3682
      %v3684 = vpop.f32.mrb[0].mxu0
      %v3685 = vpop.f32.mrb[0].mxu0
      %v3686 = vadd.f32 %v3126, %v3685
      %v3687 = vpop.f32.mrb[0].mxu0
      %3688 = vmatprep.mubr.bf16.mxu0 0
      %3689 = vmatmul.mubr.bf16.gmra.mrb[0].mxu0 %v3102
      %v3690 = vpop.f32.mrb[0].mxu0
      %v3691 = vadd.f32 %v3126, %v3690
      %v3692 = vpop.f32.mrb[0].mxu0
      %v3693 = vpop.f32.mrb[0].mxu0
      %v3694 = vadd.f32 %v3126, %v3693
      %v3695 = vpop.f32.mrb[0].mxu0
      %3696 = vmatprep.mubr.bf16.mxu0 0
      %3697 = vmatmul.mubr.bf16.gmra.mrb[0].mxu0 %v3103
      %v3698 = vpop.f32.mrb[0].mxu0
      %v3699 = vadd.f32 %v3126, %v3698
      %v3700 = vpop.f32.mrb[0].mxu0
      %v3701 = vpop.f32.mrb[0].mxu0
      %v3702 = vadd.f32 %v3126, %v3701
      %v3703 = vpop.f32.mrb[0].mxu0
      %3704 = vmatprep.mubr.bf16.mxu0 0
      %3705 = vmatmul.mubr.bf16.gmra.mrb[0].mxu0 %v3104
      %v3706 = vpop.f32.mrb[0].mxu0
      %v3707 = vadd.f32 %v3126, %v3706
      %v3708 = vpop.f32.mrb[0].mxu0
      %v3709 = vpop.f32.mrb[0].mxu0
      %v3710 = vpop.f32.mrb[0].mxu0
      %3711 = vdwg.mxu0
      %v3712 = vmax.f32 %v3211, 0.0
      %v3713 = vmax.f32 %v3214, 0.0
      %v3714 = vmax.f32 %v3219, 0.0
      %v3715 = vmax.f32 %v3222, 0.0
      %v3716 = vmax.f32 %v3227, 0.0
      %v3717 = vmax.f32 %v3230, 0.0
      %v3718 = vmax.f32 %v3235, 0.0
      %v3719 = vmax.f32 %v3238, 0.0
      %v3720 = vmax.f32 %v3243, 0.0
      %v3721 = vmax.f32 %v3246, 0.0
      %v3722 = vmax.f32 %v3251, 0.0
      %v3723 = vmax.f32 %v3254, 0.0
      %v3724 = vmax.f32 %v3259, 0.0
      %v3725 = vmax.f32 %v3262, 0.0
      %v3726 = vmax.f32 %v3267, 0.0
      %v3727 = vmax.f32 %v3270, 0.0
      %v3728 = vmax.f32 %v3275, 0.0
      %v3729 = vmax.f32 %v3278, 0.0
      %v3730 = vmax.f32 %v3283, 0.0
      %v3731 = vmax.f32 %v3286, 0.0
      %v3732 = vmax.f32 %v3291, 0.0
      %v3733 = vmax.f32 %v3294, 0.0
      %v3734 = vmax.f32 %v3299, 0.0
      %v3735 = vmax.f32 %v3302, 0.0
      %v3736 = vmax.f32 %v3307, 0.0
      %v3737 = vmax.f32 %v3310, 0.0
      %v3738 = vmax.f32 %v3315, 0.0
      %v3739 = vmax.f32 %v3318, 0.0
      %v3740 = vmax.f32 %v3323, 0.0
      %v3741 = vmax.f32 %v3326, 0.0
      %v3742 = vmax.f32 %v3331, 0.0
      %v3743 = vmax.f32 %v3334, 0.0
      %v3744 = vmax.f32 %v3339, 0.0
      %v3745 = vmax.f32 %v3342, 0.0
      %v3746 = vmax.f32 %v3347, 0.0
      %v3747 = vmax.f32 %v3350, 0.0
      %v3748 = vmax.f32 %v3355, 0.0
      %v3749 = vmax.f32 %v3358, 0.0
      %v3750 = vmax.f32 %v3363, 0.0
      %v3751 = vmax.f32 %v3366, 0.0
      %v3752 = vmax.f32 %v3371, 0.0
      %v3753 = vmax.f32 %v3374, 0.0
      %v3754 = vmax.f32 %v3379, 0.0
      %v3755 = vmax.f32 %v3382, 0.0
      %v3756 = vmax.f32 %v3387, 0.0
      %v3757 = vmax.f32 %v3390, 0.0
      %v3758 = vmax.f32 %v3395, 0.0
      %v3759 = vmax.f32 %v3398, 0.0
      %v3760 = vmax.f32 %v3403, 0.0
      %v3761 = vmax.f32 %v3406, 0.0
      %v3762 = vmax.f32 %v3411, 0.0
      %v3763 = vmax.f32 %v3414, 0.0
      %v3764 = vmax.f32 %v3419, 0.0
      %v3765 = vmax.f32 %v3422, 0.0
      %v3766 = vmax.f32 %v3427, 0.0
      %v3767 = vmax.f32 %v3430, 0.0
      %v3768 = vmax.f32 %v3435, 0.0
      %v3769 = vmax.f32 %v3438, 0.0
      %v3770 = vmax.f32 %v3443, 0.0
      %v3771 = vmax.f32 %v3446, 0.0
      %v3772 = vmax.f32 %v3451, 0.0
      %v3773 = vmax.f32 %v3454, 0.0
      %v3774 = vmax.f32 %v3459, 0.0
      %v3775 = vmax.f32 %v3462, 0.0
      %v3776 = vmax.f32 %v3467, 0.0
      %v3777 = vmax.f32 %v3470, 0.0
      %v3778 = vmax.f32 %v3475, 0.0
      %v3779 = vmax.f32 %v3478, 0.0
      %v3780 = vmax.f32 %v3483, 0.0
      %v3781 = vmax.f32 %v3486, 0.0
      %v3782 = vmax.f32 %v3491, 0.0
      %v3783 = vmax.f32 %v3494, 0.0
      %v3784 = vmax.f32 %v3499, 0.0
      %v3785 = vmax.f32 %v3502, 0.0
      %v3786 = vmax.f32 %v3507, 0.0
      %v3787 = vmax.f32 %v3510, 0.0
      %v3788 = vmax.f32 %v3515, 0.0
      %v3789 = vmax.f32 %v3518, 0.0
      %v3790 = vmax.f32 %v3523, 0.0
      %v3791 = vmax.f32 %v3526, 0.0
      %v3792 = vmax.f32 %v3531, 0.0
      %v3793 = vmax.f32 %v3534, 0.0
      %v3794 = vmax.f32 %v3539, 0.0
      %v3795 = vmax.f32 %v3542, 0.0
      %v3796 = vmax.f32 %v3547, 0.0
      %v3797 = vmax.f32 %v3550, 0.0
      %v3798 = vmax.f32 %v3555, 0.0
      %v3799 = vmax.f32 %v3558, 0.0
      %v3800 = vmax.f32 %v3563, 0.0
      %v3801 = vmax.f32 %v3566, 0.0
      %v3802 = vmax.f32 %v3571, 0.0
      %v3803 = vmax.f32 %v3574, 0.0
      %v3804 = vmax.f32 %v3579, 0.0
      %v3805 = vmax.f32 %v3582, 0.0
      %v3806 = vmax.f32 %v3587, 0.0
      %v3807 = vmax.f32 %v3590, 0.0
      %v3808 = vmax.f32 %v3595, 0.0
      %v3809 = vmax.f32 %v3598, 0.0
      %v3810 = vmax.f32 %v3603, 0.0
      %v3811 = vmax.f32 %v3606, 0.0
      %v3812 = vmax.f32 %v3611, 0.0
      %v3813 = vmax.f32 %v3614, 0.0
      %v3814 = vmax.f32 %v3619, 0.0
      %v3815 = vmax.f32 %v3622, 0.0
      %v3816 = vmax.f32 %v3627, 0.0
      %v3817 = vmax.f32 %v3630, 0.0
      %v3818 = vmax.f32 %v3635, 0.0
      %v3819 = vmax.f32 %v3638, 0.0
      %v3820 = vmax.f32 %v3643, 0.0
      %v3821 = vmax.f32 %v3646, 0.0
      %v3822 = vmax.f32 %v3651, 0.0
      %v3823 = vmax.f32 %v3654, 0.0
      %v3824 = vmax.f32 %v3659, 0.0
      %v3825 = vmax.f32 %v3662, 0.0
      %v3826 = vmax.f32 %v3667, 0.0
      %v3827 = vmax.f32 %v3670, 0.0
      %v3828 = vmax.f32 %v3675, 0.0
      %v3829 = vmax.f32 %v3678, 0.0
      %v3830 = vmax.f32 %v3683, 0.0
      %v3831 = vmax.f32 %v3686, 0.0
      %v3832 = vmax.f32 %v3691, 0.0
      %v3833 = vmax.f32 %v3694, 0.0
      %v3834 = vmax.f32 %v3699, 0.0
      %v3835 = vmax.f32 %v3702, 0.0
      %v3836 = vmax.f32 %v3707, 0.0
      %v3837 = vpack.c.bf16 %v3713, %v3712
      %v3838 = vpack.c.bf16 %v3715, %v3714
      %v3839 = vpack.c.bf16 %v3717, %v3716
      %v3840 = vpack.c.bf16 %v3719, %v3718
      %v3841 = vpack.c.bf16 %v3721, %v3720
      %v3842 = vpack.c.bf16 %v3723, %v3722
      %v3843 = vpack.c.bf16 %v3725, %v3724
      %v3844 = vpack.c.bf16 %v3727, %v3726
      %v3845 = vpack.c.bf16 %v3729, %v3728
      %v3846 = vpack.c.bf16 %v3731, %v3730
      %v3847 = vpack.c.bf16 %v3733, %v3732
      %v3848 = vpack.c.bf16 %v3735, %v3734
      %v3849 = vpack.c.bf16 %v3737, %v3736
      %v3850 = vpack.c.bf16 %v3739, %v3738
      %v3851 = vpack.c.bf16 %v3741, %v3740
      %v3852 = vpack.c.bf16 %v3743, %v3742
      %v3853 = vpack.c.bf16 %v3745, %v3744
      %v3854 = vpack.c.bf16 %v3747, %v3746
      %v3855 = vpack.c.bf16 %v3749, %v3748
      %v3856 = vpack.c.bf16 %v3751, %v3750
      %v3857 = vpack.c.bf16 %v3753, %v3752
      %v3858 = vpack.c.bf16 %v3755, %v3754
      %v3859 = vpack.c.bf16 %v3757, %v3756
      %v3860 = vpack.c.bf16 %v3759, %v3758
      %v3861 = vpack.c.bf16 %v3761, %v3760
      %v3862 = vpack.c.bf16 %v3763, %v3762
      %v3863 = vpack.c.bf16 %v3765, %v3764
      %v3864 = vpack.c.bf16 %v3767, %v3766
      %v3865 = vpack.c.bf16 %v3769, %v3768
      %v3866 = vpack.c.bf16 %v3771, %v3770
      %v3867 = vpack.c.bf16 %v3773, %v3772
      %v3868 = vpack.c.bf16 %v3775, %v3774
      %v3869 = vpack.c.bf16 %v3777, %v3776
      %v3870 = vpack.c.bf16 %v3779, %v3778
      %v3871 = vpack.c.bf16 %v3781, %v3780
      %v3872 = vpack.c.bf16 %v3783, %v3782
      %v3873 = vpack.c.bf16 %v3785, %v3784
      %v3874 = vpack.c.bf16 %v3787, %v3786
      %v3875 = vpack.c.bf16 %v3789, %v3788
      %v3876 = vpack.c.bf16 %v3791, %v3790
      %v3877 = vpack.c.bf16 %v3793, %v3792
      %v3878 = vpack.c.bf16 %v3795, %v3794
      %v3879 = vpack.c.bf16 %v3797, %v3796
      %v3880 = vpack.c.bf16 %v3799, %v3798
      %v3881 = vpack.c.bf16 %v3801, %v3800
      %v3882 = vpack.c.bf16 %v3803, %v3802
      %v3883 = vpack.c.bf16 %v3805, %v3804
      %v3884 = vpack.c.bf16 %v3807, %v3806
      %v3885 = vpack.c.bf16 %v3809, %v3808
      %v3886 = vpack.c.bf16 %v3811, %v3810
      %v3887 = vpack.c.bf16 %v3813, %v3812
      %v3888 = vpack.c.bf16 %v3815, %v3814
      %v3889 = vpack.c.bf16 %v3817, %v3816
      %v3890 = vpack.c.bf16 %v3819, %v3818
      %v3891 = vpack.c.bf16 %v3821, %v3820
      %v3892 = vpack.c.bf16 %v3823, %v3822
      %v3893 = vpack.c.bf16 %v3825, %v3824
      %v3894 = vpack.c.bf16 %v3827, %v3826
      %v3895 = vpack.c.bf16 %v3829, %v3828
      %v3896 = vpack.c.bf16 %v3831, %v3830
      %v3897 = vpack.c.bf16 %v3833, %v3832
      %v3898 = vpack.c.bf16 %v3835, %v3834
      %v3899 = vpack.c.bf16 %v3836, %v3836
      %v3900 = vld [vmem:[%s4] sm:$0xf]
      %v3901 = vld [vmem:[%s4 + $0x4] sm:$0xf]
      %v3902 = vld [vmem:[%s4 + $0x8] sm:$0xf]
      %v3903 = vld [vmem:[%s4 + $0xc] sm:$0xf]
      %v3904 = vld [vmem:[%s4 + $0x10] sm:$0xf]
      %v3905 = vld [vmem:[%s4 + $0x14] sm:$0xf]
      %v3906 = vld [vmem:[%s4 + $0x18] sm:$0xf]
      %v3907 = vld [vmem:[%s4 + $0x1c] sm:$0xf]
      %v3908 = vld [vmem:[%s4 + $0x20] sm:$0xf]
      %v3909 = vld [vmem:[%s4 + $0x24] sm:$0xf]
      %v3910 = vld [vmem:[%s4 + $0x28] sm:$0xf]
      %v3911 = vld [vmem:[%s4 + $0x2c] sm:$0xf]
      %v3912 = vld [vmem:[%s4 + $0x30] sm:$0xf]
      %v3913 = vld [vmem:[%s4 + $0x34] sm:$0xf]
      %v3914 = vld [vmem:[%s4 + $0x38] sm:$0xf]
      %v3915 = vld [vmem:[%s4 + $0x3c] sm:$0xf]
      %v3916 = vld [vmem:[%s5] sm:$0x1]
      %v3918 = vlaneseq
      %v3919 = vshrl.u32 %v3918, 7
      %v3920 = vsub.s32 0, %v3919
      %v3921 = vrot.slane %v3916, %v3920
      %v3939 = vunpack.c.l.b16 %v3900
      %v3940 = vunpack.c.l.b16 %v3901
      %v3941 = vunpack.c.l.b16 %v3902
      %v3942 = vunpack.c.l.b16 %v3903
      %v3943 = vunpack.c.l.b16 %v3904
      %v3944 = vunpack.c.l.b16 %v3905
      %v3945 = vunpack.c.l.b16 %v3906
      %v3946 = vunpack.c.l.b16 %v3907
      %v3947 = vunpack.c.l.b16 %v3908
      %v3948 = vunpack.c.l.b16 %v3909
      %v3949 = vunpack.c.l.b16 %v3910
      %v3950 = vunpack.c.l.b16 %v3911
      %v3951 = vunpack.c.l.b16 %v3912
      %v3952 = vunpack.c.l.b16 %v3913
      %v3953 = vunpack.c.l.b16 %v3914
      %v3954 = vunpack.c.l.b16 %v3915
      %v3955 = vpack.c.b16 %v3940, %v3939
      %v3956 = vpack.c.b16 %v3942, %v3941
      %v3957 = vpack.c.b16 %v3944, %v3943
      %v3958 = vpack.c.b16 %v3946, %v3945
      %v3959 = vpack.c.b16 %v3948, %v3947
      %v3960 = vpack.c.b16 %v3950, %v3949
      %v3961 = vpack.c.b16 %v3952, %v3951
      %v3962 = vpack.c.b16 %v3954, %v3953
      %3971 = vmatprep.subr.bf16.mxu0 0
      %3972 = vmatpush1.bf16.msra.mxu0 %v3955
      %3973 = vmatprep.subr.bf16.mxu0 0
      %3974 = vmatpush1.bf16.msra.mxu0 %v3956
      %3975 = vmatprep.subr.bf16.mxu0 0
      %3976 = vmatpush1.bf16.msra.mxu0 %v3957
      %3977 = vmatprep.subr.bf16.mxu0 0
      %3978 = vmatpush1.bf16.msra.mxu0 %v3958
      %3979 = vmatprep.subr.bf16.mxu0 0
      %3980 = vmatpush1.bf16.msra.mxu0 %v3959
      %3981 = vmatprep.subr.bf16.mxu0 0
      %3982 = vmatpush1.bf16.msra.mxu0 %v3960
      %3983 = vmatprep.subr.bf16.mxu0 0
      %3984 = vmatpush1.bf16.msra.mxu0 %v3961
      %3985 = vmatprep.subr.bf16.mxu0 0
      %3986 = vmatpush1.bf16.msra.mxu0 %v3962
      %3987 = vmatprep.subr.bf16.mxu0 0
      %3988 = vmatpush1.bf16.msra.mxu0 0
      %3989 = vmatprep.subr.bf16.mxu0 0
      %3990 = vmatpush1.bf16.msra.mxu0 0
      %3991 = vmatprep.subr.bf16.mxu0 0
      %3992 = vmatpush1.bf16.msra.mxu0 0
      %3993 = vmatprep.subr.bf16.mxu0 0
      %3994 = vmatpush1.bf16.msra.mxu0 0
      %3995 = vmatprep.subr.bf16.mxu0 0
      %3996 = vmatpush1.bf16.msra.mxu0 0
      %3997 = vmatprep.subr.bf16.mxu0 0
      %3998 = vmatpush1.bf16.msra.mxu0 0
      %3999 = vmatprep.subr.bf16.mxu0 0
      %4000 = vmatpush1.bf16.msra.mxu0 0
      %4001 = vmatprep.subr.bf16.mxu0 0
      %4002 = vmatpush1.bf16.msra.mxu0 0
      %4003 = vmatprep.mubr.bf16.mxu0 0
      %4004 = vmatmul.mubr.bf16.gmra.mrb[0].mxu0 %v3837
      %v4005 = vpop.f32.mrb[0].mxu0
      %v4006 = vadd.f32 %v3921, %v4005
      %v4007 = vpop.f32.mrb[0].mxu0
      %v4008 = vpop.f32.mrb[0].mxu0
      %v4009 = vadd.f32 %v3921, %v4008
      %v4010 = vpop.f32.mrb[0].mxu0
      %4011 = vmatprep.mubr.bf16.mxu0 0
      %4012 = vmatmul.mubr.bf16.gmra.mrb[0].mxu0 %v3838
      %v4013 = vpop.f32.mrb[0].mxu0
      %v4014 = vadd.f32 %v3921, %v4013
      %v4015 = vpop.f32.mrb[0].mxu0
      %v4016 = vpop.f32.mrb[0].mxu0
      %v4017 = vadd.f32 %v3921, %v4016
      %v4018 = vpop.f32.mrb[0].mxu0
      %4019 = vmatprep.mubr.bf16.mxu0 0
      %4020 = vmatmul.mubr.bf16.gmra.mrb[0].mxu0 %v3839
      %v4021 = vpop.f32.mrb[0].mxu0
      %v4022 = vadd.f32 %v3921, %v4021
      %v4023 = vpop.f32.mrb[0].mxu0
      %v4024 = vpop.f32.mrb[0].mxu0
      %v4025 = vadd.f32 %v3921, %v4024
      %v4026 = vpop.f32.mrb[0].mxu0
      %4027 = vmatprep.mubr.bf16.mxu0 0
      %4028 = vmatmul.mubr.bf16.gmra.mrb[0].mxu0 %v3840
      %v4029 = vpop.f32.mrb[0].mxu0
      %v4030 = vadd.f32 %v3921, %v4029
      %v4031 = vpop.f32.mrb[0].mxu0
      %v4032 = vpop.f32.mrb[0].mxu0
      %v4033 = vadd.f32 %v3921, %v4032
      %v4034 = vpop.f32.mrb[0].mxu0
      %4035 = vmatprep.mubr.bf16.mxu0 0
      %4036 = vmatmul.mubr.bf16.gmra.mrb[0].mxu0 %v3841
      %v4037 = vpop.f32.mrb[0].mxu0
      %v4038 = vadd.f32 %v3921, %v4037
      %v4039 = vpop.f32.mrb[0].mxu0
      %v4040 = vpop.f32.mrb[0].mxu0
      %v4041 = vadd.f32 %v3921, %v4040
      %v4042 = vpop.f32.mrb[0].mxu0
      %4043 = vmatprep.mubr.bf16.mxu0 0
      %4044 = vmatmul.mubr.bf16.gmra.mrb[0].mxu0 %v3842
      %v4045 = vpop.f32.mrb[0].mxu0
      %v4046 = vadd.f32 %v3921, %v4045
      %v4047 = vpop.f32.mrb[0].mxu0
      %v4048 = vpop.f32.mrb[0].mxu0
      %v4049 = vadd.f32 %v3921, %v4048
      %v4050 = vpop.f32.mrb[0].mxu0
      %4051 = vmatprep.mubr.bf16.mxu0 0
      %4052 = vmatmul.mubr.bf16.gmra.mrb[0].mxu0 %v3843
      %v4053 = vpop.f32.mrb[0].mxu0
      %v4054 = vadd.f32 %v3921, %v4053
      %v4055 = vpop.f32.mrb[0].mxu0
      %v4056 = vpop.f32.mrb[0].mxu0
      %v4057 = vadd.f32 %v3921, %v4056
      %v4058 = vpop.f32.mrb[0].mxu0
      %4059 = vmatprep.mubr.bf16.mxu0 0
      %4060 = vmatmul.mubr.bf16.gmra.mrb[0].mxu0 %v3844
      %v4061 = vpop.f32.mrb[0].mxu0
      %v4062 = vadd.f32 %v3921, %v4061
      %v4063 = vpop.f32.mrb[0].mxu0
      %v4064 = vpop.f32.mrb[0].mxu0
      %v4065 = vadd.f32 %v3921, %v4064
      %v4066 = vpop.f32.mrb[0].mxu0
      %4067 = vmatprep.mubr.bf16.mxu0 0
      %4068 = vmatmul.mubr.bf16.gmra.mrb[0].mxu0 %v3845
      %v4069 = vpop.f32.mrb[0].mxu0
      %v4070 = vadd.f32 %v3921, %v4069
      %v4071 = vpop.f32.mrb[0].mxu0
      %v4072 = vpop.f32.mrb[0].mxu0
      %v4073 = vadd.f32 %v3921, %v4072
      %v4074 = vpop.f32.mrb[0].mxu0
      %4075 = vmatprep.mubr.bf16.mxu0 0
      %4076 = vmatmul.mubr.bf16.gmra.mrb[0].mxu0 %v3846
      %v4077 = vpop.f32.mrb[0].mxu0
      %v4078 = vadd.f32 %v3921, %v4077
      %v4079 = vpop.f32.mrb[0].mxu0
      %v4080 = vpop.f32.mrb[0].mxu0
      %v4081 = vadd.f32 %v3921, %v4080
      %v4082 = vpop.f32.mrb[0].mxu0
      %4083 = vmatprep.mubr.bf16.mxu0 0
      %4084 = vmatmul.mubr.bf16.gmra.mrb[0].mxu0 %v3847
      %v4085 = vpop.f32.mrb[0].mxu0
      %v4086 = vadd.f32 %v3921, %v4085
      %v4087 = vpop.f32.mrb[0].mxu0
      %v4088 = vpop.f32.mrb[0].mxu0
      %v4089 = vadd.f32 %v3921, %v4088
      %v4090 = vpop.f32.mrb[0].mxu0
      %4091 = vmatprep.mubr.bf16.mxu0 0
      %4092 = vmatmul.mubr.bf16.gmra.mrb[0].mxu0 %v3848
      %v4093 = vpop.f32.mrb[0].mxu0
      %v4094 = vadd.f32 %v3921, %v4093
      %v4095 = vpop.f32.mrb[0].mxu0
      %v4096 = vpop.f32.mrb[0].mxu0
      %v4097 = vadd.f32 %v3921, %v4096
      %v4098 = vpop.f32.mrb[0].mxu0
      %4099 = vmatprep.mubr.bf16.mxu0 0
      %4100 = vmatmul.mubr.bf16.gmra.mrb[0].mxu0 %v3849
      %v4101 = vpop.f32.mrb[0].mxu0
      %v4102 = vadd.f32 %v3921, %v4101
      %v4103 = vpop.f32.mrb[0].mxu0
      %v4104 = vpop.f32.mrb[0].mxu0
      %v4105 = vadd.f32 %v3921, %v4104
      %v4106 = vpop.f32.mrb[0].mxu0
      %4107 = vmatprep.mubr.bf16.mxu0 0
      %4108 = vmatmul.mubr.bf16.gmra.mrb[0].mxu0 %v3850
      %v4109 = vpop.f32.mrb[0].mxu0
      %v4110 = vadd.f32 %v3921, %v4109
      %v4111 = vpop.f32.mrb[0].mxu0
      %v4112 = vpop.f32.mrb[0].mxu0
      %v4113 = vadd.f32 %v3921, %v4112
      %v4114 = vpop.f32.mrb[0].mxu0
      %4115 = vmatprep.mubr.bf16.mxu0 0
      %4116 = vmatmul.mubr.bf16.gmra.mrb[0].mxu0 %v3851
      %v4117 = vpop.f32.mrb[0].mxu0
      %v4118 = vadd.f32 %v3921, %v4117
      %v4119 = vpop.f32.mrb[0].mxu0
      %v4120 = vpop.f32.mrb[0].mxu0
      %v4121 = vadd.f32 %v3921, %v4120
      %v4122 = vpop.f32.mrb[0].mxu0
      %4123 = vmatprep.mubr.bf16.mxu0 0
      %4124 = vmatmul.mubr.bf16.gmra.mrb[0].mxu0 %v3852
      %v4125 = vpop.f32.mrb[0].mxu0
      %v4126 = vadd.f32 %v3921, %v4125
      %v4127 = vpop.f32.mrb[0].mxu0
      %v4128 = vpop.f32.mrb[0].mxu0
      %v4129 = vadd.f32 %v3921, %v4128
      %v4130 = vpop.f32.mrb[0].mxu0
      %4131 = vmatprep.mubr.bf16.mxu0 0
      %4132 = vmatmul.mubr.bf16.gmra.mrb[0].mxu0 %v3853
      %v4133 = vpop.f32.mrb[0].mxu0
      %v4134 = vadd.f32 %v3921, %v4133
      %v4135 = vpop.f32.mrb[0].mxu0
      %v4136 = vpop.f32.mrb[0].mxu0
      %v4137 = vadd.f32 %v3921, %v4136
      %v4138 = vpop.f32.mrb[0].mxu0
      %4139 = vmatprep.mubr.bf16.mxu0 0
      %4140 = vmatmul.mubr.bf16.gmra.mrb[0].mxu0 %v3854
      %v4141 = vpop.f32.mrb[0].mxu0
      %v4142 = vadd.f32 %v3921, %v4141
      %v4143 = vpop.f32.mrb[0].mxu0
      %v4144 = vpop.f32.mrb[0].mxu0
      %v4145 = vadd.f32 %v3921, %v4144
      %v4146 = vpop.f32.mrb[0].mxu0
      %4147 = vmatprep.mubr.bf16.mxu0 0
      %4148 = vmatmul.mubr.bf16.gmra.mrb[0].mxu0 %v3855
      %v4149 = vpop.f32.mrb[0].mxu0
      %v4150 = vadd.f32 %v3921, %v4149
      %v4151 = vpop.f32.mrb[0].mxu0
      %v4152 = vpop.f32.mrb[0].mxu0
      %v4153 = vadd.f32 %v3921, %v4152
      %v4154 = vpop.f32.mrb[0].mxu0
      %4155 = vmatprep.mubr.bf16.mxu0 0
      %4156 = vmatmul.mubr.bf16.gmra.mrb[0].mxu0 %v3856
      %v4157 = vpop.f32.mrb[0].mxu0
      %v4158 = vadd.f32 %v3921, %v4157
      %v4159 = vpop.f32.mrb[0].mxu0
      %v4160 = vpop.f32.mrb[0].mxu0
      %v4161 = vadd.f32 %v3921, %v4160
      %v4162 = vpop.f32.mrb[0].mxu0
      %4163 = vmatprep.mubr.bf16.mxu0 0
      %4164 = vmatmul.mubr.bf16.gmra.mrb[0].mxu0 %v3857
      %v4165 = vpop.f32.mrb[0].mxu0
      %v4166 = vadd.f32 %v3921, %v4165
      %v4167 = vpop.f32.mrb[0].mxu0
      %v4168 = vpop.f32.mrb[0].mxu0
      %v4169 = vadd.f32 %v3921, %v4168
      %v4170 = vpop.f32.mrb[0].mxu0
      %4171 = vmatprep.mubr.bf16.mxu0 0
      %4172 = vmatmul.mubr.bf16.gmra.mrb[0].mxu0 %v3858
      %v4173 = vpop.f32.mrb[0].mxu0
      %v4174 = vadd.f32 %v3921, %v4173
      %v4175 = vpop.f32.mrb[0].mxu0
      %v4176 = vpop.f32.mrb[0].mxu0
      %v4177 = vadd.f32 %v3921, %v4176
      %v4178 = vpop.f32.mrb[0].mxu0
      %4179 = vmatprep.mubr.bf16.mxu0 0
      %4180 = vmatmul.mubr.bf16.gmra.mrb[0].mxu0 %v3859
      %v4181 = vpop.f32.mrb[0].mxu0
      %v4182 = vadd.f32 %v3921, %v4181
      %v4183 = vpop.f32.mrb[0].mxu0
      %v4184 = vpop.f32.mrb[0].mxu0
      %v4185 = vadd.f32 %v3921, %v4184
      %v4186 = vpop.f32.mrb[0].mxu0
      %4187 = vmatprep.mubr.bf16.mxu0 0
      %4188 = vmatmul.mubr.bf16.gmra.mrb[0].mxu0 %v3860
      %v4189 = vpop.f32.mrb[0].mxu0
      %v4190 = vadd.f32 %v3921, %v4189
      %v4191 = vpop.f32.mrb[0].mxu0
      %v4192 = vpop.f32.mrb[0].mxu0
      %v4193 = vadd.f32 %v3921, %v4192
      %v4194 = vpop.f32.mrb[0].mxu0
      %4195 = vmatprep.mubr.bf16.mxu0 0
      %4196 = vmatmul.mubr.bf16.gmra.mrb[0].mxu0 %v3861
      %v4197 = vpop.f32.mrb[0].mxu0
      %v4198 = vadd.f32 %v3921, %v4197
      %v4199 = vpop.f32.mrb[0].mxu0
      %v4200 = vpop.f32.mrb[0].mxu0
      %v4201 = vadd.f32 %v3921, %v4200
      %v4202 = vpop.f32.mrb[0].mxu0
      %4203 = vmatprep.mubr.bf16.mxu0 0
      %4204 = vmatmul.mubr.bf16.gmra.mrb[0].mxu0 %v3862
      %v4205 = vpop.f32.mrb[0].mxu0
      %v4206 = vadd.f32 %v3921, %v4205
      %v4207 = vpop.f32.mrb[0].mxu0
      %v4208 = vpop.f32.mrb[0].mxu0
      %v4209 = vadd.f32 %v3921, %v4208
      %v4210 = vpop.f32.mrb[0].mxu0
      %4211 = vmatprep.mubr.bf16.mxu0 0
      %4212 = vmatmul.mubr.bf16.gmra.mrb[0].mxu0 %v3863
      %v4213 = vpop.f32.mrb[0].mxu0
      %v4214 = vadd.f32 %v3921, %v4213
      %v4215 = vpop.f32.mrb[0].mxu0
      %v4216 = vpop.f32.mrb[0].mxu0
      %v4217 = vadd.f32 %v3921, %v4216
      %v4218 = vpop.f32.mrb[0].mxu0
      %4219 = vmatprep.mubr.bf16.mxu0 0
      %4220 = vmatmul.mubr.bf16.gmra.mrb[0].mxu0 %v3864
      %v4221 = vpop.f32.mrb[0].mxu0
      %v4222 = vadd.f32 %v3921, %v4221
      %v4223 = vpop.f32.mrb[0].mxu0
      %v4224 = vpop.f32.mrb[0].mxu0
      %v4225 = vadd.f32 %v3921, %v4224
      %v4226 = vpop.f32.mrb[0].mxu0
      %4227 = vmatprep.mubr.bf16.mxu0 0
      %4228 = vmatmul.mubr.bf16.gmra.mrb[0].mxu0 %v3865
      %v4229 = vpop.f32.mrb[0].mxu0
      %v4230 = vadd.f32 %v3921, %v4229
      %v4231 = vpop.f32.mrb[0].mxu0
      %v4232 = vpop.f32.mrb[0].mxu0
      %v4233 = vadd.f32 %v3921, %v4232
      %v4234 = vpop.f32.mrb[0].mxu0
      %4235 = vmatprep.mubr.bf16.mxu0 0
      %4236 = vmatmul.mubr.bf16.gmra.mrb[0].mxu0 %v3866
      %v4237 = vpop.f32.mrb[0].mxu0
      %v4238 = vadd.f32 %v3921, %v4237
      %v4239 = vpop.f32.mrb[0].mxu0
      %v4240 = vpop.f32.mrb[0].mxu0
      %v4241 = vadd.f32 %v3921, %v4240
      %v4242 = vpop.f32.mrb[0].mxu0
      %4243 = vmatprep.mubr.bf16.mxu0 0
      %4244 = vmatmul.mubr.bf16.gmra.mrb[0].mxu0 %v3867
      %v4245 = vpop.f32.mrb[0].mxu0
      %v4246 = vadd.f32 %v3921, %v4245
      %v4247 = vpop.f32.mrb[0].mxu0
      %v4248 = vpop.f32.mrb[0].mxu0
      %v4249 = vadd.f32 %v3921, %v4248
      %v4250 = vpop.f32.mrb[0].mxu0
      %4251 = vmatprep.mubr.bf16.mxu0 0
      %4252 = vmatmul.mubr.bf16.gmra.mrb[0].mxu0 %v3868
      %v4253 = vpop.f32.mrb[0].mxu0
      %v4254 = vadd.f32 %v3921, %v4253
      %v4255 = vpop.f32.mrb[0].mxu0
      %v4256 = vpop.f32.mrb[0].mxu0
      %v4257 = vadd.f32 %v3921, %v4256
      %v4258 = vpop.f32.mrb[0].mxu0
      %4259 = vmatprep.mubr.bf16.mxu0 0
      %4260 = vmatmul.mubr.bf16.gmra.mrb[0].mxu0 %v3869
      %v4261 = vpop.f32.mrb[0].mxu0
      %v4262 = vadd.f32 %v3921, %v4261
      %v4263 = vpop.f32.mrb[0].mxu0
      %v4264 = vpop.f32.mrb[0].mxu0
      %v4265 = vadd.f32 %v3921, %v4264
      %v4266 = vpop.f32.mrb[0].mxu0
      %4267 = vmatprep.mubr.bf16.mxu0 0
      %4268 = vmatmul.mubr.bf16.gmra.mrb[0].mxu0 %v3870
      %v4269 = vpop.f32.mrb[0].mxu0
      %v4270 = vadd.f32 %v3921, %v4269
      %v4271 = vpop.f32.mrb[0].mxu0
      %v4272 = vpop.f32.mrb[0].mxu0
      %v4273 = vadd.f32 %v3921, %v4272
      %v4274 = vpop.f32.mrb[0].mxu0
      %4275 = vmatprep.mubr.bf16.mxu0 0
      %4276 = vmatmul.mubr.bf16.gmra.mrb[0].mxu0 %v3871
      %v4277 = vpop.f32.mrb[0].mxu0
      %v4278 = vadd.f32 %v3921, %v4277
      %v4279 = vpop.f32.mrb[0].mxu0
      %v4280 = vpop.f32.mrb[0].mxu0
      %v4281 = vadd.f32 %v3921, %v4280
      %v4282 = vpop.f32.mrb[0].mxu0
      %4283 = vmatprep.mubr.bf16.mxu0 0
      %4284 = vmatmul.mubr.bf16.gmra.mrb[0].mxu0 %v3872
      %v4285 = vpop.f32.mrb[0].mxu0
      %v4286 = vadd.f32 %v3921, %v4285
      %v4287 = vpop.f32.mrb[0].mxu0
      %v4288 = vpop.f32.mrb[0].mxu0
      %v4289 = vadd.f32 %v3921, %v4288
      %v4290 = vpop.f32.mrb[0].mxu0
      %4291 = vmatprep.mubr.bf16.mxu0 0
      %4292 = vmatmul.mubr.bf16.gmra.mrb[0].mxu0 %v3873
      %v4293 = vpop.f32.mrb[0].mxu0
      %v4294 = vadd.f32 %v3921, %v4293
      %v4295 = vpop.f32.mrb[0].mxu0
      %v4296 = vpop.f32.mrb[0].mxu0
      %v4297 = vadd.f32 %v3921, %v4296
      %v4298 = vpop.f32.mrb[0].mxu0
      %4299 = vmatprep.mubr.bf16.mxu0 0
      %4300 = vmatmul.mubr.bf16.gmra.mrb[0].mxu0 %v3874
      %v4301 = vpop.f32.mrb[0].mxu0
      %v4302 = vadd.f32 %v3921, %v4301
      %v4303 = vpop.f32.mrb[0].mxu0
      %v4304 = vpop.f32.mrb[0].mxu0
      %v4305 = vadd.f32 %v3921, %v4304
      %v4306 = vpop.f32.mrb[0].mxu0
      %4307 = vmatprep.mubr.bf16.mxu0 0
      %4308 = vmatmul.mubr.bf16.gmra.mrb[0].mxu0 %v3875
      %v4309 = vpop.f32.mrb[0].mxu0
      %v4310 = vadd.f32 %v3921, %v4309
      %v4311 = vpop.f32.mrb[0].mxu0
      %v4312 = vpop.f32.mrb[0].mxu0
      %v4313 = vadd.f32 %v3921, %v4312
      %v4314 = vpop.f32.mrb[0].mxu0
      %4315 = vmatprep.mubr.bf16.mxu0 0
      %4316 = vmatmul.mubr.bf16.gmra.mrb[0].mxu0 %v3876
      %v4317 = vpop.f32.mrb[0].mxu0
      %v4318 = vadd.f32 %v3921, %v4317
      %v4319 = vpop.f32.mrb[0].mxu0
      %v4320 = vpop.f32.mrb[0].mxu0
      %v4321 = vadd.f32 %v3921, %v4320
      %v4322 = vpop.f32.mrb[0].mxu0
      %4323 = vmatprep.mubr.bf16.mxu0 0
      %4324 = vmatmul.mubr.bf16.gmra.mrb[0].mxu0 %v3877
      %v4325 = vpop.f32.mrb[0].mxu0
      %v4326 = vadd.f32 %v3921, %v4325
      %v4327 = vpop.f32.mrb[0].mxu0
      %v4328 = vpop.f32.mrb[0].mxu0
      %v4329 = vadd.f32 %v3921, %v4328
      %v4330 = vpop.f32.mrb[0].mxu0
      %4331 = vmatprep.mubr.bf16.mxu0 0
      %4332 = vmatmul.mubr.bf16.gmra.mrb[0].mxu0 %v3878
      %v4333 = vpop.f32.mrb[0].mxu0
      %v4334 = vadd.f32 %v3921, %v4333
      %v4335 = vpop.f32.mrb[0].mxu0
      %v4336 = vpop.f32.mrb[0].mxu0
      %v4337 = vadd.f32 %v3921, %v4336
      %v4338 = vpop.f32.mrb[0].mxu0
      %4339 = vmatprep.mubr.bf16.mxu0 0
      %4340 = vmatmul.mubr.bf16.gmra.mrb[0].mxu0 %v3879
      %v4341 = vpop.f32.mrb[0].mxu0
      %v4342 = vadd.f32 %v3921, %v4341
      %v4343 = vpop.f32.mrb[0].mxu0
      %v4344 = vpop.f32.mrb[0].mxu0
      %v4345 = vadd.f32 %v3921, %v4344
      %v4346 = vpop.f32.mrb[0].mxu0
      %4347 = vmatprep.mubr.bf16.mxu0 0
      %4348 = vmatmul.mubr.bf16.gmra.mrb[0].mxu0 %v3880
      %v4349 = vpop.f32.mrb[0].mxu0
      %v4350 = vadd.f32 %v3921, %v4349
      %v4351 = vpop.f32.mrb[0].mxu0
      %v4352 = vpop.f32.mrb[0].mxu0
      %v4353 = vadd.f32 %v3921, %v4352
      %v4354 = vpop.f32.mrb[0].mxu0
      %4355 = vmatprep.mubr.bf16.mxu0 0
      %4356 = vmatmul.mubr.bf16.gmra.mrb[0].mxu0 %v3881
      %v4357 = vpop.f32.mrb[0].mxu0
      %v4358 = vadd.f32 %v3921, %v4357
      %v4359 = vpop.f32.mrb[0].mxu0
      %v4360 = vpop.f32.mrb[0].mxu0
      %v4361 = vadd.f32 %v3921, %v4360
      %v4362 = vpop.f32.mrb[0].mxu0
      %4363 = vmatprep.mubr.bf16.mxu0 0
      %4364 = vmatmul.mubr.bf16.gmra.mrb[0].mxu0 %v3882
      %v4365 = vpop.f32.mrb[0].mxu0
      %v4366 = vadd.f32 %v3921, %v4365
      %v4367 = vpop.f32.mrb[0].mxu0
      %v4368 = vpop.f32.mrb[0].mxu0
      %v4369 = vadd.f32 %v3921, %v4368
      %v4370 = vpop.f32.mrb[0].mxu0
      %4371 = vmatprep.mubr.bf16.mxu0 0
      %4372 = vmatmul.mubr.bf16.gmra.mrb[0].mxu0 %v3883
      %v4373 = vpop.f32.mrb[0].mxu0
      %v4374 = vadd.f32 %v3921, %v4373
      %v4375 = vpop.f32.mrb[0].mxu0
      %v4376 = vpop.f32.mrb[0].mxu0
      %v4377 = vadd.f32 %v3921, %v4376
      %v4378 = vpop.f32.mrb[0].mxu0
      %4379 = vmatprep.mubr.bf16.mxu0 0
      %4380 = vmatmul.mubr.bf16.gmra.mrb[0].mxu0 %v3884
      %v4381 = vpop.f32.mrb[0].mxu0
      %v4382 = vadd.f32 %v3921, %v4381
      %v4383 = vpop.f32.mrb[0].mxu0
      %v4384 = vpop.f32.mrb[0].mxu0
      %v4385 = vadd.f32 %v3921, %v4384
      %v4386 = vpop.f32.mrb[0].mxu0
      %4387 = vmatprep.mubr.bf16.mxu0 0
      %4388 = vmatmul.mubr.bf16.gmra.mrb[0].mxu0 %v3885
      %v4389 = vpop.f32.mrb[0].mxu0
      %v4390 = vadd.f32 %v3921, %v4389
      %v4391 = vpop.f32.mrb[0].mxu0
      %v4392 = vpop.f32.mrb[0].mxu0
      %v4393 = vadd.f32 %v3921, %v4392
      %v4394 = vpop.f32.mrb[0].mxu0
      %4395 = vmatprep.mubr.bf16.mxu0 0
      %4396 = vmatmul.mubr.bf16.gmra.mrb[0].mxu0 %v3886
      %v4397 = vpop.f32.mrb[0].mxu0
      %v4398 = vadd.f32 %v3921, %v4397
      %v4399 = vpop.f32.mrb[0].mxu0
      %v4400 = vpop.f32.mrb[0].mxu0
      %v4401 = vadd.f32 %v3921, %v4400
      %v4402 = vpop.f32.mrb[0].mxu0
      %4403 = vmatprep.mubr.bf16.mxu0 0
      %4404 = vmatmul.mubr.bf16.gmra.mrb[0].mxu0 %v3887
      %v4405 = vpop.f32.mrb[0].mxu0
      %v4406 = vadd.f32 %v3921, %v4405
      %v4407 = vpop.f32.mrb[0].mxu0
      %v4408 = vpop.f32.mrb[0].mxu0
      %v4409 = vadd.f32 %v3921, %v4408
      %v4410 = vpop.f32.mrb[0].mxu0
      %4411 = vmatprep.mubr.bf16.mxu0 0
      %4412 = vmatmul.mubr.bf16.gmra.mrb[0].mxu0 %v3888
      %v4413 = vpop.f32.mrb[0].mxu0
      %v4414 = vadd.f32 %v3921, %v4413
      %v4415 = vpop.f32.mrb[0].mxu0
      %v4416 = vpop.f32.mrb[0].mxu0
      %v4417 = vadd.f32 %v3921, %v4416
      %v4418 = vpop.f32.mrb[0].mxu0
      %4419 = vmatprep.mubr.bf16.mxu0 0
      %4420 = vmatmul.mubr.bf16.gmra.mrb[0].mxu0 %v3889
      %v4421 = vpop.f32.mrb[0].mxu0
      %v4422 = vadd.f32 %v3921, %v4421
      %v4423 = vpop.f32.mrb[0].mxu0
      %v4424 = vpop.f32.mrb[0].mxu0
      %v4425 = vadd.f32 %v3921, %v4424
      %v4426 = vpop.f32.mrb[0].mxu0
      %4427 = vmatprep.mubr.bf16.mxu0 0
      %4428 = vmatmul.mubr.bf16.gmra.mrb[0].mxu0 %v3890
      %v4429 = vpop.f32.mrb[0].mxu0
      %v4430 = vadd.f32 %v3921, %v4429
      %v4431 = vpop.f32.mrb[0].mxu0
      %v4432 = vpop.f32.mrb[0].mxu0
      %v4433 = vadd.f32 %v3921, %v4432
      %v4434 = vpop.f32.mrb[0].mxu0
      %4435 = vmatprep.mubr.bf16.mxu0 0
      %4436 = vmatmul.mubr.bf16.gmra.mrb[0].mxu0 %v3891
      %v4437 = vpop.f32.mrb[0].mxu0
      %v4438 = vadd.f32 %v3921, %v4437
      %v4439 = vpop.f32.mrb[0].mxu0
      %v4440 = vpop.f32.mrb[0].mxu0
      %v4441 = vadd.f32 %v3921, %v4440
      %v4442 = vpop.f32.mrb[0].mxu0
      %4443 = vmatprep.mubr.bf16.mxu0 0
      %4444 = vmatmul.mubr.bf16.gmra.mrb[0].mxu0 %v3892
      %v4445 = vpop.f32.mrb[0].mxu0
      %v4446 = vadd.f32 %v3921, %v4445
      %v4447 = vpop.f32.mrb[0].mxu0
      %v4448 = vpop.f32.mrb[0].mxu0
      %v4449 = vadd.f32 %v3921, %v4448
      %v4450 = vpop.f32.mrb[0].mxu0
      %4451 = vmatprep.mubr.bf16.mxu0 0
      %4452 = vmatmul.mubr.bf16.gmra.mrb[0].mxu0 %v3893
      %v4453 = vpop.f32.mrb[0].mxu0
      %v4454 = vadd.f32 %v3921, %v4453
      %v4455 = vpop.f32.mrb[0].mxu0
      %v4456 = vpop.f32.mrb[0].mxu0
      %v4457 = vadd.f32 %v3921, %v4456
      %v4458 = vpop.f32.mrb[0].mxu0
      %4459 = vmatprep.mubr.bf16.mxu0 0
      %4460 = vmatmul.mubr.bf16.gmra.mrb[0].mxu0 %v3894
      %v4461 = vpop.f32.mrb[0].mxu0
      %v4462 = vadd.f32 %v3921, %v4461
      %v4463 = vpop.f32.mrb[0].mxu0
      %v4464 = vpop.f32.mrb[0].mxu0
      %v4465 = vadd.f32 %v3921, %v4464
      %v4466 = vpop.f32.mrb[0].mxu0
      %4467 = vmatprep.mubr.bf16.mxu0 0
      %4468 = vmatmul.mubr.bf16.gmra.mrb[0].mxu0 %v3895
      %v4469 = vpop.f32.mrb[0].mxu0
      %v4470 = vadd.f32 %v3921, %v4469
      %v4471 = vpop.f32.mrb[0].mxu0
      %v4472 = vpop.f32.mrb[0].mxu0
      %v4473 = vadd.f32 %v3921, %v4472
      %v4474 = vpop.f32.mrb[0].mxu0
      %4475 = vmatprep.mubr.bf16.mxu0 0
      %4476 = vmatmul.mubr.bf16.gmra.mrb[0].mxu0 %v3896
      %v4477 = vpop.f32.mrb[0].mxu0
      %v4478 = vadd.f32 %v3921, %v4477
      %v4479 = vpop.f32.mrb[0].mxu0
      %v4480 = vpop.f32.mrb[0].mxu0
      %v4481 = vadd.f32 %v3921, %v4480
      %v4482 = vpop.f32.mrb[0].mxu0
      %4483 = vmatprep.mubr.bf16.mxu0 0
      %4484 = vmatmul.mubr.bf16.gmra.mrb[0].mxu0 %v3897
      %v4485 = vpop.f32.mrb[0].mxu0
      %v4486 = vadd.f32 %v3921, %v4485
      %v4487 = vpop.f32.mrb[0].mxu0
      %v4488 = vpop.f32.mrb[0].mxu0
      %v4489 = vadd.f32 %v3921, %v4488
      %v4490 = vpop.f32.mrb[0].mxu0
      %4491 = vmatprep.mubr.bf16.mxu0 0
      %4492 = vmatmul.mubr.bf16.gmra.mrb[0].mxu0 %v3898
      %v4493 = vpop.f32.mrb[0].mxu0
      %v4494 = vadd.f32 %v3921, %v4493
      %v4495 = vpop.f32.mrb[0].mxu0
      %v4496 = vpop.f32.mrb[0].mxu0
      %v4497 = vadd.f32 %v3921, %v4496
      %v4498 = vpop.f32.mrb[0].mxu0
      %4499 = vmatprep.mubr.bf16.mxu0 0
      %4500 = vmatmul.mubr.bf16.gmra.mrb[0].mxu0 %v3899
      %v4501 = vpop.f32.mrb[0].mxu0
      %v4502 = vadd.f32 %v3921, %v4501
      %v4503 = vpop.f32.mrb[0].mxu0
      %v4504 = vpop.f32.mrb[0].mxu0
      %v4505 = vpop.f32.mrb[0].mxu0
      %4506 = vdwg.mxu0
      %vm4507 = vcmask 15360
      %v4508 = vsel %vm4507, %v4006, -inf
      %4509 = vmax.xlane.f32.xlu0 %v4508
      %v4510 = vpop.xlane.xlu0 %4509
      %v4511 = vsel %vm4507, %v4009, -inf
      %4512 = vmax.xlane.f32.xlu0 %v4511
      %v4513 = vpop.xlane.xlu0 %4512
      %v4514 = vsel %vm4507, %v4014, -inf
      %4515 = vmax.xlane.f32.xlu0 %v4514
      %v4516 = vpop.xlane.xlu0 %4515
      %v4517 = vsel %vm4507, %v4017, -inf
      %4518 = vmax.xlane.f32.xlu0 %v4517
      %v4519 = vpop.xlane.xlu0 %4518
      %v4520 = vsel %vm4507, %v4022, -inf
      %4521 = vmax.xlane.f32.xlu0 %v4520
      %v4522 = vpop.xlane.xlu0 %4521
      %v4523 = vsel %vm4507, %v4025, -inf
      %4524 = vmax.xlane.f32.xlu0 %v4523
      %v4525 = vpop.xlane.xlu0 %4524
      %v4526 = vsel %vm4507, %v4030, -inf
      %4527 = vmax.xlane.f32.xlu0 %v4526
      %v4528 = vpop.xlane.xlu0 %4527
      %v4529 = vsel %vm4507, %v4033, -inf
      %4530 = vmax.xlane.f32.xlu0 %v4529
      %v4531 = vpop.xlane.xlu0 %4530
      %v4532 = vsel %vm4507, %v4038, -inf
      %4533 = vmax.xlane.f32.xlu0 %v4532
      %v4534 = vpop.xlane.xlu0 %4533
      %v4535 = vsel %vm4507, %v4041, -inf
      %4536 = vmax.xlane.f32.xlu0 %v4535
      %v4537 = vpop.xlane.xlu0 %4536
      %v4538 = vsel %vm4507, %v4046, -inf
      %4539 = vmax.xlane.f32.xlu0 %v4538
      %v4540 = vpop.xlane.xlu0 %4539
      %v4541 = vsel %vm4507, %v4049, -inf
      %4542 = vmax.xlane.f32.xlu0 %v4541
      %v4543 = vpop.xlane.xlu0 %4542
      %v4544 = vsel %vm4507, %v4054, -inf
      %4545 = vmax.xlane.f32.xlu0 %v4544
      %v4546 = vpop.xlane.xlu0 %4545
      %v4547 = vsel %vm4507, %v4057, -inf
      %4548 = vmax.xlane.f32.xlu0 %v4547
      %v4549 = vpop.xlane.xlu0 %4548
      %v4550 = vsel %vm4507, %v4062, -inf
      %4551 = vmax.xlane.f32.xlu0 %v4550
      %v4552 = vpop.xlane.xlu0 %4551
      %v4553 = vsel %vm4507, %v4065, -inf
      %4554 = vmax.xlane.f32.xlu0 %v4553
      %v4555 = vpop.xlane.xlu0 %4554
      %v4556 = vsel %vm4507, %v4070, -inf
      %4557 = vmax.xlane.f32.xlu0 %v4556
      %v4558 = vpop.xlane.xlu0 %4557
      %v4559 = vsel %vm4507, %v4073, -inf
      %4560 = vmax.xlane.f32.xlu0 %v4559
      %v4561 = vpop.xlane.xlu0 %4560
      %v4562 = vsel %vm4507, %v4078, -inf
      %4563 = vmax.xlane.f32.xlu0 %v4562
      %v4564 = vpop.xlane.xlu0 %4563
      %v4565 = vsel %vm4507, %v4081, -inf
      %4566 = vmax.xlane.f32.xlu0 %v4565
      %v4567 = vpop.xlane.xlu0 %4566
      %v4568 = vsel %vm4507, %v4086, -inf
      %4569 = vmax.xlane.f32.xlu0 %v4568
      %v4570 = vpop.xlane.xlu0 %4569
      %v4571 = vsel %vm4507, %v4089, -inf
      %4572 = vmax.xlane.f32.xlu0 %v4571
      %v4573 = vpop.xlane.xlu0 %4572
      %v4574 = vsel %vm4507, %v4094, -inf
      %4575 = vmax.xlane.f32.xlu0 %v4574
      %v4576 = vpop.xlane.xlu0 %4575
      %v4577 = vsel %vm4507, %v4097, -inf
      %4578 = vmax.xlane.f32.xlu0 %v4577
      %v4579 = vpop.xlane.xlu0 %4578
      %v4580 = vsel %vm4507, %v4102, -inf
      %4581 = vmax.xlane.f32.xlu0 %v4580
      %v4582 = vpop.xlane.xlu0 %4581
      %v4583 = vsel %vm4507, %v4105, -inf
      %4584 = vmax.xlane.f32.xlu0 %v4583
      %v4585 = vpop.xlane.xlu0 %4584
      %v4586 = vsel %vm4507, %v4110, -inf
      %4587 = vmax.xlane.f32.xlu0 %v4586
      %v4588 = vpop.xlane.xlu0 %4587
      %v4589 = vsel %vm4507, %v4113, -inf
      %4590 = vmax.xlane.f32.xlu0 %v4589
      %v4591 = vpop.xlane.xlu0 %4590
      %v4592 = vsel %vm4507, %v4118, -inf
      %4593 = vmax.xlane.f32.xlu0 %v4592
      %v4594 = vpop.xlane.xlu0 %4593
      %v4595 = vsel %vm4507, %v4121, -inf
      %4596 = vmax.xlane.f32.xlu0 %v4595
      %v4597 = vpop.xlane.xlu0 %4596
      %v4598 = vsel %vm4507, %v4126, -inf
      %4599 = vmax.xlane.f32.xlu0 %v4598
      %v4600 = vpop.xlane.xlu0 %4599
      %v4601 = vsel %vm4507, %v4129, -inf
      %4602 = vmax.xlane.f32.xlu0 %v4601
      %v4603 = vpop.xlane.xlu0 %4602
      %v4604 = vsel %vm4507, %v4134, -inf
      %4605 = vmax.xlane.f32.xlu0 %v4604
      %v4606 = vpop.xlane.xlu0 %4605
      %v4607 = vsel %vm4507, %v4137, -inf
      %4608 = vmax.xlane.f32.xlu0 %v4607
      %v4609 = vpop.xlane.xlu0 %4608
      %v4610 = vsel %vm4507, %v4142, -inf
      %4611 = vmax.xlane.f32.xlu0 %v4610
      %v4612 = vpop.xlane.xlu0 %4611
      %v4613 = vsel %vm4507, %v4145, -inf
      %4614 = vmax.xlane.f32.xlu0 %v4613
      %v4615 = vpop.xlane.xlu0 %4614
      %v4616 = vsel %vm4507, %v4150, -inf
      %4617 = vmax.xlane.f32.xlu0 %v4616
      %v4618 = vpop.xlane.xlu0 %4617
      %v4619 = vsel %vm4507, %v4153, -inf
      %4620 = vmax.xlane.f32.xlu0 %v4619
      %v4621 = vpop.xlane.xlu0 %4620
      %v4622 = vsel %vm4507, %v4158, -inf
      %4623 = vmax.xlane.f32.xlu0 %v4622
      %v4624 = vpop.xlane.xlu0 %4623
      %v4625 = vsel %vm4507, %v4161, -inf
      %4626 = vmax.xlane.f32.xlu0 %v4625
      %v4627 = vpop.xlane.xlu0 %4626
      %v4628 = vsel %vm4507, %v4166, -inf
      %4629 = vmax.xlane.f32.xlu0 %v4628
      %v4630 = vpop.xlane.xlu0 %4629
      %v4631 = vsel %vm4507, %v4169, -inf
      %4632 = vmax.xlane.f32.xlu0 %v4631
      %v4633 = vpop.xlane.xlu0 %4632
      %v4634 = vsel %vm4507, %v4174, -inf
      %4635 = vmax.xlane.f32.xlu0 %v4634
      %v4636 = vpop.xlane.xlu0 %4635
      %v4637 = vsel %vm4507, %v4177, -inf
      %4638 = vmax.xlane.f32.xlu0 %v4637
      %v4639 = vpop.xlane.xlu0 %4638
      %v4640 = vsel %vm4507, %v4182, -inf
      %4641 = vmax.xlane.f32.xlu0 %v4640
      %v4642 = vpop.xlane.xlu0 %4641
      %v4643 = vsel %vm4507, %v4185, -inf
      %4644 = vmax.xlane.f32.xlu0 %v4643
      %v4645 = vpop.xlane.xlu0 %4644
      %v4646 = vsel %vm4507, %v4190, -inf
      %4647 = vmax.xlane.f32.xlu0 %v4646
      %v4648 = vpop.xlane.xlu0 %4647
      %v4649 = vsel %vm4507, %v4193, -inf
      %4650 = vmax.xlane.f32.xlu0 %v4649
      %v4651 = vpop.xlane.xlu0 %4650
      %v4652 = vsel %vm4507, %v4198, -inf
      %4653 = vmax.xlane.f32.xlu0 %v4652
      %v4654 = vpop.xlane.xlu0 %4653
      %v4655 = vsel %vm4507, %v4201, -inf
      %4656 = vmax.xlane.f32.xlu0 %v4655
      %v4657 = vpop.xlane.xlu0 %4656
      %v4658 = vsel %vm4507, %v4206, -inf
      %4659 = vmax.xlane.f32.xlu0 %v4658
      %v4660 = vpop.xlane.xlu0 %4659
      %v4661 = vsel %vm4507, %v4209, -inf
      %4662 = vmax.xlane.f32.xlu0 %v4661
      %v4663 = vpop.xlane.xlu0 %4662
      %v4664 = vsel %vm4507, %v4214, -inf
      %4665 = vmax.xlane.f32.xlu0 %v4664
      %v4666 = vpop.xlane.xlu0 %4665
      %v4667 = vsel %vm4507, %v4217, -inf
      %4668 = vmax.xlane.f32.xlu0 %v4667
      %v4669 = vpop.xlane.xlu0 %4668
      %v4670 = vsel %vm4507, %v4222, -inf
      %4671 = vmax.xlane.f32.xlu0 %v4670
      %v4672 = vpop.xlane.xlu0 %4671
      %v4673 = vsel %vm4507, %v4225, -inf
      %4674 = vmax.xlane.f32.xlu0 %v4673
      %v4675 = vpop.xlane.xlu0 %4674
      %v4676 = vsel %vm4507, %v4230, -inf
      %4677 = vmax.xlane.f32.xlu0 %v4676
      %v4678 = vpop.xlane.xlu0 %4677
      %v4679 = vsel %vm4507, %v4233, -inf
      %4680 = vmax.xlane.f32.xlu0 %v4679
      %v4681 = vpop.xlane.xlu0 %4680
      %v4682 = vsel %vm4507, %v4238, -inf
      %4683 = vmax.xlane.f32.xlu0 %v4682
      %v4684 = vpop.xlane.xlu0 %4683
      %v4685 = vsel %vm4507, %v4241, -inf
      %4686 = vmax.xlane.f32.xlu0 %v4685
      %v4687 = vpop.xlane.xlu0 %4686
      %v4688 = vsel %vm4507, %v4246, -inf
      %4689 = vmax.xlane.f32.xlu0 %v4688
      %v4690 = vpop.xlane.xlu0 %4689
      %v4691 = vsel %vm4507, %v4249, -inf
      %4692 = vmax.xlane.f32.xlu0 %v4691
      %v4693 = vpop.xlane.xlu0 %4692
      %v4694 = vsel %vm4507, %v4254, -inf
      %4695 = vmax.xlane.f32.xlu0 %v4694
      %v4696 = vpop.xlane.xlu0 %4695
      %v4697 = vsel %vm4507, %v4257, -inf
      %4698 = vmax.xlane.f32.xlu0 %v4697
      %v4699 = vpop.xlane.xlu0 %4698
      %v4700 = vsel %vm4507, %v4262, -inf
      %4701 = vmax.xlane.f32.xlu0 %v4700
      %v4702 = vpop.xlane.xlu0 %4701
      %v4703 = vsel %vm4507, %v4265, -inf
      %4704 = vmax.xlane.f32.xlu0 %v4703
      %v4705 = vpop.xlane.xlu0 %4704
      %v4706 = vsel %vm4507, %v4270, -inf
      %4707 = vmax.xlane.f32.xlu0 %v4706
      %v4708 = vpop.xlane.xlu0 %4707
      %v4709 = vsel %vm4507, %v4273, -inf
      %4710 = vmax.xlane.f32.xlu0 %v4709
      %v4711 = vpop.xlane.xlu0 %4710
      %v4712 = vsel %vm4507, %v4278, -inf
      %4713 = vmax.xlane.f32.xlu0 %v4712
      %v4714 = vpop.xlane.xlu0 %4713
      %v4715 = vsel %vm4507, %v4281, -inf
      %4716 = vmax.xlane.f32.xlu0 %v4715
      %v4717 = vpop.xlane.xlu0 %4716
      %v4718 = vsel %vm4507, %v4286, -inf
      %4719 = vmax.xlane.f32.xlu0 %v4718
      %v4720 = vpop.xlane.xlu0 %4719
      %v4721 = vsel %vm4507, %v4289, -inf
      %4722 = vmax.xlane.f32.xlu0 %v4721
      %v4723 = vpop.xlane.xlu0 %4722
      %v4724 = vsel %vm4507, %v4294, -inf
      %4725 = vmax.xlane.f32.xlu0 %v4724
      %v4726 = vpop.xlane.xlu0 %4725
      %v4727 = vsel %vm4507, %v4297, -inf
      %4728 = vmax.xlane.f32.xlu0 %v4727
      %v4729 = vpop.xlane.xlu0 %4728
      %v4730 = vsel %vm4507, %v4302, -inf
      %4731 = vmax.xlane.f32.xlu0 %v4730
      %v4732 = vpop.xlane.xlu0 %4731
      %v4733 = vsel %vm4507, %v4305, -inf
      %4734 = vmax.xlane.f32.xlu0 %v4733
      %v4735 = vpop.xlane.xlu0 %4734
      %v4736 = vsel %vm4507, %v4310, -inf
      %4737 = vmax.xlane.f32.xlu0 %v4736
      %v4738 = vpop.xlane.xlu0 %4737
      %v4739 = vsel %vm4507, %v4313, -inf
      %4740 = vmax.xlane.f32.xlu0 %v4739
      %v4741 = vpop.xlane.xlu0 %4740
      %v4742 = vsel %vm4507, %v4318, -inf
      %4743 = vmax.xlane.f32.xlu0 %v4742
      %v4744 = vpop.xlane.xlu0 %4743
      %v4745 = vsel %vm4507, %v4321, -inf
      %4746 = vmax.xlane.f32.xlu0 %v4745
      %v4747 = vpop.xlane.xlu0 %4746
      %v4748 = vsel %vm4507, %v4326, -inf
      %4749 = vmax.xlane.f32.xlu0 %v4748
      %v4750 = vpop.xlane.xlu0 %4749
      %v4751 = vsel %vm4507, %v4329, -inf
      %4752 = vmax.xlane.f32.xlu0 %v4751
      %v4753 = vpop.xlane.xlu0 %4752
      %v4754 = vsel %vm4507, %v4334, -inf
      %4755 = vmax.xlane.f32.xlu0 %v4754
      %v4756 = vpop.xlane.xlu0 %4755
      %v4757 = vsel %vm4507, %v4337, -inf
      %4758 = vmax.xlane.f32.xlu0 %v4757
      %v4759 = vpop.xlane.xlu0 %4758
      %v4760 = vsel %vm4507, %v4342, -inf
      %4761 = vmax.xlane.f32.xlu0 %v4760
      %v4762 = vpop.xlane.xlu0 %4761
      %v4763 = vsel %vm4507, %v4345, -inf
      %4764 = vmax.xlane.f32.xlu0 %v4763
      %v4765 = vpop.xlane.xlu0 %4764
      %v4766 = vsel %vm4507, %v4350, -inf
      %4767 = vmax.xlane.f32.xlu0 %v4766
      %v4768 = vpop.xlane.xlu0 %4767
      %v4769 = vsel %vm4507, %v4353, -inf
      %4770 = vmax.xlane.f32.xlu0 %v4769
      %v4771 = vpop.xlane.xlu0 %4770
      %v4772 = vsel %vm4507, %v4358, -inf
      %4773 = vmax.xlane.f32.xlu0 %v4772
      %v4774 = vpop.xlane.xlu0 %4773
      %v4775 = vsel %vm4507, %v4361, -inf
      %4776 = vmax.xlane.f32.xlu0 %v4775
      %v4777 = vpop.xlane.xlu0 %4776
      %v4778 = vsel %vm4507, %v4366, -inf
      %4779 = vmax.xlane.f32.xlu0 %v4778
      %v4780 = vpop.xlane.xlu0 %4779
      %v4781 = vsel %vm4507, %v4369, -inf
      %4782 = vmax.xlane.f32.xlu0 %v4781
      %v4783 = vpop.xlane.xlu0 %4782
      %v4784 = vsel %vm4507, %v4374, -inf
      %4785 = vmax.xlane.f32.xlu0 %v4784
      %v4786 = vpop.xlane.xlu0 %4785
      %v4787 = vsel %vm4507, %v4377, -inf
      %4788 = vmax.xlane.f32.xlu0 %v4787
      %v4789 = vpop.xlane.xlu0 %4788
      %v4790 = vsel %vm4507, %v4382, -inf
      %4791 = vmax.xlane.f32.xlu0 %v4790
      %v4792 = vpop.xlane.xlu0 %4791
      %v4793 = vsel %vm4507, %v4385, -inf
      %4794 = vmax.xlane.f32.xlu0 %v4793
      %v4795 = vpop.xlane.xlu0 %4794
      %v4796 = vsel %vm4507, %v4390, -inf
      %4797 = vmax.xlane.f32.xlu0 %v4796
      %v4798 = vpop.xlane.xlu0 %4797
      %v4799 = vsel %vm4507, %v4393, -inf
      %4800 = vmax.xlane.f32.xlu0 %v4799
      %v4801 = vpop.xlane.xlu0 %4800
      %v4802 = vsel %vm4507, %v4398, -inf
      %4803 = vmax.xlane.f32.xlu0 %v4802
      %v4804 = vpop.xlane.xlu0 %4803
      %v4805 = vsel %vm4507, %v4401, -inf
      %4806 = vmax.xlane.f32.xlu0 %v4805
      %v4807 = vpop.xlane.xlu0 %4806
      %v4808 = vsel %vm4507, %v4406, -inf
      %4809 = vmax.xlane.f32.xlu0 %v4808
      %v4810 = vpop.xlane.xlu0 %4809
      %v4811 = vsel %vm4507, %v4409, -inf
      %4812 = vmax.xlane.f32.xlu0 %v4811
      %v4813 = vpop.xlane.xlu0 %4812
      %v4814 = vsel %vm4507, %v4414, -inf
      %4815 = vmax.xlane.f32.xlu0 %v4814
      %v4816 = vpop.xlane.xlu0 %4815
      %v4817 = vsel %vm4507, %v4417, -inf
      %4818 = vmax.xlane.f32.xlu0 %v4817
      %v4819 = vpop.xlane.xlu0 %4818
      %v4820 = vsel %vm4507, %v4422, -inf
      %4821 = vmax.xlane.f32.xlu0 %v4820
      %v4822 = vpop.xlane.xlu0 %4821
      %v4823 = vsel %vm4507, %v4425, -inf
      %4824 = vmax.xlane.f32.xlu0 %v4823
      %v4825 = vpop.xlane.xlu0 %4824
      %v4826 = vsel %vm4507, %v4430, -inf
      %4827 = vmax.xlane.f32.xlu0 %v4826
      %v4828 = vpop.xlane.xlu0 %4827
      %v4829 = vsel %vm4507, %v4433, -inf
      %4830 = vmax.xlane.f32.xlu0 %v4829
      %v4831 = vpop.xlane.xlu0 %4830
      %v4832 = vsel %vm4507, %v4438, -inf
      %4833 = vmax.xlane.f32.xlu0 %v4832
      %v4834 = vpop.xlane.xlu0 %4833
      %v4835 = vsel %vm4507, %v4441, -inf
      %4836 = vmax.xlane.f32.xlu0 %v4835
      %v4837 = vpop.xlane.xlu0 %4836
      %v4838 = vsel %vm4507, %v4446, -inf
      %4839 = vmax.xlane.f32.xlu0 %v4838
      %v4840 = vpop.xlane.xlu0 %4839
      %v4841 = vsel %vm4507, %v4449, -inf
      %4842 = vmax.xlane.f32.xlu0 %v4841
      %v4843 = vpop.xlane.xlu0 %4842
      %v4844 = vsel %vm4507, %v4454, -inf
      %4845 = vmax.xlane.f32.xlu0 %v4844
      %v4846 = vpop.xlane.xlu0 %4845
      %v4847 = vsel %vm4507, %v4457, -inf
      %4848 = vmax.xlane.f32.xlu0 %v4847
      %v4849 = vpop.xlane.xlu0 %4848
      %v4850 = vsel %vm4507, %v4462, -inf
      %4851 = vmax.xlane.f32.xlu0 %v4850
      %v4852 = vpop.xlane.xlu0 %4851
      %v4853 = vsel %vm4507, %v4465, -inf
      %4854 = vmax.xlane.f32.xlu0 %v4853
      %v4855 = vpop.xlane.xlu0 %4854
      %v4856 = vsel %vm4507, %v4470, -inf
      %4857 = vmax.xlane.f32.xlu0 %v4856
      %v4858 = vpop.xlane.xlu0 %4857
      %v4859 = vsel %vm4507, %v4473, -inf
      %4860 = vmax.xlane.f32.xlu0 %v4859
      %v4861 = vpop.xlane.xlu0 %4860
      %v4862 = vsel %vm4507, %v4478, -inf
      %4863 = vmax.xlane.f32.xlu0 %v4862
      %v4864 = vpop.xlane.xlu0 %4863
      %v4865 = vsel %vm4507, %v4481, -inf
      %4866 = vmax.xlane.f32.xlu0 %v4865
      %v4867 = vpop.xlane.xlu0 %4866
      %v4868 = vsel %vm4507, %v4486, -inf
      %4869 = vmax.xlane.f32.xlu0 %v4868
      %v4870 = vpop.xlane.xlu0 %4869
      %v4871 = vsel %vm4507, %v4489, -inf
      %4872 = vmax.xlane.f32.xlu0 %v4871
      %v4873 = vpop.xlane.xlu0 %4872
      %v4874 = vsel %vm4507, %v4494, -inf
      %4875 = vmax.xlane.f32.xlu0 %v4874
      %v4876 = vpop.xlane.xlu0 %4875
      %v4877 = vsel %vm4507, %v4497, -inf
      %4878 = vmax.xlane.f32.xlu0 %v4877
      %v4879 = vpop.xlane.xlu0 %4878
      %v4880 = vsel %vm4507, %v4502, -inf
      %4881 = vmax.xlane.f32.xlu0 %v4880
      %v4882 = vpop.xlane.xlu0 %4881
      %v4883 = vsub.f32 %v4006, %v4510
      %v4884 = vsub.f32 %v4009, %v4513
      %v4885 = vsub.f32 %v4014, %v4516
      %v4886 = vsub.f32 %v4017, %v4519
      %v4887 = vsub.f32 %v4022, %v4522
      %v4888 = vsub.f32 %v4025, %v4525
      %v4889 = vsub.f32 %v4030, %v4528
      %v4890 = vsub.f32 %v4033, %v4531
      %v4891 = vsub.f32 %v4038, %v4534
      %v4892 = vsub.f32 %v4041, %v4537
      %v4893 = vsub.f32 %v4046, %v4540
      %v4894 = vsub.f32 %v4049, %v4543
      %v4895 = vsub.f32 %v4054, %v4546
      %v4896 = vsub.f32 %v4057, %v4549
      %v4897 = vsub.f32 %v4062, %v4552
      %v4898 = vsub.f32 %v4065, %v4555
      %v4899 = vsub.f32 %v4070, %v4558
      %v4900 = vsub.f32 %v4073, %v4561
      %v4901 = vsub.f32 %v4078, %v4564
      %v4902 = vsub.f32 %v4081, %v4567
      %v4903 = vsub.f32 %v4086, %v4570
      %v4904 = vsub.f32 %v4089, %v4573
      %v4905 = vsub.f32 %v4094, %v4576
      %v4906 = vsub.f32 %v4097, %v4579
      %v4907 = vsub.f32 %v4102, %v4582
      %v4908 = vsub.f32 %v4105, %v4585
      %v4909 = vsub.f32 %v4110, %v4588
      %v4910 = vsub.f32 %v4113, %v4591
      %v4911 = vsub.f32 %v4118, %v4594
      %v4912 = vsub.f32 %v4121, %v4597
      %v4913 = vsub.f32 %v4126, %v4600
      %v4914 = vsub.f32 %v4129, %v4603
      %v4915 = vsub.f32 %v4134, %v4606
      %v4916 = vsub.f32 %v4137, %v4609
      %v4917 = vsub.f32 %v4142, %v4612
      %v4918 = vsub.f32 %v4145, %v4615
      %v4919 = vsub.f32 %v4150, %v4618
      %v4920 = vsub.f32 %v4153, %v4621
      %v4921 = vsub.f32 %v4158, %v4624
      %v4922 = vsub.f32 %v4161, %v4627
      %v4923 = vsub.f32 %v4166, %v4630
      %v4924 = vsub.f32 %v4169, %v4633
      %v4925 = vsub.f32 %v4174, %v4636
      %v4926 = vsub.f32 %v4177, %v4639
      %v4927 = vsub.f32 %v4182, %v4642
      %v4928 = vsub.f32 %v4185, %v4645
      %v4929 = vsub.f32 %v4190, %v4648
      %v4930 = vsub.f32 %v4193, %v4651
      %v4931 = vsub.f32 %v4198, %v4654
      %v4932 = vsub.f32 %v4201, %v4657
      %v4933 = vsub.f32 %v4206, %v4660
      %v4934 = vsub.f32 %v4209, %v4663
      %v4935 = vsub.f32 %v4214, %v4666
      %v4936 = vsub.f32 %v4217, %v4669
      %v4937 = vsub.f32 %v4222, %v4672
      %v4938 = vsub.f32 %v4225, %v4675
      %v4939 = vsub.f32 %v4230, %v4678
      %v4940 = vsub.f32 %v4233, %v4681
      %v4941 = vsub.f32 %v4238, %v4684
      %v4942 = vsub.f32 %v4241, %v4687
      %v4943 = vsub.f32 %v4246, %v4690
      %v4944 = vsub.f32 %v4249, %v4693
      %v4945 = vsub.f32 %v4254, %v4696
      %v4946 = vsub.f32 %v4257, %v4699
      %v4947 = vsub.f32 %v4262, %v4702
      %v4948 = vsub.f32 %v4265, %v4705
      %v4949 = vsub.f32 %v4270, %v4708
      %v4950 = vsub.f32 %v4273, %v4711
      %v4951 = vsub.f32 %v4278, %v4714
      %v4952 = vsub.f32 %v4281, %v4717
      %v4953 = vsub.f32 %v4286, %v4720
      %v4954 = vsub.f32 %v4289, %v4723
      %v4955 = vsub.f32 %v4294, %v4726
      %v4956 = vsub.f32 %v4297, %v4729
      %v4957 = vsub.f32 %v4302, %v4732
      %v4958 = vsub.f32 %v4305, %v4735
      %v4959 = vsub.f32 %v4310, %v4738
      %v4960 = vsub.f32 %v4313, %v4741
      %v4961 = vsub.f32 %v4318, %v4744
      %v4962 = vsub.f32 %v4321, %v4747
      %v4963 = vsub.f32 %v4326, %v4750
      %v4964 = vsub.f32 %v4329, %v4753
      %v4965 = vsub.f32 %v4334, %v4756
      %v4966 = vsub.f32 %v4337, %v4759
      %v4967 = vsub.f32 %v4342, %v4762
      %v4968 = vsub.f32 %v4345, %v4765
      %v4969 = vsub.f32 %v4350, %v4768
      %v4970 = vsub.f32 %v4353, %v4771
      %v4971 = vsub.f32 %v4358, %v4774
      %v4972 = vsub.f32 %v4361, %v4777
      %v4973 = vsub.f32 %v4366, %v4780
      %v4974 = vsub.f32 %v4369, %v4783
      %v4975 = vsub.f32 %v4374, %v4786
      %v4976 = vsub.f32 %v4377, %v4789
      %v4977 = vsub.f32 %v4382, %v4792
      %v4978 = vsub.f32 %v4385, %v4795
      %v4979 = vsub.f32 %v4390, %v4798
      %v4980 = vsub.f32 %v4393, %v4801
      %v4981 = vsub.f32 %v4398, %v4804
      %v4982 = vsub.f32 %v4401, %v4807
      %v4983 = vsub.f32 %v4406, %v4810
      %v4984 = vsub.f32 %v4409, %v4813
      %v4985 = vsub.f32 %v4414, %v4816
      %v4986 = vsub.f32 %v4417, %v4819
      %v4987 = vsub.f32 %v4422, %v4822
      %v4988 = vsub.f32 %v4425, %v4825
      %v4989 = vsub.f32 %v4430, %v4828
      %v4990 = vsub.f32 %v4433, %v4831
      %v4991 = vsub.f32 %v4438, %v4834
      %v4992 = vsub.f32 %v4441, %v4837
      %v4993 = vsub.f32 %v4446, %v4840
      %v4994 = vsub.f32 %v4449, %v4843
      %v4995 = vsub.f32 %v4454, %v4846
      %v4996 = vsub.f32 %v4457, %v4849
      %v4997 = vsub.f32 %v4462, %v4852
      %v4998 = vsub.f32 %v4465, %v4855
      %v4999 = vsub.f32 %v4470, %v4858
      %v5000 = vsub.f32 %v4473, %v4861
      %v5001 = vsub.f32 %v4478, %v4864
      %v5002 = vsub.f32 %v4481, %v4867
      %v5003 = vsub.f32 %v4486, %v4870
      %v5004 = vsub.f32 %v4489, %v4873
      %v5005 = vsub.f32 %v4494, %v4876
      %v5006 = vsub.f32 %v4497, %v4879
      %v5007 = vsub.f32 %v4502, %v4882
      %v5008 = vmul.f32 %v4883, 1.442695
      %v5009 = vpow.pop %v5008
      %v5010 = vmul.f32 %v4884, 1.442695
      %v5011 = vpow.pop %v5010
      %v5012 = vmul.f32 %v4885, 1.442695
      %v5013 = vpow.pop %v5012
      %v5014 = vmul.f32 %v4886, 1.442695
      %v5015 = vpow.pop %v5014
      %v5016 = vmul.f32 %v4887, 1.442695
      %v5017 = vpow.pop %v5016
      %v5018 = vmul.f32 %v4888, 1.442695
      %v5019 = vpow.pop %v5018
      %v5020 = vmul.f32 %v4889, 1.442695
      %v5021 = vpow.pop %v5020
      %v5022 = vmul.f32 %v4890, 1.442695
      %v5023 = vpow.pop %v5022
      %v5024 = vmul.f32 %v4891, 1.442695
      %v5025 = vpow.pop %v5024
      %v5026 = vmul.f32 %v4892, 1.442695
      %v5027 = vpow.pop %v5026
      %v5028 = vmul.f32 %v4893, 1.442695
      %v5029 = vpow.pop %v5028
      %v5030 = vmul.f32 %v4894, 1.442695
      %v5031 = vpow.pop %v5030
      %v5032 = vmul.f32 %v4895, 1.442695
      %v5033 = vpow.pop %v5032
      %v5034 = vmul.f32 %v4896, 1.442695
      %v5035 = vpow.pop %v5034
      %v5036 = vmul.f32 %v4897, 1.442695
      %v5037 = vpow.pop %v5036
      %v5038 = vmul.f32 %v4898, 1.442695
      %v5039 = vpow.pop %v5038
      %v5040 = vmul.f32 %v4899, 1.442695
      %v5041 = vpow.pop %v5040
      %v5042 = vmul.f32 %v4900, 1.442695
      %v5043 = vpow.pop %v5042
      %v5044 = vmul.f32 %v4901, 1.442695
      %v5045 = vpow.pop %v5044
      %v5046 = vmul.f32 %v4902, 1.442695
      %v5047 = vpow.pop %v5046
      %v5048 = vmul.f32 %v4903, 1.442695
      %v5049 = vpow.pop %v5048
      %v5050 = vmul.f32 %v4904, 1.442695
      %v5051 = vpow.pop %v5050
      %v5052 = vmul.f32 %v4905, 1.442695
      %v5053 = vpow.pop %v5052
      %v5054 = vmul.f32 %v4906, 1.442695
      %v5055 = vpow.pop %v5054
      %v5056 = vmul.f32 %v4907, 1.442695
      %v5057 = vpow.pop %v5056
      %v5058 = vmul.f32 %v4908, 1.442695
      %v5059 = vpow.pop %v5058
      %v5060 = vmul.f32 %v4909, 1.442695
      %v5061 = vpow.pop %v5060
      %v5062 = vmul.f32 %v4910, 1.442695
      %v5063 = vpow.pop %v5062
      %v5064 = vmul.f32 %v4911, 1.442695
      %v5065 = vpow.pop %v5064
      %v5066 = vmul.f32 %v4912, 1.442695
      %v5067 = vpow.pop %v5066
      %v5068 = vmul.f32 %v4913, 1.442695
      %v5069 = vpow.pop %v5068
      %v5070 = vmul.f32 %v4914, 1.442695
      %v5071 = vpow.pop %v5070
      %v5072 = vmul.f32 %v4915, 1.442695
      %v5073 = vpow.pop %v5072
      %v5074 = vmul.f32 %v4916, 1.442695
      %v5075 = vpow.pop %v5074
      %v5076 = vmul.f32 %v4917, 1.442695
      %v5077 = vpow.pop %v5076
      %v5078 = vmul.f32 %v4918, 1.442695
      %v5079 = vpow.pop %v5078
      %v5080 = vmul.f32 %v4919, 1.442695
      %v5081 = vpow.pop %v5080
      %v5082 = vmul.f32 %v4920, 1.442695
      %v5083 = vpow.pop %v5082
      %v5084 = vmul.f32 %v4921, 1.442695
      %v5085 = vpow.pop %v5084
      %v5086 = vmul.f32 %v4922, 1.442695
      %v5087 = vpow.pop %v5086
      %v5088 = vmul.f32 %v4923, 1.442695
      %v5089 = vpow.pop %v5088
      %v5090 = vmul.f32 %v4924, 1.442695
      %v5091 = vpow.pop %v5090
      %v5092 = vmul.f32 %v4925, 1.442695
      %v5093 = vpow.pop %v5092
      %v5094 = vmul.f32 %v4926, 1.442695
      %v5095 = vpow.pop %v5094
      %v5096 = vmul.f32 %v4927, 1.442695
      %v5097 = vpow.pop %v5096
      %v5098 = vmul.f32 %v4928, 1.442695
      %v5099 = vpow.pop %v5098
      %v5100 = vmul.f32 %v4929, 1.442695
      %v5101 = vpow.pop %v5100
      %v5102 = vmul.f32 %v4930, 1.442695
      %v5103 = vpow.pop %v5102
      %v5104 = vmul.f32 %v4931, 1.442695
      %v5105 = vpow.pop %v5104
      %v5106 = vmul.f32 %v4932, 1.442695
      %v5107 = vpow.pop %v5106
      %v5108 = vmul.f32 %v4933, 1.442695
      %v5109 = vpow.pop %v5108
      %v5110 = vmul.f32 %v4934, 1.442695
      %v5111 = vpow.pop %v5110
      %v5112 = vmul.f32 %v4935, 1.442695
      %v5113 = vpow.pop %v5112
      %v5114 = vmul.f32 %v4936, 1.442695
      %v5115 = vpow.pop %v5114
      %v5116 = vmul.f32 %v4937, 1.442695
      %v5117 = vpow.pop %v5116
      %v5118 = vmul.f32 %v4938, 1.442695
      %v5119 = vpow.pop %v5118
      %v5120 = vmul.f32 %v4939, 1.442695
      %v5121 = vpow.pop %v5120
      %v5122 = vmul.f32 %v4940, 1.442695
      %v5123 = vpow.pop %v5122
      %v5124 = vmul.f32 %v4941, 1.442695
      %v5125 = vpow.pop %v5124
      %v5126 = vmul.f32 %v4942, 1.442695
      %v5127 = vpow.pop %v5126
      %v5128 = vmul.f32 %v4943, 1.442695
      %v5129 = vpow.pop %v5128
      %v5130 = vmul.f32 %v4944, 1.442695
      %v5131 = vpow.pop %v5130
      %v5132 = vmul.f32 %v4945, 1.442695
      %v5133 = vpow.pop %v5132
      %v5134 = vmul.f32 %v4946, 1.442695
      %v5135 = vpow.pop %v5134
      %v5136 = vmul.f32 %v4947, 1.442695
      %v5137 = vpow.pop %v5136
      %v5138 = vmul.f32 %v4948, 1.442695
      %v5139 = vpow.pop %v5138
      %v5140 = vmul.f32 %v4949, 1.442695
      %v5141 = vpow.pop %v5140
      %v5142 = vmul.f32 %v4950, 1.442695
      %v5143 = vpow.pop %v5142
      %v5144 = vmul.f32 %v4951, 1.442695
      %v5145 = vpow.pop %v5144
      %v5146 = vmul.f32 %v4952, 1.442695
      %v5147 = vpow.pop %v5146
      %v5148 = vmul.f32 %v4953, 1.442695
      %v5149 = vpow.pop %v5148
      %v5150 = vmul.f32 %v4954, 1.442695
      %v5151 = vpow.pop %v5150
      %v5152 = vmul.f32 %v4955, 1.442695
      %v5153 = vpow.pop %v5152
      %v5154 = vmul.f32 %v4956, 1.442695
      %v5155 = vpow.pop %v5154
      %v5156 = vmul.f32 %v4957, 1.442695
      %v5157 = vpow.pop %v5156
      %v5158 = vmul.f32 %v4958, 1.442695
      %v5159 = vpow.pop %v5158
      %v5160 = vmul.f32 %v4959, 1.442695
      %v5161 = vpow.pop %v5160
      %v5162 = vmul.f32 %v4960, 1.442695
      %v5163 = vpow.pop %v5162
      %v5164 = vmul.f32 %v4961, 1.442695
      %v5165 = vpow.pop %v5164
      %v5166 = vmul.f32 %v4962, 1.442695
      %v5167 = vpow.pop %v5166
      %v5168 = vmul.f32 %v4963, 1.442695
      %v5169 = vpow.pop %v5168
      %v5170 = vmul.f32 %v4964, 1.442695
      %v5171 = vpow.pop %v5170
      %v5172 = vmul.f32 %v4965, 1.442695
      %v5173 = vpow.pop %v5172
      %v5174 = vmul.f32 %v4966, 1.442695
      %v5175 = vpow.pop %v5174
      %v5176 = vmul.f32 %v4967, 1.442695
      %v5177 = vpow.pop %v5176
      %v5178 = vmul.f32 %v4968, 1.442695
      %v5179 = vpow.pop %v5178
      %v5180 = vmul.f32 %v4969, 1.442695
      %v5181 = vpow.pop %v5180
      %v5182 = vmul.f32 %v4970, 1.442695
      %v5183 = vpow.pop %v5182
      %v5184 = vmul.f32 %v4971, 1.442695
      %v5185 = vpow.pop %v5184
      %v5186 = vmul.f32 %v4972, 1.442695
      %v5187 = vpow.pop %v5186
      %v5188 = vmul.f32 %v4973, 1.442695
      %v5189 = vpow.pop %v5188
      %v5190 = vmul.f32 %v4974, 1.442695
      %v5191 = vpow.pop %v5190
      %v5192 = vmul.f32 %v4975, 1.442695
      %v5193 = vpow.pop %v5192
      %v5194 = vmul.f32 %v4976, 1.442695
      %v5195 = vpow.pop %v5194
      %v5196 = vmul.f32 %v4977, 1.442695
      %v5197 = vpow.pop %v5196
      %v5198 = vmul.f32 %v4978, 1.442695
      %v5199 = vpow.pop %v5198
      %v5200 = vmul.f32 %v4979, 1.442695
      %v5201 = vpow.pop %v5200
      %v5202 = vmul.f32 %v4980, 1.442695
      %v5203 = vpow.pop %v5202
      %v5204 = vmul.f32 %v4981, 1.442695
      %v5205 = vpow.pop %v5204
      %v5206 = vmul.f32 %v4982, 1.442695
      %v5207 = vpow.pop %v5206
      %v5208 = vmul.f32 %v4983, 1.442695
      %v5209 = vpow.pop %v5208
      %v5210 = vmul.f32 %v4984, 1.442695
      %v5211 = vpow.pop %v5210
      %v5212 = vmul.f32 %v4985, 1.442695
      %v5213 = vpow.pop %v5212
      %v5214 = vmul.f32 %v4986, 1.442695
      %v5215 = vpow.pop %v5214
      %v5216 = vmul.f32 %v4987, 1.442695
      %v5217 = vpow.pop %v5216
      %v5218 = vmul.f32 %v4988, 1.442695
      %v5219 = vpow.pop %v5218
      %v5220 = vmul.f32 %v4989, 1.442695
      %v5221 = vpow.pop %v5220
      %v5222 = vmul.f32 %v4990, 1.442695
      %v5223 = vpow.pop %v5222
      %v5224 = vmul.f32 %v4991, 1.442695
      %v5225 = vpow.pop %v5224
      %v5226 = vmul.f32 %v4992, 1.442695
      %v5227 = vpow.pop %v5226
      %v5228 = vmul.f32 %v4993, 1.442695
      %v5229 = vpow.pop %v5228
      %v5230 = vmul.f32 %v4994, 1.442695
      %v5231 = vpow.pop %v5230
      %v5232 = vmul.f32 %v4995, 1.442695
      %v5233 = vpow.pop %v5232
      %v5234 = vmul.f32 %v4996, 1.442695
      %v5235 = vpow.pop %v5234
      %v5236 = vmul.f32 %v4997, 1.442695
      %v5237 = vpow.pop %v5236
      %v5238 = vmul.f32 %v4998, 1.442695
      %v5239 = vpow.pop %v5238
      %v5240 = vmul.f32 %v4999, 1.442695
      %v5241 = vpow.pop %v5240
      %v5242 = vmul.f32 %v5000, 1.442695
      %v5243 = vpow.pop %v5242
      %v5244 = vmul.f32 %v5001, 1.442695
      %v5245 = vpow.pop %v5244
      %v5246 = vmul.f32 %v5002, 1.442695
      %v5247 = vpow.pop %v5246
      %v5248 = vmul.f32 %v5003, 1.442695
      %v5249 = vpow.pop %v5248
      %v5250 = vmul.f32 %v5004, 1.442695
      %v5251 = vpow.pop %v5250
      %v5252 = vmul.f32 %v5005, 1.442695
      %v5253 = vpow.pop %v5252
      %v5254 = vmul.f32 %v5006, 1.442695
      %v5255 = vpow.pop %v5254
      %v5256 = vmul.f32 %v5007, 1.442695
      %v5257 = vpow.pop %v5256
      %v5258 = vsel %vm4507, %v5009, 0.0
      %5259 = vadd.xlane.f32.xlu0 %v5258
      %v5260 = vpop.xlane.xlu0 %5259
      %v5261 = vsel %vm4507, %v5011, 0.0
      %5262 = vadd.xlane.f32.xlu0 %v5261
      %v5263 = vpop.xlane.xlu0 %5262
      %v5264 = vsel %vm4507, %v5013, 0.0
      %5265 = vadd.xlane.f32.xlu0 %v5264
      %v5266 = vpop.xlane.xlu0 %5265
      %v5267 = vsel %vm4507, %v5015, 0.0
      %5268 = vadd.xlane.f32.xlu0 %v5267
      %v5269 = vpop.xlane.xlu0 %5268
      %v5270 = vsel %vm4507, %v5017, 0.0
      %5271 = vadd.xlane.f32.xlu0 %v5270
      %v5272 = vpop.xlane.xlu0 %5271
      %v5273 = vsel %vm4507, %v5019, 0.0
      %5274 = vadd.xlane.f32.xlu0 %v5273
      %v5275 = vpop.xlane.xlu0 %5274
      %v5276 = vsel %vm4507, %v5021, 0.0
      %5277 = vadd.xlane.f32.xlu0 %v5276
      %v5278 = vpop.xlane.xlu0 %5277
      %v5279 = vsel %vm4507, %v5023, 0.0
      %5280 = vadd.xlane.f32.xlu0 %v5279
      %v5281 = vpop.xlane.xlu0 %5280
      %v5282 = vsel %vm4507, %v5025, 0.0
      %5283 = vadd.xlane.f32.xlu0 %v5282
      %v5284 = vpop.xlane.xlu0 %5283
      %v5285 = vsel %vm4507, %v5027, 0.0
      %5286 = vadd.xlane.f32.xlu0 %v5285
      %v5287 = vpop.xlane.xlu0 %5286
      %v5288 = vsel %vm4507, %v5029, 0.0
      %5289 = vadd.xlane.f32.xlu0 %v5288
      %v5290 = vpop.xlane.xlu0 %5289
      %v5291 = vsel %vm4507, %v5031, 0.0
      %5292 = vadd.xlane.f32.xlu0 %v5291
      %v5293 = vpop.xlane.xlu0 %5292
      %v5294 = vsel %vm4507, %v5033, 0.0
      %5295 = vadd.xlane.f32.xlu0 %v5294
      %v5296 = vpop.xlane.xlu0 %5295
      %v5297 = vsel %vm4507, %v5035, 0.0
      %5298 = vadd.xlane.f32.xlu0 %v5297
      %v5299 = vpop.xlane.xlu0 %5298
      %v5300 = vsel %vm4507, %v5037, 0.0
      %5301 = vadd.xlane.f32.xlu0 %v5300
      %v5302 = vpop.xlane.xlu0 %5301
      %v5303 = vsel %vm4507, %v5039, 0.0
      %5304 = vadd.xlane.f32.xlu0 %v5303
      %v5305 = vpop.xlane.xlu0 %5304
      %v5306 = vsel %vm4507, %v5041, 0.0
      %5307 = vadd.xlane.f32.xlu0 %v5306
      %v5308 = vpop.xlane.xlu0 %5307
      %v5309 = vsel %vm4507, %v5043, 0.0
      %5310 = vadd.xlane.f32.xlu0 %v5309
      %v5311 = vpop.xlane.xlu0 %5310
      %v5312 = vsel %vm4507, %v5045, 0.0
      %5313 = vadd.xlane.f32.xlu0 %v5312
      %v5314 = vpop.xlane.xlu0 %5313
      %v5315 = vsel %vm4507, %v5047, 0.0
      %5316 = vadd.xlane.f32.xlu0 %v5315
      %v5317 = vpop.xlane.xlu0 %5316
      %v5318 = vsel %vm4507, %v5049, 0.0
      %5319 = vadd.xlane.f32.xlu0 %v5318
      %v5320 = vpop.xlane.xlu0 %5319
      %v5321 = vsel %vm4507, %v5051, 0.0
      %5322 = vadd.xlane.f32.xlu0 %v5321
      %v5323 = vpop.xlane.xlu0 %5322
      %v5324 = vsel %vm4507, %v5053, 0.0
      %5325 = vadd.xlane.f32.xlu0 %v5324
      %v5326 = vpop.xlane.xlu0 %5325
      %v5327 = vsel %vm4507, %v5055, 0.0
      %5328 = vadd.xlane.f32.xlu0 %v5327
      %v5329 = vpop.xlane.xlu0 %5328
      %v5330 = vsel %vm4507, %v5057, 0.0
      %5331 = vadd.xlane.f32.xlu0 %v5330
      %v5332 = vpop.xlane.xlu0 %5331
      %v5333 = vsel %vm4507, %v5059, 0.0
      %5334 = vadd.xlane.f32.xlu0 %v5333
      %v5335 = vpop.xlane.xlu0 %5334
      %v5336 = vsel %vm4507, %v5061, 0.0
      %5337 = vadd.xlane.f32.xlu0 %v5336
      %v5338 = vpop.xlane.xlu0 %5337
      %v5339 = vsel %vm4507, %v5063, 0.0
      %5340 = vadd.xlane.f32.xlu0 %v5339
      %v5341 = vpop.xlane.xlu0 %5340
      %v5342 = vsel %vm4507, %v5065, 0.0
      %5343 = vadd.xlane.f32.xlu0 %v5342
      %v5344 = vpop.xlane.xlu0 %5343
      %v5345 = vsel %vm4507, %v5067, 0.0
      %5346 = vadd.xlane.f32.xlu0 %v5345
      %v5347 = vpop.xlane.xlu0 %5346
      %v5348 = vsel %vm4507, %v5069, 0.0
      %5349 = vadd.xlane.f32.xlu0 %v5348
      %v5350 = vpop.xlane.xlu0 %5349
      %v5351 = vsel %vm4507, %v5071, 0.0
      %5352 = vadd.xlane.f32.xlu0 %v5351
      %v5353 = vpop.xlane.xlu0 %5352
      %v5354 = vsel %vm4507, %v5073, 0.0
      %5355 = vadd.xlane.f32.xlu0 %v5354
      %v5356 = vpop.xlane.xlu0 %5355
      %v5357 = vsel %vm4507, %v5075, 0.0
      %5358 = vadd.xlane.f32.xlu0 %v5357
      %v5359 = vpop.xlane.xlu0 %5358
      %v5360 = vsel %vm4507, %v5077, 0.0
      %5361 = vadd.xlane.f32.xlu0 %v5360
      %v5362 = vpop.xlane.xlu0 %5361
      %v5363 = vsel %vm4507, %v5079, 0.0
      %5364 = vadd.xlane.f32.xlu0 %v5363
      %v5365 = vpop.xlane.xlu0 %5364
      %v5366 = vsel %vm4507, %v5081, 0.0
      %5367 = vadd.xlane.f32.xlu0 %v5366
      %v5368 = vpop.xlane.xlu0 %5367
      %v5369 = vsel %vm4507, %v5083, 0.0
      %5370 = vadd.xlane.f32.xlu0 %v5369
      %v5371 = vpop.xlane.xlu0 %5370
      %v5372 = vsel %vm4507, %v5085, 0.0
      %5373 = vadd.xlane.f32.xlu0 %v5372
      %v5374 = vpop.xlane.xlu0 %5373
      %v5375 = vsel %vm4507, %v5087, 0.0
      %5376 = vadd.xlane.f32.xlu0 %v5375
      %v5377 = vpop.xlane.xlu0 %5376
      %v5378 = vsel %vm4507, %v5089, 0.0
      %5379 = vadd.xlane.f32.xlu0 %v5378
      %v5380 = vpop.xlane.xlu0 %5379
      %v5381 = vsel %vm4507, %v5091, 0.0
      %5382 = vadd.xlane.f32.xlu0 %v5381
      %v5383 = vpop.xlane.xlu0 %5382
      %v5384 = vsel %vm4507, %v5093, 0.0
      %5385 = vadd.xlane.f32.xlu0 %v5384
      %v5386 = vpop.xlane.xlu0 %5385
      %v5387 = vsel %vm4507, %v5095, 0.0
      %5388 = vadd.xlane.f32.xlu0 %v5387
      %v5389 = vpop.xlane.xlu0 %5388
      %v5390 = vsel %vm4507, %v5097, 0.0
      %5391 = vadd.xlane.f32.xlu0 %v5390
      %v5392 = vpop.xlane.xlu0 %5391
      %v5393 = vsel %vm4507, %v5099, 0.0
      %5394 = vadd.xlane.f32.xlu0 %v5393
      %v5395 = vpop.xlane.xlu0 %5394
      %v5396 = vsel %vm4507, %v5101, 0.0
      %5397 = vadd.xlane.f32.xlu0 %v5396
      %v5398 = vpop.xlane.xlu0 %5397
      %v5399 = vsel %vm4507, %v5103, 0.0
      %5400 = vadd.xlane.f32.xlu0 %v5399
      %v5401 = vpop.xlane.xlu0 %5400
      %v5402 = vsel %vm4507, %v5105, 0.0
      %5403 = vadd.xlane.f32.xlu0 %v5402
      %v5404 = vpop.xlane.xlu0 %5403
      %v5405 = vsel %vm4507, %v5107, 0.0
      %5406 = vadd.xlane.f32.xlu0 %v5405
      %v5407 = vpop.xlane.xlu0 %5406
      %v5408 = vsel %vm4507, %v5109, 0.0
      %5409 = vadd.xlane.f32.xlu0 %v5408
      %v5410 = vpop.xlane.xlu0 %5409
      %v5411 = vsel %vm4507, %v5111, 0.0
      %5412 = vadd.xlane.f32.xlu0 %v5411
      %v5413 = vpop.xlane.xlu0 %5412
      %v5414 = vsel %vm4507, %v5113, 0.0
      %5415 = vadd.xlane.f32.xlu0 %v5414
      %v5416 = vpop.xlane.xlu0 %5415
      %v5417 = vsel %vm4507, %v5115, 0.0
      %5418 = vadd.xlane.f32.xlu0 %v5417
      %v5419 = vpop.xlane.xlu0 %5418
      %v5420 = vsel %vm4507, %v5117, 0.0
      %5421 = vadd.xlane.f32.xlu0 %v5420
      %v5422 = vpop.xlane.xlu0 %5421
      %v5423 = vsel %vm4507, %v5119, 0.0
      %5424 = vadd.xlane.f32.xlu0 %v5423
      %v5425 = vpop.xlane.xlu0 %5424
      %v5426 = vsel %vm4507, %v5121, 0.0
      %5427 = vadd.xlane.f32.xlu0 %v5426
      %v5428 = vpop.xlane.xlu0 %5427
      %v5429 = vsel %vm4507, %v5123, 0.0
      %5430 = vadd.xlane.f32.xlu0 %v5429
      %v5431 = vpop.xlane.xlu0 %5430
      %v5432 = vsel %vm4507, %v5125, 0.0
      %5433 = vadd.xlane.f32.xlu0 %v5432
      %v5434 = vpop.xlane.xlu0 %5433
      %v5435 = vsel %vm4507, %v5127, 0.0
      %5436 = vadd.xlane.f32.xlu0 %v5435
      %v5437 = vpop.xlane.xlu0 %5436
      %v5438 = vsel %vm4507, %v5129, 0.0
      %5439 = vadd.xlane.f32.xlu0 %v5438
      %v5440 = vpop.xlane.xlu0 %5439
      %v5441 = vsel %vm4507, %v5131, 0.0
      %5442 = vadd.xlane.f32.xlu0 %v5441
      %v5443 = vpop.xlane.xlu0 %5442
      %v5444 = vsel %vm4507, %v5133, 0.0
      %5445 = vadd.xlane.f32.xlu0 %v5444
      %v5446 = vpop.xlane.xlu0 %5445
      %v5447 = vsel %vm4507, %v5135, 0.0
      %5448 = vadd.xlane.f32.xlu0 %v5447
      %v5449 = vpop.xlane.xlu0 %5448
      %v5450 = vsel %vm4507, %v5137, 0.0
      %5451 = vadd.xlane.f32.xlu0 %v5450
      %v5452 = vpop.xlane.xlu0 %5451
      %v5453 = vsel %vm4507, %v5139, 0.0
      %5454 = vadd.xlane.f32.xlu0 %v5453
      %v5455 = vpop.xlane.xlu0 %5454
      %v5456 = vsel %vm4507, %v5141, 0.0
      %5457 = vadd.xlane.f32.xlu0 %v5456
      %v5458 = vpop.xlane.xlu0 %5457
      %v5459 = vsel %vm4507, %v5143, 0.0
      %5460 = vadd.xlane.f32.xlu0 %v5459
      %v5461 = vpop.xlane.xlu0 %5460
      %v5462 = vsel %vm4507, %v5145, 0.0
      %5463 = vadd.xlane.f32.xlu0 %v5462
      %v5464 = vpop.xlane.xlu0 %5463
      %v5465 = vsel %vm4507, %v5147, 0.0
      %5466 = vadd.xlane.f32.xlu0 %v5465
      %v5467 = vpop.xlane.xlu0 %5466
      %v5468 = vsel %vm4507, %v5149, 0.0
      %5469 = vadd.xlane.f32.xlu0 %v5468
      %v5470 = vpop.xlane.xlu0 %5469
      %v5471 = vsel %vm4507, %v5151, 0.0
      %5472 = vadd.xlane.f32.xlu0 %v5471
      %v5473 = vpop.xlane.xlu0 %5472
      %v5474 = vsel %vm4507, %v5153, 0.0
      %5475 = vadd.xlane.f32.xlu0 %v5474
      %v5476 = vpop.xlane.xlu0 %5475
      %v5477 = vsel %vm4507, %v5155, 0.0
      %5478 = vadd.xlane.f32.xlu0 %v5477
      %v5479 = vpop.xlane.xlu0 %5478
      %v5480 = vsel %vm4507, %v5157, 0.0
      %5481 = vadd.xlane.f32.xlu0 %v5480
      %v5482 = vpop.xlane.xlu0 %5481
      %v5483 = vsel %vm4507, %v5159, 0.0
      %5484 = vadd.xlane.f32.xlu0 %v5483
      %v5485 = vpop.xlane.xlu0 %5484
      %v5486 = vsel %vm4507, %v5161, 0.0
      %5487 = vadd.xlane.f32.xlu0 %v5486
      %v5488 = vpop.xlane.xlu0 %5487
      %v5489 = vsel %vm4507, %v5163, 0.0
      %5490 = vadd.xlane.f32.xlu0 %v5489
      %v5491 = vpop.xlane.xlu0 %5490
      %v5492 = vsel %vm4507, %v5165, 0.0
      %5493 = vadd.xlane.f32.xlu0 %v5492
      %v5494 = vpop.xlane.xlu0 %5493
      %v5495 = vsel %vm4507, %v5167, 0.0
      %5496 = vadd.xlane.f32.xlu0 %v5495
      %v5497 = vpop.xlane.xlu0 %5496
      %v5498 = vsel %vm4507, %v5169, 0.0
      %5499 = vadd.xlane.f32.xlu0 %v5498
      %v5500 = vpop.xlane.xlu0 %5499
      %v5501 = vsel %vm4507, %v5171, 0.0
      %5502 = vadd.xlane.f32.xlu0 %v5501
      %v5503 = vpop.xlane.xlu0 %5502
      %v5504 = vsel %vm4507, %v5173, 0.0
      %5505 = vadd.xlane.f32.xlu0 %v5504
      %v5506 = vpop.xlane.xlu0 %5505
      %v5507 = vsel %vm4507, %v5175, 0.0
      %5508 = vadd.xlane.f32.xlu0 %v5507
      %v5509 = vpop.xlane.xlu0 %5508
      %v5510 = vsel %vm4507, %v5177, 0.0
      %5511 = vadd.xlane.f32.xlu0 %v5510
      %v5512 = vpop.xlane.xlu0 %5511
      %v5513 = vsel %vm4507, %v5179, 0.0
      %5514 = vadd.xlane.f32.xlu0 %v5513
      %v5515 = vpop.xlane.xlu0 %5514
      %v5516 = vsel %vm4507, %v5181, 0.0
      %5517 = vadd.xlane.f32.xlu0 %v5516
      %v5518 = vpop.xlane.xlu0 %5517
      %v5519 = vsel %vm4507, %v5183, 0.0
      %5520 = vadd.xlane.f32.xlu0 %v5519
      %v5521 = vpop.xlane.xlu0 %5520
      %v5522 = vsel %vm4507, %v5185, 0.0
      %5523 = vadd.xlane.f32.xlu0 %v5522
      %v5524 = vpop.xlane.xlu0 %5523
      %v5525 = vsel %vm4507, %v5187, 0.0
      %5526 = vadd.xlane.f32.xlu0 %v5525
      %v5527 = vpop.xlane.xlu0 %5526
      %v5528 = vsel %vm4507, %v5189, 0.0
      %5529 = vadd.xlane.f32.xlu0 %v5528
      %v5530 = vpop.xlane.xlu0 %5529
      %v5531 = vsel %vm4507, %v5191, 0.0
      %5532 = vadd.xlane.f32.xlu0 %v5531
      %v5533 = vpop.xlane.xlu0 %5532
      %v5534 = vsel %vm4507, %v5193, 0.0
      %5535 = vadd.xlane.f32.xlu0 %v5534
      %v5536 = vpop.xlane.xlu0 %5535
      %v5537 = vsel %vm4507, %v5195, 0.0
      %5538 = vadd.xlane.f32.xlu0 %v5537
      %v5539 = vpop.xlane.xlu0 %5538
      %v5540 = vsel %vm4507, %v5197, 0.0
      %5541 = vadd.xlane.f32.xlu0 %v5540
      %v5542 = vpop.xlane.xlu0 %5541
      %v5543 = vsel %vm4507, %v5199, 0.0
      %5544 = vadd.xlane.f32.xlu0 %v5543
      %v5545 = vpop.xlane.xlu0 %5544
      %v5546 = vsel %vm4507, %v5201, 0.0
      %5547 = vadd.xlane.f32.xlu0 %v5546
      %v5548 = vpop.xlane.xlu0 %5547
      %v5549 = vsel %vm4507, %v5203, 0.0
      %5550 = vadd.xlane.f32.xlu0 %v5549
      %v5551 = vpop.xlane.xlu0 %5550
      %v5552 = vsel %vm4507, %v5205, 0.0
      %5553 = vadd.xlane.f32.xlu0 %v5552
      %v5554 = vpop.xlane.xlu0 %5553
      %v5555 = vsel %vm4507, %v5207, 0.0
      %5556 = vadd.xlane.f32.xlu0 %v5555
      %v5557 = vpop.xlane.xlu0 %5556
      %v5558 = vsel %vm4507, %v5209, 0.0
      %5559 = vadd.xlane.f32.xlu0 %v5558
      %v5560 = vpop.xlane.xlu0 %5559
      %v5561 = vsel %vm4507, %v5211, 0.0
      %5562 = vadd.xlane.f32.xlu0 %v5561
      %v5563 = vpop.xlane.xlu0 %5562
      %v5564 = vsel %vm4507, %v5213, 0.0
      %5565 = vadd.xlane.f32.xlu0 %v5564
      %v5566 = vpop.xlane.xlu0 %5565
      %v5567 = vsel %vm4507, %v5215, 0.0
      %5568 = vadd.xlane.f32.xlu0 %v5567
      %v5569 = vpop.xlane.xlu0 %5568
      %v5570 = vsel %vm4507, %v5217, 0.0
      %5571 = vadd.xlane.f32.xlu0 %v5570
      %v5572 = vpop.xlane.xlu0 %5571
      %v5573 = vsel %vm4507, %v5219, 0.0
      %5574 = vadd.xlane.f32.xlu0 %v5573
      %v5575 = vpop.xlane.xlu0 %5574
      %v5576 = vsel %vm4507, %v5221, 0.0
      %5577 = vadd.xlane.f32.xlu0 %v5576
      %v5578 = vpop.xlane.xlu0 %5577
      %v5579 = vsel %vm4507, %v5223, 0.0
      %5580 = vadd.xlane.f32.xlu0 %v5579
      %v5581 = vpop.xlane.xlu0 %5580
      %v5582 = vsel %vm4507, %v5225, 0.0
      %5583 = vadd.xlane.f32.xlu0 %v5582
      %v5584 = vpop.xlane.xlu0 %5583
      %v5585 = vsel %vm4507, %v5227, 0.0
      %5586 = vadd.xlane.f32.xlu0 %v5585
      %v5587 = vpop.xlane.xlu0 %5586
      %v5588 = vsel %vm4507, %v5229, 0.0
      %5589 = vadd.xlane.f32.xlu0 %v5588
      %v5590 = vpop.xlane.xlu0 %5589
      %v5591 = vsel %vm4507, %v5231, 0.0
      %5592 = vadd.xlane.f32.xlu0 %v5591
      %v5593 = vpop.xlane.xlu0 %5592
      %v5594 = vsel %vm4507, %v5233, 0.0
      %5595 = vadd.xlane.f32.xlu0 %v5594
      %v5596 = vpop.xlane.xlu0 %5595
      %v5597 = vsel %vm4507, %v5235, 0.0
      %5598 = vadd.xlane.f32.xlu0 %v5597
      %v5599 = vpop.xlane.xlu0 %5598
      %v5600 = vsel %vm4507, %v5237, 0.0
      %5601 = vadd.xlane.f32.xlu0 %v5600
      %v5602 = vpop.xlane.xlu0 %5601
      %v5603 = vsel %vm4507, %v5239, 0.0
      %5604 = vadd.xlane.f32.xlu0 %v5603
      %v5605 = vpop.xlane.xlu0 %5604
      %v5606 = vsel %vm4507, %v5241, 0.0
      %5607 = vadd.xlane.f32.xlu0 %v5606
      %v5608 = vpop.xlane.xlu0 %5607
      %v5609 = vsel %vm4507, %v5243, 0.0
      %5610 = vadd.xlane.f32.xlu0 %v5609
      %v5611 = vpop.xlane.xlu0 %5610
      %v5612 = vsel %vm4507, %v5245, 0.0
      %5613 = vadd.xlane.f32.xlu0 %v5612
      %v5614 = vpop.xlane.xlu0 %5613
      %v5615 = vsel %vm4507, %v5247, 0.0
      %5616 = vadd.xlane.f32.xlu0 %v5615
      %v5617 = vpop.xlane.xlu0 %5616
      %v5618 = vsel %vm4507, %v5249, 0.0
      %5619 = vadd.xlane.f32.xlu0 %v5618
      %v5620 = vpop.xlane.xlu0 %5619
      %v5621 = vsel %vm4507, %v5251, 0.0
      %5622 = vadd.xlane.f32.xlu0 %v5621
      %v5623 = vpop.xlane.xlu0 %5622
      %v5624 = vsel %vm4507, %v5253, 0.0
      %5625 = vadd.xlane.f32.xlu0 %v5624
      %v5626 = vpop.xlane.xlu0 %5625
      %v5627 = vsel %vm4507, %v5255, 0.0
      %5628 = vadd.xlane.f32.xlu0 %v5627
      %v5629 = vpop.xlane.xlu0 %5628
      %v5630 = vsel %vm4507, %v5257, 0.0
      %5631 = vadd.xlane.f32.xlu0 %v5630
      %v5632 = vpop.xlane.xlu0 %5631
      %v5633 = vrcp.pop %v5260
      %v5634 = vrcp.pop %v5263
      %v5635 = vrcp.pop %v5266
      %v5636 = vrcp.pop %v5269
      %v5637 = vrcp.pop %v5272
      %v5638 = vrcp.pop %v5275
      %v5639 = vrcp.pop %v5278
      %v5640 = vrcp.pop %v5281
      %v5641 = vrcp.pop %v5284
      %v5642 = vrcp.pop %v5287
      %v5643 = vrcp.pop %v5290
      %v5644 = vrcp.pop %v5293
      %v5645 = vrcp.pop %v5296
      %v5646 = vrcp.pop %v5299
      %v5647 = vrcp.pop %v5302
      %v5648 = vrcp.pop %v5305
      %v5649 = vrcp.pop %v5308
      %v5650 = vrcp.pop %v5311
      %v5651 = vrcp.pop %v5314
      %v5652 = vrcp.pop %v5317
      %v5653 = vrcp.pop %v5320
      %v5654 = vrcp.pop %v5323
      %v5655 = vrcp.pop %v5326
      %v5656 = vrcp.pop %v5329
      %v5657 = vrcp.pop %v5332
      %v5658 = vrcp.pop %v5335
      %v5659 = vrcp.pop %v5338
      %v5660 = vrcp.pop %v5341
      %v5661 = vrcp.pop %v5344
      %v5662 = vrcp.pop %v5347
      %v5663 = vrcp.pop %v5350
      %v5664 = vrcp.pop %v5353
      %v5665 = vrcp.pop %v5356
      %v5666 = vrcp.pop %v5359
      %v5667 = vrcp.pop %v5362
      %v5668 = vrcp.pop %v5365
      %v5669 = vrcp.pop %v5368
      %v5670 = vrcp.pop %v5371
      %v5671 = vrcp.pop %v5374
      %v5672 = vrcp.pop %v5377
      %v5673 = vrcp.pop %v5380
      %v5674 = vrcp.pop %v5383
      %v5675 = vrcp.pop %v5386
      %v5676 = vrcp.pop %v5389
      %v5677 = vrcp.pop %v5392
      %v5678 = vrcp.pop %v5395
      %v5679 = vrcp.pop %v5398
      %v5680 = vrcp.pop %v5401
      %v5681 = vrcp.pop %v5404
      %v5682 = vrcp.pop %v5407
      %v5683 = vrcp.pop %v5410
      %v5684 = vrcp.pop %v5413
      %v5685 = vrcp.pop %v5416
      %v5686 = vrcp.pop %v5419
      %v5687 = vrcp.pop %v5422
      %v5688 = vrcp.pop %v5425
      %v5689 = vrcp.pop %v5428
      %v5690 = vrcp.pop %v5431
      %v5691 = vrcp.pop %v5434
      %v5692 = vrcp.pop %v5437
      %v5693 = vrcp.pop %v5440
      %v5694 = vrcp.pop %v5443
      %v5695 = vrcp.pop %v5446
      %v5696 = vrcp.pop %v5449
      %v5697 = vrcp.pop %v5452
      %v5698 = vrcp.pop %v5455
      %v5699 = vrcp.pop %v5458
      %v5700 = vrcp.pop %v5461
      %v5701 = vrcp.pop %v5464
      %v5702 = vrcp.pop %v5467
      %v5703 = vrcp.pop %v5470
      %v5704 = vrcp.pop %v5473
      %v5705 = vrcp.pop %v5476
      %v5706 = vrcp.pop %v5479
      %v5707 = vrcp.pop %v5482
      %v5708 = vrcp.pop %v5485
      %v5709 = vrcp.pop %v5488
      %v5710 = vrcp.pop %v5491
      %v5711 = vrcp.pop %v5494
      %v5712 = vrcp.pop %v5497
      %v5713 = vrcp.pop %v5500
      %v5714 = vrcp.pop %v5503
      %v5715 = vrcp.pop %v5506
      %v5716 = vrcp.pop %v5509
      %v5717 = vrcp.pop %v5512
      %v5718 = vrcp.pop %v5515
      %v5719 = vrcp.pop %v5518
      %v5720 = vrcp.pop %v5521
      %v5721 = vrcp.pop %v5524
      %v5722 = vrcp.pop %v5527
      %v5723 = vrcp.pop %v5530
      %v5724 = vrcp.pop %v5533
      %v5725 = vrcp.pop %v5536
      %v5726 = vrcp.pop %v5539
      %v5727 = vrcp.pop %v5542
      %v5728 = vrcp.pop %v5545
      %v5729 = vrcp.pop %v5548
      %v5730 = vrcp.pop %v5551
      %v5731 = vrcp.pop %v5554
      %v5732 = vrcp.pop %v5557
      %v5733 = vrcp.pop %v5560
      %v5734 = vrcp.pop %v5563
      %v5735 = vrcp.pop %v5566
      %v5736 = vrcp.pop %v5569
      %v5737 = vrcp.pop %v5572
      %v5738 = vrcp.pop %v5575
      %v5739 = vrcp.pop %v5578
      %v5740 = vrcp.pop %v5581
      %v5741 = vrcp.pop %v5584
      %v5742 = vrcp.pop %v5587
      %v5743 = vrcp.pop %v5590
      %v5744 = vrcp.pop %v5593
      %v5745 = vrcp.pop %v5596
      %v5746 = vrcp.pop %v5599
      %v5747 = vrcp.pop %v5602
      %v5748 = vrcp.pop %v5605
      %v5749 = vrcp.pop %v5608
      %v5750 = vrcp.pop %v5611
      %v5751 = vrcp.pop %v5614
      %v5752 = vrcp.pop %v5617
      %v5753 = vrcp.pop %v5620
      %v5754 = vrcp.pop %v5623
      %v5755 = vrcp.pop %v5626
      %v5756 = vrcp.pop %v5629
      %v5757 = vrcp.pop %v5632
      %v5758 = vmul.f32 %v5009, %v5633
      %v5759 = vmul.f32 %v5011, %v5634
      %v5760 = vmul.f32 %v5013, %v5635
      %v5761 = vmul.f32 %v5015, %v5636
      %v5762 = vmul.f32 %v5017, %v5637
      %v5763 = vmul.f32 %v5019, %v5638
      %v5764 = vmul.f32 %v5021, %v5639
      %v5765 = vmul.f32 %v5023, %v5640
      %v5766 = vmul.f32 %v5025, %v5641
      %v5767 = vmul.f32 %v5027, %v5642
      %v5768 = vmul.f32 %v5029, %v5643
      %v5769 = vmul.f32 %v5031, %v5644
      %v5770 = vmul.f32 %v5033, %v5645
      %v5771 = vmul.f32 %v5035, %v5646
      %v5772 = vmul.f32 %v5037, %v5647
      %v5773 = vmul.f32 %v5039, %v5648
      %v5774 = vmul.f32 %v5041, %v5649
      %v5775 = vmul.f32 %v5043, %v5650
      %v5776 = vmul.f32 %v5045, %v5651
      %v5777 = vmul.f32 %v5047, %v5652
      %v5778 = vmul.f32 %v5049, %v5653
      %v5779 = vmul.f32 %v5051, %v5654
      %v5780 = vmul.f32 %v5053, %v5655
      %v5781 = vmul.f32 %v5055, %v5656
      %v5782 = vmul.f32 %v5057, %v5657
      %v5783 = vmul.f32 %v5059, %v5658
      %v5784 = vmul.f32 %v5061, %v5659
      %v5785 = vmul.f32 %v5063, %v5660
      %v5786 = vmul.f32 %v5065, %v5661
      %v5787 = vmul.f32 %v5067, %v5662
      %v5788 = vmul.f32 %v5069, %v5663
      %v5789 = vmul.f32 %v5071, %v5664
      %v5790 = vmul.f32 %v5073, %v5665
      %v5791 = vmul.f32 %v5075, %v5666
      %v5792 = vmul.f32 %v5077, %v5667
      %v5793 = vmul.f32 %v5079, %v5668
      %v5794 = vmul.f32 %v5081, %v5669
      %v5795 = vmul.f32 %v5083, %v5670
      %v5796 = vmul.f32 %v5085, %v5671
      %v5797 = vmul.f32 %v5087, %v5672
      %v5798 = vmul.f32 %v5089, %v5673
      %v5799 = vmul.f32 %v5091, %v5674
      %v5800 = vmul.f32 %v5093, %v5675
      %v5801 = vmul.f32 %v5095, %v5676
      %v5802 = vmul.f32 %v5097, %v5677
      %v5803 = vmul.f32 %v5099, %v5678
      %v5804 = vmul.f32 %v5101, %v5679
      %v5805 = vmul.f32 %v5103, %v5680
      %v5806 = vmul.f32 %v5105, %v5681
      %v5807 = vmul.f32 %v5107, %v5682
      %v5808 = vmul.f32 %v5109, %v5683
      %v5809 = vmul.f32 %v5111, %v5684
      %v5810 = vmul.f32 %v5113, %v5685
      %v5811 = vmul.f32 %v5115, %v5686
      %v5812 = vmul.f32 %v5117, %v5687
      %v5813 = vmul.f32 %v5119, %v5688
      %v5814 = vmul.f32 %v5121, %v5689
      %v5815 = vmul.f32 %v5123, %v5690
      %v5816 = vmul.f32 %v5125, %v5691
      %v5817 = vmul.f32 %v5127, %v5692
      %v5818 = vmul.f32 %v5129, %v5693
      %v5819 = vmul.f32 %v5131, %v5694
      %v5820 = vmul.f32 %v5133, %v5695
      %v5821 = vmul.f32 %v5135, %v5696
      %v5822 = vmul.f32 %v5137, %v5697
      %v5823 = vmul.f32 %v5139, %v5698
      %v5824 = vmul.f32 %v5141, %v5699
      %v5825 = vmul.f32 %v5143, %v5700
      %v5826 = vmul.f32 %v5145, %v5701
      %v5827 = vmul.f32 %v5147, %v5702
      %v5828 = vmul.f32 %v5149, %v5703
      %v5829 = vmul.f32 %v5151, %v5704
      %v5830 = vmul.f32 %v5153, %v5705
      %v5831 = vmul.f32 %v5155, %v5706
      %v5832 = vmul.f32 %v5157, %v5707
      %v5833 = vmul.f32 %v5159, %v5708
      %v5834 = vmul.f32 %v5161, %v5709
      %v5835 = vmul.f32 %v5163, %v5710
      %v5836 = vmul.f32 %v5165, %v5711
      %v5837 = vmul.f32 %v5167, %v5712
      %v5838 = vmul.f32 %v5169, %v5713
      %v5839 = vmul.f32 %v5171, %v5714
      %v5840 = vmul.f32 %v5173, %v5715
      %v5841 = vmul.f32 %v5175, %v5716
      %v5842 = vmul.f32 %v5177, %v5717
      %v5843 = vmul.f32 %v5179, %v5718
      %v5844 = vmul.f32 %v5181, %v5719
      %v5845 = vmul.f32 %v5183, %v5720
      %v5846 = vmul.f32 %v5185, %v5721
      %v5847 = vmul.f32 %v5187, %v5722
      %v5848 = vmul.f32 %v5189, %v5723
      %v5849 = vmul.f32 %v5191, %v5724
      %v5850 = vmul.f32 %v5193, %v5725
      %v5851 = vmul.f32 %v5195, %v5726
      %v5852 = vmul.f32 %v5197, %v5727
      %v5853 = vmul.f32 %v5199, %v5728
      %v5854 = vmul.f32 %v5201, %v5729
      %v5855 = vmul.f32 %v5203, %v5730
      %v5856 = vmul.f32 %v5205, %v5731
      %v5857 = vmul.f32 %v5207, %v5732
      %v5858 = vmul.f32 %v5209, %v5733
      %v5859 = vmul.f32 %v5211, %v5734
      %v5860 = vmul.f32 %v5213, %v5735
      %v5861 = vmul.f32 %v5215, %v5736
      %v5862 = vmul.f32 %v5217, %v5737
      %v5863 = vmul.f32 %v5219, %v5738
      %v5864 = vmul.f32 %v5221, %v5739
      %v5865 = vmul.f32 %v5223, %v5740
      %v5866 = vmul.f32 %v5225, %v5741
      %v5867 = vmul.f32 %v5227, %v5742
      %v5868 = vmul.f32 %v5229, %v5743
      %v5869 = vmul.f32 %v5231, %v5744
      %v5870 = vmul.f32 %v5233, %v5745
      %v5871 = vmul.f32 %v5235, %v5746
      %v5872 = vmul.f32 %v5237, %v5747
      %v5873 = vmul.f32 %v5239, %v5748
      %v5874 = vmul.f32 %v5241, %v5749
      %v5875 = vmul.f32 %v5243, %v5750
      %v5876 = vmul.f32 %v5245, %v5751
      %v5877 = vmul.f32 %v5247, %v5752
      %v5878 = vmul.f32 %v5249, %v5753
      %v5879 = vmul.f32 %v5251, %v5754
      %v5880 = vmul.f32 %v5253, %v5755
      %v5881 = vmul.f32 %v5255, %v5756
      %v5882 = vmul.f32 %v5257, %v5757
      %v5883 = vmul.f32 %v5758, 1.442695
      %v5884 = vpow.pop %v5883
      %v5885 = vmul.f32 %v5759, 1.442695
      %v5886 = vpow.pop %v5885
      %v5887 = vmul.f32 %v5760, 1.442695
      %v5888 = vpow.pop %v5887
      %v5889 = vmul.f32 %v5761, 1.442695
      %v5890 = vpow.pop %v5889
      %v5891 = vmul.f32 %v5762, 1.442695
      %v5892 = vpow.pop %v5891
      %v5893 = vmul.f32 %v5763, 1.442695
      %v5894 = vpow.pop %v5893
      %v5895 = vmul.f32 %v5764, 1.442695
      %v5896 = vpow.pop %v5895
      %v5897 = vmul.f32 %v5765, 1.442695
      %v5898 = vpow.pop %v5897
      %v5899 = vmul.f32 %v5766, 1.442695
      %v5900 = vpow.pop %v5899
      %v5901 = vmul.f32 %v5767, 1.442695
      %v5902 = vpow.pop %v5901
      %v5903 = vmul.f32 %v5768, 1.442695
      %v5904 = vpow.pop %v5903
      %v5905 = vmul.f32 %v5769, 1.442695
      %v5906 = vpow.pop %v5905
      %v5907 = vmul.f32 %v5770, 1.442695
      %v5908 = vpow.pop %v5907
      %v5909 = vmul.f32 %v5771, 1.442695
      %v5910 = vpow.pop %v5909
      %v5911 = vmul.f32 %v5772, 1.442695
      %v5912 = vpow.pop %v5911
      %v5913 = vmul.f32 %v5773, 1.442695
      %v5914 = vpow.pop %v5913
      %v5915 = vmul.f32 %v5774, 1.442695
      %v5916 = vpow.pop %v5915
      %v5917 = vmul.f32 %v5775, 1.442695
      %v5918 = vpow.pop %v5917
      %v5919 = vmul.f32 %v5776, 1.442695
      %v5920 = vpow.pop %v5919
      %v5921 = vmul.f32 %v5777, 1.442695
      %v5922 = vpow.pop %v5921
      %v5923 = vmul.f32 %v5778, 1.442695
      %v5924 = vpow.pop %v5923
      %v5925 = vmul.f32 %v5779, 1.442695
      %v5926 = vpow.pop %v5925
      %v5927 = vmul.f32 %v5780, 1.442695
      %v5928 = vpow.pop %v5927
      %v5929 = vmul.f32 %v5781, 1.442695
      %v5930 = vpow.pop %v5929
      %v5931 = vmul.f32 %v5782, 1.442695
      %v5932 = vpow.pop %v5931
      %v5933 = vmul.f32 %v5783, 1.442695
      %v5934 = vpow.pop %v5933
      %v5935 = vmul.f32 %v5784, 1.442695
      %v5936 = vpow.pop %v5935
      %v5937 = vmul.f32 %v5785, 1.442695
      %v5938 = vpow.pop %v5937
      %v5939 = vmul.f32 %v5786, 1.442695
      %v5940 = vpow.pop %v5939
      %v5941 = vmul.f32 %v5787, 1.442695
      %v5942 = vpow.pop %v5941
      %v5943 = vmul.f32 %v5788, 1.442695
      %v5944 = vpow.pop %v5943
      %v5945 = vmul.f32 %v5789, 1.442695
      %v5946 = vpow.pop %v5945
      %v5947 = vmul.f32 %v5790, 1.442695
      %v5948 = vpow.pop %v5947
      %v5949 = vmul.f32 %v5791, 1.442695
      %v5950 = vpow.pop %v5949
      %v5951 = vmul.f32 %v5792, 1.442695
      %v5952 = vpow.pop %v5951
      %v5953 = vmul.f32 %v5793, 1.442695
      %v5954 = vpow.pop %v5953
      %v5955 = vmul.f32 %v5794, 1.442695
      %v5956 = vpow.pop %v5955
      %v5957 = vmul.f32 %v5795, 1.442695
      %v5958 = vpow.pop %v5957
      %v5959 = vmul.f32 %v5796, 1.442695
      %v5960 = vpow.pop %v5959
      %v5961 = vmul.f32 %v5797, 1.442695
      %v5962 = vpow.pop %v5961
      %v5963 = vmul.f32 %v5798, 1.442695
      %v5964 = vpow.pop %v5963
      %v5965 = vmul.f32 %v5799, 1.442695
      %v5966 = vpow.pop %v5965
      %v5967 = vmul.f32 %v5800, 1.442695
      %v5968 = vpow.pop %v5967
      %v5969 = vmul.f32 %v5801, 1.442695
      %v5970 = vpow.pop %v5969
      %v5971 = vmul.f32 %v5802, 1.442695
      %v5972 = vpow.pop %v5971
      %v5973 = vmul.f32 %v5803, 1.442695
      %v5974 = vpow.pop %v5973
      %v5975 = vmul.f32 %v5804, 1.442695
      %v5976 = vpow.pop %v5975
      %v5977 = vmul.f32 %v5805, 1.442695
      %v5978 = vpow.pop %v5977
      %v5979 = vmul.f32 %v5806, 1.442695
      %v5980 = vpow.pop %v5979
      %v5981 = vmul.f32 %v5807, 1.442695
      %v5982 = vpow.pop %v5981
      %v5983 = vmul.f32 %v5808, 1.442695
      %v5984 = vpow.pop %v5983
      %v5985 = vmul.f32 %v5809, 1.442695
      %v5986 = vpow.pop %v5985
      %v5987 = vmul.f32 %v5810, 1.442695
      %v5988 = vpow.pop %v5987
      %v5989 = vmul.f32 %v5811, 1.442695
      %v5990 = vpow.pop %v5989
      %v5991 = vmul.f32 %v5812, 1.442695
      %v5992 = vpow.pop %v5991
      %v5993 = vmul.f32 %v5813, 1.442695
      %v5994 = vpow.pop %v5993
      %v5995 = vmul.f32 %v5814, 1.442695
      %v5996 = vpow.pop %v5995
      %v5997 = vmul.f32 %v5815, 1.442695
      %v5998 = vpow.pop %v5997
      %v5999 = vmul.f32 %v5816, 1.442695
      %v6000 = vpow.pop %v5999
      %v6001 = vmul.f32 %v5817, 1.442695
      %v6002 = vpow.pop %v6001
      %v6003 = vmul.f32 %v5818, 1.442695
      %v6004 = vpow.pop %v6003
      %v6005 = vmul.f32 %v5819, 1.442695
      %v6006 = vpow.pop %v6005
      %v6007 = vmul.f32 %v5820, 1.442695
      %v6008 = vpow.pop %v6007
      %v6009 = vmul.f32 %v5821, 1.442695
      %v6010 = vpow.pop %v6009
      %v6011 = vmul.f32 %v5822, 1.442695
      %v6012 = vpow.pop %v6011
      %v6013 = vmul.f32 %v5823, 1.442695
      %v6014 = vpow.pop %v6013
      %v6015 = vmul.f32 %v5824, 1.442695
      %v6016 = vpow.pop %v6015
      %v6017 = vmul.f32 %v5825, 1.442695
      %v6018 = vpow.pop %v6017
      %v6019 = vmul.f32 %v5826, 1.442695
      %v6020 = vpow.pop %v6019
      %v6021 = vmul.f32 %v5827, 1.442695
      %v6022 = vpow.pop %v6021
      %v6023 = vmul.f32 %v5828, 1.442695
      %v6024 = vpow.pop %v6023
      %v6025 = vmul.f32 %v5829, 1.442695
      %v6026 = vpow.pop %v6025
      %v6027 = vmul.f32 %v5830, 1.442695
      %v6028 = vpow.pop %v6027
      %v6029 = vmul.f32 %v5831, 1.442695
      %v6030 = vpow.pop %v6029
      %v6031 = vmul.f32 %v5832, 1.442695
      %v6032 = vpow.pop %v6031
      %v6033 = vmul.f32 %v5833, 1.442695
      %v6034 = vpow.pop %v6033
      %v6035 = vmul.f32 %v5834, 1.442695
      %v6036 = vpow.pop %v6035
      %v6037 = vmul.f32 %v5835, 1.442695
      %v6038 = vpow.pop %v6037
      %v6039 = vmul.f32 %v5836, 1.442695
      %v6040 = vpow.pop %v6039
      %v6041 = vmul.f32 %v5837, 1.442695
      %v6042 = vpow.pop %v6041
      %v6043 = vmul.f32 %v5838, 1.442695
      %v6044 = vpow.pop %v6043
      %v6045 = vmul.f32 %v5839, 1.442695
      %v6046 = vpow.pop %v6045
      %v6047 = vmul.f32 %v5840, 1.442695
      %v6048 = vpow.pop %v6047
      %v6049 = vmul.f32 %v5841, 1.442695
      %v6050 = vpow.pop %v6049
      %v6051 = vmul.f32 %v5842, 1.442695
      %v6052 = vpow.pop %v6051
      %v6053 = vmul.f32 %v5843, 1.442695
      %v6054 = vpow.pop %v6053
      %v6055 = vmul.f32 %v5844, 1.442695
      %v6056 = vpow.pop %v6055
      %v6057 = vmul.f32 %v5845, 1.442695
      %v6058 = vpow.pop %v6057
      %v6059 = vmul.f32 %v5846, 1.442695
      %v6060 = vpow.pop %v6059
      %v6061 = vmul.f32 %v5847, 1.442695
      %v6062 = vpow.pop %v6061
      %v6063 = vmul.f32 %v5848, 1.442695
      %v6064 = vpow.pop %v6063
      %v6065 = vmul.f32 %v5849, 1.442695
      %v6066 = vpow.pop %v6065
      %v6067 = vmul.f32 %v5850, 1.442695
      %v6068 = vpow.pop %v6067
      %v6069 = vmul.f32 %v5851, 1.442695
      %v6070 = vpow.pop %v6069
      %v6071 = vmul.f32 %v5852, 1.442695
      %v6072 = vpow.pop %v6071
      %v6073 = vmul.f32 %v5853, 1.442695
      %v6074 = vpow.pop %v6073
      %v6075 = vmul.f32 %v5854, 1.442695
      %v6076 = vpow.pop %v6075
      %v6077 = vmul.f32 %v5855, 1.442695
      %v6078 = vpow.pop %v6077
      %v6079 = vmul.f32 %v5856, 1.442695
      %v6080 = vpow.pop %v6079
      %v6081 = vmul.f32 %v5857, 1.442695
      %v6082 = vpow.pop %v6081
      %v6083 = vmul.f32 %v5858, 1.442695
      %v6084 = vpow.pop %v6083
      %v6085 = vmul.f32 %v5859, 1.442695
      %v6086 = vpow.pop %v6085
      %v6087 = vmul.f32 %v5860, 1.442695
      %v6088 = vpow.pop %v6087
      %v6089 = vmul.f32 %v5861, 1.442695
      %v6090 = vpow.pop %v6089
      %v6091 = vmul.f32 %v5862, 1.442695
      %v6092 = vpow.pop %v6091
      %v6093 = vmul.f32 %v5863, 1.442695
      %v6094 = vpow.pop %v6093
      %v6095 = vmul.f32 %v5864, 1.442695
      %v6096 = vpow.pop %v6095
      %v6097 = vmul.f32 %v5865, 1.442695
      %v6098 = vpow.pop %v6097
      %v6099 = vmul.f32 %v5866, 1.442695
      %v6100 = vpow.pop %v6099
      %v6101 = vmul.f32 %v5867, 1.442695
      %v6102 = vpow.pop %v6101
      %v6103 = vmul.f32 %v5868, 1.442695
      %v6104 = vpow.pop %v6103
      %v6105 = vmul.f32 %v5869, 1.442695
      %v6106 = vpow.pop %v6105
      %v6107 = vmul.f32 %v5870, 1.442695
      %v6108 = vpow.pop %v6107
      %v6109 = vmul.f32 %v5871, 1.442695
      %v6110 = vpow.pop %v6109
      %v6111 = vmul.f32 %v5872, 1.442695
      %v6112 = vpow.pop %v6111
      %v6113 = vmul.f32 %v5873, 1.442695
      %v6114 = vpow.pop %v6113
      %v6115 = vmul.f32 %v5874, 1.442695
      %v6116 = vpow.pop %v6115
      %v6117 = vmul.f32 %v5875, 1.442695
      %v6118 = vpow.pop %v6117
      %v6119 = vmul.f32 %v5876, 1.442695
      %v6120 = vpow.pop %v6119
      %v6121 = vmul.f32 %v5877, 1.442695
      %v6122 = vpow.pop %v6121
      %v6123 = vmul.f32 %v5878, 1.442695
      %v6124 = vpow.pop %v6123
      %v6125 = vmul.f32 %v5879, 1.442695
      %v6126 = vpow.pop %v6125
      %v6127 = vmul.f32 %v5880, 1.442695
      %v6128 = vpow.pop %v6127
      %v6129 = vmul.f32 %v5881, 1.442695
      %v6130 = vpow.pop %v6129
      %v6131 = vmul.f32 %v5882, 1.442695
      %v6132 = vpow.pop %v6131
      %v6133 = vsel %vm4507, %v5884, 0.0
      %6134 = vadd.xlane.f32.xlu0 %v6133
      %v6135 = vpop.xlane.xlu0 %6134
      %v6136 = vsel %vm4507, %v5886, 0.0
      %6137 = vadd.xlane.f32.xlu0 %v6136
      %v6138 = vpop.xlane.xlu0 %6137
      %v6139 = vsel %vm4507, %v5888, 0.0
      %6140 = vadd.xlane.f32.xlu0 %v6139
      %v6141 = vpop.xlane.xlu0 %6140
      %v6142 = vsel %vm4507, %v5890, 0.0
      %6143 = vadd.xlane.f32.xlu0 %v6142
      %v6144 = vpop.xlane.xlu0 %6143
      %v6145 = vsel %vm4507, %v5892, 0.0
      %6146 = vadd.xlane.f32.xlu0 %v6145
      %v6147 = vpop.xlane.xlu0 %6146
      %v6148 = vsel %vm4507, %v5894, 0.0
      %6149 = vadd.xlane.f32.xlu0 %v6148
      %v6150 = vpop.xlane.xlu0 %6149
      %v6151 = vsel %vm4507, %v5896, 0.0
      %6152 = vadd.xlane.f32.xlu0 %v6151
      %v6153 = vpop.xlane.xlu0 %6152
      %v6154 = vsel %vm4507, %v5898, 0.0
      %6155 = vadd.xlane.f32.xlu0 %v6154
      %v6156 = vpop.xlane.xlu0 %6155
      %v6157 = vsel %vm4507, %v5900, 0.0
      %6158 = vadd.xlane.f32.xlu0 %v6157
      %v6159 = vpop.xlane.xlu0 %6158
      %v6160 = vsel %vm4507, %v5902, 0.0
      %6161 = vadd.xlane.f32.xlu0 %v6160
      %v6162 = vpop.xlane.xlu0 %6161
      %v6163 = vsel %vm4507, %v5904, 0.0
      %6164 = vadd.xlane.f32.xlu0 %v6163
      %v6165 = vpop.xlane.xlu0 %6164
      %v6166 = vsel %vm4507, %v5906, 0.0
      %6167 = vadd.xlane.f32.xlu0 %v6166
      %v6168 = vpop.xlane.xlu0 %6167
      %v6169 = vsel %vm4507, %v5908, 0.0
      %6170 = vadd.xlane.f32.xlu0 %v6169
      %v6171 = vpop.xlane.xlu0 %6170
      %v6172 = vsel %vm4507, %v5910, 0.0
      %6173 = vadd.xlane.f32.xlu0 %v6172
      %v6174 = vpop.xlane.xlu0 %6173
      %v6175 = vsel %vm4507, %v5912, 0.0
      %6176 = vadd.xlane.f32.xlu0 %v6175
      %v6177 = vpop.xlane.xlu0 %6176
      %v6178 = vsel %vm4507, %v5914, 0.0
      %6179 = vadd.xlane.f32.xlu0 %v6178
      %v6180 = vpop.xlane.xlu0 %6179
      %v6181 = vsel %vm4507, %v5916, 0.0
      %6182 = vadd.xlane.f32.xlu0 %v6181
      %v6183 = vpop.xlane.xlu0 %6182
      %v6184 = vsel %vm4507, %v5918, 0.0
      %6185 = vadd.xlane.f32.xlu0 %v6184
      %v6186 = vpop.xlane.xlu0 %6185
      %v6187 = vsel %vm4507, %v5920, 0.0
      %6188 = vadd.xlane.f32.xlu0 %v6187
      %v6189 = vpop.xlane.xlu0 %6188
      %v6190 = vsel %vm4507, %v5922, 0.0
      %6191 = vadd.xlane.f32.xlu0 %v6190
      %v6192 = vpop.xlane.xlu0 %6191
      %v6193 = vsel %vm4507, %v5924, 0.0
      %6194 = vadd.xlane.f32.xlu0 %v6193
      %v6195 = vpop.xlane.xlu0 %6194
      %v6196 = vsel %vm4507, %v5926, 0.0
      %6197 = vadd.xlane.f32.xlu0 %v6196
      %v6198 = vpop.xlane.xlu0 %6197
      %v6199 = vsel %vm4507, %v5928, 0.0
      %6200 = vadd.xlane.f32.xlu0 %v6199
      %v6201 = vpop.xlane.xlu0 %6200
      %v6202 = vsel %vm4507, %v5930, 0.0
      %6203 = vadd.xlane.f32.xlu0 %v6202
      %v6204 = vpop.xlane.xlu0 %6203
      %v6205 = vsel %vm4507, %v5932, 0.0
      %6206 = vadd.xlane.f32.xlu0 %v6205
      %v6207 = vpop.xlane.xlu0 %6206
      %v6208 = vsel %vm4507, %v5934, 0.0
      %6209 = vadd.xlane.f32.xlu0 %v6208
      %v6210 = vpop.xlane.xlu0 %6209
      %v6211 = vsel %vm4507, %v5936, 0.0
      %6212 = vadd.xlane.f32.xlu0 %v6211
      %v6213 = vpop.xlane.xlu0 %6212
      %v6214 = vsel %vm4507, %v5938, 0.0
      %6215 = vadd.xlane.f32.xlu0 %v6214
      %v6216 = vpop.xlane.xlu0 %6215
      %v6217 = vsel %vm4507, %v5940, 0.0
      %6218 = vadd.xlane.f32.xlu0 %v6217
      %v6219 = vpop.xlane.xlu0 %6218
      %v6220 = vsel %vm4507, %v5942, 0.0
      %6221 = vadd.xlane.f32.xlu0 %v6220
      %v6222 = vpop.xlane.xlu0 %6221
      %v6223 = vsel %vm4507, %v5944, 0.0
      %6224 = vadd.xlane.f32.xlu0 %v6223
      %v6225 = vpop.xlane.xlu0 %6224
      %v6226 = vsel %vm4507, %v5946, 0.0
      %6227 = vadd.xlane.f32.xlu0 %v6226
      %v6228 = vpop.xlane.xlu0 %6227
      %v6229 = vsel %vm4507, %v5948, 0.0
      %6230 = vadd.xlane.f32.xlu0 %v6229
      %v6231 = vpop.xlane.xlu0 %6230
      %v6232 = vsel %vm4507, %v5950, 0.0
      %6233 = vadd.xlane.f32.xlu0 %v6232
      %v6234 = vpop.xlane.xlu0 %6233
      %v6235 = vsel %vm4507, %v5952, 0.0
      %6236 = vadd.xlane.f32.xlu0 %v6235
      %v6237 = vpop.xlane.xlu0 %6236
      %v6238 = vsel %vm4507, %v5954, 0.0
      %6239 = vadd.xlane.f32.xlu0 %v6238
      %v6240 = vpop.xlane.xlu0 %6239
      %v6241 = vsel %vm4507, %v5956, 0.0
      %6242 = vadd.xlane.f32.xlu0 %v6241
      %v6243 = vpop.xlane.xlu0 %6242
      %v6244 = vsel %vm4507, %v5958, 0.0
      %6245 = vadd.xlane.f32.xlu0 %v6244
      %v6246 = vpop.xlane.xlu0 %6245
      %v6247 = vsel %vm4507, %v5960, 0.0
      %6248 = vadd.xlane.f32.xlu0 %v6247
      %v6249 = vpop.xlane.xlu0 %6248
      %v6250 = vsel %vm4507, %v5962, 0.0
      %6251 = vadd.xlane.f32.xlu0 %v6250
      %v6252 = vpop.xlane.xlu0 %6251
      %v6253 = vsel %vm4507, %v5964, 0.0
      %6254 = vadd.xlane.f32.xlu0 %v6253
      %v6255 = vpop.xlane.xlu0 %6254
      %v6256 = vsel %vm4507, %v5966, 0.0
      %6257 = vadd.xlane.f32.xlu0 %v6256
      %v6258 = vpop.xlane.xlu0 %6257
      %v6259 = vsel %vm4507, %v5968, 0.0
      %6260 = vadd.xlane.f32.xlu0 %v6259
      %v6261 = vpop.xlane.xlu0 %6260
      %v6262 = vsel %vm4507, %v5970, 0.0
      %6263 = vadd.xlane.f32.xlu0 %v6262
      %v6264 = vpop.xlane.xlu0 %6263
      %v6265 = vsel %vm4507, %v5972, 0.0
      %6266 = vadd.xlane.f32.xlu0 %v6265
      %v6267 = vpop.xlane.xlu0 %6266
      %v6268 = vsel %vm4507, %v5974, 0.0
      %6269 = vadd.xlane.f32.xlu0 %v6268
      %v6270 = vpop.xlane.xlu0 %6269
      %v6271 = vsel %vm4507, %v5976, 0.0
      %6272 = vadd.xlane.f32.xlu0 %v6271
      %v6273 = vpop.xlane.xlu0 %6272
      %v6274 = vsel %vm4507, %v5978, 0.0
      %6275 = vadd.xlane.f32.xlu0 %v6274
      %v6276 = vpop.xlane.xlu0 %6275
      %v6277 = vsel %vm4507, %v5980, 0.0
      %6278 = vadd.xlane.f32.xlu0 %v6277
      %v6279 = vpop.xlane.xlu0 %6278
      %v6280 = vsel %vm4507, %v5982, 0.0
      %6281 = vadd.xlane.f32.xlu0 %v6280
      %v6282 = vpop.xlane.xlu0 %6281
      %v6283 = vsel %vm4507, %v5984, 0.0
      %6284 = vadd.xlane.f32.xlu0 %v6283
      %v6285 = vpop.xlane.xlu0 %6284
      %v6286 = vsel %vm4507, %v5986, 0.0
      %6287 = vadd.xlane.f32.xlu0 %v6286
      %v6288 = vpop.xlane.xlu0 %6287
      %v6289 = vsel %vm4507, %v5988, 0.0
      %6290 = vadd.xlane.f32.xlu0 %v6289
      %v6291 = vpop.xlane.xlu0 %6290
      %v6292 = vsel %vm4507, %v5990, 0.0
      %6293 = vadd.xlane.f32.xlu0 %v6292
      %v6294 = vpop.xlane.xlu0 %6293
      %v6295 = vsel %vm4507, %v5992, 0.0
      %6296 = vadd.xlane.f32.xlu0 %v6295
      %v6297 = vpop.xlane.xlu0 %6296
      %v6298 = vsel %vm4507, %v5994, 0.0
      %6299 = vadd.xlane.f32.xlu0 %v6298
      %v6300 = vpop.xlane.xlu0 %6299
      %v6301 = vsel %vm4507, %v5996, 0.0
      %6302 = vadd.xlane.f32.xlu0 %v6301
      %v6303 = vpop.xlane.xlu0 %6302
      %v6304 = vsel %vm4507, %v5998, 0.0
      %6305 = vadd.xlane.f32.xlu0 %v6304
      %v6306 = vpop.xlane.xlu0 %6305
      %v6307 = vsel %vm4507, %v6000, 0.0
      %6308 = vadd.xlane.f32.xlu0 %v6307
      %v6309 = vpop.xlane.xlu0 %6308
      %v6310 = vsel %vm4507, %v6002, 0.0
      %6311 = vadd.xlane.f32.xlu0 %v6310
      %v6312 = vpop.xlane.xlu0 %6311
      %v6313 = vsel %vm4507, %v6004, 0.0
      %6314 = vadd.xlane.f32.xlu0 %v6313
      %v6315 = vpop.xlane.xlu0 %6314
      %v6316 = vsel %vm4507, %v6006, 0.0
      %6317 = vadd.xlane.f32.xlu0 %v6316
      %v6318 = vpop.xlane.xlu0 %6317
      %v6319 = vsel %vm4507, %v6008, 0.0
      %6320 = vadd.xlane.f32.xlu0 %v6319
      %v6321 = vpop.xlane.xlu0 %6320
      %v6322 = vsel %vm4507, %v6010, 0.0
      %6323 = vadd.xlane.f32.xlu0 %v6322
      %v6324 = vpop.xlane.xlu0 %6323
      %v6325 = vsel %vm4507, %v6012, 0.0
      %6326 = vadd.xlane.f32.xlu0 %v6325
      %v6327 = vpop.xlane.xlu0 %6326
      %v6328 = vsel %vm4507, %v6014, 0.0
      %6329 = vadd.xlane.f32.xlu0 %v6328
      %v6330 = vpop.xlane.xlu0 %6329
      %v6331 = vsel %vm4507, %v6016, 0.0
      %6332 = vadd.xlane.f32.xlu0 %v6331
      %v6333 = vpop.xlane.xlu0 %6332
      %v6334 = vsel %vm4507, %v6018, 0.0
      %6335 = vadd.xlane.f32.xlu0 %v6334
      %v6336 = vpop.xlane.xlu0 %6335
      %v6337 = vsel %vm4507, %v6020, 0.0
      %6338 = vadd.xlane.f32.xlu0 %v6337
      %v6339 = vpop.xlane.xlu0 %6338
      %v6340 = vsel %vm4507, %v6022, 0.0
      %6341 = vadd.xlane.f32.xlu0 %v6340
      %v6342 = vpop.xlane.xlu0 %6341
      %v6343 = vsel %vm4507, %v6024, 0.0
      %6344 = vadd.xlane.f32.xlu0 %v6343
      %v6345 = vpop.xlane.xlu0 %6344
      %v6346 = vsel %vm4507, %v6026, 0.0
      %6347 = vadd.xlane.f32.xlu0 %v6346
      %v6348 = vpop.xlane.xlu0 %6347
      %v6349 = vsel %vm4507, %v6028, 0.0
      %6350 = vadd.xlane.f32.xlu0 %v6349
      %v6351 = vpop.xlane.xlu0 %6350
      %v6352 = vsel %vm4507, %v6030, 0.0
      %6353 = vadd.xlane.f32.xlu0 %v6352
      %v6354 = vpop.xlane.xlu0 %6353
      %v6355 = vsel %vm4507, %v6032, 0.0
      %6356 = vadd.xlane.f32.xlu0 %v6355
      %v6357 = vpop.xlane.xlu0 %6356
      %v6358 = vsel %vm4507, %v6034, 0.0
      %6359 = vadd.xlane.f32.xlu0 %v6358
      %v6360 = vpop.xlane.xlu0 %6359
      %v6361 = vsel %vm4507, %v6036, 0.0
      %6362 = vadd.xlane.f32.xlu0 %v6361
      %v6363 = vpop.xlane.xlu0 %6362
      %v6364 = vsel %vm4507, %v6038, 0.0
      %6365 = vadd.xlane.f32.xlu0 %v6364
      %v6366 = vpop.xlane.xlu0 %6365
      %v6367 = vsel %vm4507, %v6040, 0.0
      %6368 = vadd.xlane.f32.xlu0 %v6367
      %v6369 = vpop.xlane.xlu0 %6368
      %v6370 = vsel %vm4507, %v6042, 0.0
      %6371 = vadd.xlane.f32.xlu0 %v6370
      %v6372 = vpop.xlane.xlu0 %6371
      %v6373 = vsel %vm4507, %v6044, 0.0
      %6374 = vadd.xlane.f32.xlu0 %v6373
      %v6375 = vpop.xlane.xlu0 %6374
      %v6376 = vsel %vm4507, %v6046, 0.0
      %6377 = vadd.xlane.f32.xlu0 %v6376
      %v6378 = vpop.xlane.xlu0 %6377
      %v6379 = vsel %vm4507, %v6048, 0.0
      %6380 = vadd.xlane.f32.xlu0 %v6379
      %v6381 = vpop.xlane.xlu0 %6380
      %v6382 = vsel %vm4507, %v6050, 0.0
      %6383 = vadd.xlane.f32.xlu0 %v6382
      %v6384 = vpop.xlane.xlu0 %6383
      %v6385 = vsel %vm4507, %v6052, 0.0
      %6386 = vadd.xlane.f32.xlu0 %v6385
      %v6387 = vpop.xlane.xlu0 %6386
      %v6388 = vsel %vm4507, %v6054, 0.0
      %6389 = vadd.xlane.f32.xlu0 %v6388
      %v6390 = vpop.xlane.xlu0 %6389
      %v6391 = vsel %vm4507, %v6056, 0.0
      %6392 = vadd.xlane.f32.xlu0 %v6391
      %v6393 = vpop.xlane.xlu0 %6392
      %v6394 = vsel %vm4507, %v6058, 0.0
      %6395 = vadd.xlane.f32.xlu0 %v6394
      %v6396 = vpop.xlane.xlu0 %6395
      %v6397 = vsel %vm4507, %v6060, 0.0
      %6398 = vadd.xlane.f32.xlu0 %v6397
      %v6399 = vpop.xlane.xlu0 %6398
      %v6400 = vsel %vm4507, %v6062, 0.0
      %6401 = vadd.xlane.f32.xlu0 %v6400
      %v6402 = vpop.xlane.xlu0 %6401
      %v6403 = vsel %vm4507, %v6064, 0.0
      %6404 = vadd.xlane.f32.xlu0 %v6403
      %v6405 = vpop.xlane.xlu0 %6404
      %v6406 = vsel %vm4507, %v6066, 0.0
      %6407 = vadd.xlane.f32.xlu0 %v6406
      %v6408 = vpop.xlane.xlu0 %6407
      %v6409 = vsel %vm4507, %v6068, 0.0
      %6410 = vadd.xlane.f32.xlu0 %v6409
      %v6411 = vpop.xlane.xlu0 %6410
      %v6412 = vsel %vm4507, %v6070, 0.0
      %6413 = vadd.xlane.f32.xlu0 %v6412
      %v6414 = vpop.xlane.xlu0 %6413
      %v6415 = vsel %vm4507, %v6072, 0.0
      %6416 = vadd.xlane.f32.xlu0 %v6415
      %v6417 = vpop.xlane.xlu0 %6416
      %v6418 = vsel %vm4507, %v6074, 0.0
      %6419 = vadd.xlane.f32.xlu0 %v6418
      %v6420 = vpop.xlane.xlu0 %6419
      %v6421 = vsel %vm4507, %v6076, 0.0
      %6422 = vadd.xlane.f32.xlu0 %v6421
      %v6423 = vpop.xlane.xlu0 %6422
      %v6424 = vsel %vm4507, %v6078, 0.0
      %6425 = vadd.xlane.f32.xlu0 %v6424
      %v6426 = vpop.xlane.xlu0 %6425
      %v6427 = vsel %vm4507, %v6080, 0.0
      %6428 = vadd.xlane.f32.xlu0 %v6427
      %v6429 = vpop.xlane.xlu0 %6428
      %v6430 = vsel %vm4507, %v6082, 0.0
      %6431 = vadd.xlane.f32.xlu0 %v6430
      %v6432 = vpop.xlane.xlu0 %6431
      %v6433 = vsel %vm4507, %v6084, 0.0
      %6434 = vadd.xlane.f32.xlu0 %v6433
      %v6435 = vpop.xlane.xlu0 %6434
      %v6436 = vsel %vm4507, %v6086, 0.0
      %6437 = vadd.xlane.f32.xlu0 %v6436
      %v6438 = vpop.xlane.xlu0 %6437
      %v6439 = vsel %vm4507, %v6088, 0.0
      %6440 = vadd.xlane.f32.xlu0 %v6439
      %v6441 = vpop.xlane.xlu0 %6440
      %v6442 = vsel %vm4507, %v6090, 0.0
      %6443 = vadd.xlane.f32.xlu0 %v6442
      %v6444 = vpop.xlane.xlu0 %6443
      %v6445 = vsel %vm4507, %v6092, 0.0
      %6446 = vadd.xlane.f32.xlu0 %v6445
      %v6447 = vpop.xlane.xlu0 %6446
      %v6448 = vsel %vm4507, %v6094, 0.0
      %6449 = vadd.xlane.f32.xlu0 %v6448
      %v6450 = vpop.xlane.xlu0 %6449
      %v6451 = vsel %vm4507, %v6096, 0.0
      %6452 = vadd.xlane.f32.xlu0 %v6451
      %v6453 = vpop.xlane.xlu0 %6452
      %v6454 = vsel %vm4507, %v6098, 0.0
      %6455 = vadd.xlane.f32.xlu0 %v6454
      %v6456 = vpop.xlane.xlu0 %6455
      %v6457 = vsel %vm4507, %v6100, 0.0
      %6458 = vadd.xlane.f32.xlu0 %v6457
      %v6459 = vpop.xlane.xlu0 %6458
      %v6460 = vsel %vm4507, %v6102, 0.0
      %6461 = vadd.xlane.f32.xlu0 %v6460
      %v6462 = vpop.xlane.xlu0 %6461
      %v6463 = vsel %vm4507, %v6104, 0.0
      %6464 = vadd.xlane.f32.xlu0 %v6463
      %v6465 = vpop.xlane.xlu0 %6464
      %v6466 = vsel %vm4507, %v6106, 0.0
      %6467 = vadd.xlane.f32.xlu0 %v6466
      %v6468 = vpop.xlane.xlu0 %6467
      %v6469 = vsel %vm4507, %v6108, 0.0
      %6470 = vadd.xlane.f32.xlu0 %v6469
      %v6471 = vpop.xlane.xlu0 %6470
      %v6472 = vsel %vm4507, %v6110, 0.0
      %6473 = vadd.xlane.f32.xlu0 %v6472
      %v6474 = vpop.xlane.xlu0 %6473
      %v6475 = vsel %vm4507, %v6112, 0.0
      %6476 = vadd.xlane.f32.xlu0 %v6475
      %v6477 = vpop.xlane.xlu0 %6476
      %v6478 = vsel %vm4507, %v6114, 0.0
      %6479 = vadd.xlane.f32.xlu0 %v6478
      %v6480 = vpop.xlane.xlu0 %6479
      %v6481 = vsel %vm4507, %v6116, 0.0
      %6482 = vadd.xlane.f32.xlu0 %v6481
      %v6483 = vpop.xlane.xlu0 %6482
      %v6484 = vsel %vm4507, %v6118, 0.0
      %6485 = vadd.xlane.f32.xlu0 %v6484
      %v6486 = vpop.xlane.xlu0 %6485
      %v6487 = vsel %vm4507, %v6120, 0.0
      %6488 = vadd.xlane.f32.xlu0 %v6487
      %v6489 = vpop.xlane.xlu0 %6488
      %v6490 = vsel %vm4507, %v6122, 0.0
      %6491 = vadd.xlane.f32.xlu0 %v6490
      %v6492 = vpop.xlane.xlu0 %6491
      %v6493 = vsel %vm4507, %v6124, 0.0
      %6494 = vadd.xlane.f32.xlu0 %v6493
      %v6495 = vpop.xlane.xlu0 %6494
      %v6496 = vsel %vm4507, %v6126, 0.0
      %6497 = vadd.xlane.f32.xlu0 %v6496
      %v6498 = vpop.xlane.xlu0 %6497
      %v6499 = vsel %vm4507, %v6128, 0.0
      %6500 = vadd.xlane.f32.xlu0 %v6499
      %v6501 = vpop.xlane.xlu0 %6500
      %v6502 = vsel %vm4507, %v6130, 0.0
      %6503 = vadd.xlane.f32.xlu0 %v6502
      %v6504 = vpop.xlane.xlu0 %6503
      %v6505 = vsel %vm4507, %v6132, 0.0
      %6506 = vadd.xlane.f32.xlu0 %v6505
      %v6507 = vpop.xlane.xlu0 %6506
      %v6508 = vlog2.pop %v6135
      %v6509 = vmul.f32 %v6508, 0.6931472
      %v6510 = vlog2.pop %v6138
      %v6511 = vmul.f32 %v6510, 0.6931472
      %v6512 = vlog2.pop %v6141
      %v6513 = vmul.f32 %v6512, 0.6931472
      %v6514 = vlog2.pop %v6144
      %v6515 = vmul.f32 %v6514, 0.6931472
      %v6516 = vlog2.pop %v6147
      %v6517 = vmul.f32 %v6516, 0.6931472
      %v6518 = vlog2.pop %v6150
      %v6519 = vmul.f32 %v6518, 0.6931472
      %v6520 = vlog2.pop %v6153
      %v6521 = vmul.f32 %v6520, 0.6931472
      %v6522 = vlog2.pop %v6156
      %v6523 = vmul.f32 %v6522, 0.6931472
      %v6524 = vlog2.pop %v6159
      %v6525 = vmul.f32 %v6524, 0.6931472
      %v6526 = vlog2.pop %v6162
      %v6527 = vmul.f32 %v6526, 0.6931472
      %v6528 = vlog2.pop %v6165
      %v6529 = vmul.f32 %v6528, 0.6931472
      %v6530 = vlog2.pop %v6168
      %v6531 = vmul.f32 %v6530, 0.6931472
      %v6532 = vlog2.pop %v6171
      %v6533 = vmul.f32 %v6532, 0.6931472
      %v6534 = vlog2.pop %v6174
      %v6535 = vmul.f32 %v6534, 0.6931472
      %v6536 = vlog2.pop %v6177
      %v6537 = vmul.f32 %v6536, 0.6931472
      %v6538 = vlog2.pop %v6180
      %v6539 = vmul.f32 %v6538, 0.6931472
      %v6540 = vlog2.pop %v6183
      %v6541 = vmul.f32 %v6540, 0.6931472
      %v6542 = vlog2.pop %v6186
      %v6543 = vmul.f32 %v6542, 0.6931472
      %v6544 = vlog2.pop %v6189
      %v6545 = vmul.f32 %v6544, 0.6931472
      %v6546 = vlog2.pop %v6192
      %v6547 = vmul.f32 %v6546, 0.6931472
      %v6548 = vlog2.pop %v6195
      %v6549 = vmul.f32 %v6548, 0.6931472
      %v6550 = vlog2.pop %v6198
      %v6551 = vmul.f32 %v6550, 0.6931472
      %v6552 = vlog2.pop %v6201
      %v6553 = vmul.f32 %v6552, 0.6931472
      %v6554 = vlog2.pop %v6204
      %v6555 = vmul.f32 %v6554, 0.6931472
      %v6556 = vlog2.pop %v6207
      %v6557 = vmul.f32 %v6556, 0.6931472
      %v6558 = vlog2.pop %v6210
      %v6559 = vmul.f32 %v6558, 0.6931472
      %v6560 = vlog2.pop %v6213
      %v6561 = vmul.f32 %v6560, 0.6931472
      %v6562 = vlog2.pop %v6216
      %v6563 = vmul.f32 %v6562, 0.6931472
      %v6564 = vlog2.pop %v6219
      %v6565 = vmul.f32 %v6564, 0.6931472
      %v6566 = vlog2.pop %v6222
      %v6567 = vmul.f32 %v6566, 0.6931472
      %v6568 = vlog2.pop %v6225
      %v6569 = vmul.f32 %v6568, 0.6931472
      %v6570 = vlog2.pop %v6228
      %v6571 = vmul.f32 %v6570, 0.6931472
      %v6572 = vlog2.pop %v6231
      %v6573 = vmul.f32 %v6572, 0.6931472
      %v6574 = vlog2.pop %v6234
      %v6575 = vmul.f32 %v6574, 0.6931472
      %v6576 = vlog2.pop %v6237
      %v6577 = vmul.f32 %v6576, 0.6931472
      %v6578 = vlog2.pop %v6240
      %v6579 = vmul.f32 %v6578, 0.6931472
      %v6580 = vlog2.pop %v6243
      %v6581 = vmul.f32 %v6580, 0.6931472
      %v6582 = vlog2.pop %v6246
      %v6583 = vmul.f32 %v6582, 0.6931472
      %v6584 = vlog2.pop %v6249
      %v6585 = vmul.f32 %v6584, 0.6931472
      %v6586 = vlog2.pop %v6252
      %v6587 = vmul.f32 %v6586, 0.6931472
      %v6588 = vlog2.pop %v6255
      %v6589 = vmul.f32 %v6588, 0.6931472
      %v6590 = vlog2.pop %v6258
      %v6591 = vmul.f32 %v6590, 0.6931472
      %v6592 = vlog2.pop %v6261
      %v6593 = vmul.f32 %v6592, 0.6931472
      %v6594 = vlog2.pop %v6264
      %v6595 = vmul.f32 %v6594, 0.6931472
      %v6596 = vlog2.pop %v6267
      %v6597 = vmul.f32 %v6596, 0.6931472
      %v6598 = vlog2.pop %v6270
      %v6599 = vmul.f32 %v6598, 0.6931472
      %v6600 = vlog2.pop %v6273
      %v6601 = vmul.f32 %v6600, 0.6931472
      %v6602 = vlog2.pop %v6276
      %v6603 = vmul.f32 %v6602, 0.6931472
      %v6604 = vlog2.pop %v6279
      %v6605 = vmul.f32 %v6604, 0.6931472
      %v6606 = vlog2.pop %v6282
      %v6607 = vmul.f32 %v6606, 0.6931472
      %v6608 = vlog2.pop %v6285
      %v6609 = vmul.f32 %v6608, 0.6931472
      %v6610 = vlog2.pop %v6288
      %v6611 = vmul.f32 %v6610, 0.6931472
      %v6612 = vlog2.pop %v6291
      %v6613 = vmul.f32 %v6612, 0.6931472
      %v6614 = vlog2.pop %v6294
      %v6615 = vmul.f32 %v6614, 0.6931472
      %v6616 = vlog2.pop %v6297
      %v6617 = vmul.f32 %v6616, 0.6931472
      %v6618 = vlog2.pop %v6300
      %v6619 = vmul.f32 %v6618, 0.6931472
      %v6620 = vlog2.pop %v6303
      %v6621 = vmul.f32 %v6620, 0.6931472
      %v6622 = vlog2.pop %v6306
      %v6623 = vmul.f32 %v6622, 0.6931472
      %v6624 = vlog2.pop %v6309
      %v6625 = vmul.f32 %v6624, 0.6931472
      %v6626 = vlog2.pop %v6312
      %v6627 = vmul.f32 %v6626, 0.6931472
      %v6628 = vlog2.pop %v6315
      %v6629 = vmul.f32 %v6628, 0.6931472
      %v6630 = vlog2.pop %v6318
      %v6631 = vmul.f32 %v6630, 0.6931472
      %v6632 = vlog2.pop %v6321
      %v6633 = vmul.f32 %v6632, 0.6931472
      %v6634 = vlog2.pop %v6324
      %v6635 = vmul.f32 %v6634, 0.6931472
      %v6636 = vlog2.pop %v6327
      %v6637 = vmul.f32 %v6636, 0.6931472
      %v6638 = vlog2.pop %v6330
      %v6639 = vmul.f32 %v6638, 0.6931472
      %v6640 = vlog2.pop %v6333
      %v6641 = vmul.f32 %v6640, 0.6931472
      %v6642 = vlog2.pop %v6336
      %v6643 = vmul.f32 %v6642, 0.6931472
      %v6644 = vlog2.pop %v6339
      %v6645 = vmul.f32 %v6644, 0.6931472
      %v6646 = vlog2.pop %v6342
      %v6647 = vmul.f32 %v6646, 0.6931472
      %v6648 = vlog2.pop %v6345
      %v6649 = vmul.f32 %v6648, 0.6931472
      %v6650 = vlog2.pop %v6348
      %v6651 = vmul.f32 %v6650, 0.6931472
      %v6652 = vlog2.pop %v6351
      %v6653 = vmul.f32 %v6652, 0.6931472
      %v6654 = vlog2.pop %v6354
      %v6655 = vmul.f32 %v6654, 0.6931472
      %v6656 = vlog2.pop %v6357
      %v6657 = vmul.f32 %v6656, 0.6931472
      %v6658 = vlog2.pop %v6360
      %v6659 = vmul.f32 %v6658, 0.6931472
      %v6660 = vlog2.pop %v6363
      %v6661 = vmul.f32 %v6660, 0.6931472
      %v6662 = vlog2.pop %v6366
      %v6663 = vmul.f32 %v6662, 0.6931472
      %v6664 = vlog2.pop %v6369
      %v6665 = vmul.f32 %v6664, 0.6931472
      %v6666 = vlog2.pop %v6372
      %v6667 = vmul.f32 %v6666, 0.6931472
      %v6668 = vlog2.pop %v6375
      %v6669 = vmul.f32 %v6668, 0.6931472
      %v6670 = vlog2.pop %v6378
      %v6671 = vmul.f32 %v6670, 0.6931472
      %v6672 = vlog2.pop %v6381
      %v6673 = vmul.f32 %v6672, 0.6931472
      %v6674 = vlog2.pop %v6384
      %v6675 = vmul.f32 %v6674, 0.6931472
      %v6676 = vlog2.pop %v6387
      %v6677 = vmul.f32 %v6676, 0.6931472
      %v6678 = vlog2.pop %v6390
      %v6679 = vmul.f32 %v6678, 0.6931472
      %v6680 = vlog2.pop %v6393
      %v6681 = vmul.f32 %v6680, 0.6931472
      %v6682 = vlog2.pop %v6396
      %v6683 = vmul.f32 %v6682, 0.6931472
      %v6684 = vlog2.pop %v6399
      %v6685 = vmul.f32 %v6684, 0.6931472
      %v6686 = vlog2.pop %v6402
      %v6687 = vmul.f32 %v6686, 0.6931472
      %v6688 = vlog2.pop %v6405
      %v6689 = vmul.f32 %v6688, 0.6931472
      %v6690 = vlog2.pop %v6408
      %v6691 = vmul.f32 %v6690, 0.6931472
      %v6692 = vlog2.pop %v6411
      %v6693 = vmul.f32 %v6692, 0.6931472
      %v6694 = vlog2.pop %v6414
      %v6695 = vmul.f32 %v6694, 0.6931472
      %v6696 = vlog2.pop %v6417
      %v6697 = vmul.f32 %v6696, 0.6931472
      %v6698 = vlog2.pop %v6420
      %v6699 = vmul.f32 %v6698, 0.6931472
      %v6700 = vlog2.pop %v6423
      %v6701 = vmul.f32 %v6700, 0.6931472
      %v6702 = vlog2.pop %v6426
      %v6703 = vmul.f32 %v6702, 0.6931472
      %v6704 = vlog2.pop %v6429
      %v6705 = vmul.f32 %v6704, 0.6931472
      %v6706 = vlog2.pop %v6432
      %v6707 = vmul.f32 %v6706, 0.6931472
      %v6708 = vlog2.pop %v6435
      %v6709 = vmul.f32 %v6708, 0.6931472
      %v6710 = vlog2.pop %v6438
      %v6711 = vmul.f32 %v6710, 0.6931472
      %v6712 = vlog2.pop %v6441
      %v6713 = vmul.f32 %v6712, 0.6931472
      %v6714 = vlog2.pop %v6444
      %v6715 = vmul.f32 %v6714, 0.6931472
      %v6716 = vlog2.pop %v6447
      %v6717 = vmul.f32 %v6716, 0.6931472
      %v6718 = vlog2.pop %v6450
      %v6719 = vmul.f32 %v6718, 0.6931472
      %v6720 = vlog2.pop %v6453
      %v6721 = vmul.f32 %v6720, 0.6931472
      %v6722 = vlog2.pop %v6456
      %v6723 = vmul.f32 %v6722, 0.6931472
      %v6724 = vlog2.pop %v6459
      %v6725 = vmul.f32 %v6724, 0.6931472
      %v6726 = vlog2.pop %v6462
      %v6727 = vmul.f32 %v6726, 0.6931472
      %v6728 = vlog2.pop %v6465
      %v6729 = vmul.f32 %v6728, 0.6931472
      %v6730 = vlog2.pop %v6468
      %v6731 = vmul.f32 %v6730, 0.6931472
      %v6732 = vlog2.pop %v6471
      %v6733 = vmul.f32 %v6732, 0.6931472
      %v6734 = vlog2.pop %v6474
      %v6735 = vmul.f32 %v6734, 0.6931472
      %v6736 = vlog2.pop %v6477
      %v6737 = vmul.f32 %v6736, 0.6931472
      %v6738 = vlog2.pop %v6480
      %v6739 = vmul.f32 %v6738, 0.6931472
      %v6740 = vlog2.pop %v6483
      %v6741 = vmul.f32 %v6740, 0.6931472
      %v6742 = vlog2.pop %v6486
      %v6743 = vmul.f32 %v6742, 0.6931472
      %v6744 = vlog2.pop %v6489
      %v6745 = vmul.f32 %v6744, 0.6931472
      %v6746 = vlog2.pop %v6492
      %v6747 = vmul.f32 %v6746, 0.6931472
      %v6748 = vlog2.pop %v6495
      %v6749 = vmul.f32 %v6748, 0.6931472
      %v6750 = vlog2.pop %v6498
      %v6751 = vmul.f32 %v6750, 0.6931472
      %v6752 = vlog2.pop %v6501
      %v6753 = vmul.f32 %v6752, 0.6931472
      %v6754 = vlog2.pop %v6504
      %v6755 = vmul.f32 %v6754, 0.6931472
      %v6756 = vlog2.pop %v6507
      %v6757 = vmul.f32 %v6756, 0.6931472
      %v6758 = vsub.f32 %v5758, %v6509
      %v6759 = vsub.f32 %v5759, %v6511
      %v6760 = vsub.f32 %v5760, %v6513
      %v6761 = vsub.f32 %v5761, %v6515
      %v6762 = vsub.f32 %v5762, %v6517
      %v6763 = vsub.f32 %v5763, %v6519
      %v6764 = vsub.f32 %v5764, %v6521
      %v6765 = vsub.f32 %v5765, %v6523
      %v6766 = vsub.f32 %v5766, %v6525
      %v6767 = vsub.f32 %v5767, %v6527
      %v6768 = vsub.f32 %v5768, %v6529
      %v6769 = vsub.f32 %v5769, %v6531
      %v6770 = vsub.f32 %v5770, %v6533
      %v6771 = vsub.f32 %v5771, %v6535
      %v6772 = vsub.f32 %v5772, %v6537
      %v6773 = vsub.f32 %v5773, %v6539
      %v6774 = vsub.f32 %v5774, %v6541
      %v6775 = vsub.f32 %v5775, %v6543
      %v6776 = vsub.f32 %v5776, %v6545
      %v6777 = vsub.f32 %v5777, %v6547
      %v6778 = vsub.f32 %v5778, %v6549
      %v6779 = vsub.f32 %v5779, %v6551
      %v6780 = vsub.f32 %v5780, %v6553
      %v6781 = vsub.f32 %v5781, %v6555
      %v6782 = vsub.f32 %v5782, %v6557
      %v6783 = vsub.f32 %v5783, %v6559
      %v6784 = vsub.f32 %v5784, %v6561
      %v6785 = vsub.f32 %v5785, %v6563
      %v6786 = vsub.f32 %v5786, %v6565
      %v6787 = vsub.f32 %v5787, %v6567
      %v6788 = vsub.f32 %v5788, %v6569
      %v6789 = vsub.f32 %v5789, %v6571
      %v6790 = vsub.f32 %v5790, %v6573
      %v6791 = vsub.f32 %v5791, %v6575
      %v6792 = vsub.f32 %v5792, %v6577
      %v6793 = vsub.f32 %v5793, %v6579
      %v6794 = vsub.f32 %v5794, %v6581
      %v6795 = vsub.f32 %v5795, %v6583
      %v6796 = vsub.f32 %v5796, %v6585
      %v6797 = vsub.f32 %v5797, %v6587
      %v6798 = vsub.f32 %v5798, %v6589
      %v6799 = vsub.f32 %v5799, %v6591
      %v6800 = vsub.f32 %v5800, %v6593
      %v6801 = vsub.f32 %v5801, %v6595
      %v6802 = vsub.f32 %v5802, %v6597
      %v6803 = vsub.f32 %v5803, %v6599
      %v6804 = vsub.f32 %v5804, %v6601
      %v6805 = vsub.f32 %v5805, %v6603
      %v6806 = vsub.f32 %v5806, %v6605
      %v6807 = vsub.f32 %v5807, %v6607
      %v6808 = vsub.f32 %v5808, %v6609
      %v6809 = vsub.f32 %v5809, %v6611
      %v6810 = vsub.f32 %v5810, %v6613
      %v6811 = vsub.f32 %v5811, %v6615
      %v6812 = vsub.f32 %v5812, %v6617
      %v6813 = vsub.f32 %v5813, %v6619
      %v6814 = vsub.f32 %v5814, %v6621
      %v6815 = vsub.f32 %v5815, %v6623
      %v6816 = vsub.f32 %v5816, %v6625
      %v6817 = vsub.f32 %v5817, %v6627
      %v6818 = vsub.f32 %v5818, %v6629
      %v6819 = vsub.f32 %v5819, %v6631
      %v6820 = vsub.f32 %v5820, %v6633
      %v6821 = vsub.f32 %v5821, %v6635
      %v6822 = vsub.f32 %v5822, %v6637
      %v6823 = vsub.f32 %v5823, %v6639
      %v6824 = vsub.f32 %v5824, %v6641
      %v6825 = vsub.f32 %v5825, %v6643
      %v6826 = vsub.f32 %v5826, %v6645
      %v6827 = vsub.f32 %v5827, %v6647
      %v6828 = vsub.f32 %v5828, %v6649
      %v6829 = vsub.f32 %v5829, %v6651
      %v6830 = vsub.f32 %v5830, %v6653
      %v6831 = vsub.f32 %v5831, %v6655
      %v6832 = vsub.f32 %v5832, %v6657
      %v6833 = vsub.f32 %v5833, %v6659
      %v6834 = vsub.f32 %v5834, %v6661
      %v6835 = vsub.f32 %v5835, %v6663
      %v6836 = vsub.f32 %v5836, %v6665
      %v6837 = vsub.f32 %v5837, %v6667
      %v6838 = vsub.f32 %v5838, %v6669
      %v6839 = vsub.f32 %v5839, %v6671
      %v6840 = vsub.f32 %v5840, %v6673
      %v6841 = vsub.f32 %v5841, %v6675
      %v6842 = vsub.f32 %v5842, %v6677
      %v6843 = vsub.f32 %v5843, %v6679
      %v6844 = vsub.f32 %v5844, %v6681
      %v6845 = vsub.f32 %v5845, %v6683
      %v6846 = vsub.f32 %v5846, %v6685
      %v6847 = vsub.f32 %v5847, %v6687
      %v6848 = vsub.f32 %v5848, %v6689
      %v6849 = vsub.f32 %v5849, %v6691
      %v6850 = vsub.f32 %v5850, %v6693
      %v6851 = vsub.f32 %v5851, %v6695
      %v6852 = vsub.f32 %v5852, %v6697
      %v6853 = vsub.f32 %v5853, %v6699
      %v6854 = vsub.f32 %v5854, %v6701
      %v6855 = vsub.f32 %v5855, %v6703
      %v6856 = vsub.f32 %v5856, %v6705
      %v6857 = vsub.f32 %v5857, %v6707
      %v6858 = vsub.f32 %v5858, %v6709
      %v6859 = vsub.f32 %v5859, %v6711
      %v6860 = vsub.f32 %v5860, %v6713
      %v6861 = vsub.f32 %v5861, %v6715
      %v6862 = vsub.f32 %v5862, %v6717
      %v6863 = vsub.f32 %v5863, %v6719
      %v6864 = vsub.f32 %v5864, %v6721
      %v6865 = vsub.f32 %v5865, %v6723
      %v6866 = vsub.f32 %v5866, %v6725
      %v6867 = vsub.f32 %v5867, %v6727
      %v6868 = vsub.f32 %v5868, %v6729
      %v6869 = vsub.f32 %v5869, %v6731
      %v6870 = vsub.f32 %v5870, %v6733
      %v6871 = vsub.f32 %v5871, %v6735
      %v6872 = vsub.f32 %v5872, %v6737
      %v6873 = vsub.f32 %v5873, %v6739
      %v6874 = vsub.f32 %v5874, %v6741
      %v6875 = vsub.f32 %v5875, %v6743
      %v6876 = vsub.f32 %v5876, %v6745
      %v6877 = vsub.f32 %v5877, %v6747
      %v6878 = vsub.f32 %v5878, %v6749
      %v6879 = vsub.f32 %v5879, %v6751
      %v6880 = vsub.f32 %v5880, %v6753
      %v6881 = vsub.f32 %v5881, %v6755
      %v6882 = vsub.f32 %v5882, %v6757
      %6883 = vset.pattern.permute.xlu0 2
      %6884 = vperm.xlu0 %6883, %v277
      %v6885 = vpop.permute.xlu0 %6884
      %6886 = vset.pattern.permute.xlu0 2
      %6887 = vperm.xlu0 %6886, %v278
      %v6888 = vpop.permute.xlu0 %6887
      %6889 = vset.pattern.permute.xlu0 2
      %6890 = vperm.xlu0 %6889, %v279
      %v6891 = vpop.permute.xlu0 %6890
      %6892 = vset.pattern.permute.xlu0 2
      %6893 = vperm.xlu0 %6892, %v280
      %v6894 = vpop.permute.xlu0 %6893
      %6895 = vset.pattern.permute.xlu0 2
      %6896 = vperm.xlu0 %6895, %v281
      %v6897 = vpop.permute.xlu0 %6896
      %6898 = vset.pattern.permute.xlu0 2
      %6899 = vperm.xlu0 %6898, %v282
      %v6900 = vpop.permute.xlu0 %6899
      %6901 = vset.pattern.permute.xlu0 2
      %6902 = vperm.xlu0 %6901, %v283
      %v6903 = vpop.permute.xlu0 %6902
      %6904 = vset.pattern.permute.xlu0 2
      %6905 = vperm.xlu0 %6904, %v284
      %v6906 = vpop.permute.xlu0 %6905
      %6907 = vset.pattern.permute.xlu0 2
      %6908 = vperm.xlu0 %6907, %v285
      %v6909 = vpop.permute.xlu0 %6908
      %6910 = vset.pattern.permute.xlu0 2
      %6911 = vperm.xlu0 %6910, %v286
      %v6912 = vpop.permute.xlu0 %6911
      %6913 = vset.pattern.permute.xlu0 2
      %6914 = vperm.xlu0 %6913, %v287
      %v6915 = vpop.permute.xlu0 %6914
      %6916 = vset.pattern.permute.xlu0 2
      %6917 = vperm.xlu0 %6916, %v288
      %v6918 = vpop.permute.xlu0 %6917
      %6919 = vset.pattern.permute.xlu0 2
      %6920 = vperm.xlu0 %6919, %v289
      %v6921 = vpop.permute.xlu0 %6920
      %6922 = vset.pattern.permute.xlu0 2
      %6923 = vperm.xlu0 %6922, %v290
      %v6924 = vpop.permute.xlu0 %6923
      %6925 = vset.pattern.permute.xlu0 2
      %6926 = vperm.xlu0 %6925, %v291
      %v6927 = vpop.permute.xlu0 %6926
      %6928 = vset.pattern.permute.xlu0 2
      %6929 = vperm.xlu0 %6928, %v292
      %v6930 = vpop.permute.xlu0 %6929
      %6931 = vset.pattern.permute.xlu0 2
      %6932 = vperm.xlu0 %6931, %v293
      %v6933 = vpop.permute.xlu0 %6932
      %6934 = vset.pattern.permute.xlu0 2
      %6935 = vperm.xlu0 %6934, %v294
      %v6936 = vpop.permute.xlu0 %6935
      %6937 = vset.pattern.permute.xlu0 2
      %6938 = vperm.xlu0 %6937, %v295
      %v6939 = vpop.permute.xlu0 %6938
      %6940 = vset.pattern.permute.xlu0 2
      %6941 = vperm.xlu0 %6940, %v296
      %v6942 = vpop.permute.xlu0 %6941
      %6943 = vset.pattern.permute.xlu0 2
      %6944 = vperm.xlu0 %6943, %v297
      %v6945 = vpop.permute.xlu0 %6944
      %6946 = vset.pattern.permute.xlu0 2
      %6947 = vperm.xlu0 %6946, %v298
      %v6948 = vpop.permute.xlu0 %6947
      %6949 = vset.pattern.permute.xlu0 2
      %6950 = vperm.xlu0 %6949, %v299
      %v6951 = vpop.permute.xlu0 %6950
      %6952 = vset.pattern.permute.xlu0 2
      %6953 = vperm.xlu0 %6952, %v300
      %v6954 = vpop.permute.xlu0 %6953
      %6955 = vset.pattern.permute.xlu0 2
      %6956 = vperm.xlu0 %6955, %v301
      %v6957 = vpop.permute.xlu0 %6956
      %6958 = vset.pattern.permute.xlu0 2
      %6959 = vperm.xlu0 %6958, %v302
      %v6960 = vpop.permute.xlu0 %6959
      %6961 = vset.pattern.permute.xlu0 2
      %6962 = vperm.xlu0 %6961, %v303
      %v6963 = vpop.permute.xlu0 %6962
      %6964 = vset.pattern.permute.xlu0 2
      %6965 = vperm.xlu0 %6964, %v304
      %v6966 = vpop.permute.xlu0 %6965
      %6967 = vset.pattern.permute.xlu0 2
      %6968 = vperm.xlu0 %6967, %v305
      %v6969 = vpop.permute.xlu0 %6968
      %6970 = vset.pattern.permute.xlu0 2
      %6971 = vperm.xlu0 %6970, %v306
      %v6972 = vpop.permute.xlu0 %6971
      %6973 = vset.pattern.permute.xlu0 2
      %6974 = vperm.xlu0 %6973, %v307
      %v6975 = vpop.permute.xlu0 %6974
      %6976 = vset.pattern.permute.xlu0 2
      %6977 = vperm.xlu0 %6976, %v308
      %v6978 = vpop.permute.xlu0 %6977
      %6979 = vset.pattern.permute.xlu0 2
      %6980 = vperm.xlu0 %6979, %v309
      %v6981 = vpop.permute.xlu0 %6980
      %6982 = vset.pattern.permute.xlu0 2
      %6983 = vperm.xlu0 %6982, %v310
      %v6984 = vpop.permute.xlu0 %6983
      %6985 = vset.pattern.permute.xlu0 2
      %6986 = vperm.xlu0 %6985, %v311
      %v6987 = vpop.permute.xlu0 %6986
      %6988 = vset.pattern.permute.xlu0 2
      %6989 = vperm.xlu0 %6988, %v312
      %v6990 = vpop.permute.xlu0 %6989
      %6991 = vset.pattern.permute.xlu0 2
      %6992 = vperm.xlu0 %6991, %v313
      %v6993 = vpop.permute.xlu0 %6992
      %6994 = vset.pattern.permute.xlu0 2
      %6995 = vperm.xlu0 %6994, %v314
      %v6996 = vpop.permute.xlu0 %6995
      %6997 = vset.pattern.permute.xlu0 2
      %6998 = vperm.xlu0 %6997, %v315
      %v6999 = vpop.permute.xlu0 %6998
      %7000 = vset.pattern.permute.xlu0 2
      %7001 = vperm.xlu0 %7000, %v316
      %v7002 = vpop.permute.xlu0 %7001
      %7003 = vset.pattern.permute.xlu0 2
      %7004 = vperm.xlu0 %7003, %v317
      %v7005 = vpop.permute.xlu0 %7004
      %7006 = vset.pattern.permute.xlu0 2
      %7007 = vperm.xlu0 %7006, %v318
      %v7008 = vpop.permute.xlu0 %7007
      %7009 = vset.pattern.permute.xlu0 2
      %7010 = vperm.xlu0 %7009, %v319
      %v7011 = vpop.permute.xlu0 %7010
      %7012 = vset.pattern.permute.xlu0 2
      %7013 = vperm.xlu0 %7012, %v320
      %v7014 = vpop.permute.xlu0 %7013
      %7015 = vset.pattern.permute.xlu0 2
      %7016 = vperm.xlu0 %7015, %v321
      %v7017 = vpop.permute.xlu0 %7016
      %7018 = vset.pattern.permute.xlu0 2
      %7019 = vperm.xlu0 %7018, %v322
      %v7020 = vpop.permute.xlu0 %7019
      %7021 = vset.pattern.permute.xlu0 2
      %7022 = vperm.xlu0 %7021, %v323
      %v7023 = vpop.permute.xlu0 %7022
      %7024 = vset.pattern.permute.xlu0 2
      %7025 = vperm.xlu0 %7024, %v324
      %v7026 = vpop.permute.xlu0 %7025
      %7027 = vset.pattern.permute.xlu0 2
      %7028 = vperm.xlu0 %7027, %v325
      %v7029 = vpop.permute.xlu0 %7028
      %7030 = vset.pattern.permute.xlu0 2
      %7031 = vperm.xlu0 %7030, %v326
      %v7032 = vpop.permute.xlu0 %7031
      %7033 = vset.pattern.permute.xlu0 2
      %7034 = vperm.xlu0 %7033, %v327
      %v7035 = vpop.permute.xlu0 %7034
      %7036 = vset.pattern.permute.xlu0 2
      %7037 = vperm.xlu0 %7036, %v328
      %v7038 = vpop.permute.xlu0 %7037
      %7039 = vset.pattern.permute.xlu0 2
      %7040 = vperm.xlu0 %7039, %v329
      %v7041 = vpop.permute.xlu0 %7040
      %7042 = vset.pattern.permute.xlu0 2
      %7043 = vperm.xlu0 %7042, %v330
      %v7044 = vpop.permute.xlu0 %7043
      %7045 = vset.pattern.permute.xlu0 2
      %7046 = vperm.xlu0 %7045, %v331
      %v7047 = vpop.permute.xlu0 %7046
      %7048 = vset.pattern.permute.xlu0 2
      %7049 = vperm.xlu0 %7048, %v332
      %v7050 = vpop.permute.xlu0 %7049
      %7051 = vset.pattern.permute.xlu0 2
      %7052 = vperm.xlu0 %7051, %v333
      %v7053 = vpop.permute.xlu0 %7052
      %7054 = vset.pattern.permute.xlu0 2
      %7055 = vperm.xlu0 %7054, %v334
      %v7056 = vpop.permute.xlu0 %7055
      %7057 = vset.pattern.permute.xlu0 2
      %7058 = vperm.xlu0 %7057, %v335
      %v7059 = vpop.permute.xlu0 %7058
      %7060 = vset.pattern.permute.xlu0 2
      %7061 = vperm.xlu0 %7060, %v336
      %v7062 = vpop.permute.xlu0 %7061
      %7063 = vset.pattern.permute.xlu0 2
      %7064 = vperm.xlu0 %7063, %v337
      %v7065 = vpop.permute.xlu0 %7064
      %7066 = vset.pattern.permute.xlu0 2
      %7067 = vperm.xlu0 %7066, %v338
      %v7068 = vpop.permute.xlu0 %7067
      %7069 = vset.pattern.permute.xlu0 2
      %7070 = vperm.xlu0 %7069, %v339
      %v7071 = vpop.permute.xlu0 %7070
      %7072 = vset.pattern.permute.xlu0 2
      %7073 = vperm.xlu0 %7072, %v340
      %v7074 = vpop.permute.xlu0 %7073
      %7075 = vset.pattern.permute.xlu0 2
      %7076 = vperm.xlu0 %7075, %v341
      %v7077 = vpop.permute.xlu0 %7076
      %7078 = vset.pattern.permute.xlu0 2
      %7079 = vperm.xlu0 %7078, %v342
      %v7080 = vpop.permute.xlu0 %7079
      %7081 = vset.pattern.permute.xlu0 2
      %7082 = vperm.xlu0 %7081, %v343
      %v7083 = vpop.permute.xlu0 %7082
      %7084 = vset.pattern.permute.xlu0 2
      %7085 = vperm.xlu0 %7084, %v344
      %v7086 = vpop.permute.xlu0 %7085
      %7087 = vset.pattern.permute.xlu0 2
      %7088 = vperm.xlu0 %7087, %v345
      %v7089 = vpop.permute.xlu0 %7088
      %7090 = vset.pattern.permute.xlu0 2
      %7091 = vperm.xlu0 %7090, %v346
      %v7092 = vpop.permute.xlu0 %7091
      %7093 = vset.pattern.permute.xlu0 2
      %7094 = vperm.xlu0 %7093, %v347
      %v7095 = vpop.permute.xlu0 %7094
      %7096 = vset.pattern.permute.xlu0 2
      %7097 = vperm.xlu0 %7096, %v348
      %v7098 = vpop.permute.xlu0 %7097
      %7099 = vset.pattern.permute.xlu0 2
      %7100 = vperm.xlu0 %7099, %v349
      %v7101 = vpop.permute.xlu0 %7100
      %7102 = vset.pattern.permute.xlu0 2
      %7103 = vperm.xlu0 %7102, %v350
      %v7104 = vpop.permute.xlu0 %7103
      %7105 = vset.pattern.permute.xlu0 2
      %7106 = vperm.xlu0 %7105, %v351
      %v7107 = vpop.permute.xlu0 %7106
      %7108 = vset.pattern.permute.xlu0 2
      %7109 = vperm.xlu0 %7108, %v352
      %v7110 = vpop.permute.xlu0 %7109
      %7111 = vset.pattern.permute.xlu0 2
      %7112 = vperm.xlu0 %7111, %v353
      %v7113 = vpop.permute.xlu0 %7112
      %7114 = vset.pattern.permute.xlu0 2
      %7115 = vperm.xlu0 %7114, %v354
      %v7116 = vpop.permute.xlu0 %7115
      %7117 = vset.pattern.permute.xlu0 2
      %7118 = vperm.xlu0 %7117, %v355
      %v7119 = vpop.permute.xlu0 %7118
      %7120 = vset.pattern.permute.xlu0 2
      %7121 = vperm.xlu0 %7120, %v356
      %v7122 = vpop.permute.xlu0 %7121
      %7123 = vset.pattern.permute.xlu0 2
      %7124 = vperm.xlu0 %7123, %v357
      %v7125 = vpop.permute.xlu0 %7124
      %7126 = vset.pattern.permute.xlu0 2
      %7127 = vperm.xlu0 %7126, %v358
      %v7128 = vpop.permute.xlu0 %7127
      %7129 = vset.pattern.permute.xlu0 2
      %7130 = vperm.xlu0 %7129, %v359
      %v7131 = vpop.permute.xlu0 %7130
      %7132 = vset.pattern.permute.xlu0 2
      %7133 = vperm.xlu0 %7132, %v360
      %v7134 = vpop.permute.xlu0 %7133
      %7135 = vset.pattern.permute.xlu0 2
      %7136 = vperm.xlu0 %7135, %v361
      %v7137 = vpop.permute.xlu0 %7136
      %7138 = vset.pattern.permute.xlu0 2
      %7139 = vperm.xlu0 %7138, %v362
      %v7140 = vpop.permute.xlu0 %7139
      %7141 = vset.pattern.permute.xlu0 2
      %7142 = vperm.xlu0 %7141, %v363
      %v7143 = vpop.permute.xlu0 %7142
      %7144 = vset.pattern.permute.xlu0 2
      %7145 = vperm.xlu0 %7144, %v364
      %v7146 = vpop.permute.xlu0 %7145
      %7147 = vset.pattern.permute.xlu0 2
      %7148 = vperm.xlu0 %7147, %v365
      %v7149 = vpop.permute.xlu0 %7148
      %7150 = vset.pattern.permute.xlu0 2
      %7151 = vperm.xlu0 %7150, %v366
      %v7152 = vpop.permute.xlu0 %7151
      %7153 = vset.pattern.permute.xlu0 2
      %7154 = vperm.xlu0 %7153, %v367
      %v7155 = vpop.permute.xlu0 %7154
      %7156 = vset.pattern.permute.xlu0 2
      %7157 = vperm.xlu0 %7156, %v368
      %v7158 = vpop.permute.xlu0 %7157
      %7159 = vset.pattern.permute.xlu0 2
      %7160 = vperm.xlu0 %7159, %v369
      %v7161 = vpop.permute.xlu0 %7160
      %7162 = vset.pattern.permute.xlu0 2
      %7163 = vperm.xlu0 %7162, %v370
      %v7164 = vpop.permute.xlu0 %7163
      %7165 = vset.pattern.permute.xlu0 2
      %7166 = vperm.xlu0 %7165, %v371
      %v7167 = vpop.permute.xlu0 %7166
      %7168 = vset.pattern.permute.xlu0 2
      %7169 = vperm.xlu0 %7168, %v372
      %v7170 = vpop.permute.xlu0 %7169
      %7171 = vset.pattern.permute.xlu0 2
      %7172 = vperm.xlu0 %7171, %v373
      %v7173 = vpop.permute.xlu0 %7172
      %7174 = vset.pattern.permute.xlu0 2
      %7175 = vperm.xlu0 %7174, %v374
      %v7176 = vpop.permute.xlu0 %7175
      %7177 = vset.pattern.permute.xlu0 2
      %7178 = vperm.xlu0 %7177, %v375
      %v7179 = vpop.permute.xlu0 %7178
      %7180 = vset.pattern.permute.xlu0 2
      %7181 = vperm.xlu0 %7180, %v376
      %v7182 = vpop.permute.xlu0 %7181
      %7183 = vset.pattern.permute.xlu0 2
      %7184 = vperm.xlu0 %7183, %v377
      %v7185 = vpop.permute.xlu0 %7184
      %7186 = vset.pattern.permute.xlu0 2
      %7187 = vperm.xlu0 %7186, %v378
      %v7188 = vpop.permute.xlu0 %7187
      %7189 = vset.pattern.permute.xlu0 2
      %7190 = vperm.xlu0 %7189, %v379
      %v7191 = vpop.permute.xlu0 %7190
      %7192 = vset.pattern.permute.xlu0 2
      %7193 = vperm.xlu0 %7192, %v380
      %v7194 = vpop.permute.xlu0 %7193
      %7195 = vset.pattern.permute.xlu0 2
      %7196 = vperm.xlu0 %7195, %v381
      %v7197 = vpop.permute.xlu0 %7196
      %7198 = vset.pattern.permute.xlu0 2
      %7199 = vperm.xlu0 %7198, %v382
      %v7200 = vpop.permute.xlu0 %7199
      %7201 = vset.pattern.permute.xlu0 2
      %7202 = vperm.xlu0 %7201, %v383
      %v7203 = vpop.permute.xlu0 %7202
      %7204 = vset.pattern.permute.xlu0 2
      %7205 = vperm.xlu0 %7204, %v384
      %v7206 = vpop.permute.xlu0 %7205
      %7207 = vset.pattern.permute.xlu0 2
      %7208 = vperm.xlu0 %7207, %v385
      %v7209 = vpop.permute.xlu0 %7208
      %7210 = vset.pattern.permute.xlu0 2
      %7211 = vperm.xlu0 %7210, %v386
      %v7212 = vpop.permute.xlu0 %7211
      %7213 = vset.pattern.permute.xlu0 2
      %7214 = vperm.xlu0 %7213, %v387
      %v7215 = vpop.permute.xlu0 %7214
      %7216 = vset.pattern.permute.xlu0 2
      %7217 = vperm.xlu0 %7216, %v388
      %v7218 = vpop.permute.xlu0 %7217
      %7219 = vset.pattern.permute.xlu0 2
      %7220 = vperm.xlu0 %7219, %v389
      %v7221 = vpop.permute.xlu0 %7220
      %7222 = vset.pattern.permute.xlu0 2
      %7223 = vperm.xlu0 %7222, %v390
      %v7224 = vpop.permute.xlu0 %7223
      %7225 = vset.pattern.permute.xlu0 2
      %7226 = vperm.xlu0 %7225, %v391
      %v7227 = vpop.permute.xlu0 %7226
      %7228 = vset.pattern.permute.xlu0 2
      %7229 = vperm.xlu0 %7228, %v392
      %v7230 = vpop.permute.xlu0 %7229
      %7231 = vset.pattern.permute.xlu0 2
      %7232 = vperm.xlu0 %7231, %v393
      %v7233 = vpop.permute.xlu0 %7232
      %7234 = vset.pattern.permute.xlu0 2
      %7235 = vperm.xlu0 %7234, %v394
      %v7236 = vpop.permute.xlu0 %7235
      %7237 = vset.pattern.permute.xlu0 2
      %7238 = vperm.xlu0 %7237, %v395
      %v7239 = vpop.permute.xlu0 %7238
      %7240 = vset.pattern.permute.xlu0 2
      %7241 = vperm.xlu0 %7240, %v396
      %v7242 = vpop.permute.xlu0 %7241
      %7243 = vset.pattern.permute.xlu0 2
      %7244 = vperm.xlu0 %7243, %v397
      %v7245 = vpop.permute.xlu0 %7244
      %7246 = vset.pattern.permute.xlu0 2
      %7247 = vperm.xlu0 %7246, %v398
      %v7248 = vpop.permute.xlu0 %7247
      %7249 = vset.pattern.permute.xlu0 2
      %7250 = vperm.xlu0 %7249, %v399
      %v7251 = vpop.permute.xlu0 %7250
      %7252 = vset.pattern.permute.xlu0 2
      %7253 = vperm.xlu0 %7252, %v400
      %v7254 = vpop.permute.xlu0 %7253
      %7255 = vset.pattern.permute.xlu0 2
      %7256 = vperm.xlu0 %7255, %v401
      %v7257 = vpop.permute.xlu0 %7256
      %vm7258 = vcmp.eq.s32.totalorder %v403, %v6885
      %vm7259 = vcmp.eq.s32.totalorder %v403, %v6888
      %vm7260 = vcmp.eq.s32.totalorder %v403, %v6891
      %vm7261 = vcmp.eq.s32.totalorder %v403, %v6894
      %vm7262 = vcmp.eq.s32.totalorder %v403, %v6897
      %vm7263 = vcmp.eq.s32.totalorder %v403, %v6900
      %vm7264 = vcmp.eq.s32.totalorder %v403, %v6903
      %vm7265 = vcmp.eq.s32.totalorder %v403, %v6906
      %vm7266 = vcmp.eq.s32.totalorder %v403, %v6909
      %vm7267 = vcmp.eq.s32.totalorder %v403, %v6912
      %vm7268 = vcmp.eq.s32.totalorder %v403, %v6915
      %vm7269 = vcmp.eq.s32.totalorder %v403, %v6918
      %vm7270 = vcmp.eq.s32.totalorder %v403, %v6921
      %vm7271 = vcmp.eq.s32.totalorder %v403, %v6924
      %vm7272 = vcmp.eq.s32.totalorder %v403, %v6927
      %vm7273 = vcmp.eq.s32.totalorder %v403, %v6930
      %vm7274 = vcmp.eq.s32.totalorder %v403, %v6933
      %vm7275 = vcmp.eq.s32.totalorder %v403, %v6936
      %vm7276 = vcmp.eq.s32.totalorder %v403, %v6939
      %vm7277 = vcmp.eq.s32.totalorder %v403, %v6942
      %vm7278 = vcmp.eq.s32.totalorder %v403, %v6945
      %vm7279 = vcmp.eq.s32.totalorder %v403, %v6948
      %vm7280 = vcmp.eq.s32.totalorder %v403, %v6951
      %vm7281 = vcmp.eq.s32.totalorder %v403, %v6954
      %vm7282 = vcmp.eq.s32.totalorder %v403, %v6957
      %vm7283 = vcmp.eq.s32.totalorder %v403, %v6960
      %vm7284 = vcmp.eq.s32.totalorder %v403, %v6963
      %vm7285 = vcmp.eq.s32.totalorder %v403, %v6966
      %vm7286 = vcmp.eq.s32.totalorder %v403, %v6969
      %vm7287 = vcmp.eq.s32.totalorder %v403, %v6972
      %vm7288 = vcmp.eq.s32.totalorder %v403, %v6975
      %vm7289 = vcmp.eq.s32.totalorder %v403, %v6978
      %vm7290 = vcmp.eq.s32.totalorder %v403, %v6981
      %vm7291 = vcmp.eq.s32.totalorder %v403, %v6984
      %vm7292 = vcmp.eq.s32.totalorder %v403, %v6987
      %vm7293 = vcmp.eq.s32.totalorder %v403, %v6990
      %vm7294 = vcmp.eq.s32.totalorder %v403, %v6993
      %vm7295 = vcmp.eq.s32.totalorder %v403, %v6996
      %vm7296 = vcmp.eq.s32.totalorder %v403, %v6999
      %vm7297 = vcmp.eq.s32.totalorder %v403, %v7002
      %vm7298 = vcmp.eq.s32.totalorder %v403, %v7005
      %vm7299 = vcmp.eq.s32.totalorder %v403, %v7008
      %vm7300 = vcmp.eq.s32.totalorder %v403, %v7011
      %vm7301 = vcmp.eq.s32.totalorder %v403, %v7014
      %vm7302 = vcmp.eq.s32.totalorder %v403, %v7017
      %vm7303 = vcmp.eq.s32.totalorder %v403, %v7020
      %vm7304 = vcmp.eq.s32.totalorder %v403, %v7023
      %vm7305 = vcmp.eq.s32.totalorder %v403, %v7026
      %vm7306 = vcmp.eq.s32.totalorder %v403, %v7029
      %vm7307 = vcmp.eq.s32.totalorder %v403, %v7032
      %vm7308 = vcmp.eq.s32.totalorder %v403, %v7035
      %vm7309 = vcmp.eq.s32.totalorder %v403, %v7038
      %vm7310 = vcmp.eq.s32.totalorder %v403, %v7041
      %vm7311 = vcmp.eq.s32.totalorder %v403, %v7044
      %vm7312 = vcmp.eq.s32.totalorder %v403, %v7047
      %vm7313 = vcmp.eq.s32.totalorder %v403, %v7050
      %vm7314 = vcmp.eq.s32.totalorder %v403, %v7053
      %vm7315 = vcmp.eq.s32.totalorder %v403, %v7056
      %vm7316 = vcmp.eq.s32.totalorder %v403, %v7059
      %vm7317 = vcmp.eq.s32.totalorder %v403, %v7062
      %vm7318 = vcmp.eq.s32.totalorder %v403, %v7065
      %vm7319 = vcmp.eq.s32.totalorder %v403, %v7068
      %vm7320 = vcmp.eq.s32.totalorder %v403, %v7071
      %vm7321 = vcmp.eq.s32.totalorder %v403, %v7074
      %vm7322 = vcmp.eq.s32.totalorder %v403, %v7077
      %vm7323 = vcmp.eq.s32.totalorder %v403, %v7080
      %vm7324 = vcmp.eq.s32.totalorder %v403, %v7083
      %vm7325 = vcmp.eq.s32.totalorder %v403, %v7086
      %vm7326 = vcmp.eq.s32.totalorder %v403, %v7089
      %vm7327 = vcmp.eq.s32.totalorder %v403, %v7092
      %vm7328 = vcmp.eq.s32.totalorder %v403, %v7095
      %vm7329 = vcmp.eq.s32.totalorder %v403, %v7098
      %vm7330 = vcmp.eq.s32.totalorder %v403, %v7101
      %vm7331 = vcmp.eq.s32.totalorder %v403, %v7104
      %vm7332 = vcmp.eq.s32.totalorder %v403, %v7107
      %vm7333 = vcmp.eq.s32.totalorder %v403, %v7110
      %vm7334 = vcmp.eq.s32.totalorder %v403, %v7113
      %vm7335 = vcmp.eq.s32.totalorder %v403, %v7116
      %vm7336 = vcmp.eq.s32.totalorder %v403, %v7119
      %vm7337 = vcmp.eq.s32.totalorder %v403, %v7122
      %vm7338 = vcmp.eq.s32.totalorder %v403, %v7125
      %vm7339 = vcmp.eq.s32.totalorder %v403, %v7128
      %vm7340 = vcmp.eq.s32.totalorder %v403, %v7131
      %vm7341 = vcmp.eq.s32.totalorder %v403, %v7134
      %vm7342 = vcmp.eq.s32.totalorder %v403, %v7137
      %vm7343 = vcmp.eq.s32.totalorder %v403, %v7140
      %vm7344 = vcmp.eq.s32.totalorder %v403, %v7143
      %vm7345 = vcmp.eq.s32.totalorder %v403, %v7146
      %vm7346 = vcmp.eq.s32.totalorder %v403, %v7149
      %vm7347 = vcmp.eq.s32.totalorder %v403, %v7152
      %vm7348 = vcmp.eq.s32.totalorder %v403, %v7155
      %vm7349 = vcmp.eq.s32.totalorder %v403, %v7158
      %vm7350 = vcmp.eq.s32.totalorder %v403, %v7161
      %vm7351 = vcmp.eq.s32.totalorder %v403, %v7164
      %vm7352 = vcmp.eq.s32.totalorder %v403, %v7167
      %vm7353 = vcmp.eq.s32.totalorder %v403, %v7170
      %vm7354 = vcmp.eq.s32.totalorder %v403, %v7173
      %vm7355 = vcmp.eq.s32.totalorder %v403, %v7176
      %vm7356 = vcmp.eq.s32.totalorder %v403, %v7179
      %vm7357 = vcmp.eq.s32.totalorder %v403, %v7182
      %vm7358 = vcmp.eq.s32.totalorder %v403, %v7185
      %vm7359 = vcmp.eq.s32.totalorder %v403, %v7188
      %vm7360 = vcmp.eq.s32.totalorder %v403, %v7191
      %vm7361 = vcmp.eq.s32.totalorder %v403, %v7194
      %vm7362 = vcmp.eq.s32.totalorder %v403, %v7197
      %vm7363 = vcmp.eq.s32.totalorder %v403, %v7200
      %vm7364 = vcmp.eq.s32.totalorder %v403, %v7203
      %vm7365 = vcmp.eq.s32.totalorder %v403, %v7206
      %vm7366 = vcmp.eq.s32.totalorder %v403, %v7209
      %vm7367 = vcmp.eq.s32.totalorder %v403, %v7212
      %vm7368 = vcmp.eq.s32.totalorder %v403, %v7215
      %vm7369 = vcmp.eq.s32.totalorder %v403, %v7218
      %vm7370 = vcmp.eq.s32.totalorder %v403, %v7221
      %vm7371 = vcmp.eq.s32.totalorder %v403, %v7224
      %vm7372 = vcmp.eq.s32.totalorder %v403, %v7227
      %vm7373 = vcmp.eq.s32.totalorder %v403, %v7230
      %vm7374 = vcmp.eq.s32.totalorder %v403, %v7233
      %vm7375 = vcmp.eq.s32.totalorder %v403, %v7236
      %vm7376 = vcmp.eq.s32.totalorder %v403, %v7239
      %vm7377 = vcmp.eq.s32.totalorder %v403, %v7242
      %vm7378 = vcmp.eq.s32.totalorder %v403, %v7245
      %vm7379 = vcmp.eq.s32.totalorder %v403, %v7248
      %vm7380 = vcmp.eq.s32.totalorder %v403, %v7251
      %vm7381 = vcmp.eq.s32.totalorder %v403, %v7254
      %vm7382 = vcmp.eq.s32.totalorder %v403, %v7257
      %v7383 = vsel %vm7258, %v6758, 0.0
      %v7384 = vsel %vm7259, %v6759, 0.0
      %v7385 = vsel %vm7260, %v6760, 0.0
      %v7386 = vsel %vm7261, %v6761, 0.0
      %v7387 = vsel %vm7262, %v6762, 0.0
      %v7388 = vsel %vm7263, %v6763, 0.0
      %v7389 = vsel %vm7264, %v6764, 0.0
      %v7390 = vsel %vm7265, %v6765, 0.0
      %v7391 = vsel %vm7266, %v6766, 0.0
      %v7392 = vsel %vm7267, %v6767, 0.0
      %v7393 = vsel %vm7268, %v6768, 0.0
      %v7394 = vsel %vm7269, %v6769, 0.0
      %v7395 = vsel %vm7270, %v6770, 0.0
      %v7396 = vsel %vm7271, %v6771, 0.0
      %v7397 = vsel %vm7272, %v6772, 0.0
      %v7398 = vsel %vm7273, %v6773, 0.0
      %v7399 = vsel %vm7274, %v6774, 0.0
      %v7400 = vsel %vm7275, %v6775, 0.0
      %v7401 = vsel %vm7276, %v6776, 0.0
      %v7402 = vsel %vm7277, %v6777, 0.0
      %v7403 = vsel %vm7278, %v6778, 0.0
      %v7404 = vsel %vm7279, %v6779, 0.0
      %v7405 = vsel %vm7280, %v6780, 0.0
      %v7406 = vsel %vm7281, %v6781, 0.0
      %v7407 = vsel %vm7282, %v6782, 0.0
      %v7408 = vsel %vm7283, %v6783, 0.0
      %v7409 = vsel %vm7284, %v6784, 0.0
      %v7410 = vsel %vm7285, %v6785, 0.0
      %v7411 = vsel %vm7286, %v6786, 0.0
      %v7412 = vsel %vm7287, %v6787, 0.0
      %v7413 = vsel %vm7288, %v6788, 0.0
      %v7414 = vsel %vm7289, %v6789, 0.0
      %v7415 = vsel %vm7290, %v6790, 0.0
      %v7416 = vsel %vm7291, %v6791, 0.0
      %v7417 = vsel %vm7292, %v6792, 0.0
      %v7418 = vsel %vm7293, %v6793, 0.0
      %v7419 = vsel %vm7294, %v6794, 0.0
      %v7420 = vsel %vm7295, %v6795, 0.0
      %v7421 = vsel %vm7296, %v6796, 0.0
      %v7422 = vsel %vm7297, %v6797, 0.0
      %v7423 = vsel %vm7298, %v6798, 0.0
      %v7424 = vsel %vm7299, %v6799, 0.0
      %v7425 = vsel %vm7300, %v6800, 0.0
      %v7426 = vsel %vm7301, %v6801, 0.0
      %v7427 = vsel %vm7302, %v6802, 0.0
      %v7428 = vsel %vm7303, %v6803, 0.0
      %v7429 = vsel %vm7304, %v6804, 0.0
      %v7430 = vsel %vm7305, %v6805, 0.0
      %v7431 = vsel %vm7306, %v6806, 0.0
      %v7432 = vsel %vm7307, %v6807, 0.0
      %v7433 = vsel %vm7308, %v6808, 0.0
      %v7434 = vsel %vm7309, %v6809, 0.0
      %v7435 = vsel %vm7310, %v6810, 0.0
      %v7436 = vsel %vm7311, %v6811, 0.0
      %v7437 = vsel %vm7312, %v6812, 0.0
      %v7438 = vsel %vm7313, %v6813, 0.0
      %v7439 = vsel %vm7314, %v6814, 0.0
      %v7440 = vsel %vm7315, %v6815, 0.0
      %v7441 = vsel %vm7316, %v6816, 0.0
      %v7442 = vsel %vm7317, %v6817, 0.0
      %v7443 = vsel %vm7318, %v6818, 0.0
      %v7444 = vsel %vm7319, %v6819, 0.0
      %v7445 = vsel %vm7320, %v6820, 0.0
      %v7446 = vsel %vm7321, %v6821, 0.0
      %v7447 = vsel %vm7322, %v6822, 0.0
      %v7448 = vsel %vm7323, %v6823, 0.0
      %v7449 = vsel %vm7324, %v6824, 0.0
      %v7450 = vsel %vm7325, %v6825, 0.0
      %v7451 = vsel %vm7326, %v6826, 0.0
      %v7452 = vsel %vm7327, %v6827, 0.0
      %v7453 = vsel %vm7328, %v6828, 0.0
      %v7454 = vsel %vm7329, %v6829, 0.0
      %v7455 = vsel %vm7330, %v6830, 0.0
      %v7456 = vsel %vm7331, %v6831, 0.0
      %v7457 = vsel %vm7332, %v6832, 0.0
      %v7458 = vsel %vm7333, %v6833, 0.0
      %v7459 = vsel %vm7334, %v6834, 0.0
      %v7460 = vsel %vm7335, %v6835, 0.0
      %v7461 = vsel %vm7336, %v6836, 0.0
      %v7462 = vsel %vm7337, %v6837, 0.0
      %v7463 = vsel %vm7338, %v6838, 0.0
      %v7464 = vsel %vm7339, %v6839, 0.0
      %v7465 = vsel %vm7340, %v6840, 0.0
      %v7466 = vsel %vm7341, %v6841, 0.0
      %v7467 = vsel %vm7342, %v6842, 0.0
      %v7468 = vsel %vm7343, %v6843, 0.0
      %v7469 = vsel %vm7344, %v6844, 0.0
      %v7470 = vsel %vm7345, %v6845, 0.0
      %v7471 = vsel %vm7346, %v6846, 0.0
      %v7472 = vsel %vm7347, %v6847, 0.0
      %v7473 = vsel %vm7348, %v6848, 0.0
      %v7474 = vsel %vm7349, %v6849, 0.0
      %v7475 = vsel %vm7350, %v6850, 0.0
      %v7476 = vsel %vm7351, %v6851, 0.0
      %v7477 = vsel %vm7352, %v6852, 0.0
      %v7478 = vsel %vm7353, %v6853, 0.0
      %v7479 = vsel %vm7354, %v6854, 0.0
      %v7480 = vsel %vm7355, %v6855, 0.0
      %v7481 = vsel %vm7356, %v6856, 0.0
      %v7482 = vsel %vm7357, %v6857, 0.0
      %v7483 = vsel %vm7358, %v6858, 0.0
      %v7484 = vsel %vm7359, %v6859, 0.0
      %v7485 = vsel %vm7360, %v6860, 0.0
      %v7486 = vsel %vm7361, %v6861, 0.0
      %v7487 = vsel %vm7362, %v6862, 0.0
      %v7488 = vsel %vm7363, %v6863, 0.0
      %v7489 = vsel %vm7364, %v6864, 0.0
      %v7490 = vsel %vm7365, %v6865, 0.0
      %v7491 = vsel %vm7366, %v6866, 0.0
      %v7492 = vsel %vm7367, %v6867, 0.0
      %v7493 = vsel %vm7368, %v6868, 0.0
      %v7494 = vsel %vm7369, %v6869, 0.0
      %v7495 = vsel %vm7370, %v6870, 0.0
      %v7496 = vsel %vm7371, %v6871, 0.0
      %v7497 = vsel %vm7372, %v6872, 0.0
      %v7498 = vsel %vm7373, %v6873, 0.0
      %v7499 = vsel %vm7374, %v6874, 0.0
      %v7500 = vsel %vm7375, %v6875, 0.0
      %v7501 = vsel %vm7376, %v6876, 0.0
      %v7502 = vsel %vm7377, %v6877, 0.0
      %v7503 = vsel %vm7378, %v6878, 0.0
      %v7504 = vsel %vm7379, %v6879, 0.0
      %v7505 = vsel %vm7380, %v6880, 0.0
      %v7506 = vsel %vm7381, %v6881, 0.0
      %v7507 = vsel %vm7382, %v6882, 0.0
      %v7508 = vsel %vm4507, %v7383, 0.0
      %7509 = vadd.xlane.f32.xlu0 %v7508
      %v7510 = vpop.xlane.xlu0 %7509
      %v7511 = vsel %vm4507, %v7384, 0.0
      %7512 = vadd.xlane.f32.xlu0 %v7511
      %v7513 = vpop.xlane.xlu0 %7512
      %v7514 = vsel %vm4507, %v7385, 0.0
      %7515 = vadd.xlane.f32.xlu0 %v7514
      %v7516 = vpop.xlane.xlu0 %7515
      %v7517 = vsel %vm4507, %v7386, 0.0
      %7518 = vadd.xlane.f32.xlu0 %v7517
      %v7519 = vpop.xlane.xlu0 %7518
      %v7520 = vsel %vm4507, %v7387, 0.0
      %7521 = vadd.xlane.f32.xlu0 %v7520
      %v7522 = vpop.xlane.xlu0 %7521
      %v7523 = vsel %vm4507, %v7388, 0.0
      %7524 = vadd.xlane.f32.xlu0 %v7523
      %v7525 = vpop.xlane.xlu0 %7524
      %v7526 = vsel %vm4507, %v7389, 0.0
      %7527 = vadd.xlane.f32.xlu0 %v7526
      %v7528 = vpop.xlane.xlu0 %7527
      %v7529 = vsel %vm4507, %v7390, 0.0
      %7530 = vadd.xlane.f32.xlu0 %v7529
      %v7531 = vpop.xlane.xlu0 %7530
      %v7532 = vsel %vm4507, %v7391, 0.0
      %7533 = vadd.xlane.f32.xlu0 %v7532
      %v7534 = vpop.xlane.xlu0 %7533
      %v7535 = vsel %vm4507, %v7392, 0.0
      %7536 = vadd.xlane.f32.xlu0 %v7535
      %v7537 = vpop.xlane.xlu0 %7536
      %v7538 = vsel %vm4507, %v7393, 0.0
      %7539 = vadd.xlane.f32.xlu0 %v7538
      %v7540 = vpop.xlane.xlu0 %7539
      %v7541 = vsel %vm4507, %v7394, 0.0
      %7542 = vadd.xlane.f32.xlu0 %v7541
      %v7543 = vpop.xlane.xlu0 %7542
      %v7544 = vsel %vm4507, %v7395, 0.0
      %7545 = vadd.xlane.f32.xlu0 %v7544
      %v7546 = vpop.xlane.xlu0 %7545
      %v7547 = vsel %vm4507, %v7396, 0.0
      %7548 = vadd.xlane.f32.xlu0 %v7547
      %v7549 = vpop.xlane.xlu0 %7548
      %v7550 = vsel %vm4507, %v7397, 0.0
      %7551 = vadd.xlane.f32.xlu0 %v7550
      %v7552 = vpop.xlane.xlu0 %7551
      %v7553 = vsel %vm4507, %v7398, 0.0
      %7554 = vadd.xlane.f32.xlu0 %v7553
      %v7555 = vpop.xlane.xlu0 %7554
      %v7556 = vsel %vm4507, %v7399, 0.0
      %7557 = vadd.xlane.f32.xlu0 %v7556
      %v7558 = vpop.xlane.xlu0 %7557
      %v7559 = vsel %vm4507, %v7400, 0.0
      %7560 = vadd.xlane.f32.xlu0 %v7559
      %v7561 = vpop.xlane.xlu0 %7560
      %v7562 = vsel %vm4507, %v7401, 0.0
      %7563 = vadd.xlane.f32.xlu0 %v7562
      %v7564 = vpop.xlane.xlu0 %7563
      %v7565 = vsel %vm4507, %v7402, 0.0
      %7566 = vadd.xlane.f32.xlu0 %v7565
      %v7567 = vpop.xlane.xlu0 %7566
      %v7568 = vsel %vm4507, %v7403, 0.0
      %7569 = vadd.xlane.f32.xlu0 %v7568
      %v7570 = vpop.xlane.xlu0 %7569
      %v7571 = vsel %vm4507, %v7404, 0.0
      %7572 = vadd.xlane.f32.xlu0 %v7571
      %v7573 = vpop.xlane.xlu0 %7572
      %v7574 = vsel %vm4507, %v7405, 0.0
      %7575 = vadd.xlane.f32.xlu0 %v7574
      %v7576 = vpop.xlane.xlu0 %7575
      %v7577 = vsel %vm4507, %v7406, 0.0
      %7578 = vadd.xlane.f32.xlu0 %v7577
      %v7579 = vpop.xlane.xlu0 %7578
      %v7580 = vsel %vm4507, %v7407, 0.0
      %7581 = vadd.xlane.f32.xlu0 %v7580
      %v7582 = vpop.xlane.xlu0 %7581
      %v7583 = vsel %vm4507, %v7408, 0.0
      %7584 = vadd.xlane.f32.xlu0 %v7583
      %v7585 = vpop.xlane.xlu0 %7584
      %v7586 = vsel %vm4507, %v7409, 0.0
      %7587 = vadd.xlane.f32.xlu0 %v7586
      %v7588 = vpop.xlane.xlu0 %7587
      %v7589 = vsel %vm4507, %v7410, 0.0
      %7590 = vadd.xlane.f32.xlu0 %v7589
      %v7591 = vpop.xlane.xlu0 %7590
      %v7592 = vsel %vm4507, %v7411, 0.0
      %7593 = vadd.xlane.f32.xlu0 %v7592
      %v7594 = vpop.xlane.xlu0 %7593
      %v7595 = vsel %vm4507, %v7412, 0.0
      %7596 = vadd.xlane.f32.xlu0 %v7595
      %v7597 = vpop.xlane.xlu0 %7596
      %v7598 = vsel %vm4507, %v7413, 0.0
      %7599 = vadd.xlane.f32.xlu0 %v7598
      %v7600 = vpop.xlane.xlu0 %7599
      %v7601 = vsel %vm4507, %v7414, 0.0
      %7602 = vadd.xlane.f32.xlu0 %v7601
      %v7603 = vpop.xlane.xlu0 %7602
      %v7604 = vsel %vm4507, %v7415, 0.0
      %7605 = vadd.xlane.f32.xlu0 %v7604
      %v7606 = vpop.xlane.xlu0 %7605
      %v7607 = vsel %vm4507, %v7416, 0.0
      %7608 = vadd.xlane.f32.xlu0 %v7607
      %v7609 = vpop.xlane.xlu0 %7608
      %v7610 = vsel %vm4507, %v7417, 0.0
      %7611 = vadd.xlane.f32.xlu0 %v7610
      %v7612 = vpop.xlane.xlu0 %7611
      %v7613 = vsel %vm4507, %v7418, 0.0
      %7614 = vadd.xlane.f32.xlu0 %v7613
      %v7615 = vpop.xlane.xlu0 %7614
      %v7616 = vsel %vm4507, %v7419, 0.0
      %7617 = vadd.xlane.f32.xlu0 %v7616
      %v7618 = vpop.xlane.xlu0 %7617
      %v7619 = vsel %vm4507, %v7420, 0.0
      %7620 = vadd.xlane.f32.xlu0 %v7619
      %v7621 = vpop.xlane.xlu0 %7620
      %v7622 = vsel %vm4507, %v7421, 0.0
      %7623 = vadd.xlane.f32.xlu0 %v7622
      %v7624 = vpop.xlane.xlu0 %7623
      %v7625 = vsel %vm4507, %v7422, 0.0
      %7626 = vadd.xlane.f32.xlu0 %v7625
      %v7627 = vpop.xlane.xlu0 %7626
      %v7628 = vsel %vm4507, %v7423, 0.0
      %7629 = vadd.xlane.f32.xlu0 %v7628
      %v7630 = vpop.xlane.xlu0 %7629
      %v7631 = vsel %vm4507, %v7424, 0.0
      %7632 = vadd.xlane.f32.xlu0 %v7631
      %v7633 = vpop.xlane.xlu0 %7632
      %v7634 = vsel %vm4507, %v7425, 0.0
      %7635 = vadd.xlane.f32.xlu0 %v7634
      %v7636 = vpop.xlane.xlu0 %7635
      %v7637 = vsel %vm4507, %v7426, 0.0
      %7638 = vadd.xlane.f32.xlu0 %v7637
      %v7639 = vpop.xlane.xlu0 %7638
      %v7640 = vsel %vm4507, %v7427, 0.0
      %7641 = vadd.xlane.f32.xlu0 %v7640
      %v7642 = vpop.xlane.xlu0 %7641
      %v7643 = vsel %vm4507, %v7428, 0.0
      %7644 = vadd.xlane.f32.xlu0 %v7643
      %v7645 = vpop.xlane.xlu0 %7644
      %v7646 = vsel %vm4507, %v7429, 0.0
      %7647 = vadd.xlane.f32.xlu0 %v7646
      %v7648 = vpop.xlane.xlu0 %7647
      %v7649 = vsel %vm4507, %v7430, 0.0
      %7650 = vadd.xlane.f32.xlu0 %v7649
      %v7651 = vpop.xlane.xlu0 %7650
      %v7652 = vsel %vm4507, %v7431, 0.0
      %7653 = vadd.xlane.f32.xlu0 %v7652
      %v7654 = vpop.xlane.xlu0 %7653
      %v7655 = vsel %vm4507, %v7432, 0.0
      %7656 = vadd.xlane.f32.xlu0 %v7655
      %v7657 = vpop.xlane.xlu0 %7656
      %v7658 = vsel %vm4507, %v7433, 0.0
      %7659 = vadd.xlane.f32.xlu0 %v7658
      %v7660 = vpop.xlane.xlu0 %7659
      %v7661 = vsel %vm4507, %v7434, 0.0
      %7662 = vadd.xlane.f32.xlu0 %v7661
      %v7663 = vpop.xlane.xlu0 %7662
      %v7664 = vsel %vm4507, %v7435, 0.0
      %7665 = vadd.xlane.f32.xlu0 %v7664
      %v7666 = vpop.xlane.xlu0 %7665
      %v7667 = vsel %vm4507, %v7436, 0.0
      %7668 = vadd.xlane.f32.xlu0 %v7667
      %v7669 = vpop.xlane.xlu0 %7668
      %v7670 = vsel %vm4507, %v7437, 0.0
      %7671 = vadd.xlane.f32.xlu0 %v7670
      %v7672 = vpop.xlane.xlu0 %7671
      %v7673 = vsel %vm4507, %v7438, 0.0
      %7674 = vadd.xlane.f32.xlu0 %v7673
      %v7675 = vpop.xlane.xlu0 %7674
      %v7676 = vsel %vm4507, %v7439, 0.0
      %7677 = vadd.xlane.f32.xlu0 %v7676
      %v7678 = vpop.xlane.xlu0 %7677
      %v7679 = vsel %vm4507, %v7440, 0.0
      %7680 = vadd.xlane.f32.xlu0 %v7679
      %v7681 = vpop.xlane.xlu0 %7680
      %v7682 = vsel %vm4507, %v7441, 0.0
      %7683 = vadd.xlane.f32.xlu0 %v7682
      %v7684 = vpop.xlane.xlu0 %7683
      %v7685 = vsel %vm4507, %v7442, 0.0
      %7686 = vadd.xlane.f32.xlu0 %v7685
      %v7687 = vpop.xlane.xlu0 %7686
      %v7688 = vsel %vm4507, %v7443, 0.0
      %7689 = vadd.xlane.f32.xlu0 %v7688
      %v7690 = vpop.xlane.xlu0 %7689
      %v7691 = vsel %vm4507, %v7444, 0.0
      %7692 = vadd.xlane.f32.xlu0 %v7691
      %v7693 = vpop.xlane.xlu0 %7692
      %v7694 = vsel %vm4507, %v7445, 0.0
      %7695 = vadd.xlane.f32.xlu0 %v7694
      %v7696 = vpop.xlane.xlu0 %7695
      %v7697 = vsel %vm4507, %v7446, 0.0
      %7698 = vadd.xlane.f32.xlu0 %v7697
      %v7699 = vpop.xlane.xlu0 %7698
      %v7700 = vsel %vm4507, %v7447, 0.0
      %7701 = vadd.xlane.f32.xlu0 %v7700
      %v7702 = vpop.xlane.xlu0 %7701
      %v7703 = vsel %vm4507, %v7448, 0.0
      %7704 = vadd.xlane.f32.xlu0 %v7703
      %v7705 = vpop.xlane.xlu0 %7704
      %v7706 = vsel %vm4507, %v7449, 0.0
      %7707 = vadd.xlane.f32.xlu0 %v7706
      %v7708 = vpop.xlane.xlu0 %7707
      %v7709 = vsel %vm4507, %v7450, 0.0
      %7710 = vadd.xlane.f32.xlu0 %v7709
      %v7711 = vpop.xlane.xlu0 %7710
      %v7712 = vsel %vm4507, %v7451, 0.0
      %7713 = vadd.xlane.f32.xlu0 %v7712
      %v7714 = vpop.xlane.xlu0 %7713
      %v7715 = vsel %vm4507, %v7452, 0.0
      %7716 = vadd.xlane.f32.xlu0 %v7715
      %v7717 = vpop.xlane.xlu0 %7716
      %v7718 = vsel %vm4507, %v7453, 0.0
      %7719 = vadd.xlane.f32.xlu0 %v7718
      %v7720 = vpop.xlane.xlu0 %7719
      %v7721 = vsel %vm4507, %v7454, 0.0
      %7722 = vadd.xlane.f32.xlu0 %v7721
      %v7723 = vpop.xlane.xlu0 %7722
      %v7724 = vsel %vm4507, %v7455, 0.0
      %7725 = vadd.xlane.f32.xlu0 %v7724
      %v7726 = vpop.xlane.xlu0 %7725
      %v7727 = vsel %vm4507, %v7456, 0.0
      %7728 = vadd.xlane.f32.xlu0 %v7727
      %v7729 = vpop.xlane.xlu0 %7728
      %v7730 = vsel %vm4507, %v7457, 0.0
      %7731 = vadd.xlane.f32.xlu0 %v7730
      %v7732 = vpop.xlane.xlu0 %7731
      %v7733 = vsel %vm4507, %v7458, 0.0
      %7734 = vadd.xlane.f32.xlu0 %v7733
      %v7735 = vpop.xlane.xlu0 %7734
      %v7736 = vsel %vm4507, %v7459, 0.0
      %7737 = vadd.xlane.f32.xlu0 %v7736
      %v7738 = vpop.xlane.xlu0 %7737
      %v7739 = vsel %vm4507, %v7460, 0.0
      %7740 = vadd.xlane.f32.xlu0 %v7739
      %v7741 = vpop.xlane.xlu0 %7740
      %v7742 = vsel %vm4507, %v7461, 0.0
      %7743 = vadd.xlane.f32.xlu0 %v7742
      %v7744 = vpop.xlane.xlu0 %7743
      %v7745 = vsel %vm4507, %v7462, 0.0
      %7746 = vadd.xlane.f32.xlu0 %v7745
      %v7747 = vpop.xlane.xlu0 %7746
      %v7748 = vsel %vm4507, %v7463, 0.0
      %7749 = vadd.xlane.f32.xlu0 %v7748
      %v7750 = vpop.xlane.xlu0 %7749
      %v7751 = vsel %vm4507, %v7464, 0.0
      %7752 = vadd.xlane.f32.xlu0 %v7751
      %v7753 = vpop.xlane.xlu0 %7752
      %v7754 = vsel %vm4507, %v7465, 0.0
      %7755 = vadd.xlane.f32.xlu0 %v7754
      %v7756 = vpop.xlane.xlu0 %7755
      %v7757 = vsel %vm4507, %v7466, 0.0
      %7758 = vadd.xlane.f32.xlu0 %v7757
      %v7759 = vpop.xlane.xlu0 %7758
      %v7760 = vsel %vm4507, %v7467, 0.0
      %7761 = vadd.xlane.f32.xlu0 %v7760
      %v7762 = vpop.xlane.xlu0 %7761
      %v7763 = vsel %vm4507, %v7468, 0.0
      %7764 = vadd.xlane.f32.xlu0 %v7763
      %v7765 = vpop.xlane.xlu0 %7764
      %v7766 = vsel %vm4507, %v7469, 0.0
      %7767 = vadd.xlane.f32.xlu0 %v7766
      %v7768 = vpop.xlane.xlu0 %7767
      %v7769 = vsel %vm4507, %v7470, 0.0
      %7770 = vadd.xlane.f32.xlu0 %v7769
      %v7771 = vpop.xlane.xlu0 %7770
      %v7772 = vsel %vm4507, %v7471, 0.0
      %7773 = vadd.xlane.f32.xlu0 %v7772
      %v7774 = vpop.xlane.xlu0 %7773
      %v7775 = vsel %vm4507, %v7472, 0.0
      %7776 = vadd.xlane.f32.xlu0 %v7775
      %v7777 = vpop.xlane.xlu0 %7776
      %v7778 = vsel %vm4507, %v7473, 0.0
      %7779 = vadd.xlane.f32.xlu0 %v7778
      %v7780 = vpop.xlane.xlu0 %7779
      %v7781 = vsel %vm4507, %v7474, 0.0
      %7782 = vadd.xlane.f32.xlu0 %v7781
      %v7783 = vpop.xlane.xlu0 %7782
      %v7784 = vsel %vm4507, %v7475, 0.0
      %7785 = vadd.xlane.f32.xlu0 %v7784
      %v7786 = vpop.xlane.xlu0 %7785
      %v7787 = vsel %vm4507, %v7476, 0.0
      %7788 = vadd.xlane.f32.xlu0 %v7787
      %v7789 = vpop.xlane.xlu0 %7788
      %v7790 = vsel %vm4507, %v7477, 0.0
      %7791 = vadd.xlane.f32.xlu0 %v7790
      %v7792 = vpop.xlane.xlu0 %7791
      %v7793 = vsel %vm4507, %v7478, 0.0
      %7794 = vadd.xlane.f32.xlu0 %v7793
      %v7795 = vpop.xlane.xlu0 %7794
      %v7796 = vsel %vm4507, %v7479, 0.0
      %7797 = vadd.xlane.f32.xlu0 %v7796
      %v7798 = vpop.xlane.xlu0 %7797
      %v7799 = vsel %vm4507, %v7480, 0.0
      %7800 = vadd.xlane.f32.xlu0 %v7799
      %v7801 = vpop.xlane.xlu0 %7800
      %v7802 = vsel %vm4507, %v7481, 0.0
      %7803 = vadd.xlane.f32.xlu0 %v7802
      %v7804 = vpop.xlane.xlu0 %7803
      %v7805 = vsel %vm4507, %v7482, 0.0
      %7806 = vadd.xlane.f32.xlu0 %v7805
      %v7807 = vpop.xlane.xlu0 %7806
      %v7808 = vsel %vm4507, %v7483, 0.0
      %7809 = vadd.xlane.f32.xlu0 %v7808
      %v7810 = vpop.xlane.xlu0 %7809
      %v7811 = vsel %vm4507, %v7484, 0.0
      %7812 = vadd.xlane.f32.xlu0 %v7811
      %v7813 = vpop.xlane.xlu0 %7812
      %v7814 = vsel %vm4507, %v7485, 0.0
      %7815 = vadd.xlane.f32.xlu0 %v7814
      %v7816 = vpop.xlane.xlu0 %7815
      %v7817 = vsel %vm4507, %v7486, 0.0
      %7818 = vadd.xlane.f32.xlu0 %v7817
      %v7819 = vpop.xlane.xlu0 %7818
      %v7820 = vsel %vm4507, %v7487, 0.0
      %7821 = vadd.xlane.f32.xlu0 %v7820
      %v7822 = vpop.xlane.xlu0 %7821
      %v7823 = vsel %vm4507, %v7488, 0.0
      %7824 = vadd.xlane.f32.xlu0 %v7823
      %v7825 = vpop.xlane.xlu0 %7824
      %v7826 = vsel %vm4507, %v7489, 0.0
      %7827 = vadd.xlane.f32.xlu0 %v7826
      %v7828 = vpop.xlane.xlu0 %7827
      %v7829 = vsel %vm4507, %v7490, 0.0
      %7830 = vadd.xlane.f32.xlu0 %v7829
      %v7831 = vpop.xlane.xlu0 %7830
      %v7832 = vsel %vm4507, %v7491, 0.0
      %7833 = vadd.xlane.f32.xlu0 %v7832
      %v7834 = vpop.xlane.xlu0 %7833
      %v7835 = vsel %vm4507, %v7492, 0.0
      %7836 = vadd.xlane.f32.xlu0 %v7835
      %v7837 = vpop.xlane.xlu0 %7836
      %v7838 = vsel %vm4507, %v7493, 0.0
      %7839 = vadd.xlane.f32.xlu0 %v7838
      %v7840 = vpop.xlane.xlu0 %7839
      %v7841 = vsel %vm4507, %v7494, 0.0
      %7842 = vadd.xlane.f32.xlu0 %v7841
      %v7843 = vpop.xlane.xlu0 %7842
      %v7844 = vsel %vm4507, %v7495, 0.0
      %7845 = vadd.xlane.f32.xlu0 %v7844
      %v7846 = vpop.xlane.xlu0 %7845
      %v7847 = vsel %vm4507, %v7496, 0.0
      %7848 = vadd.xlane.f32.xlu0 %v7847
      %v7849 = vpop.xlane.xlu0 %7848
      %v7850 = vsel %vm4507, %v7497, 0.0
      %7851 = vadd.xlane.f32.xlu0 %v7850
      %v7852 = vpop.xlane.xlu0 %7851
      %v7853 = vsel %vm4507, %v7498, 0.0
      %7854 = vadd.xlane.f32.xlu0 %v7853
      %v7855 = vpop.xlane.xlu0 %7854
      %v7856 = vsel %vm4507, %v7499, 0.0
      %7857 = vadd.xlane.f32.xlu0 %v7856
      %v7858 = vpop.xlane.xlu0 %7857
      %v7859 = vsel %vm4507, %v7500, 0.0
      %7860 = vadd.xlane.f32.xlu0 %v7859
      %v7861 = vpop.xlane.xlu0 %7860
      %v7862 = vsel %vm4507, %v7501, 0.0
      %7863 = vadd.xlane.f32.xlu0 %v7862
      %v7864 = vpop.xlane.xlu0 %7863
      %v7865 = vsel %vm4507, %v7502, 0.0
      %7866 = vadd.xlane.f32.xlu0 %v7865
      %v7867 = vpop.xlane.xlu0 %7866
      %v7868 = vsel %vm4507, %v7503, 0.0
      %7869 = vadd.xlane.f32.xlu0 %v7868
      %v7870 = vpop.xlane.xlu0 %7869
      %v7871 = vsel %vm4507, %v7504, 0.0
      %7872 = vadd.xlane.f32.xlu0 %v7871
      %v7873 = vpop.xlane.xlu0 %7872
      %v7874 = vsel %vm4507, %v7505, 0.0
      %7875 = vadd.xlane.f32.xlu0 %v7874
      %v7876 = vpop.xlane.xlu0 %7875
      %v7877 = vsel %vm4507, %v7506, 0.0
      %7878 = vadd.xlane.f32.xlu0 %v7877
      %v7879 = vpop.xlane.xlu0 %7878
      %v7880 = vsel %vm4507, %v7507, 0.0
      %7881 = vadd.xlane.f32.xlu0 %v7880
      %v7882 = vpop.xlane.xlu0 %7881
      %v7883 = vlaneseq
      %v7884 = vshrl.u32 %v7883, 7
      %v7885 = vadd.s32 %v7884, 8
      %v7886 = vadd.s32 %v7884, 16
      %v7887 = vadd.s32 %v7884, 24
      %v7888 = vadd.s32 %v7884, 32
      %v7889 = vadd.s32 %v7884, 40
      %v7890 = vadd.s32 %v7884, 48
      %v7891 = vadd.s32 %v7884, 56
      %v7892 = vadd.s32 %v7884, 64
      %v7893 = vadd.s32 %v7884, 72
      %v7894 = vadd.s32 %v7884, 80
      %v7895 = vadd.s32 %v7884, 88
      %v7896 = vadd.s32 %v7884, 96
      %v7897 = vadd.s32 %v7884, 104
      %v7898 = vadd.s32 %v7884, 112
      %v7899 = vadd.s32 %v7884, 120
      %v7900 = vadd.s32 %v7884, 128
      %v7901 = vadd.s32 %v7884, 136
      %v7902 = vadd.s32 %v7884, 144
      %v7903 = vadd.s32 %v7884, 152
      %v7904 = vadd.s32 %v7884, 160
      %v7905 = vadd.s32 %v7884, 168
      %v7906 = vadd.s32 %v7884, 176
      %v7907 = vadd.s32 %v7884, 184
      %v7908 = vadd.s32 %v7884, 192
      %v7909 = vadd.s32 %v7884, 200
      %v7910 = vadd.s32 %v7884, 208
      %v7911 = vadd.s32 %v7884, 216
      %v7912 = vadd.s32 %v7884, 224
      %v7913 = vadd.s32 %v7884, 232
      %v7914 = vadd.s32 %v7884, 240
      %v7915 = vadd.s32 %v7884, 248
      %v7916 = vadd.s32 %v7884, 256
      %v7917 = vadd.s32 %v7884, 264
      %v7918 = vadd.s32 %v7884, 272
      %v7919 = vadd.s32 %v7884, 280
      %v7920 = vadd.s32 %v7884, 288
      %v7921 = vadd.s32 %v7884, 296
      %v7922 = vadd.s32 %v7884, 304
      %v7923 = vadd.s32 %v7884, 312
      %v7924 = vadd.s32 %v7884, 320
      %v7925 = vadd.s32 %v7884, 328
      %v7926 = vadd.s32 %v7884, 336
      %v7927 = vadd.s32 %v7884, 344
      %v7928 = vadd.s32 %v7884, 352
      %v7929 = vadd.s32 %v7884, 360
      %v7930 = vadd.s32 %v7884, 368
      %v7931 = vadd.s32 %v7884, 376
      %v7932 = vadd.s32 %v7884, 384
      %v7933 = vadd.s32 %v7884, 392
      %v7934 = vadd.s32 %v7884, 400
      %v7935 = vadd.s32 %v7884, 408
      %v7936 = vadd.s32 %v7884, 416
      %v7937 = vadd.s32 %v7884, 424
      %v7938 = vadd.s32 %v7884, 432
      %v7939 = vadd.s32 %v7884, 440
      %v7940 = vadd.s32 %v7884, 448
      %v7941 = vadd.s32 %v7884, 456
      %v7942 = vadd.s32 %v7884, 464
      %v7943 = vadd.s32 %v7884, 472
      %v7944 = vadd.s32 %v7884, 480
      %v7945 = vadd.s32 %v7884, 488
      %v7946 = vadd.s32 %v7884, 496
      %v7947 = vadd.s32 %v7884, 504
      %v7948 = vadd.s32 %v7884, 512
      %v7949 = vadd.s32 %v7884, 520
      %v7950 = vadd.s32 %v7884, 528
      %v7951 = vadd.s32 %v7884, 536
      %v7952 = vadd.s32 %v7884, 544
      %v7953 = vadd.s32 %v7884, 552
      %v7954 = vadd.s32 %v7884, 560
      %v7955 = vadd.s32 %v7884, 568
      %v7956 = vadd.s32 %v7884, 576
      %v7957 = vadd.s32 %v7884, 584
      %v7958 = vadd.s32 %v7884, 592
      %v7959 = vadd.s32 %v7884, 600
      %v7960 = vadd.s32 %v7884, 608
      %v7961 = vadd.s32 %v7884, 616
      %v7962 = vadd.s32 %v7884, 624
      %v7963 = vadd.s32 %v7884, 632
      %v7964 = vadd.s32 %v7884, 640
      %v7965 = vadd.s32 %v7884, 648
      %v7966 = vadd.s32 %v7884, 656
      %v7967 = vadd.s32 %v7884, 664
      %v7968 = vadd.s32 %v7884, 672
      %v7969 = vadd.s32 %v7884, 680
      %v7970 = vadd.s32 %v7884, 688
      %v7971 = vadd.s32 %v7884, 696
      %v7972 = vadd.s32 %v7884, 704
      %v7973 = vadd.s32 %v7884, 712
      %v7974 = vadd.s32 %v7884, 720
      %v7975 = vadd.s32 %v7884, 728
      %v7976 = vadd.s32 %v7884, 736
      %v7977 = vadd.s32 %v7884, 744
      %v7978 = vadd.s32 %v7884, 752
      %v7979 = vadd.s32 %v7884, 760
      %v7980 = vadd.s32 %v7884, 768
      %v7981 = vadd.s32 %v7884, 776
      %v7982 = vadd.s32 %v7884, 784
      %v7983 = vadd.s32 %v7884, 792
      %v7984 = vadd.s32 %v7884, 800
      %v7985 = vadd.s32 %v7884, 808
      %v7986 = vadd.s32 %v7884, 816
      %v7987 = vadd.s32 %v7884, 824
      %v7988 = vadd.s32 %v7884, 832
      %v7989 = vadd.s32 %v7884, 840
      %v7990 = vadd.s32 %v7884, 848
      %v7991 = vadd.s32 %v7884, 856
      %v7992 = vadd.s32 %v7884, 864
      %v7993 = vadd.s32 %v7884, 872
      %v7994 = vadd.s32 %v7884, 880
      %v7995 = vadd.s32 %v7884, 888
      %v7996 = vadd.s32 %v7884, 896
      %v7997 = vadd.s32 %v7884, 904
      %v7998 = vadd.s32 %v7884, 912
      %v7999 = vadd.s32 %v7884, 920
      %v8000 = vadd.s32 %v7884, 928
      %v8001 = vadd.s32 %v7884, 936
      %v8002 = vadd.s32 %v7884, 944
      %v8003 = vadd.s32 %v7884, 952
      %v8004 = vadd.s32 %v7884, 960
      %v8005 = vadd.s32 %v7884, 968
      %v8006 = vadd.s32 %v7884, 976
      %v8007 = vadd.s32 %v7884, 984
      %v8008 = vadd.s32 %v7884, 992
      %s8009 = smul.u32 %s3041, 1000
      %v8010 = vstv %s8009
      %v8011 = vadd.s32 %v7884, %v8010
      %v8012 = vadd.s32 %v7885, %v8010
      %v8013 = vadd.s32 %v7886, %v8010
      %v8014 = vadd.s32 %v7887, %v8010
      %v8015 = vadd.s32 %v7888, %v8010
      %v8016 = vadd.s32 %v7889, %v8010
      %v8017 = vadd.s32 %v7890, %v8010
      %v8018 = vadd.s32 %v7891, %v8010
      %v8019 = vadd.s32 %v7892, %v8010
      %v8020 = vadd.s32 %v7893, %v8010
      %v8021 = vadd.s32 %v7894, %v8010
      %v8022 = vadd.s32 %v7895, %v8010
      %v8023 = vadd.s32 %v7896, %v8010
      %v8024 = vadd.s32 %v7897, %v8010
      %v8025 = vadd.s32 %v7898, %v8010
      %v8026 = vadd.s32 %v7899, %v8010
      %v8027 = vadd.s32 %v7900, %v8010
      %v8028 = vadd.s32 %v7901, %v8010
      %v8029 = vadd.s32 %v7902, %v8010
      %v8030 = vadd.s32 %v7903, %v8010
      %v8031 = vadd.s32 %v7904, %v8010
      %v8032 = vadd.s32 %v7905, %v8010
      %v8033 = vadd.s32 %v7906, %v8010
      %v8034 = vadd.s32 %v7907, %v8010
      %v8035 = vadd.s32 %v7908, %v8010
      %v8036 = vadd.s32 %v7909, %v8010
      %v8037 = vadd.s32 %v7910, %v8010
      %v8038 = vadd.s32 %v7911, %v8010
      %v8039 = vadd.s32 %v7912, %v8010
      %v8040 = vadd.s32 %v7913, %v8010
      %v8041 = vadd.s32 %v7914, %v8010
      %v8042 = vadd.s32 %v7915, %v8010
      %v8043 = vadd.s32 %v7916, %v8010
      %v8044 = vadd.s32 %v7917, %v8010
      %v8045 = vadd.s32 %v7918, %v8010
      %v8046 = vadd.s32 %v7919, %v8010
      %v8047 = vadd.s32 %v7920, %v8010
      %v8048 = vadd.s32 %v7921, %v8010
      %v8049 = vadd.s32 %v7922, %v8010
      %v8050 = vadd.s32 %v7923, %v8010
      %v8051 = vadd.s32 %v7924, %v8010
      %v8052 = vadd.s32 %v7925, %v8010
      %v8053 = vadd.s32 %v7926, %v8010
      %v8054 = vadd.s32 %v7927, %v8010
      %v8055 = vadd.s32 %v7928, %v8010
      %v8056 = vadd.s32 %v7929, %v8010
      %v8057 = vadd.s32 %v7930, %v8010
      %v8058 = vadd.s32 %v7931, %v8010
      %v8059 = vadd.s32 %v7932, %v8010
      %v8060 = vadd.s32 %v7933, %v8010
      %v8061 = vadd.s32 %v7934, %v8010
      %v8062 = vadd.s32 %v7935, %v8010
      %v8063 = vadd.s32 %v7936, %v8010
      %v8064 = vadd.s32 %v7937, %v8010
      %v8065 = vadd.s32 %v7938, %v8010
      %v8066 = vadd.s32 %v7939, %v8010
      %v8067 = vadd.s32 %v7940, %v8010
      %v8068 = vadd.s32 %v7941, %v8010
      %v8069 = vadd.s32 %v7942, %v8010
      %v8070 = vadd.s32 %v7943, %v8010
      %v8071 = vadd.s32 %v7944, %v8010
      %v8072 = vadd.s32 %v7945, %v8010
      %v8073 = vadd.s32 %v7946, %v8010
      %v8074 = vadd.s32 %v7947, %v8010
      %v8075 = vadd.s32 %v7948, %v8010
      %v8076 = vadd.s32 %v7949, %v8010
      %v8077 = vadd.s32 %v7950, %v8010
      %v8078 = vadd.s32 %v7951, %v8010
      %v8079 = vadd.s32 %v7952, %v8010
      %v8080 = vadd.s32 %v7953, %v8010
      %v8081 = vadd.s32 %v7954, %v8010
      %v8082 = vadd.s32 %v7955, %v8010
      %v8083 = vadd.s32 %v7956, %v8010
      %v8084 = vadd.s32 %v7957, %v8010
      %v8085 = vadd.s32 %v7958, %v8010
      %v8086 = vadd.s32 %v7959, %v8010
      %v8087 = vadd.s32 %v7960, %v8010
      %v8088 = vadd.s32 %v7961, %v8010
      %v8089 = vadd.s32 %v7962, %v8010
      %v8090 = vadd.s32 %v7963, %v8010
      %v8091 = vadd.s32 %v7964, %v8010
      %v8092 = vadd.s32 %v7965, %v8010
      %v8093 = vadd.s32 %v7966, %v8010
      %v8094 = vadd.s32 %v7967, %v8010
      %v8095 = vadd.s32 %v7968, %v8010
      %v8096 = vadd.s32 %v7969, %v8010
      %v8097 = vadd.s32 %v7970, %v8010
      %v8098 = vadd.s32 %v7971, %v8010
      %v8099 = vadd.s32 %v7972, %v8010
      %v8100 = vadd.s32 %v7973, %v8010
      %v8101 = vadd.s32 %v7974, %v8010
      %v8102 = vadd.s32 %v7975, %v8010
      %v8103 = vadd.s32 %v7976, %v8010
      %v8104 = vadd.s32 %v7977, %v8010
      %v8105 = vadd.s32 %v7978, %v8010
      %v8106 = vadd.s32 %v7979, %v8010
      %v8107 = vadd.s32 %v7980, %v8010
      %v8108 = vadd.s32 %v7981, %v8010
      %v8109 = vadd.s32 %v7982, %v8010
      %v8110 = vadd.s32 %v7983, %v8010
      %v8111 = vadd.s32 %v7984, %v8010
      %v8112 = vadd.s32 %v7985, %v8010
      %v8113 = vadd.s32 %v7986, %v8010
      %v8114 = vadd.s32 %v7987, %v8010
      %v8115 = vadd.s32 %v7988, %v8010
      %v8116 = vadd.s32 %v7989, %v8010
      %v8117 = vadd.s32 %v7990, %v8010
      %v8118 = vadd.s32 %v7991, %v8010
      %v8119 = vadd.s32 %v7992, %v8010
      %v8120 = vadd.s32 %v7993, %v8010
      %v8121 = vadd.s32 %v7994, %v8010
      %v8122 = vadd.s32 %v7995, %v8010
      %v8123 = vadd.s32 %v7996, %v8010
      %v8124 = vadd.s32 %v7997, %v8010
      %v8125 = vadd.s32 %v7998, %v8010
      %v8126 = vadd.s32 %v7999, %v8010
      %v8127 = vadd.s32 %v8000, %v8010
      %v8128 = vadd.s32 %v8001, %v8010
      %v8129 = vadd.s32 %v8002, %v8010
      %v8130 = vadd.s32 %v8003, %v8010
      %v8131 = vadd.s32 %v8004, %v8010
      %v8132 = vadd.s32 %v8005, %v8010
      %v8133 = vadd.s32 %v8006, %v8010
      %v8134 = vadd.s32 %v8007, %v8010
      %v8135 = vadd.s32 %v8008, %v8010
      %vm8136 = vcmp.lt.s32.totalorder %v8011, 1000
      %vm8137 = vcmp.lt.s32.totalorder %v8012, 1000
      %vm8138 = vcmp.lt.s32.totalorder %v8013, 1000
      %vm8139 = vcmp.lt.s32.totalorder %v8014, 1000
      %vm8140 = vcmp.lt.s32.totalorder %v8015, 1000
      %vm8141 = vcmp.lt.s32.totalorder %v8016, 1000
      %vm8142 = vcmp.lt.s32.totalorder %v8017, 1000
      %vm8143 = vcmp.lt.s32.totalorder %v8018, 1000
      %vm8144 = vcmp.lt.s32.totalorder %v8019, 1000
      %vm8145 = vcmp.lt.s32.totalorder %v8020, 1000
      %vm8146 = vcmp.lt.s32.totalorder %v8021, 1000
      %vm8147 = vcmp.lt.s32.totalorder %v8022, 1000
      %vm8148 = vcmp.lt.s32.totalorder %v8023, 1000
      %vm8149 = vcmp.lt.s32.totalorder %v8024, 1000
      %vm8150 = vcmp.lt.s32.totalorder %v8025, 1000
      %vm8151 = vcmp.lt.s32.totalorder %v8026, 1000
      %vm8152 = vcmp.lt.s32.totalorder %v8027, 1000
      %vm8153 = vcmp.lt.s32.totalorder %v8028, 1000
      %vm8154 = vcmp.lt.s32.totalorder %v8029, 1000
      %vm8155 = vcmp.lt.s32.totalorder %v8030, 1000
      %vm8156 = vcmp.lt.s32.totalorder %v8031, 1000
      %vm8157 = vcmp.lt.s32.totalorder %v8032, 1000
      %vm8158 = vcmp.lt.s32.totalorder %v8033, 1000
      %vm8159 = vcmp.lt.s32.totalorder %v8034, 1000
      %vm8160 = vcmp.lt.s32.totalorder %v8035, 1000
      %vm8161 = vcmp.lt.s32.totalorder %v8036, 1000
      %vm8162 = vcmp.lt.s32.totalorder %v8037, 1000
      %vm8163 = vcmp.lt.s32.totalorder %v8038, 1000
      %vm8164 = vcmp.lt.s32.totalorder %v8039, 1000
      %vm8165 = vcmp.lt.s32.totalorder %v8040, 1000
      %vm8166 = vcmp.lt.s32.totalorder %v8041, 1000
      %vm8167 = vcmp.lt.s32.totalorder %v8042, 1000
      %vm8168 = vcmp.lt.s32.totalorder %v8043, 1000
      %vm8169 = vcmp.lt.s32.totalorder %v8044, 1000
      %vm8170 = vcmp.lt.s32.totalorder %v8045, 1000
      %vm8171 = vcmp.lt.s32.totalorder %v8046, 1000
      %vm8172 = vcmp.lt.s32.totalorder %v8047, 1000
      %vm8173 = vcmp.lt.s32.totalorder %v8048, 1000
      %vm8174 = vcmp.lt.s32.totalorder %v8049, 1000
      %vm8175 = vcmp.lt.s32.totalorder %v8050, 1000
      %vm8176 = vcmp.lt.s32.totalorder %v8051, 1000
      %vm8177 = vcmp.lt.s32.totalorder %v8052, 1000
      %vm8178 = vcmp.lt.s32.totalorder %v8053, 1000
      %vm8179 = vcmp.lt.s32.totalorder %v8054, 1000
      %vm8180 = vcmp.lt.s32.totalorder %v8055, 1000
      %vm8181 = vcmp.lt.s32.totalorder %v8056, 1000
      %vm8182 = vcmp.lt.s32.totalorder %v8057, 1000
      %vm8183 = vcmp.lt.s32.totalorder %v8058, 1000
      %vm8184 = vcmp.lt.s32.totalorder %v8059, 1000
      %vm8185 = vcmp.lt.s32.totalorder %v8060, 1000
      %vm8186 = vcmp.lt.s32.totalorder %v8061, 1000
      %vm8187 = vcmp.lt.s32.totalorder %v8062, 1000
      %vm8188 = vcmp.lt.s32.totalorder %v8063, 1000
      %vm8189 = vcmp.lt.s32.totalorder %v8064, 1000
      %vm8190 = vcmp.lt.s32.totalorder %v8065, 1000
      %vm8191 = vcmp.lt.s32.totalorder %v8066, 1000
      %vm8192 = vcmp.lt.s32.totalorder %v8067, 1000
      %vm8193 = vcmp.lt.s32.totalorder %v8068, 1000
      %vm8194 = vcmp.lt.s32.totalorder %v8069, 1000
      %vm8195 = vcmp.lt.s32.totalorder %v8070, 1000
      %vm8196 = vcmp.lt.s32.totalorder %v8071, 1000
      %vm8197 = vcmp.lt.s32.totalorder %v8072, 1000
      %vm8198 = vcmp.lt.s32.totalorder %v8073, 1000
      %vm8199 = vcmp.lt.s32.totalorder %v8074, 1000
      %vm8200 = vcmp.lt.s32.totalorder %v8075, 1000
      %vm8201 = vcmp.lt.s32.totalorder %v8076, 1000
      %vm8202 = vcmp.lt.s32.totalorder %v8077, 1000
      %vm8203 = vcmp.lt.s32.totalorder %v8078, 1000
      %vm8204 = vcmp.lt.s32.totalorder %v8079, 1000
      %vm8205 = vcmp.lt.s32.totalorder %v8080, 1000
      %vm8206 = vcmp.lt.s32.totalorder %v8081, 1000
      %vm8207 = vcmp.lt.s32.totalorder %v8082, 1000
      %vm8208 = vcmp.lt.s32.totalorder %v8083, 1000
      %vm8209 = vcmp.lt.s32.totalorder %v8084, 1000
      %vm8210 = vcmp.lt.s32.totalorder %v8085, 1000
      %vm8211 = vcmp.lt.s32.totalorder %v8086, 1000
      %vm8212 = vcmp.lt.s32.totalorder %v8087, 1000
      %vm8213 = vcmp.lt.s32.totalorder %v8088, 1000
      %vm8214 = vcmp.lt.s32.totalorder %v8089, 1000
      %vm8215 = vcmp.lt.s32.totalorder %v8090, 1000
      %vm8216 = vcmp.lt.s32.totalorder %v8091, 1000
      %vm8217 = vcmp.lt.s32.totalorder %v8092, 1000
      %vm8218 = vcmp.lt.s32.totalorder %v8093, 1000
      %vm8219 = vcmp.lt.s32.totalorder %v8094, 1000
      %vm8220 = vcmp.lt.s32.totalorder %v8095, 1000
      %vm8221 = vcmp.lt.s32.totalorder %v8096, 1000
      %vm8222 = vcmp.lt.s32.totalorder %v8097, 1000
      %vm8223 = vcmp.lt.s32.totalorder %v8098, 1000
      %vm8224 = vcmp.lt.s32.totalorder %v8099, 1000
      %vm8225 = vcmp.lt.s32.totalorder %v8100, 1000
      %vm8226 = vcmp.lt.s32.totalorder %v8101, 1000
      %vm8227 = vcmp.lt.s32.totalorder %v8102, 1000
      %vm8228 = vcmp.lt.s32.totalorder %v8103, 1000
      %vm8229 = vcmp.lt.s32.totalorder %v8104, 1000
      %vm8230 = vcmp.lt.s32.totalorder %v8105, 1000
      %vm8231 = vcmp.lt.s32.totalorder %v8106, 1000
      %vm8232 = vcmp.lt.s32.totalorder %v8107, 1000
      %vm8233 = vcmp.lt.s32.totalorder %v8108, 1000
      %vm8234 = vcmp.lt.s32.totalorder %v8109, 1000
      %vm8235 = vcmp.lt.s32.totalorder %v8110, 1000
      %vm8236 = vcmp.lt.s32.totalorder %v8111, 1000
      %vm8237 = vcmp.lt.s32.totalorder %v8112, 1000
      %vm8238 = vcmp.lt.s32.totalorder %v8113, 1000
      %vm8239 = vcmp.lt.s32.totalorder %v8114, 1000
      %vm8240 = vcmp.lt.s32.totalorder %v8115, 1000
      %vm8241 = vcmp.lt.s32.totalorder %v8116, 1000
      %vm8242 = vcmp.lt.s32.totalorder %v8117, 1000
      %vm8243 = vcmp.lt.s32.totalorder %v8118, 1000
      %vm8244 = vcmp.lt.s32.totalorder %v8119, 1000
      %vm8245 = vcmp.lt.s32.totalorder %v8120, 1000
      %vm8246 = vcmp.lt.s32.totalorder %v8121, 1000
      %vm8247 = vcmp.lt.s32.totalorder %v8122, 1000
      %vm8248 = vcmp.lt.s32.totalorder %v8123, 1000
      %vm8249 = vcmp.lt.s32.totalorder %v8124, 1000
      %vm8250 = vcmp.lt.s32.totalorder %v8125, 1000
      %vm8251 = vcmp.lt.s32.totalorder %v8126, 1000
      %vm8252 = vcmp.lt.s32.totalorder %v8127, 1000
      %vm8253 = vcmp.lt.s32.totalorder %v8128, 1000
      %vm8254 = vcmp.lt.s32.totalorder %v8129, 1000
      %vm8255 = vcmp.lt.s32.totalorder %v8130, 1000
      %vm8256 = vcmp.lt.s32.totalorder %v8131, 1000
      %vm8257 = vcmp.lt.s32.totalorder %v8132, 1000
      %vm8258 = vcmp.lt.s32.totalorder %v8133, 1000
      %vm8259 = vcmp.lt.s32.totalorder %v8134, 1000
      %vm8260 = vcmp.lt.s32.totalorder %v8135, 1000
      %v8261 = vsub.f32 0.0, %v7510
      %v8262 = vsub.f32 0.0, %v7513
      %v8263 = vsub.f32 0.0, %v7516
      %v8264 = vsub.f32 0.0, %v7519
      %v8265 = vsub.f32 0.0, %v7522
      %v8266 = vsub.f32 0.0, %v7525
      %v8267 = vsub.f32 0.0, %v7528
      %v8268 = vsub.f32 0.0, %v7531
      %v8269 = vsub.f32 0.0, %v7534
      %v8270 = vsub.f32 0.0, %v7537
      %v8271 = vsub.f32 0.0, %v7540
      %v8272 = vsub.f32 0.0, %v7543
      %v8273 = vsub.f32 0.0, %v7546
      %v8274 = vsub.f32 0.0, %v7549
      %v8275 = vsub.f32 0.0, %v7552
      %v8276 = vsub.f32 0.0, %v7555
      %v8277 = vsub.f32 0.0, %v7558
      %v8278 = vsub.f32 0.0, %v7561
      %v8279 = vsub.f32 0.0, %v7564
      %v8280 = vsub.f32 0.0, %v7567
      %v8281 = vsub.f32 0.0, %v7570
      %v8282 = vsub.f32 0.0, %v7573
      %v8283 = vsub.f32 0.0, %v7576
      %v8284 = vsub.f32 0.0, %v7579
      %v8285 = vsub.f32 0.0, %v7582
      %v8286 = vsub.f32 0.0, %v7585
      %v8287 = vsub.f32 0.0, %v7588
      %v8288 = vsub.f32 0.0, %v7591
      %v8289 = vsub.f32 0.0, %v7594
      %v8290 = vsub.f32 0.0, %v7597
      %v8291 = vsub.f32 0.0, %v7600
      %v8292 = vsub.f32 0.0, %v7603
      %v8293 = vsub.f32 0.0, %v7606
      %v8294 = vsub.f32 0.0, %v7609
      %v8295 = vsub.f32 0.0, %v7612
      %v8296 = vsub.f32 0.0, %v7615
      %v8297 = vsub.f32 0.0, %v7618
      %v8298 = vsub.f32 0.0, %v7621
      %v8299 = vsub.f32 0.0, %v7624
      %v8300 = vsub.f32 0.0, %v7627
      %v8301 = vsub.f32 0.0, %v7630
      %v8302 = vsub.f32 0.0, %v7633
      %v8303 = vsub.f32 0.0, %v7636
      %v8304 = vsub.f32 0.0, %v7639
      %v8305 = vsub.f32 0.0, %v7642
      %v8306 = vsub.f32 0.0, %v7645
      %v8307 = vsub.f32 0.0, %v7648
      %v8308 = vsub.f32 0.0, %v7651
      %v8309 = vsub.f32 0.0, %v7654
      %v8310 = vsub.f32 0.0, %v7657
      %v8311 = vsub.f32 0.0, %v7660
      %v8312 = vsub.f32 0.0, %v7663
      %v8313 = vsub.f32 0.0, %v7666
      %v8314 = vsub.f32 0.0, %v7669
      %v8315 = vsub.f32 0.0, %v7672
      %v8316 = vsub.f32 0.0, %v7675
      %v8317 = vsub.f32 0.0, %v7678
      %v8318 = vsub.f32 0.0, %v7681
      %v8319 = vsub.f32 0.0, %v7684
      %v8320 = vsub.f32 0.0, %v7687
      %v8321 = vsub.f32 0.0, %v7690
      %v8322 = vsub.f32 0.0, %v7693
      %v8323 = vsub.f32 0.0, %v7696
      %v8324 = vsub.f32 0.0, %v7699
      %v8325 = vsub.f32 0.0, %v7702
      %v8326 = vsub.f32 0.0, %v7705
      %v8327 = vsub.f32 0.0, %v7708
      %v8328 = vsub.f32 0.0, %v7711
      %v8329 = vsub.f32 0.0, %v7714
      %v8330 = vsub.f32 0.0, %v7717
      %v8331 = vsub.f32 0.0, %v7720
      %v8332 = vsub.f32 0.0, %v7723
      %v8333 = vsub.f32 0.0, %v7726
      %v8334 = vsub.f32 0.0, %v7729
      %v8335 = vsub.f32 0.0, %v7732
      %v8336 = vsub.f32 0.0, %v7735
      %v8337 = vsub.f32 0.0, %v7738
      %v8338 = vsub.f32 0.0, %v7741
      %v8339 = vsub.f32 0.0, %v7744
      %v8340 = vsub.f32 0.0, %v7747
      %v8341 = vsub.f32 0.0, %v7750
      %v8342 = vsub.f32 0.0, %v7753
      %v8343 = vsub.f32 0.0, %v7756
      %v8344 = vsub.f32 0.0, %v7759
      %v8345 = vsub.f32 0.0, %v7762
      %v8346 = vsub.f32 0.0, %v7765
      %v8347 = vsub.f32 0.0, %v7768
      %v8348 = vsub.f32 0.0, %v7771
      %v8349 = vsub.f32 0.0, %v7774
      %v8350 = vsub.f32 0.0, %v7777
      %v8351 = vsub.f32 0.0, %v7780
      %v8352 = vsub.f32 0.0, %v7783
      %v8353 = vsub.f32 0.0, %v7786
      %v8354 = vsub.f32 0.0, %v7789
      %v8355 = vsub.f32 0.0, %v7792
      %v8356 = vsub.f32 0.0, %v7795
      %v8357 = vsub.f32 0.0, %v7798
      %v8358 = vsub.f32 0.0, %v7801
      %v8359 = vsub.f32 0.0, %v7804
      %v8360 = vsub.f32 0.0, %v7807
      %v8361 = vsub.f32 0.0, %v7810
      %v8362 = vsub.f32 0.0, %v7813
      %v8363 = vsub.f32 0.0, %v7816
      %v8364 = vsub.f32 0.0, %v7819
      %v8365 = vsub.f32 0.0, %v7822
      %v8366 = vsub.f32 0.0, %v7825
      %v8367 = vsub.f32 0.0, %v7828
      %v8368 = vsub.f32 0.0, %v7831
      %v8369 = vsub.f32 0.0, %v7834
      %v8370 = vsub.f32 0.0, %v7837
      %v8371 = vsub.f32 0.0, %v7840
      %v8372 = vsub.f32 0.0, %v7843
      %v8373 = vsub.f32 0.0, %v7846
      %v8374 = vsub.f32 0.0, %v7849
      %v8375 = vsub.f32 0.0, %v7852
      %v8376 = vsub.f32 0.0, %v7855
      %v8377 = vsub.f32 0.0, %v7858
      %v8378 = vsub.f32 0.0, %v7861
      %v8379 = vsub.f32 0.0, %v7864
      %v8380 = vsub.f32 0.0, %v7867
      %v8381 = vsub.f32 0.0, %v7870
      %v8382 = vsub.f32 0.0, %v7873
      %v8383 = vsub.f32 0.0, %v7876
      %v8384 = vsub.f32 0.0, %v7879
      %v8385 = vsub.f32 0.0, %v7882
      %v8386 = vsel %vm8136, %v8261, 0.0
      %v8387 = vsel %vm8137, %v8262, 0.0
      %v8388 = vsel %vm8138, %v8263, 0.0
      %v8389 = vsel %vm8139, %v8264, 0.0
      %v8390 = vsel %vm8140, %v8265, 0.0
      %v8391 = vsel %vm8141, %v8266, 0.0
      %v8392 = vsel %vm8142, %v8267, 0.0
      %v8393 = vsel %vm8143, %v8268, 0.0
      %v8394 = vsel %vm8144, %v8269, 0.0
      %v8395 = vsel %vm8145, %v8270, 0.0
      %v8396 = vsel %vm8146, %v8271, 0.0
      %v8397 = vsel %vm8147, %v8272, 0.0
      %v8398 = vsel %vm8148, %v8273, 0.0
      %v8399 = vsel %vm8149, %v8274, 0.0
      %v8400 = vsel %vm8150, %v8275, 0.0
      %v8401 = vsel %vm8151, %v8276, 0.0
      %v8402 = vsel %vm8152, %v8277, 0.0
      %v8403 = vsel %vm8153, %v8278, 0.0
      %v8404 = vsel %vm8154, %v8279, 0.0
      %v8405 = vsel %vm8155, %v8280, 0.0
      %v8406 = vsel %vm8156, %v8281, 0.0
      %v8407 = vsel %vm8157, %v8282, 0.0
      %v8408 = vsel %vm8158, %v8283, 0.0
      %v8409 = vsel %vm8159, %v8284, 0.0
      %v8410 = vsel %vm8160, %v8285, 0.0
      %v8411 = vsel %vm8161, %v8286, 0.0
      %v8412 = vsel %vm8162, %v8287, 0.0
      %v8413 = vsel %vm8163, %v8288, 0.0
      %v8414 = vsel %vm8164, %v8289, 0.0
      %v8415 = vsel %vm8165, %v8290, 0.0
      %v8416 = vsel %vm8166, %v8291, 0.0
      %v8417 = vsel %vm8167, %v8292, 0.0
      %v8418 = vsel %vm8168, %v8293, 0.0
      %v8419 = vsel %vm8169, %v8294, 0.0
      %v8420 = vsel %vm8170, %v8295, 0.0
      %v8421 = vsel %vm8171, %v8296, 0.0
      %v8422 = vsel %vm8172, %v8297, 0.0
      %v8423 = vsel %vm8173, %v8298, 0.0
      %v8424 = vsel %vm8174, %v8299, 0.0
      %v8425 = vsel %vm8175, %v8300, 0.0
      %v8426 = vsel %vm8176, %v8301, 0.0
      %v8427 = vsel %vm8177, %v8302, 0.0
      %v8428 = vsel %vm8178, %v8303, 0.0
      %v8429 = vsel %vm8179, %v8304, 0.0
      %v8430 = vsel %vm8180, %v8305, 0.0
      %v8431 = vsel %vm8181, %v8306, 0.0
      %v8432 = vsel %vm8182, %v8307, 0.0
      %v8433 = vsel %vm8183, %v8308, 0.0
      %v8434 = vsel %vm8184, %v8309, 0.0
      %v8435 = vsel %vm8185, %v8310, 0.0
      %v8436 = vsel %vm8186, %v8311, 0.0
      %v8437 = vsel %vm8187, %v8312, 0.0
      %v8438 = vsel %vm8188, %v8313, 0.0
      %v8439 = vsel %vm8189, %v8314, 0.0
      %v8440 = vsel %vm8190, %v8315, 0.0
      %v8441 = vsel %vm8191, %v8316, 0.0
      %v8442 = vsel %vm8192, %v8317, 0.0
      %v8443 = vsel %vm8193, %v8318, 0.0
      %v8444 = vsel %vm8194, %v8319, 0.0
      %v8445 = vsel %vm8195, %v8320, 0.0
      %v8446 = vsel %vm8196, %v8321, 0.0
      %v8447 = vsel %vm8197, %v8322, 0.0
      %v8448 = vsel %vm8198, %v8323, 0.0
      %v8449 = vsel %vm8199, %v8324, 0.0
      %v8450 = vsel %vm8200, %v8325, 0.0
      %v8451 = vsel %vm8201, %v8326, 0.0
      %v8452 = vsel %vm8202, %v8327, 0.0
      %v8453 = vsel %vm8203, %v8328, 0.0
      %v8454 = vsel %vm8204, %v8329, 0.0
      %v8455 = vsel %vm8205, %v8330, 0.0
      %v8456 = vsel %vm8206, %v8331, 0.0
      %v8457 = vsel %vm8207, %v8332, 0.0
      %v8458 = vsel %vm8208, %v8333, 0.0
      %v8459 = vsel %vm8209, %v8334, 0.0
      %v8460 = vsel %vm8210, %v8335, 0.0
      %v8461 = vsel %vm8211, %v8336, 0.0
      %v8462 = vsel %vm8212, %v8337, 0.0
      %v8463 = vsel %vm8213, %v8338, 0.0
      %v8464 = vsel %vm8214, %v8339, 0.0
      %v8465 = vsel %vm8215, %v8340, 0.0
      %v8466 = vsel %vm8216, %v8341, 0.0
      %v8467 = vsel %vm8217, %v8342, 0.0
      %v8468 = vsel %vm8218, %v8343, 0.0
      %v8469 = vsel %vm8219, %v8344, 0.0
      %v8470 = vsel %vm8220, %v8345, 0.0
      %v8471 = vsel %vm8221, %v8346, 0.0
      %v8472 = vsel %vm8222, %v8347, 0.0
      %v8473 = vsel %vm8223, %v8348, 0.0
      %v8474 = vsel %vm8224, %v8349, 0.0
      %v8475 = vsel %vm8225, %v8350, 0.0
      %v8476 = vsel %vm8226, %v8351, 0.0
      %v8477 = vsel %vm8227, %v8352, 0.0
      %v8478 = vsel %vm8228, %v8353, 0.0
      %v8479 = vsel %vm8229, %v8354, 0.0
      %v8480 = vsel %vm8230, %v8355, 0.0
      %v8481 = vsel %vm8231, %v8356, 0.0
      %v8482 = vsel %vm8232, %v8357, 0.0
      %v8483 = vsel %vm8233, %v8358, 0.0
      %v8484 = vsel %vm8234, %v8359, 0.0
      %v8485 = vsel %vm8235, %v8360, 0.0
      %v8486 = vsel %vm8236, %v8361, 0.0
      %v8487 = vsel %vm8237, %v8362, 0.0
      %v8488 = vsel %vm8238, %v8363, 0.0
      %v8489 = vsel %vm8239, %v8364, 0.0
      %v8490 = vsel %vm8240, %v8365, 0.0
      %v8491 = vsel %vm8241, %v8366, 0.0
      %v8492 = vsel %vm8242, %v8367, 0.0
      %v8493 = vsel %vm8243, %v8368, 0.0
      %v8494 = vsel %vm8244, %v8369, 0.0
      %v8495 = vsel %vm8245, %v8370, 0.0
      %v8496 = vsel %vm8246, %v8371, 0.0
      %v8497 = vsel %vm8247, %v8372, 0.0
      %v8498 = vsel %vm8248, %v8373, 0.0
      %v8499 = vsel %vm8249, %v8374, 0.0
      %v8500 = vsel %vm8250, %v8375, 0.0
      %v8501 = vsel %vm8251, %v8376, 0.0
      %v8502 = vsel %vm8252, %v8377, 0.0
      %v8503 = vsel %vm8253, %v8378, 0.0
      %v8504 = vsel %vm8254, %v8379, 0.0
      %v8505 = vsel %vm8255, %v8380, 0.0
      %v8506 = vsel %vm8256, %v8381, 0.0
      %v8507 = vsel %vm8257, %v8382, 0.0
      %v8508 = vsel %vm8258, %v8383, 0.0
      %v8509 = vsel %vm8259, %v8384, 0.0
      %v8510 = vsel %vm8260, %v8385, 0.0
      %v8511 = vld [vmem:[%s270] sm:$0xff]
      %vm8512 = vcmask 7168
      %v8513 = vsel %vm8512, %v8386, 0.0
      %v8514 = vsel %vm8512, %v8387, 0.0
      %v8515 = vadd.f32 %v8513, %v8514
      %v8516 = vsel %vm8512, %v8388, 0.0
      %v8517 = vadd.f32 %v8515, %v8516
      %v8518 = vsel %vm8512, %v8389, 0.0
      %v8519 = vadd.f32 %v8517, %v8518
      %v8520 = vsel %vm8512, %v8390, 0.0
      %v8521 = vadd.f32 %v8519, %v8520
      %v8522 = vsel %vm8512, %v8391, 0.0
      %v8523 = vadd.f32 %v8521, %v8522
      %v8524 = vsel %vm8512, %v8392, 0.0
      %v8525 = vadd.f32 %v8523, %v8524
      %v8526 = vsel %vm8512, %v8393, 0.0
      %v8527 = vadd.f32 %v8525, %v8526
      %v8528 = vsel %vm8512, %v8394, 0.0
      %v8529 = vadd.f32 %v8527, %v8528
      %v8530 = vsel %vm8512, %v8395, 0.0
      %v8531 = vadd.f32 %v8529, %v8530
      %v8532 = vsel %vm8512, %v8396, 0.0
      %v8533 = vadd.f32 %v8531, %v8532
      %v8534 = vsel %vm8512, %v8397, 0.0
      %v8535 = vadd.f32 %v8533, %v8534
      %v8536 = vsel %vm8512, %v8398, 0.0
      %v8537 = vadd.f32 %v8535, %v8536
      %v8538 = vsel %vm8512, %v8399, 0.0
      %v8539 = vadd.f32 %v8537, %v8538
      %v8540 = vsel %vm8512, %v8400, 0.0
      %v8541 = vadd.f32 %v8539, %v8540
      %v8542 = vsel %vm8512, %v8401, 0.0
      %v8543 = vadd.f32 %v8541, %v8542
      %v8544 = vsel %vm8512, %v8402, 0.0
      %v8545 = vadd.f32 %v8543, %v8544
      %v8546 = vsel %vm8512, %v8403, 0.0
      %v8547 = vadd.f32 %v8545, %v8546
      %v8548 = vsel %vm8512, %v8404, 0.0
      %v8549 = vadd.f32 %v8547, %v8548
      %v8550 = vsel %vm8512, %v8405, 0.0
      %v8551 = vadd.f32 %v8549, %v8550
      %v8552 = vsel %vm8512, %v8406, 0.0
      %v8553 = vadd.f32 %v8551, %v8552
      %v8554 = vsel %vm8512, %v8407, 0.0
      %v8555 = vadd.f32 %v8553, %v8554
      %v8556 = vsel %vm8512, %v8408, 0.0
      %v8557 = vadd.f32 %v8555, %v8556
      %v8558 = vsel %vm8512, %v8409, 0.0
      %v8559 = vadd.f32 %v8557, %v8558
      %v8560 = vsel %vm8512, %v8410, 0.0
      %v8561 = vadd.f32 %v8559, %v8560
      %v8562 = vsel %vm8512, %v8411, 0.0
      %v8563 = vadd.f32 %v8561, %v8562
      %v8564 = vsel %vm8512, %v8412, 0.0
      %v8565 = vadd.f32 %v8563, %v8564
      %v8566 = vsel %vm8512, %v8413, 0.0
      %v8567 = vadd.f32 %v8565, %v8566
      %v8568 = vsel %vm8512, %v8414, 0.0
      %v8569 = vadd.f32 %v8567, %v8568
      %v8570 = vsel %vm8512, %v8415, 0.0
      %v8571 = vadd.f32 %v8569, %v8570
      %v8572 = vsel %vm8512, %v8416, 0.0
      %v8573 = vadd.f32 %v8571, %v8572
      %v8574 = vsel %vm8512, %v8417, 0.0
      %v8575 = vadd.f32 %v8573, %v8574
      %v8576 = vsel %vm8512, %v8418, 0.0
      %v8577 = vadd.f32 %v8575, %v8576
      %v8578 = vsel %vm8512, %v8419, 0.0
      %v8579 = vadd.f32 %v8577, %v8578
      %v8580 = vsel %vm8512, %v8420, 0.0
      %v8581 = vadd.f32 %v8579, %v8580
      %v8582 = vsel %vm8512, %v8421, 0.0
      %v8583 = vadd.f32 %v8581, %v8582
      %v8584 = vsel %vm8512, %v8422, 0.0
      %v8585 = vadd.f32 %v8583, %v8584
      %v8586 = vsel %vm8512, %v8423, 0.0
      %v8587 = vadd.f32 %v8585, %v8586
      %v8588 = vsel %vm8512, %v8424, 0.0
      %v8589 = vadd.f32 %v8587, %v8588
      %v8590 = vsel %vm8512, %v8425, 0.0
      %v8591 = vadd.f32 %v8589, %v8590
      %v8592 = vsel %vm8512, %v8426, 0.0
      %v8593 = vadd.f32 %v8591, %v8592
      %v8594 = vsel %vm8512, %v8427, 0.0
      %v8595 = vadd.f32 %v8593, %v8594
      %v8596 = vsel %vm8512, %v8428, 0.0
      %v8597 = vadd.f32 %v8595, %v8596
      %v8598 = vsel %vm8512, %v8429, 0.0
      %v8599 = vadd.f32 %v8597, %v8598
      %v8600 = vsel %vm8512, %v8430, 0.0
      %v8601 = vadd.f32 %v8599, %v8600
      %v8602 = vsel %vm8512, %v8431, 0.0
      %v8603 = vadd.f32 %v8601, %v8602
      %v8604 = vsel %vm8512, %v8432, 0.0
      %v8605 = vadd.f32 %v8603, %v8604
      %v8606 = vsel %vm8512, %v8433, 0.0
      %v8607 = vadd.f32 %v8605, %v8606
      %v8608 = vsel %vm8512, %v8434, 0.0
      %v8609 = vadd.f32 %v8607, %v8608
      %v8610 = vsel %vm8512, %v8435, 0.0
      %v8611 = vadd.f32 %v8609, %v8610
      %v8612 = vsel %vm8512, %v8436, 0.0
      %v8613 = vadd.f32 %v8611, %v8612
      %v8614 = vsel %vm8512, %v8437, 0.0
      %v8615 = vadd.f32 %v8613, %v8614
      %v8616 = vsel %vm8512, %v8438, 0.0
      %v8617 = vadd.f32 %v8615, %v8616
      %v8618 = vsel %vm8512, %v8439, 0.0
      %v8619 = vadd.f32 %v8617, %v8618
      %v8620 = vsel %vm8512, %v8440, 0.0
      %v8621 = vadd.f32 %v8619, %v8620
      %v8622 = vsel %vm8512, %v8441, 0.0
      %v8623 = vadd.f32 %v8621, %v8622
      %v8624 = vsel %vm8512, %v8442, 0.0
      %v8625 = vadd.f32 %v8623, %v8624
      %v8626 = vsel %vm8512, %v8443, 0.0
      %v8627 = vadd.f32 %v8625, %v8626
      %v8628 = vsel %vm8512, %v8444, 0.0
      %v8629 = vadd.f32 %v8627, %v8628
      %v8630 = vsel %vm8512, %v8445, 0.0
      %v8631 = vadd.f32 %v8629, %v8630
      %v8632 = vsel %vm8512, %v8446, 0.0
      %v8633 = vadd.f32 %v8631, %v8632
      %v8634 = vsel %vm8512, %v8447, 0.0
      %v8635 = vadd.f32 %v8633, %v8634
      %v8636 = vsel %vm8512, %v8448, 0.0
      %v8637 = vadd.f32 %v8635, %v8636
      %v8638 = vsel %vm8512, %v8449, 0.0
      %v8639 = vadd.f32 %v8637, %v8638
      %v8640 = vsel %vm8512, %v8450, 0.0
      %v8641 = vadd.f32 %v8639, %v8640
      %v8642 = vsel %vm8512, %v8451, 0.0
      %v8643 = vadd.f32 %v8641, %v8642
      %v8644 = vsel %vm8512, %v8452, 0.0
      %v8645 = vadd.f32 %v8643, %v8644
      %v8646 = vsel %vm8512, %v8453, 0.0
      %v8647 = vadd.f32 %v8645, %v8646
      %v8648 = vsel %vm8512, %v8454, 0.0
      %v8649 = vadd.f32 %v8647, %v8648
      %v8650 = vsel %vm8512, %v8455, 0.0
      %v8651 = vadd.f32 %v8649, %v8650
      %v8652 = vsel %vm8512, %v8456, 0.0
      %v8653 = vadd.f32 %v8651, %v8652
      %v8654 = vsel %vm8512, %v8457, 0.0
      %v8655 = vadd.f32 %v8653, %v8654
      %v8656 = vsel %vm8512, %v8458, 0.0
      %v8657 = vadd.f32 %v8655, %v8656
      %v8658 = vsel %vm8512, %v8459, 0.0
      %v8659 = vadd.f32 %v8657, %v8658
      %v8660 = vsel %vm8512, %v8460, 0.0
      %v8661 = vadd.f32 %v8659, %v8660
      %v8662 = vsel %vm8512, %v8461, 0.0
      %v8663 = vadd.f32 %v8661, %v8662
      %v8664 = vsel %vm8512, %v8462, 0.0
      %v8665 = vadd.f32 %v8663, %v8664
      %v8666 = vsel %vm8512, %v8463, 0.0
      %v8667 = vadd.f32 %v8665, %v8666
      %v8668 = vsel %vm8512, %v8464, 0.0
      %v8669 = vadd.f32 %v8667, %v8668
      %v8670 = vsel %vm8512, %v8465, 0.0
      %v8671 = vadd.f32 %v8669, %v8670
      %v8672 = vsel %vm8512, %v8466, 0.0
      %v8673 = vadd.f32 %v8671, %v8672
      %v8674 = vsel %vm8512, %v8467, 0.0
      %v8675 = vadd.f32 %v8673, %v8674
      %v8676 = vsel %vm8512, %v8468, 0.0
      %v8677 = vadd.f32 %v8675, %v8676
      %v8678 = vsel %vm8512, %v8469, 0.0
      %v8679 = vadd.f32 %v8677, %v8678
      %v8680 = vsel %vm8512, %v8470, 0.0
      %v8681 = vadd.f32 %v8679, %v8680
      %v8682 = vsel %vm8512, %v8471, 0.0
      %v8683 = vadd.f32 %v8681, %v8682
      %v8684 = vsel %vm8512, %v8472, 0.0
      %v8685 = vadd.f32 %v8683, %v8684
      %v8686 = vsel %vm8512, %v8473, 0.0
      %v8687 = vadd.f32 %v8685, %v8686
      %v8688 = vsel %vm8512, %v8474, 0.0
      %v8689 = vadd.f32 %v8687, %v8688
      %v8690 = vsel %vm8512, %v8475, 0.0
      %v8691 = vadd.f32 %v8689, %v8690
      %v8692 = vsel %vm8512, %v8476, 0.0
      %v8693 = vadd.f32 %v8691, %v8692
      %v8694 = vsel %vm8512, %v8477, 0.0
      %v8695 = vadd.f32 %v8693, %v8694
      %v8696 = vsel %vm8512, %v8478, 0.0
      %v8697 = vadd.f32 %v8695, %v8696
      %v8698 = vsel %vm8512, %v8479, 0.0
      %v8699 = vadd.f32 %v8697, %v8698
      %v8700 = vsel %vm8512, %v8480, 0.0
      %v8701 = vadd.f32 %v8699, %v8700
      %v8702 = vsel %vm8512, %v8481, 0.0
      %v8703 = vadd.f32 %v8701, %v8702
      %v8704 = vsel %vm8512, %v8482, 0.0
      %v8705 = vadd.f32 %v8703, %v8704
      %v8706 = vsel %vm8512, %v8483, 0.0
      %v8707 = vadd.f32 %v8705, %v8706
      %v8708 = vsel %vm8512, %v8484, 0.0
      %v8709 = vadd.f32 %v8707, %v8708
      %v8710 = vsel %vm8512, %v8485, 0.0
      %v8711 = vadd.f32 %v8709, %v8710
      %v8712 = vsel %vm8512, %v8486, 0.0
      %v8713 = vadd.f32 %v8711, %v8712
      %v8714 = vsel %vm8512, %v8487, 0.0
      %v8715 = vadd.f32 %v8713, %v8714
      %v8716 = vsel %vm8512, %v8488, 0.0
      %v8717 = vadd.f32 %v8715, %v8716
      %v8718 = vsel %vm8512, %v8489, 0.0
      %v8719 = vadd.f32 %v8717, %v8718
      %v8720 = vsel %vm8512, %v8490, 0.0
      %v8721 = vadd.f32 %v8719, %v8720
      %v8722 = vsel %vm8512, %v8491, 0.0
      %v8723 = vadd.f32 %v8721, %v8722
      %v8724 = vsel %vm8512, %v8492, 0.0
      %v8725 = vadd.f32 %v8723, %v8724
      %v8726 = vsel %vm8512, %v8493, 0.0
      %v8727 = vadd.f32 %v8725, %v8726
      %v8728 = vsel %vm8512, %v8494, 0.0
      %v8729 = vadd.f32 %v8727, %v8728
      %v8730 = vsel %vm8512, %v8495, 0.0
      %v8731 = vadd.f32 %v8729, %v8730
      %v8732 = vsel %vm8512, %v8496, 0.0
      %v8733 = vadd.f32 %v8731, %v8732
      %v8734 = vsel %vm8512, %v8497, 0.0
      %v8735 = vadd.f32 %v8733, %v8734
      %v8736 = vsel %vm8512, %v8498, 0.0
      %v8737 = vadd.f32 %v8735, %v8736
      %v8738 = vsel %vm8512, %v8499, 0.0
      %v8739 = vadd.f32 %v8737, %v8738
      %v8740 = vsel %vm8512, %v8500, 0.0
      %v8741 = vadd.f32 %v8739, %v8740
      %v8742 = vsel %vm8512, %v8501, 0.0
      %v8743 = vadd.f32 %v8741, %v8742
      %v8744 = vsel %vm8512, %v8502, 0.0
      %v8745 = vadd.f32 %v8743, %v8744
      %v8746 = vsel %vm8512, %v8503, 0.0
      %v8747 = vadd.f32 %v8745, %v8746
      %v8748 = vsel %vm8512, %v8504, 0.0
      %v8749 = vadd.f32 %v8747, %v8748
      %v8750 = vsel %vm8512, %v8505, 0.0
      %v8751 = vadd.f32 %v8749, %v8750
      %v8752 = vsel %vm8512, %v8506, 0.0
      %v8753 = vadd.f32 %v8751, %v8752
      %v8754 = vsel %vm8512, %v8507, 0.0
      %v8755 = vadd.f32 %v8753, %v8754
      %v8756 = vsel %vm8512, %v8508, 0.0
      %v8757 = vadd.f32 %v8755, %v8756
      %v8758 = vsel %vm8512, %v8509, 0.0
      %v8759 = vadd.f32 %v8757, %v8758
      %v8760 = vsel %vm8512, %v8510, 0.0
      %v8761 = vadd.f32 %v8759, %v8760
      %8762 = vadd.xlane.f32.xlu0 %v8761
      %v8763 = vpop.xlane.xlu0 %8762
      %v8764 = vrot.slane %v8763, 4
      %v8765 = vadd.f32 %v8763, %v8764
      %v8766 = vrot.slane %v8765, 2
      %v8767 = vadd.f32 %v8765, %v8766
      %v8768 = vrot.slane %v8767, 1
      %v8769 = vadd.f32 %v8767, %v8768
      %s8770 = vtos %v8769
      %v8771 = vstv %s8770
      %v8772 = vadd.f32 %v8511, %v8771
      %8773 = vst [vmem:[%s270] sm:$0xff] %v8772
      %p8774 = scmp.lt.s32.totalorder %s21, 1
      %s8775 = scalar_select %p8774, %s21, 1
      %s8776 = smul.addr %s8775, 8
      %s8777 = scalar_lea.vmem %s6, %s8776
      // Predicated region
      $region49: #{deepwalk_forward.1} parent=43 // pred_check
        %p8778 = pneg %p180
      $region50: #{deepwalk_forward.1} parent=43 // pred_check_branch
        %8780 = sbr.rel (%p8778) target = $region52
      $region51: #{deepwalk_forward.1} parent=43 // pred_region
        _
      $region52: #{deepwalk_forward.1} parent=43 // pred_fallthru
        _
    $region44: #{deepwalk_forward.1} parent=5 // pred_fallthru
      _
    %p8781 = scmp.le.s32.totalorder 2, %s12
    // Predicated region
    $region53: #{deepwalk_forward.1} parent=5 // pred_check
      %p8782 = pneg %p8781
    $region54: #{deepwalk_forward.1} parent=5 // pred_check_branch
      %8784 = sbr.rel (%p8782) target = $region56
    $region55: #{deepwalk_forward.1} parent=5 // pred_region
      %s8785 = ssub.s32 %s12, 2
      // Predicated region
      $region57: #{deepwalk_forward.1} parent=55 // pred_check
        %p8786 = pneg %p186
      $region58: #{deepwalk_forward.1} parent=55 // pred_check_branch
        %8788 = sbr.rel (%p8786) target = $region60
      $region59: #{deepwalk_forward.1} parent=55 // pred_region
        %p8789 = scmp.lt.s32.totalorder %s23, 1
        %s8790 = scalar_select %p8789, %s23, 1
        %s8791 = smul.addr %s8790, 8
        %s8792 = scalar_lea.vmem %s6, %s8791
      $region60: #{deepwalk_forward.1} parent=55 // pred_fallthru
        _
    $region56: #{deepwalk_forward.1} parent=5 // pred_fallthru
      _
  $region6: #{deepwalk_forward.1} parent=0 // loop_footer
    %s16 = sadd.s32 1, %s12
  $region7: #{deepwalk_forward.1} parent=0 // loop_footer_branch
    %11 = sbr.rel target = $region3
  $region8: #{deepwalk_forward.1} parent=0 // loop_exit
    _

</llo_original>
